<compile_context>
chip_gen: v7x
topology: tpu7x:2x2x1
jax: 0.10.0
libtpu: 0.0.40
codegen_flags: <defaults>
</compile_context>

<pallas_src>
import functools
import math

import jax
import jax.numpy as jnp
from jax import lax
from jax.experimental import pallas as pl
from jax.experimental.pallas import tpu as pltpu  # noqa: F401  (TPU backend)

LN_EPS = 1e-5
PER_LAYER_KEYS = ("wq", "bq", "wk", "bk", "wv", "bv", "wo", "bo",
                  "n1w", "n1b", "n2w", "n2b", "w1", "b1", "w2", "b2")


def _layer_norm(x, w, b):
    mu = jnp.mean(x, axis=-1, keepdims=True)
    var = jnp.mean(jnp.square(x - mu), axis=-1, keepdims=True)
    return (x - mu) * lax.rsqrt(var + LN_EPS) * w + b


def fused_forward_kernel(tok_ref, emb_ref, *refs,
                         num_heads, n_layers, batch, seq, causal):
    """Whole TransformerOnly forward in one kernel invocation (grid=()).

    refs layout: n_layers * len(PER_LAYER_KEYS) per-layer params, then the padded decode
    weight/bias, then the output ref.
    """
    per_layer = len(PER_LAYER_KEYS)
    layer_refs = refs[:n_layers * per_layer]
    wdec_ref, bdec_ref, o_ref = refs[n_layers * per_layer:]

    vocab_in, d_model = emb_ref.shape
    n_rows = batch * seq
    dh = d_model // num_heads
    scale = 1.0 / math.sqrt(dh)

    # ---- token embedding as a one-hot matmul (gather fused into the kernel) ----
    tok = tok_ref[...]                                                      # [N, 1] int32
    onehot = (lax.broadcasted_iota(jnp.int32, (n_rows, vocab_in), 1) == tok)
    x = jnp.dot(onehot.astype(jnp.float32), emb_ref[...],
                preferred_element_type=jnp.float32) * math.sqrt(d_model)    # [N, D]

    # ---- hoisted constants: causal additive bias and the lane-index vector ----
    if causal:
        row = lax.broadcasted_iota(jnp.int32, (seq, seq), 0)
        col = lax.broadcasted_iota(jnp.int32, (seq, seq), 1)
        causal_bias = jnp.where(col <= row, 0.0, -1e30)[None]               # [1, S, S]
    d_idx = lax.broadcasted_iota(jnp.int32, (1, 1, d_model), 2)             # [1, 1, D]

    for l in range(n_layers):
        (wq, bq, wk, bk, wv, bv, wo, bo,
         n1w, n1b, n2w, n2b, w1, b1, w2, b2) = \
            layer_refs[l * per_layer:(l + 1) * per_layer]

        # ---- self attention ----
        q = jnp.dot(x, wq[...], preferred_element_type=jnp.float32) + bq[...]
        k = jnp.dot(x, wk[...], preferred_element_type=jnp.float32) + bk[...]
        v = jnp.dot(x, wv[...], preferred_element_type=jnp.float32) + bv[...]
        q3 = q.reshape(batch, seq, d_model)
        k3 = k.reshape(batch, seq, d_model)
        v3 = v.reshape(batch, seq, d_model)

        attn3 = jnp.zeros((batch, seq, d_model), jnp.float32)
        for h in range(num_heads):
            # Full-width masked matmuls: zero the lanes outside head h instead of slicing
            # 8-lane sub-blocks (avoids relayouts and the output concatenate entirely).
            mh = ((d_idx >= h * dh) & (d_idx < (h + 1) * dh)).astype(jnp.float32)
            s = jnp.einsum('bqd,bkd->bqk', q3, k3 * mh,
                           preferred_element_type=jnp.float32) * scale      # [B, S, S]
            if causal:
                s = s + causal_bias
            m = jnp.max(s, axis=-1, keepdims=True)
            p = jnp.exp(s - m)
            denom = jnp.sum(p, axis=-1, keepdims=True)
            p = p * pl.reciprocal(denom, approx=True)
            attn3 = attn3 + jnp.einsum('bqk,bkd->bqd', p, v3 * mh,
                                       preferred_element_type=jnp.float32)
        attn = attn3.reshape(n_rows, d_model)
        attn = jnp.dot(attn, wo[...], preferred_element_type=jnp.float32) + bo[...]

        # ---- residual + norm1 (dropout == identity) ----
        h1 = _layer_norm(x + attn, n1w[...], n1b[...])

        # ---- feed forward: linear1 -> relu -> linear2 ----
        ff = jnp.dot(h1, w1[...], preferred_element_type=jnp.float32) + b1[...]
        ff = jnp.maximum(ff, 0.0)
        ff = jnp.dot(ff, w2[...], preferred_element_type=jnp.float32) + b2[...]

        # ---- residual + norm2 ----
        x = _layer_norm(h1 + ff, n2w[...], n2b[...])

    # ---- decode: weights padded to a 128-lane multiple -> unmasked, lane-dense store ----
    o_ref[...] = (jnp.dot(x, wdec_ref[...], preferred_element_type=jnp.float32)
                  + bdec_ref[...])


def fused_forward(tok_bm, emb, layer_params, wdec_p, bdec_p,
                  *, num_heads, causal, batch, seq):
    n_rows = batch * seq
    v_pad = wdec_p.shape[1]
    inputs = [tok_bm, emb]
    for lp in layer_params:
        inputs.extend(lp[k] for k in PER_LAYER_KEYS)
    inputs.extend([wdec_p, bdec_p])

    def full_spec(a):
        nd = a.ndim
        return pl.BlockSpec(a.shape, lambda *_: (0,) * nd)

    kern = functools.partial(fused_forward_kernel,
                             num_heads=num_heads, n_layers=len(layer_params),
                             batch=batch, seq=seq, causal=causal)
    return pl.pallas_call(
        kern,
        out_shape=jax.ShapeDtypeStruct((n_rows, v_pad), jnp.float32),
        in_specs=[full_spec(a) for a in inputs],
        out_specs=pl.BlockSpec((n_rows, v_pad), lambda *_: (0, 0)),
    )(*inputs)


def init_params(key, *, vocab_in, vocab_out, d, ff, n_layers):
    keys = jax.random.split(key, 2 + n_layers)

    def nrm(k, shape, scale=0.02):
        return (scale * jax.random.normal(k, shape)).astype(jnp.float32)

    params = {"embedding": nrm(keys[0], (vocab_in, d))}
    layers = []
    for i in range(n_layers):
        lk = jax.random.split(keys[1 + i], 8)
        layers.append(dict(
            wq=nrm(lk[0], (d, d)), bq=jnp.zeros((1, d), jnp.float32),
            wk=nrm(lk[1], (d, d)), bk=jnp.zeros((1, d), jnp.float32),
            wv=nrm(lk[2], (d, d)), bv=jnp.zeros((1, d), jnp.float32),
            wo=nrm(lk[3], (d, d)), bo=jnp.zeros((1, d), jnp.float32),
            n1w=jnp.ones((1, d), jnp.float32), n1b=jnp.zeros((1, d), jnp.float32),
            n2w=jnp.ones((1, d), jnp.float32), n2b=jnp.zeros((1, d), jnp.float32),
            w1=nrm(lk[4], (d, ff)), b1=nrm(lk[5], (1, ff)),
            w2=nrm(lk[6], (ff, d)), b2=nrm(lk[7], (1, d)),
        ))
    params["layers"] = layers
    dk = jax.random.split(keys[-1], 2)
    params["wdec"] = nrm(dk[0], (d, vocab_out))
    params["bdec"] = nrm(dk[1], (1, vocab_out))
    return params


def transformer_only_forward(tokens, params, *, num_heads, positional_mask):
    """tokens: [S, B] int32 (seq-first, like PyTorch). Returns [S, B, vocab_out]."""
    seq, batch = tokens.shape
    vocab_out = params["wdec"].shape[1]
    v_pad = ((vocab_out + 127) // 128) * 128
    wdec_p = jnp.pad(params["wdec"], ((0, 0), (0, v_pad - vocab_out)))
    bdec_p = jnp.pad(params["bdec"], ((0, 0), (0, v_pad - vocab_out)))
    # batch-major flat token ids [B*S, 1] (tiny index prep, done outside the kernel)
    tok_bm = tokens.astype(jnp.int32).T.reshape(batch * seq, 1)
    # PositionalEncoding: its result is discarded in the reference forward -> no-op.
    out2d = fused_forward(tok_bm, params["embedding"], params["layers"],
                          wdec_p, bdec_p, num_heads=num_heads,
                          causal=bool(positional_mask), batch=batch, seq=seq)
    out = out2d[:, :vocab_out].reshape(batch, seq, vocab_out)
    return jnp.transpose(out, (1, 0, 2))


if __name__ == "__main__":
    VOCAB_IN, VOCAB_OUT = 50, 64
    D_CHANNELS, NUM_HEADS = 32, 4
    LAYERS = 2                       # module requires layers % 2 == 0 -> 2 encoder layers
    DIM_FF = 2048                    # PyTorch TransformerEncoderLayer default
    SEQ, BATCH = 8, 2
    POSITIONAL_MASK = True           # causal self-attention path

    key = jax.random.PRNGKey(0)
    k_tok, k_par = jax.random.split(key)
    tokens = jax.random.randint(k_tok, (SEQ, BATCH), 0, VOCAB_IN, dtype=jnp.int32)

    params = init_params(k_par, vocab_in=VOCAB_IN, vocab_out=VOCAB_OUT,
                         d=D_CHANNELS, ff=DIM_FF, n_layers=LAYERS)

    fwd = jax.jit(functools.partial(transformer_only_forward,
                                    num_heads=NUM_HEADS,
                                    positional_mask=POSITIONAL_MASK))
    out = jax.block_until_ready(fwd(tokens, params))
    assert out.shape == (SEQ, BATCH, VOCAB_OUT), out.shape
    assert bool(jnp.all(jnp.isfinite(out)))
    print("KERNEL_OK")
</pallas_src>

<mosaic_0001>
module attributes {stable_mosaic.version = 11 : i64} {
  func.func @fused_forward_kernel(%arg0: memref<16x1xi32, #tpu.memory_space<vmem>>, %arg1: memref<50x32xf32, #tpu.memory_space<vmem>>, %arg2: memref<32x32xf32, #tpu.memory_space<vmem>>, %arg3: memref<1x32xf32, #tpu.memory_space<vmem>>, %arg4: memref<32x32xf32, #tpu.memory_space<vmem>>, %arg5: memref<1x32xf32, #tpu.memory_space<vmem>>, %arg6: memref<32x32xf32, #tpu.memory_space<vmem>>, %arg7: memref<1x32xf32, #tpu.memory_space<vmem>>, %arg8: memref<32x32xf32, #tpu.memory_space<vmem>>, %arg9: memref<1x32xf32, #tpu.memory_space<vmem>>, %arg10: memref<1x32xf32, #tpu.memory_space<vmem>>, %arg11: memref<1x32xf32, #tpu.memory_space<vmem>>, %arg12: memref<1x32xf32, #tpu.memory_space<vmem>>, %arg13: memref<1x32xf32, #tpu.memory_space<vmem>>, %arg14: memref<32x2048xf32, #tpu.memory_space<vmem>>, %arg15: memref<1x2048xf32, #tpu.memory_space<vmem>>, %arg16: memref<2048x32xf32, #tpu.memory_space<vmem>>, %arg17: memref<1x32xf32, #tpu.memory_space<vmem>>, %arg18: memref<32x32xf32, #tpu.memory_space<vmem>>, %arg19: memref<1x32xf32, #tpu.memory_space<vmem>>, %arg20: memref<32x32xf32, #tpu.memory_space<vmem>>, %arg21: memref<1x32xf32, #tpu.memory_space<vmem>>, %arg22: memref<32x32xf32, #tpu.memory_space<vmem>>, %arg23: memref<1x32xf32, #tpu.memory_space<vmem>>, %arg24: memref<32x32xf32, #tpu.memory_space<vmem>>, %arg25: memref<1x32xf32, #tpu.memory_space<vmem>>, %arg26: memref<1x32xf32, #tpu.memory_space<vmem>>, %arg27: memref<1x32xf32, #tpu.memory_space<vmem>>, %arg28: memref<1x32xf32, #tpu.memory_space<vmem>>, %arg29: memref<1x32xf32, #tpu.memory_space<vmem>>, %arg30: memref<32x2048xf32, #tpu.memory_space<vmem>>, %arg31: memref<1x2048xf32, #tpu.memory_space<vmem>>, %arg32: memref<2048x32xf32, #tpu.memory_space<vmem>>, %arg33: memref<1x32xf32, #tpu.memory_space<vmem>>, %arg34: memref<32x128xf32, #tpu.memory_space<vmem>>, %arg35: memref<1x128xf32, #tpu.memory_space<vmem>>, %arg36: memref<16x128xf32, #tpu.memory_space<vmem>>) attributes {dimension_semantics = [], scalar_prefetch = 0 : i64, scratch_operands = 0 : i64, tpu.core_type = #tpu.core_type<tc>} {
    %c0 = arith.constant 0 : index
    %c0_0 = arith.constant 0 : index
    %0 = vector.load %arg0[%c0, %c0_0] : memref<16x1xi32, #tpu.memory_space<vmem>>, vector<16x1xi32>
    %1 = tpu.iota {dimensions = array<i32: 1>} : vector<16x50xi32>
    %2 = vector.broadcast %0 : vector<16x1xi32> to vector<16x50xi32>
    %3 = arith.cmpi eq, %1, %2 : vector<16x50xi32>
    %4 = arith.extui %3 : vector<16x50xi1> to vector<16x50xi32>
    %5 = arith.sitofp %4 : vector<16x50xi32> to vector<16x50xf32>
    %c0_1 = arith.constant 0 : index
    %c0_2 = arith.constant 0 : index
    %6 = vector.load %arg1[%c0_1, %c0_2] : memref<50x32xf32, #tpu.memory_space<vmem>>, vector<50x32xf32>
    %cst = arith.constant dense<0.000000e+00> : vector<16x32xf32>
    %7 = tpu.matmul %5, %6, %cst {dimension_numbers = #tpu.dot_dimension_numbers<[1], [0], [0], [1], [0, 0, 1, 1], [], []>} : vector<16x50xf32>, vector<50x32xf32>, vector<16x32xf32> -> vector<16x32xf32>
    %cst_3 = arith.constant 5.65685415 : f32
    %8 = vector.broadcast %cst_3 : f32 to vector<16x32xf32>
    %9 = arith.mulf %7, %8 : vector<16x32xf32>
    %10 = tpu.iota {dimensions = array<i32: 0>} : vector<8x8xi32>
    %11 = tpu.iota {dimensions = array<i32: 1>} : vector<8x8xi32>
    %12 = arith.cmpi sle, %11, %10 : vector<8x8xi32>
    %cst_4 = arith.constant 0.000000e+00 : f32
    %cst_5 = arith.constant -1.000000e+30 : f32
    %13 = vector.broadcast %cst_4 : f32 to vector<8x8xf32>
    %14 = vector.broadcast %cst_5 : f32 to vector<8x8xf32>
    %15 = arith.select %12, %13, %14 : vector<8x8xi1>, vector<8x8xf32>
    %16 = vector.shape_cast %15 : vector<8x8xf32> to vector<1x8x8xf32>
    %17 = tpu.iota {dimensions = array<i32: 2>} : vector<1x1x32xi32>
    %c0_6 = arith.constant 0 : index
    %c0_7 = arith.constant 0 : index
    %18 = vector.load %arg2[%c0_6, %c0_7] : memref<32x32xf32, #tpu.memory_space<vmem>>, vector<32x32xf32>
    %cst_8 = arith.constant dense<0.000000e+00> : vector<16x32xf32>
    %19 = tpu.matmul %9, %18, %cst_8 {dimension_numbers = #tpu.dot_dimension_numbers<[1], [0], [0], [1], [0, 0, 1, 1], [], []>} : vector<16x32xf32>, vector<32x32xf32>, vector<16x32xf32> -> vector<16x32xf32>
    %c0_9 = arith.constant 0 : index
    %c0_10 = arith.constant 0 : index
    %20 = vector.load %arg3[%c0_9, %c0_10] : memref<1x32xf32, #tpu.memory_space<vmem>>, vector<1x32xf32>
    %21 = vector.broadcast %20 : vector<1x32xf32> to vector<16x32xf32>
    %22 = arith.addf %19, %21 : vector<16x32xf32>
    %c0_11 = arith.constant 0 : index
    %c0_12 = arith.constant 0 : index
    %23 = vector.load %arg4[%c0_11, %c0_12] : memref<32x32xf32, #tpu.memory_space<vmem>>, vector<32x32xf32>
    %cst_13 = arith.constant dense<0.000000e+00> : vector<16x32xf32>
    %24 = tpu.matmul %9, %23, %cst_13 {dimension_numbers = #tpu.dot_dimension_numbers<[1], [0], [0], [1], [0, 0, 1, 1], [], []>} : vector<16x32xf32>, vector<32x32xf32>, vector<16x32xf32> -> vector<16x32xf32>
    %c0_14 = arith.constant 0 : index
    %c0_15 = arith.constant 0 : index
    %25 = vector.load %arg5[%c0_14, %c0_15] : memref<1x32xf32, #tpu.memory_space<vmem>>, vector<1x32xf32>
    %26 = vector.broadcast %25 : vector<1x32xf32> to vector<16x32xf32>
    %27 = arith.addf %24, %26 : vector<16x32xf32>
    %c0_16 = arith.constant 0 : index
    %c0_17 = arith.constant 0 : index
    %28 = vector.load %arg6[%c0_16, %c0_17] : memref<32x32xf32, #tpu.memory_space<vmem>>, vector<32x32xf32>
    %cst_18 = arith.constant dense<0.000000e+00> : vector<16x32xf32>
    %29 = tpu.matmul %9, %28, %cst_18 {dimension_numbers = #tpu.dot_dimension_numbers<[1], [0], [0], [1], [0, 0, 1, 1], [], []>} : vector<16x32xf32>, vector<32x32xf32>, vector<16x32xf32> -> vector<16x32xf32>
    %c0_19 = arith.constant 0 : index
    %c0_20 = arith.constant 0 : index
    %30 = vector.load %arg7[%c0_19, %c0_20] : memref<1x32xf32, #tpu.memory_space<vmem>>, vector<1x32xf32>
    %31 = vector.broadcast %30 : vector<1x32xf32> to vector<16x32xf32>
    %32 = arith.addf %29, %31 : vector<16x32xf32>
    %33 = vector.shape_cast %22 : vector<16x32xf32> to vector<2x8x32xf32>
    %34 = vector.shape_cast %27 : vector<16x32xf32> to vector<2x8x32xf32>
    %35 = vector.shape_cast %32 : vector<16x32xf32> to vector<2x8x32xf32>
    %cst_21 = arith.constant 0.000000e+00 : f32
    %36 = vector.broadcast %cst_21 : f32 to vector<2x8x32xf32>
    %c0_i32 = arith.constant 0 : i32
    %37 = vector.broadcast %c0_i32 : i32 to vector<1x1x32xi32>
    %38 = arith.cmpi sge, %17, %37 : vector<1x1x32xi32>
    %c8_i32 = arith.constant 8 : i32
    %39 = vector.broadcast %c8_i32 : i32 to vector<1x1x32xi32>
    %40 = arith.cmpi slt, %17, %39 : vector<1x1x32xi32>
    %41 = arith.andi %38, %40 : vector<1x1x32xi1>
    %42 = arith.extui %41 : vector<1x1x32xi1> to vector<1x1x32xi32>
    %43 = arith.sitofp %42 : vector<1x1x32xi32> to vector<1x1x32xf32>
    %44 = vector.broadcast %43 : vector<1x1x32xf32> to vector<2x8x32xf32>
    %45 = arith.mulf %34, %44 : vector<2x8x32xf32>
    "tpu.trace_start"() <{level = 10 : i32, message = "bqd,bkd->bqk"}> : () -> ()
    %cst_22 = arith.constant dense<0.000000e+00> : vector<2x8x8xf32>
    %46 = tpu.matmul %33, %45, %cst_22 {dimension_numbers = #tpu.dot_dimension_numbers<[2], [2], [1], [1], [0, 0, 0, 1, 1, 1], [0], [0]>} : vector<2x8x32xf32>, vector<2x8x32xf32>, vector<2x8x8xf32> -> vector<2x8x8xf32>
    "tpu.trace_stop"() : () -> ()
    %cst_23 = arith.constant 0.353553385 : f32
    %47 = vector.broadcast %cst_23 : f32 to vector<2x8x8xf32>
    %48 = arith.mulf %46, %47 : vector<2x8x8xf32>
    %49 = vector.broadcast %16 : vector<1x8x8xf32> to vector<2x8x8xf32>
    %50 = arith.addf %48, %49 : vector<2x8x8xf32>
    %cst_24 = arith.constant dense<0xFF800000> : vector<2x8xf32>
    %51 = vector.multi_reduction <maximumf>, %50, %cst_24 [2] : vector<2x8x8xf32> to vector<2x8xf32>
    %52 = vector.shape_cast %51 : vector<2x8xf32> to vector<2x8x1xf32>
    %53 = vector.broadcast %52 : vector<2x8x1xf32> to vector<2x8x8xf32>
    %54 = arith.subf %50, %53 : vector<2x8x8xf32>
    %55 = math.exp %54 : vector<2x8x8xf32>
    %cst_25 = arith.constant dense<0.000000e+00> : vector<2x8xf32>
    %56 = vector.multi_reduction <add>, %55, %cst_25 [2] : vector<2x8x8xf32> to vector<2x8xf32>
    %57 = vector.shape_cast %56 : vector<2x8xf32> to vector<2x8x1xf32>
    %58 = tpu.reciprocal %57 {approx = true} : vector<2x8x1xf32> -> vector<2x8x1xf32>
    %59 = vector.broadcast %58 : vector<2x8x1xf32> to vector<2x8x8xf32>
    %60 = arith.mulf %55, %59 : vector<2x8x8xf32>
    %61 = vector.broadcast %43 : vector<1x1x32xf32> to vector<2x8x32xf32>
    %62 = arith.mulf %35, %61 : vector<2x8x32xf32>
    "tpu.trace_start"() <{level = 10 : i32, message = "bqk,bkd->bqd"}> : () -> ()
    %cst_26 = arith.constant dense<0.000000e+00> : vector<2x8x32xf32>
    %63 = tpu.matmul %60, %62, %cst_26 {dimension_numbers = #tpu.dot_dimension_numbers<[2], [1], [1], [2], [0, 0, 0, 1, 1, 2], [0], [0]>} : vector<2x8x8xf32>, vector<2x8x32xf32>, vector<2x8x32xf32> -> vector<2x8x32xf32>
    "tpu.trace_stop"() : () -> ()
    %64 = arith.addf %36, %63 : vector<2x8x32xf32>
    %c8_i32_27 = arith.constant 8 : i32
    %65 = vector.broadcast %c8_i32_27 : i32 to vector<1x1x32xi32>
    %66 = arith.cmpi sge, %17, %65 : vector<1x1x32xi32>
    %c16_i32 = arith.constant 16 : i32
    %67 = vector.broadcast %c16_i32 : i32 to vector<1x1x32xi32>
    %68 = arith.cmpi slt, %17, %67 : vector<1x1x32xi32>
    %69 = arith.andi %66, %68 : vector<1x1x32xi1>
    %70 = arith.extui %69 : vector<1x1x32xi1> to vector<1x1x32xi32>
    %71 = arith.sitofp %70 : vector<1x1x32xi32> to vector<1x1x32xf32>
    %72 = vector.broadcast %71 : vector<1x1x32xf32> to vector<2x8x32xf32>
    %73 = arith.mulf %34, %72 : vector<2x8x32xf32>
    "tpu.trace_start"() <{level = 10 : i32, message = "bqd,bkd->bqk"}> : () -> ()
    %cst_28 = arith.constant dense<0.000000e+00> : vector<2x8x8xf32>
    %74 = tpu.matmul %33, %73, %cst_28 {dimension_numbers = #tpu.dot_dimension_numbers<[2], [2], [1], [1], [0, 0, 0, 1, 1, 1], [0], [0]>} : vector<2x8x32xf32>, vector<2x8x32xf32>, vector<2x8x8xf32> -> vector<2x8x8xf32>
    "tpu.trace_stop"() : () -> ()
    %cst_29 = arith.constant 0.353553385 : f32
    %75 = vector.broadcast %cst_29 : f32 to vector<2x8x8xf32>
    %76 = arith.mulf %74, %75 : vector<2x8x8xf32>
    %77 = vector.broadcast %16 : vector<1x8x8xf32> to vector<2x8x8xf32>
    %78 = arith.addf %76, %77 : vector<2x8x8xf32>
    %cst_30 = arith.constant dense<0xFF800000> : vector<2x8xf32>
    %79 = vector.multi_reduction <maximumf>, %78, %cst_30 [2] : vector<2x8x8xf32> to vector<2x8xf32>
    %80 = vector.shape_cast %79 : vector<2x8xf32> to vector<2x8x1xf32>
    %81 = vector.broadcast %80 : vector<2x8x1xf32> to vector<2x8x8xf32>
    %82 = arith.subf %78, %81 : vector<2x8x8xf32>
    %83 = math.exp %82 : vector<2x8x8xf32>
    %cst_31 = arith.constant dense<0.000000e+00> : vector<2x8xf32>
    %84 = vector.multi_reduction <add>, %83, %cst_31 [2] : vector<2x8x8xf32> to vector<2x8xf32>
    %85 = vector.shape_cast %84 : vector<2x8xf32> to vector<2x8x1xf32>
    %86 = tpu.reciprocal %85 {approx = true} : vector<2x8x1xf32> -> vector<2x8x1xf32>
    %87 = vector.broadcast %86 : vector<2x8x1xf32> to vector<2x8x8xf32>
    %88 = arith.mulf %83, %87 : vector<2x8x8xf32>
    %89 = vector.broadcast %71 : vector<1x1x32xf32> to vector<2x8x32xf32>
    %90 = arith.mulf %35, %89 : vector<2x8x32xf32>
    "tpu.trace_start"() <{level = 10 : i32, message = "bqk,bkd->bqd"}> : () -> ()
    %cst_32 = arith.constant dense<0.000000e+00> : vector<2x8x32xf32>
    %91 = tpu.matmul %88, %90, %cst_32 {dimension_numbers = #tpu.dot_dimension_numbers<[2], [1], [1], [2], [0, 0, 0, 1, 1, 2], [0], [0]>} : vector<2x8x8xf32>, vector<2x8x32xf32>, vector<2x8x32xf32> -> vector<2x8x32xf32>
    "tpu.trace_stop"() : () -> ()
    %92 = arith.addf %64, %91 : vector<2x8x32xf32>
    %c16_i32_33 = arith.constant 16 : i32
    %93 = vector.broadcast %c16_i32_33 : i32 to vector<1x1x32xi32>
    %94 = arith.cmpi sge, %17, %93 : vector<1x1x32xi32>
    %c24_i32 = arith.constant 24 : i32
    %95 = vector.broadcast %c24_i32 : i32 to vector<1x1x32xi32>
    %96 = arith.cmpi slt, %17, %95 : vector<1x1x32xi32>
    %97 = arith.andi %94, %96 : vector<1x1x32xi1>
    %98 = arith.extui %97 : vector<1x1x32xi1> to vector<1x1x32xi32>
    %99 = arith.sitofp %98 : vector<1x1x32xi32> to vector<1x1x32xf32>
    %100 = vector.broadcast %99 : vector<1x1x32xf32> to vector<2x8x32xf32>
    %101 = arith.mulf %34, %100 : vector<2x8x32xf32>
    "tpu.trace_start"() <{level = 10 : i32, message = "bqd,bkd->bqk"}> : () -> ()
    %cst_34 = arith.constant dense<0.000000e+00> : vector<2x8x8xf32>
    %102 = tpu.matmul %33, %101, %cst_34 {dimension_numbers = #tpu.dot_dimension_numbers<[2], [2], [1], [1], [0, 0, 0, 1, 1, 1], [0], [0]>} : vector<2x8x32xf32>, vector<2x8x32xf32>, vector<2x8x8xf32> -> vector<2x8x8xf32>
    "tpu.trace_stop"() : () -> ()
    %cst_35 = arith.constant 0.353553385 : f32
    %103 = vector.broadcast %cst_35 : f32 to vector<2x8x8xf32>
    %104 = arith.mulf %102, %103 : vector<2x8x8xf32>
    %105 = vector.broadcast %16 : vector<1x8x8xf32> to vector<2x8x8xf32>
    %106 = arith.addf %104, %105 : vector<2x8x8xf32>
    %cst_36 = arith.constant dense<0xFF800000> : vector<2x8xf32>
    %107 = vector.multi_reduction <maximumf>, %106, %cst_36 [2] : vector<2x8x8xf32> to vector<2x8xf32>
    %108 = vector.shape_cast %107 : vector<2x8xf32> to vector<2x8x1xf32>
    %109 = vector.broadcast %108 : vector<2x8x1xf32> to vector<2x8x8xf32>
    %110 = arith.subf %106, %109 : vector<2x8x8xf32>
    %111 = math.exp %110 : vector<2x8x8xf32>
    %cst_37 = arith.constant dense<0.000000e+00> : vector<2x8xf32>
    %112 = vector.multi_reduction <add>, %111, %cst_37 [2] : vector<2x8x8xf32> to vector<2x8xf32>
    %113 = vector.shape_cast %112 : vector<2x8xf32> to vector<2x8x1xf32>
    %114 = tpu.reciprocal %113 {approx = true} : vector<2x8x1xf32> -> vector<2x8x1xf32>
    %115 = vector.broadcast %114 : vector<2x8x1xf32> to vector<2x8x8xf32>
    %116 = arith.mulf %111, %115 : vector<2x8x8xf32>
    %117 = vector.broadcast %99 : vector<1x1x32xf32> to vector<2x8x32xf32>
    %118 = arith.mulf %35, %117 : vector<2x8x32xf32>
    "tpu.trace_start"() <{level = 10 : i32, message = "bqk,bkd->bqd"}> : () -> ()
    %cst_38 = arith.constant dense<0.000000e+00> : vector<2x8x32xf32>
    %119 = tpu.matmul %116, %118, %cst_38 {dimension_numbers = #tpu.dot_dimension_numbers<[2], [1], [1], [2], [0, 0, 0, 1, 1, 2], [0], [0]>} : vector<2x8x8xf32>, vector<2x8x32xf32>, vector<2x8x32xf32> -> vector<2x8x32xf32>
    "tpu.trace_stop"() : () -> ()
    %120 = arith.addf %92, %119 : vector<2x8x32xf32>
    %c24_i32_39 = arith.constant 24 : i32
    %121 = vector.broadcast %c24_i32_39 : i32 to vector<1x1x32xi32>
    %122 = arith.cmpi sge, %17, %121 : vector<1x1x32xi32>
    %c32_i32 = arith.constant 32 : i32
    %123 = vector.broadcast %c32_i32 : i32 to vector<1x1x32xi32>
    %124 = arith.cmpi slt, %17, %123 : vector<1x1x32xi32>
    %125 = arith.andi %122, %124 : vector<1x1x32xi1>
    %126 = arith.extui %125 : vector<1x1x32xi1> to vector<1x1x32xi32>
    %127 = arith.sitofp %126 : vector<1x1x32xi32> to vector<1x1x32xf32>
    %128 = vector.broadcast %127 : vector<1x1x32xf32> to vector<2x8x32xf32>
    %129 = arith.mulf %34, %128 : vector<2x8x32xf32>
    "tpu.trace_start"() <{level = 10 : i32, message = "bqd,bkd->bqk"}> : () -> ()
    %cst_40 = arith.constant dense<0.000000e+00> : vector<2x8x8xf32>
    %130 = tpu.matmul %33, %129, %cst_40 {dimension_numbers = #tpu.dot_dimension_numbers<[2], [2], [1], [1], [0, 0, 0, 1, 1, 1], [0], [0]>} : vector<2x8x32xf32>, vector<2x8x32xf32>, vector<2x8x8xf32> -> vector<2x8x8xf32>
    "tpu.trace_stop"() : () -> ()
    %cst_41 = arith.constant 0.353553385 : f32
    %131 = vector.broadcast %cst_41 : f32 to vector<2x8x8xf32>
    %132 = arith.mulf %130, %131 : vector<2x8x8xf32>
    %133 = vector.broadcast %16 : vector<1x8x8xf32> to vector<2x8x8xf32>
    %134 = arith.addf %132, %133 : vector<2x8x8xf32>
    %cst_42 = arith.constant dense<0xFF800000> : vector<2x8xf32>
    %135 = vector.multi_reduction <maximumf>, %134, %cst_42 [2] : vector<2x8x8xf32> to vector<2x8xf32>
    %136 = vector.shape_cast %135 : vector<2x8xf32> to vector<2x8x1xf32>
    %137 = vector.broadcast %136 : vector<2x8x1xf32> to vector<2x8x8xf32>
    %138 = arith.subf %134, %137 : vector<2x8x8xf32>
    %139 = math.exp %138 : vector<2x8x8xf32>
    %cst_43 = arith.constant dense<0.000000e+00> : vector<2x8xf32>
    %140 = vector.multi_reduction <add>, %139, %cst_43 [2] : vector<2x8x8xf32> to vector<2x8xf32>
    %141 = vector.shape_cast %140 : vector<2x8xf32> to vector<2x8x1xf32>
    %142 = tpu.reciprocal %141 {approx = true} : vector<2x8x1xf32> -> vector<2x8x1xf32>
    %143 = vector.broadcast %142 : vector<2x8x1xf32> to vector<2x8x8xf32>
    %144 = arith.mulf %139, %143 : vector<2x8x8xf32>
    %145 = vector.broadcast %127 : vector<1x1x32xf32> to vector<2x8x32xf32>
    %146 = arith.mulf %35, %145 : vector<2x8x32xf32>
    "tpu.trace_start"() <{level = 10 : i32, message = "bqk,bkd->bqd"}> : () -> ()
    %cst_44 = arith.constant dense<0.000000e+00> : vector<2x8x32xf32>
    %147 = tpu.matmul %144, %146, %cst_44 {dimension_numbers = #tpu.dot_dimension_numbers<[2], [1], [1], [2], [0, 0, 0, 1, 1, 2], [0], [0]>} : vector<2x8x8xf32>, vector<2x8x32xf32>, vector<2x8x32xf32> -> vector<2x8x32xf32>
    "tpu.trace_stop"() : () -> ()
    %148 = arith.addf %120, %147 : vector<2x8x32xf32>
    %149 = vector.shape_cast %148 : vector<2x8x32xf32> to vector<16x32xf32>
    %c0_45 = arith.constant 0 : index
    %c0_46 = arith.constant 0 : index
    %150 = vector.load %arg8[%c0_45, %c0_46] : memref<32x32xf32, #tpu.memory_space<vmem>>, vector<32x32xf32>
    %cst_47 = arith.constant dense<0.000000e+00> : vector<16x32xf32>
    %151 = tpu.matmul %149, %150, %cst_47 {dimension_numbers = #tpu.dot_dimension_numbers<[1], [0], [0], [1], [0, 0, 1, 1], [], []>} : vector<16x32xf32>, vector<32x32xf32>, vector<16x32xf32> -> vector<16x32xf32>
    %c0_48 = arith.constant 0 : index
    %c0_49 = arith.constant 0 : index
    %152 = vector.load %arg9[%c0_48, %c0_49] : memref<1x32xf32, #tpu.memory_space<vmem>>, vector<1x32xf32>
    %153 = vector.broadcast %152 : vector<1x32xf32> to vector<16x32xf32>
    %154 = arith.addf %151, %153 : vector<16x32xf32>
    %155 = arith.addf %9, %154 : vector<16x32xf32>
    %c0_50 = arith.constant 0 : index
    %c0_51 = arith.constant 0 : index
    %156 = vector.load %arg10[%c0_50, %c0_51] : memref<1x32xf32, #tpu.memory_space<vmem>>, vector<1x32xf32>
    %c0_52 = arith.constant 0 : index
    %c0_53 = arith.constant 0 : index
    %157 = vector.load %arg11[%c0_52, %c0_53] : memref<1x32xf32, #tpu.memory_space<vmem>>, vector<1x32xf32>
    %cst_54 = arith.constant dense<0.000000e+00> : vector<16xf32>
    %158 = vector.multi_reduction <add>, %155, %cst_54 [1] : vector<16x32xf32> to vector<16xf32>
    %159 = vector.shape_cast %158 : vector<16xf32> to vector<16x1xf32>
    %cst_55 = arith.constant 3.200000e+01 : f32
    %160 = vector.broadcast %cst_55 : f32 to vector<16x1xf32>
    %161 = arith.divf %159, %160 : vector<16x1xf32>
    %162 = vector.broadcast %161 : vector<16x1xf32> to vector<16x32xf32>
    %163 = arith.subf %155, %162 : vector<16x32xf32>
    %164 = arith.mulf %163, %163 : vector<16x32xf32>
    %cst_56 = arith.constant dense<0.000000e+00> : vector<16xf32>
    %165 = vector.multi_reduction <add>, %164, %cst_56 [1] : vector<16x32xf32> to vector<16xf32>
    %166 = vector.shape_cast %165 : vector<16xf32> to vector<16x1xf32>
    %cst_57 = arith.constant 3.200000e+01 : f32
    %167 = vector.broadcast %cst_57 : f32 to vector<16x1xf32>
    %168 = arith.divf %166, %167 : vector<16x1xf32>
    %169 = vector.broadcast %161 : vector<16x1xf32> to vector<16x32xf32>
    %170 = arith.subf %155, %169 : vector<16x32xf32>
    %cst_58 = arith.constant 9.99999974E-6 : f32
    %171 = vector.broadcast %cst_58 : f32 to vector<16x1xf32>
    %172 = arith.addf %168, %171 : vector<16x1xf32>
    %173 = math.rsqrt %172 : vector<16x1xf32>
    %174 = vector.broadcast %173 : vector<16x1xf32> to vector<16x32xf32>
    %175 = arith.mulf %170, %174 : vector<16x32xf32>
    %176 = vector.broadcast %156 : vector<1x32xf32> to vector<16x32xf32>
    %177 = arith.mulf %175, %176 : vector<16x32xf32>
    %178 = vector.broadcast %157 : vector<1x32xf32> to vector<16x32xf32>
    %179 = arith.addf %177, %178 : vector<16x32xf32>
    %c0_59 = arith.constant 0 : index
    %c0_60 = arith.constant 0 : index
    %180 = vector.load %arg14[%c0_59, %c0_60] : memref<32x2048xf32, #tpu.memory_space<vmem>>, vector<32x2048xf32>
    %cst_61 = arith.constant dense<0.000000e+00> : vector<16x2048xf32>
    %181 = tpu.matmul %179, %180, %cst_61 {dimension_numbers = #tpu.dot_dimension_numbers<[1], [0], [0], [1], [0, 0, 1, 1], [], []>} : vector<16x32xf32>, vector<32x2048xf32>, vector<16x2048xf32> -> vector<16x2048xf32>
    %c0_62 = arith.constant 0 : index
    %c0_63 = arith.constant 0 : index
    %182 = vector.load %arg15[%c0_62, %c0_63] : memref<1x2048xf32, #tpu.memory_space<vmem>>, vector<1x2048xf32>
    %183 = vector.broadcast %182 : vector<1x2048xf32> to vector<16x2048xf32>
    %184 = arith.addf %181, %183 : vector<16x2048xf32>
    %cst_64 = arith.constant 0.000000e+00 : f32
    %185 = vector.broadcast %cst_64 : f32 to vector<16x2048xf32>
    %186 = arith.maximumf %184, %185 : vector<16x2048xf32>
    %c0_65 = arith.constant 0 : index
    %c0_66 = arith.constant 0 : index
    %187 = vector.load %arg16[%c0_65, %c0_66] : memref<2048x32xf32, #tpu.memory_space<vmem>>, vector<2048x32xf32>
    %cst_67 = arith.constant dense<0.000000e+00> : vector<16x32xf32>
    %188 = tpu.matmul %186, %187, %cst_67 {dimension_numbers = #tpu.dot_dimension_numbers<[1], [0], [0], [1], [0, 0, 1, 1], [], []>} : vector<16x2048xf32>, vector<2048x32xf32>, vector<16x32xf32> -> vector<16x32xf32>
    %c0_68 = arith.constant 0 : index
    %c0_69 = arith.constant 0 : index
    %189 = vector.load %arg17[%c0_68, %c0_69] : memref<1x32xf32, #tpu.memory_space<vmem>>, vector<1x32xf32>
    %190 = vector.broadcast %189 : vector<1x32xf32> to vector<16x32xf32>
    %191 = arith.addf %188, %190 : vector<16x32xf32>
    %192 = arith.addf %179, %191 : vector<16x32xf32>
    %c0_70 = arith.constant 0 : index
    %c0_71 = arith.constant 0 : index
    %193 = vector.load %arg12[%c0_70, %c0_71] : memref<1x32xf32, #tpu.memory_space<vmem>>, vector<1x32xf32>
    %c0_72 = arith.constant 0 : index
    %c0_73 = arith.constant 0 : index
    %194 = vector.load %arg13[%c0_72, %c0_73] : memref<1x32xf32, #tpu.memory_space<vmem>>, vector<1x32xf32>
    %cst_74 = arith.constant dense<0.000000e+00> : vector<16xf32>
    %195 = vector.multi_reduction <add>, %192, %cst_74 [1] : vector<16x32xf32> to vector<16xf32>
    %196 = vector.shape_cast %195 : vector<16xf32> to vector<16x1xf32>
    %cst_75 = arith.constant 3.200000e+01 : f32
    %197 = vector.broadcast %cst_75 : f32 to vector<16x1xf32>
    %198 = arith.divf %196, %197 : vector<16x1xf32>
    %199 = vector.broadcast %198 : vector<16x1xf32> to vector<16x32xf32>
    %200 = arith.subf %192, %199 : vector<16x32xf32>
    %201 = arith.mulf %200, %200 : vector<16x32xf32>
    %cst_76 = arith.constant dense<0.000000e+00> : vector<16xf32>
    %202 = vector.multi_reduction <add>, %201, %cst_76 [1] : vector<16x32xf32> to vector<16xf32>
    %203 = vector.shape_cast %202 : vector<16xf32> to vector<16x1xf32>
    %cst_77 = arith.constant 3.200000e+01 : f32
    %204 = vector.broadcast %cst_77 : f32 to vector<16x1xf32>
    %205 = arith.divf %203, %204 : vector<16x1xf32>
    %206 = vector.broadcast %198 : vector<16x1xf32> to vector<16x32xf32>
    %207 = arith.subf %192, %206 : vector<16x32xf32>
    %cst_78 = arith.constant 9.99999974E-6 : f32
    %208 = vector.broadcast %cst_78 : f32 to vector<16x1xf32>
    %209 = arith.addf %205, %208 : vector<16x1xf32>
    %210 = math.rsqrt %209 : vector<16x1xf32>
    %211 = vector.broadcast %210 : vector<16x1xf32> to vector<16x32xf32>
    %212 = arith.mulf %207, %211 : vector<16x32xf32>
    %213 = vector.broadcast %193 : vector<1x32xf32> to vector<16x32xf32>
    %214 = arith.mulf %212, %213 : vector<16x32xf32>
    %215 = vector.broadcast %194 : vector<1x32xf32> to vector<16x32xf32>
    %216 = arith.addf %214, %215 : vector<16x32xf32>
    %c0_79 = arith.constant 0 : index
    %c0_80 = arith.constant 0 : index
    %217 = vector.load %arg18[%c0_79, %c0_80] : memref<32x32xf32, #tpu.memory_space<vmem>>, vector<32x32xf32>
    %cst_81 = arith.constant dense<0.000000e+00> : vector<16x32xf32>
    %218 = tpu.matmul %216, %217, %cst_81 {dimension_numbers = #tpu.dot_dimension_numbers<[1], [0], [0], [1], [0, 0, 1, 1], [], []>} : vector<16x32xf32>, vector<32x32xf32>, vector<16x32xf32> -> vector<16x32xf32>
    %c0_82 = arith.constant 0 : index
    %c0_83 = arith.constant 0 : index
    %219 = vector.load %arg19[%c0_82, %c0_83] : memref<1x32xf32, #tpu.memory_space<vmem>>, vector<1x32xf32>
    %220 = vector.broadcast %219 : vector<1x32xf32> to vector<16x32xf32>
    %221 = arith.addf %218, %220 : vector<16x32xf32>
    %c0_84 = arith.constant 0 : index
    %c0_85 = arith.constant 0 : index
    %222 = vector.load %arg20[%c0_84, %c0_85] : memref<32x32xf32, #tpu.memory_space<vmem>>, vector<32x32xf32>
    %cst_86 = arith.constant dense<0.000000e+00> : vector<16x32xf32>
    %223 = tpu.matmul %216, %222, %cst_86 {dimension_numbers = #tpu.dot_dimension_numbers<[1], [0], [0], [1], [0, 0, 1, 1], [], []>} : vector<16x32xf32>, vector<32x32xf32>, vector<16x32xf32> -> vector<16x32xf32>
    %c0_87 = arith.constant 0 : index
    %c0_88 = arith.constant 0 : index
    %224 = vector.load %arg21[%c0_87, %c0_88] : memref<1x32xf32, #tpu.memory_space<vmem>>, vector<1x32xf32>
    %225 = vector.broadcast %224 : vector<1x32xf32> to vector<16x32xf32>
    %226 = arith.addf %223, %225 : vector<16x32xf32>
    %c0_89 = arith.constant 0 : index
    %c0_90 = arith.constant 0 : index
    %227 = vector.load %arg22[%c0_89, %c0_90] : memref<32x32xf32, #tpu.memory_space<vmem>>, vector<32x32xf32>
    %cst_91 = arith.constant dense<0.000000e+00> : vector<16x32xf32>
    %228 = tpu.matmul %216, %227, %cst_91 {dimension_numbers = #tpu.dot_dimension_numbers<[1], [0], [0], [1], [0, 0, 1, 1], [], []>} : vector<16x32xf32>, vector<32x32xf32>, vector<16x32xf32> -> vector<16x32xf32>
    %c0_92 = arith.constant 0 : index
    %c0_93 = arith.constant 0 : index
    %229 = vector.load %arg23[%c0_92, %c0_93] : memref<1x32xf32, #tpu.memory_space<vmem>>, vector<1x32xf32>
    %230 = vector.broadcast %229 : vector<1x32xf32> to vector<16x32xf32>
    %231 = arith.addf %228, %230 : vector<16x32xf32>
    %232 = vector.shape_cast %221 : vector<16x32xf32> to vector<2x8x32xf32>
    %233 = vector.shape_cast %226 : vector<16x32xf32> to vector<2x8x32xf32>
    %234 = vector.shape_cast %231 : vector<16x32xf32> to vector<2x8x32xf32>
    %cst_94 = arith.constant 0.000000e+00 : f32
    %235 = vector.broadcast %cst_94 : f32 to vector<2x8x32xf32>
    %c0_i32_95 = arith.constant 0 : i32
    %236 = vector.broadcast %c0_i32_95 : i32 to vector<1x1x32xi32>
    %237 = arith.cmpi sge, %17, %236 : vector<1x1x32xi32>
    %c8_i32_96 = arith.constant 8 : i32
    %238 = vector.broadcast %c8_i32_96 : i32 to vector<1x1x32xi32>
    %239 = arith.cmpi slt, %17, %238 : vector<1x1x32xi32>
    %240 = arith.andi %237, %239 : vector<1x1x32xi1>
    %241 = arith.extui %240 : vector<1x1x32xi1> to vector<1x1x32xi32>
    %242 = arith.sitofp %241 : vector<1x1x32xi32> to vector<1x1x32xf32>
    %243 = vector.broadcast %242 : vector<1x1x32xf32> to vector<2x8x32xf32>
    %244 = arith.mulf %233, %243 : vector<2x8x32xf32>
    "tpu.trace_start"() <{level = 10 : i32, message = "bqd,bkd->bqk"}> : () -> ()
    %cst_97 = arith.constant dense<0.000000e+00> : vector<2x8x8xf32>
    %245 = tpu.matmul %232, %244, %cst_97 {dimension_numbers = #tpu.dot_dimension_numbers<[2], [2], [1], [1], [0, 0, 0, 1, 1, 1], [0], [0]>} : vector<2x8x32xf32>, vector<2x8x32xf32>, vector<2x8x8xf32> -> vector<2x8x8xf32>
    "tpu.trace_stop"() : () -> ()
    %cst_98 = arith.constant 0.353553385 : f32
    %246 = vector.broadcast %cst_98 : f32 to vector<2x8x8xf32>
    %247 = arith.mulf %245, %246 : vector<2x8x8xf32>
    %248 = vector.broadcast %16 : vector<1x8x8xf32> to vector<2x8x8xf32>
    %249 = arith.addf %247, %248 : vector<2x8x8xf32>
    %cst_99 = arith.constant dense<0xFF800000> : vector<2x8xf32>
    %250 = vector.multi_reduction <maximumf>, %249, %cst_99 [2] : vector<2x8x8xf32> to vector<2x8xf32>
    %251 = vector.shape_cast %250 : vector<2x8xf32> to vector<2x8x1xf32>
    %252 = vector.broadcast %251 : vector<2x8x1xf32> to vector<2x8x8xf32>
    %253 = arith.subf %249, %252 : vector<2x8x8xf32>
    %254 = math.exp %253 : vector<2x8x8xf32>
    %cst_100 = arith.constant dense<0.000000e+00> : vector<2x8xf32>
    %255 = vector.multi_reduction <add>, %254, %cst_100 [2] : vector<2x8x8xf32> to vector<2x8xf32>
    %256 = vector.shape_cast %255 : vector<2x8xf32> to vector<2x8x1xf32>
    %257 = tpu.reciprocal %256 {approx = true} : vector<2x8x1xf32> -> vector<2x8x1xf32>
    %258 = vector.broadcast %257 : vector<2x8x1xf32> to vector<2x8x8xf32>
    %259 = arith.mulf %254, %258 : vector<2x8x8xf32>
    %260 = vector.broadcast %242 : vector<1x1x32xf32> to vector<2x8x32xf32>
    %261 = arith.mulf %234, %260 : vector<2x8x32xf32>
    "tpu.trace_start"() <{level = 10 : i32, message = "bqk,bkd->bqd"}> : () -> ()
    %cst_101 = arith.constant dense<0.000000e+00> : vector<2x8x32xf32>
    %262 = tpu.matmul %259, %261, %cst_101 {dimension_numbers = #tpu.dot_dimension_numbers<[2], [1], [1], [2], [0, 0, 0, 1, 1, 2], [0], [0]>} : vector<2x8x8xf32>, vector<2x8x32xf32>, vector<2x8x32xf32> -> vector<2x8x32xf32>
    "tpu.trace_stop"() : () -> ()
    %263 = arith.addf %235, %262 : vector<2x8x32xf32>
    %c8_i32_102 = arith.constant 8 : i32
    %264 = vector.broadcast %c8_i32_102 : i32 to vector<1x1x32xi32>
    %265 = arith.cmpi sge, %17, %264 : vector<1x1x32xi32>
    %c16_i32_103 = arith.constant 16 : i32
    %266 = vector.broadcast %c16_i32_103 : i32 to vector<1x1x32xi32>
    %267 = arith.cmpi slt, %17, %266 : vector<1x1x32xi32>
    %268 = arith.andi %265, %267 : vector<1x1x32xi1>
    %269 = arith.extui %268 : vector<1x1x32xi1> to vector<1x1x32xi32>
    %270 = arith.sitofp %269 : vector<1x1x32xi32> to vector<1x1x32xf32>
    %271 = vector.broadcast %270 : vector<1x1x32xf32> to vector<2x8x32xf32>
    %272 = arith.mulf %233, %271 : vector<2x8x32xf32>
    "tpu.trace_start"() <{level = 10 : i32, message = "bqd,bkd->bqk"}> : () -> ()
    %cst_104 = arith.constant dense<0.000000e+00> : vector<2x8x8xf32>
    %273 = tpu.matmul %232, %272, %cst_104 {dimension_numbers = #tpu.dot_dimension_numbers<[2], [2], [1], [1], [0, 0, 0, 1, 1, 1], [0], [0]>} : vector<2x8x32xf32>, vector<2x8x32xf32>, vector<2x8x8xf32> -> vector<2x8x8xf32>
    "tpu.trace_stop"() : () -> ()
    %cst_105 = arith.constant 0.353553385 : f32
    %274 = vector.broadcast %cst_105 : f32 to vector<2x8x8xf32>
    %275 = arith.mulf %273, %274 : vector<2x8x8xf32>
    %276 = vector.broadcast %16 : vector<1x8x8xf32> to vector<2x8x8xf32>
    %277 = arith.addf %275, %276 : vector<2x8x8xf32>
    %cst_106 = arith.constant dense<0xFF800000> : vector<2x8xf32>
    %278 = vector.multi_reduction <maximumf>, %277, %cst_106 [2] : vector<2x8x8xf32> to vector<2x8xf32>
    %279 = vector.shape_cast %278 : vector<2x8xf32> to vector<2x8x1xf32>
    %280 = vector.broadcast %279 : vector<2x8x1xf32> to vector<2x8x8xf32>
    %281 = arith.subf %277, %280 : vector<2x8x8xf32>
    %282 = math.exp %281 : vector<2x8x8xf32>
    %cst_107 = arith.constant dense<0.000000e+00> : vector<2x8xf32>
    %283 = vector.multi_reduction <add>, %282, %cst_107 [2] : vector<2x8x8xf32> to vector<2x8xf32>
    %284 = vector.shape_cast %283 : vector<2x8xf32> to vector<2x8x1xf32>
    %285 = tpu.reciprocal %284 {approx = true} : vector<2x8x1xf32> -> vector<2x8x1xf32>
    %286 = vector.broadcast %285 : vector<2x8x1xf32> to vector<2x8x8xf32>
    %287 = arith.mulf %282, %286 : vector<2x8x8xf32>
    %288 = vector.broadcast %270 : vector<1x1x32xf32> to vector<2x8x32xf32>
    %289 = arith.mulf %234, %288 : vector<2x8x32xf32>
    "tpu.trace_start"() <{level = 10 : i32, message = "bqk,bkd->bqd"}> : () -> ()
    %cst_108 = arith.constant dense<0.000000e+00> : vector<2x8x32xf32>
    %290 = tpu.matmul %287, %289, %cst_108 {dimension_numbers = #tpu.dot_dimension_numbers<[2], [1], [1], [2], [0, 0, 0, 1, 1, 2], [0], [0]>} : vector<2x8x8xf32>, vector<2x8x32xf32>, vector<2x8x32xf32> -> vector<2x8x32xf32>
    "tpu.trace_stop"() : () -> ()
    %291 = arith.addf %263, %290 : vector<2x8x32xf32>
    %c16_i32_109 = arith.constant 16 : i32
    %292 = vector.broadcast %c16_i32_109 : i32 to vector<1x1x32xi32>
    %293 = arith.cmpi sge, %17, %292 : vector<1x1x32xi32>
    %c24_i32_110 = arith.constant 24 : i32
    %294 = vector.broadcast %c24_i32_110 : i32 to vector<1x1x32xi32>
    %295 = arith.cmpi slt, %17, %294 : vector<1x1x32xi32>
    %296 = arith.andi %293, %295 : vector<1x1x32xi1>
    %297 = arith.extui %296 : vector<1x1x32xi1> to vector<1x1x32xi32>
    %298 = arith.sitofp %297 : vector<1x1x32xi32> to vector<1x1x32xf32>
    %299 = vector.broadcast %298 : vector<1x1x32xf32> to vector<2x8x32xf32>
    %300 = arith.mulf %233, %299 : vector<2x8x32xf32>
    "tpu.trace_start"() <{level = 10 : i32, message = "bqd,bkd->bqk"}> : () -> ()
    %cst_111 = arith.constant dense<0.000000e+00> : vector<2x8x8xf32>
    %301 = tpu.matmul %232, %300, %cst_111 {dimension_numbers = #tpu.dot_dimension_numbers<[2], [2], [1], [1], [0, 0, 0, 1, 1, 1], [0], [0]>} : vector<2x8x32xf32>, vector<2x8x32xf32>, vector<2x8x8xf32> -> vector<2x8x8xf32>
    "tpu.trace_stop"() : () -> ()
    %cst_112 = arith.constant 0.353553385 : f32
    %302 = vector.broadcast %cst_112 : f32 to vector<2x8x8xf32>
    %303 = arith.mulf %301, %302 : vector<2x8x8xf32>
    %304 = vector.broadcast %16 : vector<1x8x8xf32> to vector<2x8x8xf32>
    %305 = arith.addf %303, %304 : vector<2x8x8xf32>
    %cst_113 = arith.constant dense<0xFF800000> : vector<2x8xf32>
    %306 = vector.multi_reduction <maximumf>, %305, %cst_113 [2] : vector<2x8x8xf32> to vector<2x8xf32>
    %307 = vector.shape_cast %306 : vector<2x8xf32> to vector<2x8x1xf32>
    %308 = vector.broadcast %307 : vector<2x8x1xf32> to vector<2x8x8xf32>
    %309 = arith.subf %305, %308 : vector<2x8x8xf32>
    %310 = math.exp %309 : vector<2x8x8xf32>
    %cst_114 = arith.constant dense<0.000000e+00> : vector<2x8xf32>
    %311 = vector.multi_reduction <add>, %310, %cst_114 [2] : vector<2x8x8xf32> to vector<2x8xf32>
    %312 = vector.shape_cast %311 : vector<2x8xf32> to vector<2x8x1xf32>
    %313 = tpu.reciprocal %312 {approx = true} : vector<2x8x1xf32> -> vector<2x8x1xf32>
    %314 = vector.broadcast %313 : vector<2x8x1xf32> to vector<2x8x8xf32>
    %315 = arith.mulf %310, %314 : vector<2x8x8xf32>
    %316 = vector.broadcast %298 : vector<1x1x32xf32> to vector<2x8x32xf32>
    %317 = arith.mulf %234, %316 : vector<2x8x32xf32>
    "tpu.trace_start"() <{level = 10 : i32, message = "bqk,bkd->bqd"}> : () -> ()
    %cst_115 = arith.constant dense<0.000000e+00> : vector<2x8x32xf32>
    %318 = tpu.matmul %315, %317, %cst_115 {dimension_numbers = #tpu.dot_dimension_numbers<[2], [1], [1], [2], [0, 0, 0, 1, 1, 2], [0], [0]>} : vector<2x8x8xf32>, vector<2x8x32xf32>, vector<2x8x32xf32> -> vector<2x8x32xf32>
    "tpu.trace_stop"() : () -> ()
    %319 = arith.addf %291, %318 : vector<2x8x32xf32>
    %c24_i32_116 = arith.constant 24 : i32
    %320 = vector.broadcast %c24_i32_116 : i32 to vector<1x1x32xi32>
    %321 = arith.cmpi sge, %17, %320 : vector<1x1x32xi32>
    %c32_i32_117 = arith.constant 32 : i32
    %322 = vector.broadcast %c32_i32_117 : i32 to vector<1x1x32xi32>
    %323 = arith.cmpi slt, %17, %322 : vector<1x1x32xi32>
    %324 = arith.andi %321, %323 : vector<1x1x32xi1>
    %325 = arith.extui %324 : vector<1x1x32xi1> to vector<1x1x32xi32>
    %326 = arith.sitofp %325 : vector<1x1x32xi32> to vector<1x1x32xf32>
    %327 = vector.broadcast %326 : vector<1x1x32xf32> to vector<2x8x32xf32>
    %328 = arith.mulf %233, %327 : vector<2x8x32xf32>
    "tpu.trace_start"() <{level = 10 : i32, message = "bqd,bkd->bqk"}> : () -> ()
    %cst_118 = arith.constant dense<0.000000e+00> : vector<2x8x8xf32>
    %329 = tpu.matmul %232, %328, %cst_118 {dimension_numbers = #tpu.dot_dimension_numbers<[2], [2], [1], [1], [0, 0, 0, 1, 1, 1], [0], [0]>} : vector<2x8x32xf32>, vector<2x8x32xf32>, vector<2x8x8xf32> -> vector<2x8x8xf32>
    "tpu.trace_stop"() : () -> ()
    %cst_119 = arith.constant 0.353553385 : f32
    %330 = vector.broadcast %cst_119 : f32 to vector<2x8x8xf32>
    %331 = arith.mulf %329, %330 : vector<2x8x8xf32>
    %332 = vector.broadcast %16 : vector<1x8x8xf32> to vector<2x8x8xf32>
    %333 = arith.addf %331, %332 : vector<2x8x8xf32>
    %cst_120 = arith.constant dense<0xFF800000> : vector<2x8xf32>
    %334 = vector.multi_reduction <maximumf>, %333, %cst_120 [2] : vector<2x8x8xf32> to vector<2x8xf32>
    %335 = vector.shape_cast %334 : vector<2x8xf32> to vector<2x8x1xf32>
    %336 = vector.broadcast %335 : vector<2x8x1xf32> to vector<2x8x8xf32>
    %337 = arith.subf %333, %336 : vector<2x8x8xf32>
    %338 = math.exp %337 : vector<2x8x8xf32>
    %cst_121 = arith.constant dense<0.000000e+00> : vector<2x8xf32>
    %339 = vector.multi_reduction <add>, %338, %cst_121 [2] : vector<2x8x8xf32> to vector<2x8xf32>
    %340 = vector.shape_cast %339 : vector<2x8xf32> to vector<2x8x1xf32>
    %341 = tpu.reciprocal %340 {approx = true} : vector<2x8x1xf32> -> vector<2x8x1xf32>
    %342 = vector.broadcast %341 : vector<2x8x1xf32> to vector<2x8x8xf32>
    %343 = arith.mulf %338, %342 : vector<2x8x8xf32>
    %344 = vector.broadcast %326 : vector<1x1x32xf32> to vector<2x8x32xf32>
    %345 = arith.mulf %234, %344 : vector<2x8x32xf32>
    "tpu.trace_start"() <{level = 10 : i32, message = "bqk,bkd->bqd"}> : () -> ()
    %cst_122 = arith.constant dense<0.000000e+00> : vector<2x8x32xf32>
    %346 = tpu.matmul %343, %345, %cst_122 {dimension_numbers = #tpu.dot_dimension_numbers<[2], [1], [1], [2], [0, 0, 0, 1, 1, 2], [0], [0]>} : vector<2x8x8xf32>, vector<2x8x32xf32>, vector<2x8x32xf32> -> vector<2x8x32xf32>
    "tpu.trace_stop"() : () -> ()
    %347 = arith.addf %319, %346 : vector<2x8x32xf32>
    %348 = vector.shape_cast %347 : vector<2x8x32xf32> to vector<16x32xf32>
    %c0_123 = arith.constant 0 : index
    %c0_124 = arith.constant 0 : index
    %349 = vector.load %arg24[%c0_123, %c0_124] : memref<32x32xf32, #tpu.memory_space<vmem>>, vector<32x32xf32>
    %cst_125 = arith.constant dense<0.000000e+00> : vector<16x32xf32>
    %350 = tpu.matmul %348, %349, %cst_125 {dimension_numbers = #tpu.dot_dimension_numbers<[1], [0], [0], [1], [0, 0, 1, 1], [], []>} : vector<16x32xf32>, vector<32x32xf32>, vector<16x32xf32> -> vector<16x32xf32>
    %c0_126 = arith.constant 0 : index
    %c0_127 = arith.constant 0 : index
    %351 = vector.load %arg25[%c0_126, %c0_127] : memref<1x32xf32, #tpu.memory_space<vmem>>, vector<1x32xf32>
    %352 = vector.broadcast %351 : vector<1x32xf32> to vector<16x32xf32>
    %353 = arith.addf %350, %352 : vector<16x32xf32>
    %354 = arith.addf %216, %353 : vector<16x32xf32>
    %c0_128 = arith.constant 0 : index
    %c0_129 = arith.constant 0 : index
    %355 = vector.load %arg26[%c0_128, %c0_129] : memref<1x32xf32, #tpu.memory_space<vmem>>, vector<1x32xf32>
    %c0_130 = arith.constant 0 : index
    %c0_131 = arith.constant 0 : index
    %356 = vector.load %arg27[%c0_130, %c0_131] : memref<1x32xf32, #tpu.memory_space<vmem>>, vector<1x32xf32>
    %cst_132 = arith.constant dense<0.000000e+00> : vector<16xf32>
    %357 = vector.multi_reduction <add>, %354, %cst_132 [1] : vector<16x32xf32> to vector<16xf32>
    %358 = vector.shape_cast %357 : vector<16xf32> to vector<16x1xf32>
    %cst_133 = arith.constant 3.200000e+01 : f32
    %359 = vector.broadcast %cst_133 : f32 to vector<16x1xf32>
    %360 = arith.divf %358, %359 : vector<16x1xf32>
    %361 = vector.broadcast %360 : vector<16x1xf32> to vector<16x32xf32>
    %362 = arith.subf %354, %361 : vector<16x32xf32>
    %363 = arith.mulf %362, %362 : vector<16x32xf32>
    %cst_134 = arith.constant dense<0.000000e+00> : vector<16xf32>
    %364 = vector.multi_reduction <add>, %363, %cst_134 [1] : vector<16x32xf32> to vector<16xf32>
    %365 = vector.shape_cast %364 : vector<16xf32> to vector<16x1xf32>
    %cst_135 = arith.constant 3.200000e+01 : f32
    %366 = vector.broadcast %cst_135 : f32 to vector<16x1xf32>
    %367 = arith.divf %365, %366 : vector<16x1xf32>
    %368 = vector.broadcast %360 : vector<16x1xf32> to vector<16x32xf32>
    %369 = arith.subf %354, %368 : vector<16x32xf32>
    %cst_136 = arith.constant 9.99999974E-6 : f32
    %370 = vector.broadcast %cst_136 : f32 to vector<16x1xf32>
    %371 = arith.addf %367, %370 : vector<16x1xf32>
    %372 = math.rsqrt %371 : vector<16x1xf32>
    %373 = vector.broadcast %372 : vector<16x1xf32> to vector<16x32xf32>
    %374 = arith.mulf %369, %373 : vector<16x32xf32>
    %375 = vector.broadcast %355 : vector<1x32xf32> to vector<16x32xf32>
    %376 = arith.mulf %374, %375 : vector<16x32xf32>
    %377 = vector.broadcast %356 : vector<1x32xf32> to vector<16x32xf32>
    %378 = arith.addf %376, %377 : vector<16x32xf32>
    %c0_137 = arith.constant 0 : index
    %c0_138 = arith.constant 0 : index
    %379 = vector.load %arg30[%c0_137, %c0_138] : memref<32x2048xf32, #tpu.memory_space<vmem>>, vector<32x2048xf32>
    %cst_139 = arith.constant dense<0.000000e+00> : vector<16x2048xf32>
    %380 = tpu.matmul %378, %379, %cst_139 {dimension_numbers = #tpu.dot_dimension_numbers<[1], [0], [0], [1], [0, 0, 1, 1], [], []>} : vector<16x32xf32>, vector<32x2048xf32>, vector<16x2048xf32> -> vector<16x2048xf32>
    %c0_140 = arith.constant 0 : index
    %c0_141 = arith.constant 0 : index
    %381 = vector.load %arg31[%c0_140, %c0_141] : memref<1x2048xf32, #tpu.memory_space<vmem>>, vector<1x2048xf32>
    %382 = vector.broadcast %381 : vector<1x2048xf32> to vector<16x2048xf32>
    %383 = arith.addf %380, %382 : vector<16x2048xf32>
    %cst_142 = arith.constant 0.000000e+00 : f32
    %384 = vector.broadcast %cst_142 : f32 to vector<16x2048xf32>
    %385 = arith.maximumf %383, %384 : vector<16x2048xf32>
    %c0_143 = arith.constant 0 : index
    %c0_144 = arith.constant 0 : index
    %386 = vector.load %arg32[%c0_143, %c0_144] : memref<2048x32xf32, #tpu.memory_space<vmem>>, vector<2048x32xf32>
    %cst_145 = arith.constant dense<0.000000e+00> : vector<16x32xf32>
    %387 = tpu.matmul %385, %386, %cst_145 {dimension_numbers = #tpu.dot_dimension_numbers<[1], [0], [0], [1], [0, 0, 1, 1], [], []>} : vector<16x2048xf32>, vector<2048x32xf32>, vector<16x32xf32> -> vector<16x32xf32>
    %c0_146 = arith.constant 0 : index
    %c0_147 = arith.constant 0 : index
    %388 = vector.load %arg33[%c0_146, %c0_147] : memref<1x32xf32, #tpu.memory_space<vmem>>, vector<1x32xf32>
    %389 = vector.broadcast %388 : vector<1x32xf32> to vector<16x32xf32>
    %390 = arith.addf %387, %389 : vector<16x32xf32>
    %391 = arith.addf %378, %390 : vector<16x32xf32>
    %c0_148 = arith.constant 0 : index
    %c0_149 = arith.constant 0 : index
    %392 = vector.load %arg28[%c0_148, %c0_149] : memref<1x32xf32, #tpu.memory_space<vmem>>, vector<1x32xf32>
    %c0_150 = arith.constant 0 : index
    %c0_151 = arith.constant 0 : index
    %393 = vector.load %arg29[%c0_150, %c0_151] : memref<1x32xf32, #tpu.memory_space<vmem>>, vector<1x32xf32>
    %cst_152 = arith.constant dense<0.000000e+00> : vector<16xf32>
    %394 = vector.multi_reduction <add>, %391, %cst_152 [1] : vector<16x32xf32> to vector<16xf32>
    %395 = vector.shape_cast %394 : vector<16xf32> to vector<16x1xf32>
    %cst_153 = arith.constant 3.200000e+01 : f32
    %396 = vector.broadcast %cst_153 : f32 to vector<16x1xf32>
    %397 = arith.divf %395, %396 : vector<16x1xf32>
    %398 = vector.broadcast %397 : vector<16x1xf32> to vector<16x32xf32>
    %399 = arith.subf %391, %398 : vector<16x32xf32>
    %400 = arith.mulf %399, %399 : vector<16x32xf32>
    %cst_154 = arith.constant dense<0.000000e+00> : vector<16xf32>
    %401 = vector.multi_reduction <add>, %400, %cst_154 [1] : vector<16x32xf32> to vector<16xf32>
    %402 = vector.shape_cast %401 : vector<16xf32> to vector<16x1xf32>
    %cst_155 = arith.constant 3.200000e+01 : f32
    %403 = vector.broadcast %cst_155 : f32 to vector<16x1xf32>
    %404 = arith.divf %402, %403 : vector<16x1xf32>
    %405 = vector.broadcast %397 : vector<16x1xf32> to vector<16x32xf32>
    %406 = arith.subf %391, %405 : vector<16x32xf32>
    %cst_156 = arith.constant 9.99999974E-6 : f32
    %407 = vector.broadcast %cst_156 : f32 to vector<16x1xf32>
    %408 = arith.addf %404, %407 : vector<16x1xf32>
    %409 = math.rsqrt %408 : vector<16x1xf32>
    %410 = vector.broadcast %409 : vector<16x1xf32> to vector<16x32xf32>
    %411 = arith.mulf %406, %410 : vector<16x32xf32>
    %412 = vector.broadcast %392 : vector<1x32xf32> to vector<16x32xf32>
    %413 = arith.mulf %411, %412 : vector<16x32xf32>
    %414 = vector.broadcast %393 : vector<1x32xf32> to vector<16x32xf32>
    %415 = arith.addf %413, %414 : vector<16x32xf32>
    %c0_157 = arith.constant 0 : index
    %c0_158 = arith.constant 0 : index
    %416 = vector.load %arg34[%c0_157, %c0_158] : memref<32x128xf32, #tpu.memory_space<vmem>>, vector<32x128xf32>
    %cst_159 = arith.constant dense<0.000000e+00> : vector<16x128xf32>
    %417 = tpu.matmul %415, %416, %cst_159 {dimension_numbers = #tpu.dot_dimension_numbers<[1], [0], [0], [1], [0, 0, 1, 1], [], []>} : vector<16x32xf32>, vector<32x128xf32>, vector<16x128xf32> -> vector<16x128xf32>
    %c0_160 = arith.constant 0 : index
    %c0_161 = arith.constant 0 : index
    %418 = vector.load %arg35[%c0_160, %c0_161] : memref<1x128xf32, #tpu.memory_space<vmem>>, vector<1x128xf32>
    %419 = vector.broadcast %418 : vector<1x128xf32> to vector<16x128xf32>
    %420 = arith.addf %417, %419 : vector<16x128xf32>
    %c0_162 = arith.constant 0 : index
    %c0_163 = arith.constant 0 : index
    %421 = vector.load %arg36[%c0_162, %c0_163] : memref<16x128xf32, #tpu.memory_space<vmem>>, vector<16x128xf32>
    tpu.vector_store %arg36[%c0_162, %c0_163], %420 {strides = array<i32>} : memref<16x128xf32, #tpu.memory_space<vmem>>, vector<16x128xf32>,
    return
  }
}

</mosaic_0001>

<llo_original>
// kernel: transformer_only_forward.1
$region0: #{transformer_only_forward.1}
  #allocation0 [shape = 'u32[]', space=smem, size = 0x4, offset = 0x4, fixed_abs, tag = 'smem constant byte address 0x4 - core index']
  #allocation1 [shape = 'u32[144,128]{1,0:T(1,128)}', space=vmem, size = 0x12000, scoped, tag = 'internal scratch']
  %s0 = inlined_call_operand.smem [shape: u32[37], index: -1, kind: input, shape index: {}]
  %s1 = sld [smem:[%s0]]
  %s2 = scalar_lea.smem %s0, 1
  %s3 = sld [smem:[%s2]]
  %s4 = scalar_lea.smem %s0, 2
  %s5 = sld [smem:[%s4]]
  %s6 = scalar_lea.smem %s0, 3
  %s7 = sld [smem:[%s6]]
  %s8 = scalar_lea.smem %s0, 4
  %s9 = sld [smem:[%s8]]
  %s10 = scalar_lea.smem %s0, 5
  %s11 = sld [smem:[%s10]]
  %s12 = scalar_lea.smem %s0, 6
  %s13 = sld [smem:[%s12]]
  %s14 = scalar_lea.smem %s0, 7
  %s15 = sld [smem:[%s14]]
  %s16 = scalar_lea.smem %s0, 8
  %s17 = sld [smem:[%s16]]
  %s18 = scalar_lea.smem %s0, 9
  %s19 = sld [smem:[%s18]]
  %s20 = scalar_lea.smem %s0, 10
  %s21 = sld [smem:[%s20]]
  %s22 = scalar_lea.smem %s0, 11
  %s23 = sld [smem:[%s22]]
  %s24 = scalar_lea.smem %s0, 12
  %s25 = sld [smem:[%s24]]
  %s26 = scalar_lea.smem %s0, 13
  %s27 = sld [smem:[%s26]]
  %s28 = scalar_lea.smem %s0, 14
  %s29 = sld [smem:[%s28]]
  %s30 = scalar_lea.smem %s0, 15
  %s31 = sld [smem:[%s30]]
  %s32 = scalar_lea.smem %s0, 16
  %s33 = sld [smem:[%s32]]
  %s34 = scalar_lea.smem %s0, 17
  %s35 = sld [smem:[%s34]]
  %s36 = scalar_lea.smem %s0, 18
  %s37 = sld [smem:[%s36]]
  %s38 = scalar_lea.smem %s0, 19
  %s39 = sld [smem:[%s38]]
  %s40 = scalar_lea.smem %s0, 20
  %s41 = sld [smem:[%s40]]
  %s42 = scalar_lea.smem %s0, 21
  %s43 = sld [smem:[%s42]]
  %s44 = scalar_lea.smem %s0, 22
  %s45 = sld [smem:[%s44]]
  %s46 = scalar_lea.smem %s0, 23
  %s47 = sld [smem:[%s46]]
  %s48 = scalar_lea.smem %s0, 24
  %s49 = sld [smem:[%s48]]
  %s50 = scalar_lea.smem %s0, 25
  %s51 = sld [smem:[%s50]]
  %s52 = scalar_lea.smem %s0, 26
  %s53 = sld [smem:[%s52]]
  %s54 = scalar_lea.smem %s0, 27
  %s55 = sld [smem:[%s54]]
  %s56 = scalar_lea.smem %s0, 28
  %s57 = sld [smem:[%s56]]
  %s58 = scalar_lea.smem %s0, 29
  %s59 = sld [smem:[%s58]]
  %s60 = scalar_lea.smem %s0, 30
  %s61 = sld [smem:[%s60]]
  %s62 = scalar_lea.smem %s0, 31
  %s63 = sld [smem:[%s62]]
  %s64 = scalar_lea.smem %s0, 32
  %s65 = sld [smem:[%s64]]
  %s66 = scalar_lea.smem %s0, 33
  %s67 = sld [smem:[%s66]]
  %s68 = scalar_lea.smem %s0, 34
  %s69 = sld [smem:[%s68]]
  %s70 = scalar_lea.smem %s0, 35
  %s71 = sld [smem:[%s70]]
  %s72 = scalar_lea.smem %s0, 36
  %s73 = sld [smem:[%s72]]
  %s74 = sld [smem:[#allocation0]]
  $region154: #{transformer_only_forward.1} parent=0
    _
  %s76 = ssub.s32 1, %s74
  %s77 = scalar_select 0, %s76, %s74
  // Predicated region
  $region2: #{transformer_only_forward.1} parent=0 // pred_check
    _
  $region3: #{transformer_only_forward.1} parent=0 // pred_check_branch
    %79 = sbr.rel (0) target = $region5
  $region4: #{transformer_only_forward.1} parent=0 // pred_region
    _
  $region5: #{transformer_only_forward.1} parent=0 // pred_fallthru
    _
  // Predicated region
  $region6: #{transformer_only_forward.1} parent=0 // pred_check
    _
  $region7: #{transformer_only_forward.1} parent=0 // pred_check_branch
    %81 = sbr.rel (0) target = $region9
  $region8: #{transformer_only_forward.1} parent=0 // pred_region
    _
  $region9: #{transformer_only_forward.1} parent=0 // pred_fallthru
    _
  // Predicated region
  $region10: #{transformer_only_forward.1} parent=0 // pred_check
    _
  $region11: #{transformer_only_forward.1} parent=0 // pred_check_branch
    %83 = sbr.rel (0) target = $region13
  $region12: #{transformer_only_forward.1} parent=0 // pred_region
    _
  $region13: #{transformer_only_forward.1} parent=0 // pred_fallthru
    _
  // Predicated region
  $region14: #{transformer_only_forward.1} parent=0 // pred_check
    _
  $region15: #{transformer_only_forward.1} parent=0 // pred_check_branch
    %85 = sbr.rel (0) target = $region17
  $region16: #{transformer_only_forward.1} parent=0 // pred_region
    _
  $region17: #{transformer_only_forward.1} parent=0 // pred_fallthru
    _
  // Predicated region
  $region18: #{transformer_only_forward.1} parent=0 // pred_check
    _
  $region19: #{transformer_only_forward.1} parent=0 // pred_check_branch
    %87 = sbr.rel (0) target = $region21
  $region20: #{transformer_only_forward.1} parent=0 // pred_region
    _
  $region21: #{transformer_only_forward.1} parent=0 // pred_fallthru
    _
  // Predicated region
  $region22: #{transformer_only_forward.1} parent=0 // pred_check
    _
  $region23: #{transformer_only_forward.1} parent=0 // pred_check_branch
    %89 = sbr.rel (0) target = $region25
  $region24: #{transformer_only_forward.1} parent=0 // pred_region
    _
  $region25: #{transformer_only_forward.1} parent=0 // pred_fallthru
    _
  // Predicated region
  $region26: #{transformer_only_forward.1} parent=0 // pred_check
    _
  $region27: #{transformer_only_forward.1} parent=0 // pred_check_branch
    %91 = sbr.rel (0) target = $region29
  $region28: #{transformer_only_forward.1} parent=0 // pred_region
    _
  $region29: #{transformer_only_forward.1} parent=0 // pred_fallthru
    _
  // Predicated region
  $region30: #{transformer_only_forward.1} parent=0 // pred_check
    _
  $region31: #{transformer_only_forward.1} parent=0 // pred_check_branch
    %93 = sbr.rel (0) target = $region33
  $region32: #{transformer_only_forward.1} parent=0 // pred_region
    _
  $region33: #{transformer_only_forward.1} parent=0 // pred_fallthru
    _
  // Predicated region
  $region34: #{transformer_only_forward.1} parent=0 // pred_check
    _
  $region35: #{transformer_only_forward.1} parent=0 // pred_check_branch
    %95 = sbr.rel (0) target = $region37
  $region36: #{transformer_only_forward.1} parent=0 // pred_region
    _
  $region37: #{transformer_only_forward.1} parent=0 // pred_fallthru
    _
  // Predicated region
  $region38: #{transformer_only_forward.1} parent=0 // pred_check
    _
  $region39: #{transformer_only_forward.1} parent=0 // pred_check_branch
    %97 = sbr.rel (0) target = $region41
  $region40: #{transformer_only_forward.1} parent=0 // pred_region
    _
  $region41: #{transformer_only_forward.1} parent=0 // pred_fallthru
    _
  // Predicated region
  $region42: #{transformer_only_forward.1} parent=0 // pred_check
    _
  $region43: #{transformer_only_forward.1} parent=0 // pred_check_branch
    %99 = sbr.rel (0) target = $region45
  $region44: #{transformer_only_forward.1} parent=0 // pred_region
    _
  $region45: #{transformer_only_forward.1} parent=0 // pred_fallthru
    _
  // Predicated region
  $region46: #{transformer_only_forward.1} parent=0 // pred_check
    _
  $region47: #{transformer_only_forward.1} parent=0 // pred_check_branch
    %101 = sbr.rel (0) target = $region49
  $region48: #{transformer_only_forward.1} parent=0 // pred_region
    _
  $region49: #{transformer_only_forward.1} parent=0 // pred_fallthru
    _
  // Predicated region
  $region50: #{transformer_only_forward.1} parent=0 // pred_check
    _
  $region51: #{transformer_only_forward.1} parent=0 // pred_check_branch
    %103 = sbr.rel (0) target = $region53
  $region52: #{transformer_only_forward.1} parent=0 // pred_region
    _
  $region53: #{transformer_only_forward.1} parent=0 // pred_fallthru
    _
  // Predicated region
  $region54: #{transformer_only_forward.1} parent=0 // pred_check
    _
  $region55: #{transformer_only_forward.1} parent=0 // pred_check_branch
    %105 = sbr.rel (0) target = $region57
  $region56: #{transformer_only_forward.1} parent=0 // pred_region
    _
  $region57: #{transformer_only_forward.1} parent=0 // pred_fallthru
    _
  // Predicated region
  $region58: #{transformer_only_forward.1} parent=0 // pred_check
    _
  $region59: #{transformer_only_forward.1} parent=0 // pred_check_branch
    %107 = sbr.rel (0) target = $region61
  $region60: #{transformer_only_forward.1} parent=0 // pred_region
    _
  $region61: #{transformer_only_forward.1} parent=0 // pred_fallthru
    _
  // Predicated region
  $region62: #{transformer_only_forward.1} parent=0 // pred_check
    _
  $region63: #{transformer_only_forward.1} parent=0 // pred_check_branch
    %109 = sbr.rel (0) target = $region65
  $region64: #{transformer_only_forward.1} parent=0 // pred_region
    _
  $region65: #{transformer_only_forward.1} parent=0 // pred_fallthru
    _
  // Predicated region
  $region66: #{transformer_only_forward.1} parent=0 // pred_check
    _
  $region67: #{transformer_only_forward.1} parent=0 // pred_check_branch
    %111 = sbr.rel (0) target = $region69
  $region68: #{transformer_only_forward.1} parent=0 // pred_region
    _
  $region69: #{transformer_only_forward.1} parent=0 // pred_fallthru
    _
  // Predicated region
  $region70: #{transformer_only_forward.1} parent=0 // pred_check
    _
  $region71: #{transformer_only_forward.1} parent=0 // pred_check_branch
    %113 = sbr.rel (0) target = $region73
  $region72: #{transformer_only_forward.1} parent=0 // pred_region
    _
  $region73: #{transformer_only_forward.1} parent=0 // pred_fallthru
    _
  // Predicated region
  $region74: #{transformer_only_forward.1} parent=0 // pred_check
    _
  $region75: #{transformer_only_forward.1} parent=0 // pred_check_branch
    %115 = sbr.rel (0) target = $region77
  $region76: #{transformer_only_forward.1} parent=0 // pred_region
    _
  $region77: #{transformer_only_forward.1} parent=0 // pred_fallthru
    _
  // Predicated region
  $region78: #{transformer_only_forward.1} parent=0 // pred_check
    _
  $region79: #{transformer_only_forward.1} parent=0 // pred_check_branch
    %117 = sbr.rel (0) target = $region81
  $region80: #{transformer_only_forward.1} parent=0 // pred_region
    _
  $region81: #{transformer_only_forward.1} parent=0 // pred_fallthru
    _
  // Predicated region
  $region82: #{transformer_only_forward.1} parent=0 // pred_check
    _
  $region83: #{transformer_only_forward.1} parent=0 // pred_check_branch
    %119 = sbr.rel (0) target = $region85
  $region84: #{transformer_only_forward.1} parent=0 // pred_region
    _
  $region85: #{transformer_only_forward.1} parent=0 // pred_fallthru
    _
  // Predicated region
  $region86: #{transformer_only_forward.1} parent=0 // pred_check
    _
  $region87: #{transformer_only_forward.1} parent=0 // pred_check_branch
    %121 = sbr.rel (0) target = $region89
  $region88: #{transformer_only_forward.1} parent=0 // pred_region
    _
  $region89: #{transformer_only_forward.1} parent=0 // pred_fallthru
    _
  // Predicated region
  $region90: #{transformer_only_forward.1} parent=0 // pred_check
    _
  $region91: #{transformer_only_forward.1} parent=0 // pred_check_branch
    %123 = sbr.rel (0) target = $region93
  $region92: #{transformer_only_forward.1} parent=0 // pred_region
    _
  $region93: #{transformer_only_forward.1} parent=0 // pred_fallthru
    _
  // Predicated region
  $region94: #{transformer_only_forward.1} parent=0 // pred_check
    _
  $region95: #{transformer_only_forward.1} parent=0 // pred_check_branch
    %125 = sbr.rel (0) target = $region97
  $region96: #{transformer_only_forward.1} parent=0 // pred_region
    _
  $region97: #{transformer_only_forward.1} parent=0 // pred_fallthru
    _
  // Predicated region
  $region98: #{transformer_only_forward.1} parent=0 // pred_check
    _
  $region99: #{transformer_only_forward.1} parent=0 // pred_check_branch
    %127 = sbr.rel (0) target = $region101
  $region100: #{transformer_only_forward.1} parent=0 // pred_region
    _
  $region101: #{transformer_only_forward.1} parent=0 // pred_fallthru
    _
  // Predicated region
  $region102: #{transformer_only_forward.1} parent=0 // pred_check
    _
  $region103: #{transformer_only_forward.1} parent=0 // pred_check_branch
    %129 = sbr.rel (0) target = $region105
  $region104: #{transformer_only_forward.1} parent=0 // pred_region
    _
  $region105: #{transformer_only_forward.1} parent=0 // pred_fallthru
    _
  // Predicated region
  $region106: #{transformer_only_forward.1} parent=0 // pred_check
    _
  $region107: #{transformer_only_forward.1} parent=0 // pred_check_branch
    %131 = sbr.rel (0) target = $region109
  $region108: #{transformer_only_forward.1} parent=0 // pred_region
    _
  $region109: #{transformer_only_forward.1} parent=0 // pred_fallthru
    _
  // Predicated region
  $region110: #{transformer_only_forward.1} parent=0 // pred_check
    _
  $region111: #{transformer_only_forward.1} parent=0 // pred_check_branch
    %133 = sbr.rel (0) target = $region113
  $region112: #{transformer_only_forward.1} parent=0 // pred_region
    _
  $region113: #{transformer_only_forward.1} parent=0 // pred_fallthru
    _
  // Predicated region
  $region114: #{transformer_only_forward.1} parent=0 // pred_check
    _
  $region115: #{transformer_only_forward.1} parent=0 // pred_check_branch
    %135 = sbr.rel (0) target = $region117
  $region116: #{transformer_only_forward.1} parent=0 // pred_region
    _
  $region117: #{transformer_only_forward.1} parent=0 // pred_fallthru
    _
  // Predicated region
  $region118: #{transformer_only_forward.1} parent=0 // pred_check
    _
  $region119: #{transformer_only_forward.1} parent=0 // pred_check_branch
    %137 = sbr.rel (0) target = $region121
  $region120: #{transformer_only_forward.1} parent=0 // pred_region
    _
  $region121: #{transformer_only_forward.1} parent=0 // pred_fallthru
    _
  // Predicated region
  $region122: #{transformer_only_forward.1} parent=0 // pred_check
    _
  $region123: #{transformer_only_forward.1} parent=0 // pred_check_branch
    %139 = sbr.rel (0) target = $region125
  $region124: #{transformer_only_forward.1} parent=0 // pred_region
    _
  $region125: #{transformer_only_forward.1} parent=0 // pred_fallthru
    _
  // Predicated region
  $region126: #{transformer_only_forward.1} parent=0 // pred_check
    _
  $region127: #{transformer_only_forward.1} parent=0 // pred_check_branch
    %141 = sbr.rel (0) target = $region129
  $region128: #{transformer_only_forward.1} parent=0 // pred_region
    _
  $region129: #{transformer_only_forward.1} parent=0 // pred_fallthru
    _
  // Predicated region
  $region130: #{transformer_only_forward.1} parent=0 // pred_check
    _
  $region131: #{transformer_only_forward.1} parent=0 // pred_check_branch
    %143 = sbr.rel (0) target = $region133
  $region132: #{transformer_only_forward.1} parent=0 // pred_region
    _
  $region133: #{transformer_only_forward.1} parent=0 // pred_fallthru
    _
  // Predicated region
  $region134: #{transformer_only_forward.1} parent=0 // pred_check
    _
  $region135: #{transformer_only_forward.1} parent=0 // pred_check_branch
    %145 = sbr.rel (0) target = $region137
  $region136: #{transformer_only_forward.1} parent=0 // pred_region
    _
  $region137: #{transformer_only_forward.1} parent=0 // pred_fallthru
    _
  // Predicated region
  $region138: #{transformer_only_forward.1} parent=0 // pred_check
    _
  $region139: #{transformer_only_forward.1} parent=0 // pred_check_branch
    %147 = sbr.rel (0) target = $region141
  $region140: #{transformer_only_forward.1} parent=0 // pred_region
    _
  $region141: #{transformer_only_forward.1} parent=0 // pred_fallthru
    _
  // Predicated region
  $region142: #{transformer_only_forward.1} parent=0 // pred_check
    _
  $region143: #{transformer_only_forward.1} parent=0 // pred_check_branch
    %149 = sbr.rel (0) target = $region145
  $region144: #{transformer_only_forward.1} parent=0 // pred_region
    _
  $region145: #{transformer_only_forward.1} parent=0 // pred_fallthru
    _
  %v150 = vld [vmem:[%s1] sm:$0xff]
  %v151 = vld [vmem:[%s1 + $0x8] sm:$0xff]
  %v152 = vlaneseq
  %v153 = vand.u32 %v152, 127
  %154 = vset.pattern.permute.xlu0 0
  %155 = vperm.xlu0 %154, %v150
  %v156 = vpop.permute.xlu0 %155
  %157 = vset.pattern.permute.xlu0 0
  %158 = vperm.xlu0 %157, %v151
  %v159 = vpop.permute.xlu0 %158
  %vm160 = vcmp.eq.s32.totalorder %v153, %v156
  %vm161 = vcmp.eq.s32.totalorder %v153, %v159
  %v162 = vsel %vm160, 1, 0
  %v163 = vsel %vm161, 1, 0
  %v164 = vcvt.s32.f32 %v162
  %v165 = vcvt.s32.f32 %v163
  %v166 = vld [vmem:[%s3] sm:$0xff]
  %v167 = vld [vmem:[%s3 + $0x8] sm:$0xff]
  %v168 = vld [vmem:[%s3 + $0x10] sm:$0xff]
  %v169 = vld [vmem:[%s3 + $0x18] sm:$0xff]
  %v170 = vld [vmem:[%s3 + $0x20] sm:$0xff]
  %v171 = vld [vmem:[%s3 + $0x28] sm:$0xff]
  %v172 = vld [vmem:[%s3 + $0x30] sm:$0x3]
  %vm173 = vcmask 408576
  %v175 = vsel %vm173, %v164, 0
  %v178 = vsel %vm173, %v165, 0
  %vm180 = vcmask 1041408
  %v182 = vsel %vm180, %v172, 0
  %184 = vmatprep.subr.mxu0 0.0
  %185 = vmatpush1.msra.mxu0 %v166
  %186 = vmatprep.subr.mxu0 0.0
  %187 = vmatpush1.msra.mxu0 %v167
  %188 = vmatprep.subr.mxu0 0.0
  %189 = vmatpush1.msra.mxu0 %v168
  %190 = vmatprep.subr.mxu0 0.0
  %191 = vmatpush1.msra.mxu0 %v169
  %192 = vmatprep.subr.mxu0 0.0
  %193 = vmatpush1.msra.mxu0 %v170
  %194 = vmatprep.subr.mxu0 0.0
  %195 = vmatpush1.msra.mxu0 %v171
  %196 = vmatprep.subr.mxu0 0.0
  %197 = vmatpush1.msra.mxu0 %v182
  %198 = vmatprep.subr.mxu0 0.0
  %199 = vmatpush1.msra.mxu0 0.0
  %200 = vmatprep.subr.mxu0 0.0
  %201 = vmatpush1.msra.mxu0 0.0
  %202 = vmatprep.subr.mxu0 0.0
  %203 = vmatpush1.msra.mxu0 0.0
  %204 = vmatprep.subr.mxu0 0.0
  %205 = vmatpush1.msra.mxu0 0.0
  %206 = vmatprep.subr.mxu0 0.0
  %207 = vmatpush1.msra.mxu0 0.0
  %208 = vmatprep.subr.mxu0 0.0
  %209 = vmatpush1.msra.mxu0 0.0
  %210 = vmatprep.subr.mxu0 0.0
  %211 = vmatpush1.msra.mxu0 0.0
  %212 = vmatprep.subr.mxu0 0.0
  %213 = vmatpush1.msra.mxu0 0.0
  %214 = vmatprep.subr.mxu0 0.0
  %215 = vmatpush1.msra.mxu0 0.0
  %216 = vmatprep.subr.mxu0 0.0
  %217 = vmatpush1.msra.mxu0 0.0
  %218 = vmatprep.subr.mxu0 0.0
  %219 = vmatpush1.msra.mxu0 0.0
  %220 = vmatprep.subr.mxu0 0.0
  %221 = vmatpush1.msra.mxu0 0.0
  %222 = vmatprep.subr.mxu0 0.0
  %223 = vmatpush1.msra.mxu0 0.0
  %224 = vmatprep.subr.mxu0 0.0
  %225 = vmatpush1.msra.mxu0 0.0
  %226 = vmatprep.subr.mxu0 0.0
  %227 = vmatpush1.msra.mxu0 0.0
  %228 = vmatprep.subr.mxu0 0.0
  %229 = vmatpush1.msra.mxu0 0.0
  %230 = vmatprep.subr.mxu0 0.0
  %231 = vmatpush1.msra.mxu0 0.0
  %232 = vmatprep.subr.mxu0 0.0
  %233 = vmatpush1.msra.mxu0 0.0
  %234 = vmatprep.subr.mxu0 0.0
  %235 = vmatpush1.msra.mxu0 0.0
  %236 = vmatprep.subr.mxu0 0.0
  %237 = vmatpush1.msra.mxu0 0.0
  %238 = vmatprep.subr.mxu0 0.0
  %239 = vmatpush1.msra.mxu0 0.0
  %240 = vmatprep.subr.mxu0 0.0
  %241 = vmatpush1.msra.mxu0 0.0
  %242 = vmatprep.subr.mxu0 0.0
  %243 = vmatpush1.msra.mxu0 0.0
  %244 = vmatprep.subr.mxu0 0.0
  %245 = vmatpush1.msra.mxu0 0.0
  %246 = vmatprep.subr.mxu0 0.0
  %247 = vmatpush1.msra.mxu0 0.0
  %248 = vmatprep.mubr.f32.mxu0 0.0
  %249 = vmatmul.mubr.f32.gmra.mrb[0].mxu0 %v175
  %v250 = vpop.f32.mrb[0].mxu0
  %v251 = vadd.f32 0.0, %v250
  %v252 = vpop.f32.mrb[0].mxu0
  %253 = vmatprep.mubr.f32.mxu0 0.0
  %254 = vmatmul.mubr.f32.gmra.mrb[0].mxu0 %v178
  %v255 = vpop.f32.mrb[0].mxu0
  %v256 = vadd.f32 0.0, %v255
  %v257 = vpop.f32.mrb[0].mxu0
  %258 = vdwg.mxu0
  %v259 = vmul.f32 %v251, 5.656854
  %v260 = vmul.f32 %v256, 5.656854
  %v261 = vlaneseq
  %v262 = vshrl.u32 %v261, 7
  %vm263 = vcmp.le.s32.totalorder %v153, %v262
  %v264 = vsel %vm263, 0.0, -1e+30
  %v265 = vld [vmem:[%s5] sm:$0xff]
  %v266 = vld [vmem:[%s5 + $0x8] sm:$0xff]
  %v267 = vld [vmem:[%s5 + $0x10] sm:$0xff]
  %v268 = vld [vmem:[%s5 + $0x18] sm:$0xff]
  %v269 = vld [vmem:[%s7] sm:$0x1]
  %v271 = vlaneseq
  %v272 = vshrl.u32 %v271, 7
  %v273 = vsub.s32 0, %v272
  %v274 = vrot.slane %v269, %v273
  %vm276 = vcmask 261120
  %v278 = vsel %vm276, %v259, 0
  %v281 = vsel %vm276, %v260, 0
  %283 = vmatprep.subr.mxu0 0.0
  %284 = vmatpush1.msra.mxu0 %v265
  %285 = vmatprep.subr.mxu0 0.0
  %286 = vmatpush1.msra.mxu0 %v266
  %287 = vmatprep.subr.mxu0 0.0
  %288 = vmatpush1.msra.mxu0 %v267
  %289 = vmatprep.subr.mxu0 0.0
  %290 = vmatpush1.msra.mxu0 %v268
  %291 = vmatprep.subr.mxu0 0.0
  %292 = vmatpush1.msra.mxu0 0.0
  %293 = vmatprep.subr.mxu0 0.0
  %294 = vmatpush1.msra.mxu0 0.0
  %295 = vmatprep.subr.mxu0 0.0
  %296 = vmatpush1.msra.mxu0 0.0
  %297 = vmatprep.subr.mxu0 0.0
  %298 = vmatpush1.msra.mxu0 0.0
  %299 = vmatprep.subr.mxu0 0.0
  %300 = vmatpush1.msra.mxu0 0.0
  %301 = vmatprep.subr.mxu0 0.0
  %302 = vmatpush1.msra.mxu0 0.0
  %303 = vmatprep.subr.mxu0 0.0
  %304 = vmatpush1.msra.mxu0 0.0
  %305 = vmatprep.subr.mxu0 0.0
  %306 = vmatpush1.msra.mxu0 0.0
  %307 = vmatprep.subr.mxu0 0.0
  %308 = vmatpush1.msra.mxu0 0.0
  %309 = vmatprep.subr.mxu0 0.0
  %310 = vmatpush1.msra.mxu0 0.0
  %311 = vmatprep.subr.mxu0 0.0
  %312 = vmatpush1.msra.mxu0 0.0
  %313 = vmatprep.subr.mxu0 0.0
  %314 = vmatpush1.msra.mxu0 0.0
  %315 = vmatprep.subr.mxu0 0.0
  %316 = vmatpush1.msra.mxu0 0.0
  %317 = vmatprep.subr.mxu0 0.0
  %318 = vmatpush1.msra.mxu0 0.0
  %319 = vmatprep.subr.mxu0 0.0
  %320 = vmatpush1.msra.mxu0 0.0
  %321 = vmatprep.subr.mxu0 0.0
  %322 = vmatpush1.msra.mxu0 0.0
  %323 = vmatprep.subr.mxu0 0.0
  %324 = vmatpush1.msra.mxu0 0.0
  %325 = vmatprep.subr.mxu0 0.0
  %326 = vmatpush1.msra.mxu0 0.0
  %327 = vmatprep.subr.mxu0 0.0
  %328 = vmatpush1.msra.mxu0 0.0
  %329 = vmatprep.subr.mxu0 0.0
  %330 = vmatpush1.msra.mxu0 0.0
  %331 = vmatprep.subr.mxu0 0.0
  %332 = vmatpush1.msra.mxu0 0.0
  %333 = vmatprep.subr.mxu0 0.0
  %334 = vmatpush1.msra.mxu0 0.0
  %335 = vmatprep.subr.mxu0 0.0
  %336 = vmatpush1.msra.mxu0 0.0
  %337 = vmatprep.subr.mxu0 0.0
  %338 = vmatpush1.msra.mxu0 0.0
  %339 = vmatprep.subr.mxu0 0.0
  %340 = vmatpush1.msra.mxu0 0.0
  %341 = vmatprep.subr.mxu0 0.0
  %342 = vmatpush1.msra.mxu0 0.0
  %343 = vmatprep.subr.mxu0 0.0
  %344 = vmatpush1.msra.mxu0 0.0
  %345 = vmatprep.subr.mxu0 0.0
  %346 = vmatpush1.msra.mxu0 0.0
  %347 = vmatprep.mubr.f32.mxu0 0.0
  %348 = vmatmul.mubr.f32.gmra.mrb[0].mxu0 %v278
  %v349 = vpop.f32.mrb[0].mxu0
  %v350 = vadd.f32 %v274, %v349
  %v351 = vpop.f32.mrb[0].mxu0
  %352 = vmatprep.mubr.f32.mxu0 0.0
  %353 = vmatmul.mubr.f32.gmra.mrb[0].mxu0 %v281
  %v354 = vpop.f32.mrb[0].mxu0
  %v355 = vadd.f32 %v274, %v354
  %v356 = vpop.f32.mrb[0].mxu0
  %357 = vdwg.mxu0
  %v358 = vld [vmem:[%s9] sm:$0xff]
  %v359 = vld [vmem:[%s9 + $0x8] sm:$0xff]
  %v360 = vld [vmem:[%s9 + $0x10] sm:$0xff]
  %v361 = vld [vmem:[%s9 + $0x18] sm:$0xff]
  %v362 = vld [vmem:[%s11] sm:$0x1]
  %v364 = vlaneseq
  %v365 = vshrl.u32 %v364, 7
  %v366 = vsub.s32 0, %v365
  %v367 = vrot.slane %v362, %v366
  %369 = vmatprep.subr.mxu0 0.0
  %370 = vmatpush1.msra.mxu0 %v358
  %371 = vmatprep.subr.mxu0 0.0
  %372 = vmatpush1.msra.mxu0 %v359
  %373 = vmatprep.subr.mxu0 0.0
  %374 = vmatpush1.msra.mxu0 %v360
  %375 = vmatprep.subr.mxu0 0.0
  %376 = vmatpush1.msra.mxu0 %v361
  %377 = vmatprep.subr.mxu0 0.0
  %378 = vmatpush1.msra.mxu0 0.0
  %379 = vmatprep.subr.mxu0 0.0
  %380 = vmatpush1.msra.mxu0 0.0
  %381 = vmatprep.subr.mxu0 0.0
  %382 = vmatpush1.msra.mxu0 0.0
  %383 = vmatprep.subr.mxu0 0.0
  %384 = vmatpush1.msra.mxu0 0.0
  %385 = vmatprep.subr.mxu0 0.0
  %386 = vmatpush1.msra.mxu0 0.0
  %387 = vmatprep.subr.mxu0 0.0
  %388 = vmatpush1.msra.mxu0 0.0
  %389 = vmatprep.subr.mxu0 0.0
  %390 = vmatpush1.msra.mxu0 0.0
  %391 = vmatprep.subr.mxu0 0.0
  %392 = vmatpush1.msra.mxu0 0.0
  %393 = vmatprep.subr.mxu0 0.0
  %394 = vmatpush1.msra.mxu0 0.0
  %395 = vmatprep.subr.mxu0 0.0
  %396 = vmatpush1.msra.mxu0 0.0
  %397 = vmatprep.subr.mxu0 0.0
  %398 = vmatpush1.msra.mxu0 0.0
  %399 = vmatprep.subr.mxu0 0.0
  %400 = vmatpush1.msra.mxu0 0.0
  %401 = vmatprep.subr.mxu0 0.0
  %402 = vmatpush1.msra.mxu0 0.0
  %403 = vmatprep.subr.mxu0 0.0
  %404 = vmatpush1.msra.mxu0 0.0
  %405 = vmatprep.subr.mxu0 0.0
  %406 = vmatpush1.msra.mxu0 0.0
  %407 = vmatprep.subr.mxu0 0.0
  %408 = vmatpush1.msra.mxu0 0.0
  %409 = vmatprep.subr.mxu0 0.0
  %410 = vmatpush1.msra.mxu0 0.0
  %411 = vmatprep.subr.mxu0 0.0
  %412 = vmatpush1.msra.mxu0 0.0
  %413 = vmatprep.subr.mxu0 0.0
  %414 = vmatpush1.msra.mxu0 0.0
  %415 = vmatprep.subr.mxu0 0.0
  %416 = vmatpush1.msra.mxu0 0.0
  %417 = vmatprep.subr.mxu0 0.0
  %418 = vmatpush1.msra.mxu0 0.0
  %419 = vmatprep.subr.mxu0 0.0
  %420 = vmatpush1.msra.mxu0 0.0
  %421 = vmatprep.subr.mxu0 0.0
  %422 = vmatpush1.msra.mxu0 0.0
  %423 = vmatprep.subr.mxu0 0.0
  %424 = vmatpush1.msra.mxu0 0.0
  %425 = vmatprep.subr.mxu0 0.0
  %426 = vmatpush1.msra.mxu0 0.0
  %427 = vmatprep.subr.mxu0 0.0
  %428 = vmatpush1.msra.mxu0 0.0
  %429 = vmatprep.subr.mxu0 0.0
  %430 = vmatpush1.msra.mxu0 0.0
  %431 = vmatprep.subr.mxu0 0.0
  %432 = vmatpush1.msra.mxu0 0.0
  %433 = vmatprep.mubr.f32.mxu0 0.0
  %434 = vmatmul.mubr.f32.gmra.mrb[0].mxu0 %v278
  %v435 = vpop.f32.mrb[0].mxu0
  %v436 = vadd.f32 %v367, %v435
  %v437 = vpop.f32.mrb[0].mxu0
  %438 = vmatprep.mubr.f32.mxu0 0.0
  %439 = vmatmul.mubr.f32.gmra.mrb[0].mxu0 %v281
  %v440 = vpop.f32.mrb[0].mxu0
  %v441 = vadd.f32 %v367, %v440
  %v442 = vpop.f32.mrb[0].mxu0
  %443 = vdwg.mxu0
  %v444 = vld [vmem:[%s13] sm:$0xff]
  %v445 = vld [vmem:[%s13 + $0x8] sm:$0xff]
  %v446 = vld [vmem:[%s13 + $0x10] sm:$0xff]
  %v447 = vld [vmem:[%s13 + $0x18] sm:$0xff]
  %v448 = vld [vmem:[%s15] sm:$0x1]
  %v450 = vlaneseq
  %v451 = vshrl.u32 %v450, 7
  %v452 = vsub.s32 0, %v451
  %v453 = vrot.slane %v448, %v452
  %455 = vmatprep.subr.mxu0 0.0
  %456 = vmatpush1.msra.mxu0 %v444
  %457 = vmatprep.subr.mxu0 0.0
  %458 = vmatpush1.msra.mxu0 %v445
  %459 = vmatprep.subr.mxu0 0.0
  %460 = vmatpush1.msra.mxu0 %v446
  %461 = vmatprep.subr.mxu0 0.0
  %462 = vmatpush1.msra.mxu0 %v447
  %463 = vmatprep.subr.mxu0 0.0
  %464 = vmatpush1.msra.mxu0 0.0
  %465 = vmatprep.subr.mxu0 0.0
  %466 = vmatpush1.msra.mxu0 0.0
  %467 = vmatprep.subr.mxu0 0.0
  %468 = vmatpush1.msra.mxu0 0.0
  %469 = vmatprep.subr.mxu0 0.0
  %470 = vmatpush1.msra.mxu0 0.0
  %471 = vmatprep.subr.mxu0 0.0
  %472 = vmatpush1.msra.mxu0 0.0
  %473 = vmatprep.subr.mxu0 0.0
  %474 = vmatpush1.msra.mxu0 0.0
  %475 = vmatprep.subr.mxu0 0.0
  %476 = vmatpush1.msra.mxu0 0.0
  %477 = vmatprep.subr.mxu0 0.0
  %478 = vmatpush1.msra.mxu0 0.0
  %479 = vmatprep.subr.mxu0 0.0
  %480 = vmatpush1.msra.mxu0 0.0
  %481 = vmatprep.subr.mxu0 0.0
  %482 = vmatpush1.msra.mxu0 0.0
  %483 = vmatprep.subr.mxu0 0.0
  %484 = vmatpush1.msra.mxu0 0.0
  %485 = vmatprep.subr.mxu0 0.0
  %486 = vmatpush1.msra.mxu0 0.0
  %487 = vmatprep.subr.mxu0 0.0
  %488 = vmatpush1.msra.mxu0 0.0
  %489 = vmatprep.subr.mxu0 0.0
  %490 = vmatpush1.msra.mxu0 0.0
  %491 = vmatprep.subr.mxu0 0.0
  %492 = vmatpush1.msra.mxu0 0.0
  %493 = vmatprep.subr.mxu0 0.0
  %494 = vmatpush1.msra.mxu0 0.0
  %495 = vmatprep.subr.mxu0 0.0
  %496 = vmatpush1.msra.mxu0 0.0
  %497 = vmatprep.subr.mxu0 0.0
  %498 = vmatpush1.msra.mxu0 0.0
  %499 = vmatprep.subr.mxu0 0.0
  %500 = vmatpush1.msra.mxu0 0.0
  %501 = vmatprep.subr.mxu0 0.0
  %502 = vmatpush1.msra.mxu0 0.0
  %503 = vmatprep.subr.mxu0 0.0
  %504 = vmatpush1.msra.mxu0 0.0
  %505 = vmatprep.subr.mxu0 0.0
  %506 = vmatpush1.msra.mxu0 0.0
  %507 = vmatprep.subr.mxu0 0.0
  %508 = vmatpush1.msra.mxu0 0.0
  %509 = vmatprep.subr.mxu0 0.0
  %510 = vmatpush1.msra.mxu0 0.0
  %511 = vmatprep.subr.mxu0 0.0
  %512 = vmatpush1.msra.mxu0 0.0
  %513 = vmatprep.subr.mxu0 0.0
  %514 = vmatpush1.msra.mxu0 0.0
  %515 = vmatprep.subr.mxu0 0.0
  %516 = vmatpush1.msra.mxu0 0.0
  %517 = vmatprep.subr.mxu0 0.0
  %518 = vmatpush1.msra.mxu0 0.0
  %519 = vmatprep.mubr.f32.mxu0 0.0
  %520 = vmatmul.mubr.f32.gmra.mrb[0].mxu0 %v278
  %v521 = vpop.f32.mrb[0].mxu0
  %v522 = vadd.f32 %v453, %v521
  %v523 = vpop.f32.mrb[0].mxu0
  %524 = vmatprep.mubr.f32.mxu0 0.0
  %525 = vmatmul.mubr.f32.gmra.mrb[0].mxu0 %v281
  %v526 = vpop.f32.mrb[0].mxu0
  %v527 = vadd.f32 %v453, %v526
  %v528 = vpop.f32.mrb[0].mxu0
  %529 = vdwg.mxu0
  %vm530 = vcmp.ge.s32.totalorder %v153, 0
  %vm531 = vcmp.lt.s32.totalorder %v153, 8
  %vm532 = vmand %vm530, %vm531
  %v533 = vsel %vm532, 1, 0
  %v534 = vcvt.s32.f32 %v533
  %v535 = vmul.f32 %v436, %v534
  %v536 = vmul.f32 %v441, %v534
  %v538 = vsel %vm276, %v350, 0
  %v541 = vsel %vm276, %v535, 0
  %543 = vmatprep.subr.mxu0 0.0
  %544 = vmatpush1.xpose.msra.mxu0 %v541
  %545 = vmatprep.subr.mxu0 0.0
  %546 = vmatpush1.xpose.msra.mxu0 0.0
  %547 = vmatprep.subr.mxu0 0.0
  %548 = vmatpush1.xpose.msra.mxu0 0.0
  %549 = vmatprep.subr.mxu0 0.0
  %550 = vmatpush1.xpose.msra.mxu0 0.0
  %551 = vmatprep.subr.mxu0 0.0
  %552 = vmatpush1.xpose.msra.mxu0 0.0
  %553 = vmatprep.subr.mxu0 0.0
  %554 = vmatpush1.xpose.msra.mxu0 0.0
  %555 = vmatprep.subr.mxu0 0.0
  %556 = vmatpush1.xpose.msra.mxu0 0.0
  %557 = vmatprep.subr.mxu0 0.0
  %558 = vmatpush1.xpose.msra.mxu0 0.0
  %559 = vmatprep.subr.mxu0 0.0
  %560 = vmatpush1.xpose.msra.mxu0 0.0
  %561 = vmatprep.subr.mxu0 0.0
  %562 = vmatpush1.xpose.msra.mxu0 0.0
  %563 = vmatprep.subr.mxu0 0.0
  %564 = vmatpush1.xpose.msra.mxu0 0.0
  %565 = vmatprep.subr.mxu0 0.0
  %566 = vmatpush1.xpose.msra.mxu0 0.0
  %567 = vmatprep.subr.mxu0 0.0
  %568 = vmatpush1.xpose.msra.mxu0 0.0
  %569 = vmatprep.subr.mxu0 0.0
  %570 = vmatpush1.xpose.msra.mxu0 0.0
  %571 = vmatprep.subr.mxu0 0.0
  %572 = vmatpush1.xpose.msra.mxu0 0.0
  %573 = vmatprep.subr.mxu0 0.0
  %574 = vmatpush1.xpose.msra.mxu0 0.0
  %575 = vmatprep.subr.mxu0 0.0
  %576 = vmatpush1.xpose.msra.mxu0 0.0
  %577 = vmatprep.subr.mxu0 0.0
  %578 = vmatpush1.xpose.msra.mxu0 0.0
  %579 = vmatprep.subr.mxu0 0.0
  %580 = vmatpush1.xpose.msra.mxu0 0.0
  %581 = vmatprep.subr.mxu0 0.0
  %582 = vmatpush1.xpose.msra.mxu0 0.0
  %583 = vmatprep.subr.mxu0 0.0
  %584 = vmatpush1.xpose.msra.mxu0 0.0
  %585 = vmatprep.subr.mxu0 0.0
  %586 = vmatpush1.xpose.msra.mxu0 0.0
  %587 = vmatprep.subr.mxu0 0.0
  %588 = vmatpush1.xpose.msra.mxu0 0.0
  %589 = vmatprep.subr.mxu0 0.0
  %590 = vmatpush1.xpose.msra.mxu0 0.0
  %591 = vmatprep.subr.mxu0 0.0
  %592 = vmatpush1.xpose.msra.mxu0 0.0
  %593 = vmatprep.subr.mxu0 0.0
  %594 = vmatpush1.xpose.msra.mxu0 0.0
  %595 = vmatprep.subr.mxu0 0.0
  %596 = vmatpush1.xpose.msra.mxu0 0.0
  %597 = vmatprep.subr.mxu0 0.0
  %598 = vmatpush1.xpose.msra.mxu0 0.0
  %599 = vmatprep.subr.mxu0 0.0
  %600 = vmatpush1.xpose.msra.mxu0 0.0
  %601 = vmatprep.subr.mxu0 0.0
  %602 = vmatpush1.xpose.msra.mxu0 0.0
  %603 = vmatprep.subr.mxu0 0.0
  %604 = vmatpush1.xpose.msra.mxu0 0.0
  %605 = vmatprep.subr.mxu0 0.0
  %606 = vmatpush1.xpose.msra.mxu0 0.0
  %607 = vmatprep.mubr.f32.mxu0 0.0
  %608 = vmatmul.mubr.f32.gmra.mrb[0].mxu0 %v538
  %v609 = vpop.f32.mrb[0].mxu0
  %v610 = vadd.f32 0.0, %v609
  %v611 = vpop.f32.mrb[0].mxu0
  %612 = vdwg.mxu0
  %v614 = vsel %vm276, %v355, 0
  %v617 = vsel %vm276, %v536, 0
  %619 = vmatprep.subr.mxu0 0.0
  %620 = vmatpush1.xpose.msra.mxu0 %v617
  %621 = vmatprep.subr.mxu0 0.0
  %622 = vmatpush1.xpose.msra.mxu0 0.0
  %623 = vmatprep.subr.mxu0 0.0
  %624 = vmatpush1.xpose.msra.mxu0 0.0
  %625 = vmatprep.subr.mxu0 0.0
  %626 = vmatpush1.xpose.msra.mxu0 0.0
  %627 = vmatprep.subr.mxu0 0.0
  %628 = vmatpush1.xpose.msra.mxu0 0.0
  %629 = vmatprep.subr.mxu0 0.0
  %630 = vmatpush1.xpose.msra.mxu0 0.0
  %631 = vmatprep.subr.mxu0 0.0
  %632 = vmatpush1.xpose.msra.mxu0 0.0
  %633 = vmatprep.subr.mxu0 0.0
  %634 = vmatpush1.xpose.msra.mxu0 0.0
  %635 = vmatprep.subr.mxu0 0.0
  %636 = vmatpush1.xpose.msra.mxu0 0.0
  %637 = vmatprep.subr.mxu0 0.0
  %638 = vmatpush1.xpose.msra.mxu0 0.0
  %639 = vmatprep.subr.mxu0 0.0
  %640 = vmatpush1.xpose.msra.mxu0 0.0
  %641 = vmatprep.subr.mxu0 0.0
  %642 = vmatpush1.xpose.msra.mxu0 0.0
  %643 = vmatprep.subr.mxu0 0.0
  %644 = vmatpush1.xpose.msra.mxu0 0.0
  %645 = vmatprep.subr.mxu0 0.0
  %646 = vmatpush1.xpose.msra.mxu0 0.0
  %647 = vmatprep.subr.mxu0 0.0
  %648 = vmatpush1.xpose.msra.mxu0 0.0
  %649 = vmatprep.subr.mxu0 0.0
  %650 = vmatpush1.xpose.msra.mxu0 0.0
  %651 = vmatprep.subr.mxu0 0.0
  %652 = vmatpush1.xpose.msra.mxu0 0.0
  %653 = vmatprep.subr.mxu0 0.0
  %654 = vmatpush1.xpose.msra.mxu0 0.0
  %655 = vmatprep.subr.mxu0 0.0
  %656 = vmatpush1.xpose.msra.mxu0 0.0
  %657 = vmatprep.subr.mxu0 0.0
  %658 = vmatpush1.xpose.msra.mxu0 0.0
  %659 = vmatprep.subr.mxu0 0.0
  %660 = vmatpush1.xpose.msra.mxu0 0.0
  %661 = vmatprep.subr.mxu0 0.0
  %662 = vmatpush1.xpose.msra.mxu0 0.0
  %663 = vmatprep.subr.mxu0 0.0
  %664 = vmatpush1.xpose.msra.mxu0 0.0
  %665 = vmatprep.subr.mxu0 0.0
  %666 = vmatpush1.xpose.msra.mxu0 0.0
  %667 = vmatprep.subr.mxu0 0.0
  %668 = vmatpush1.xpose.msra.mxu0 0.0
  %669 = vmatprep.subr.mxu0 0.0
  %670 = vmatpush1.xpose.msra.mxu0 0.0
  %671 = vmatprep.subr.mxu0 0.0
  %672 = vmatpush1.xpose.msra.mxu0 0.0
  %673 = vmatprep.subr.mxu0 0.0
  %674 = vmatpush1.xpose.msra.mxu0 0.0
  %675 = vmatprep.subr.mxu0 0.0
  %676 = vmatpush1.xpose.msra.mxu0 0.0
  %677 = vmatprep.subr.mxu0 0.0
  %678 = vmatpush1.xpose.msra.mxu0 0.0
  %679 = vmatprep.subr.mxu0 0.0
  %680 = vmatpush1.xpose.msra.mxu0 0.0
  %681 = vmatprep.subr.mxu0 0.0
  %682 = vmatpush1.xpose.msra.mxu0 0.0
  %683 = vmatprep.mubr.f32.mxu0 0.0
  %684 = vmatmul.mubr.f32.gmra.mrb[0].mxu0 %v614
  %v685 = vpop.f32.mrb[0].mxu0
  %v686 = vadd.f32 0.0, %v685
  %v687 = vpop.f32.mrb[0].mxu0
  %688 = vdwg.mxu0
  %v689 = vmul.f32 %v610, 0.35355338
  %v690 = vmul.f32 %v686, 0.35355338
  %v691 = vadd.f32 %v689, %v264
  %v692 = vadd.f32 %v690, %v264
  %vm693 = vcmask 64512
  %v694 = vsel %vm693, %v691, -inf
  %695 = vmax.xlane.f32.xlu0 %v694
  %v696 = vpop.xlane.xlu0 %695
  %v697 = vsel %vm693, %v692, -inf
  %698 = vmax.xlane.f32.xlu0 %v697
  %v699 = vpop.xlane.xlu0 %698
  %v700 = vsub.f32 %v691, %v696
  %v701 = vsub.f32 %v692, %v699
  %v702 = vmul.f32 %v700, 1.442695
  %v703 = vpow.pop %v702
  %v704 = vmul.f32 %v701, 1.442695
  %v705 = vpow.pop %v704
  %v706 = vsel %vm693, %v703, 0.0
  %707 = vadd.xlane.f32.xlu0 %v706
  %v708 = vpop.xlane.xlu0 %707
  %v709 = vsel %vm693, %v705, 0.0
  %710 = vadd.xlane.f32.xlu0 %v709
  %v711 = vpop.xlane.xlu0 %710
  %v712 = vrcp.pop %v708
  %v713 = vrcp.pop %v711
  %v714 = vmul.f32 %v703, %v712
  %v715 = vmul.f32 %v705, %v713
  %v716 = vmul.f32 %v522, %v534
  %v717 = vmul.f32 %v527, %v534
  %vm718 = vcmp.ge.s32.totalorder %v153, 8
  %vm719 = vcmp.lt.s32.totalorder %v153, 16
  %vm720 = vmand %vm718, %vm719
  %v721 = vsel %vm720, 1, 0
  %v722 = vcvt.s32.f32 %v721
  %v723 = vmul.f32 %v436, %v722
  %v724 = vmul.f32 %v441, %v722
  %v726 = vsel %vm276, %v723, 0
  %728 = vmatprep.subr.mxu0 0.0
  %729 = vmatpush1.xpose.msra.mxu0 %v726
  %730 = vmatprep.subr.mxu0 0.0
  %731 = vmatpush1.xpose.msra.mxu0 0.0
  %732 = vmatprep.subr.mxu0 0.0
  %733 = vmatpush1.xpose.msra.mxu0 0.0
  %734 = vmatprep.subr.mxu0 0.0
  %735 = vmatpush1.xpose.msra.mxu0 0.0
  %736 = vmatprep.subr.mxu0 0.0
  %737 = vmatpush1.xpose.msra.mxu0 0.0
  %738 = vmatprep.subr.mxu0 0.0
  %739 = vmatpush1.xpose.msra.mxu0 0.0
  %740 = vmatprep.subr.mxu0 0.0
  %741 = vmatpush1.xpose.msra.mxu0 0.0
  %742 = vmatprep.subr.mxu0 0.0
  %743 = vmatpush1.xpose.msra.mxu0 0.0
  %744 = vmatprep.subr.mxu0 0.0
  %745 = vmatpush1.xpose.msra.mxu0 0.0
  %746 = vmatprep.subr.mxu0 0.0
  %747 = vmatpush1.xpose.msra.mxu0 0.0
  %748 = vmatprep.subr.mxu0 0.0
  %749 = vmatpush1.xpose.msra.mxu0 0.0
  %750 = vmatprep.subr.mxu0 0.0
  %751 = vmatpush1.xpose.msra.mxu0 0.0
  %752 = vmatprep.subr.mxu0 0.0
  %753 = vmatpush1.xpose.msra.mxu0 0.0
  %754 = vmatprep.subr.mxu0 0.0
  %755 = vmatpush1.xpose.msra.mxu0 0.0
  %756 = vmatprep.subr.mxu0 0.0
  %757 = vmatpush1.xpose.msra.mxu0 0.0
  %758 = vmatprep.subr.mxu0 0.0
  %759 = vmatpush1.xpose.msra.mxu0 0.0
  %760 = vmatprep.subr.mxu0 0.0
  %761 = vmatpush1.xpose.msra.mxu0 0.0
  %762 = vmatprep.subr.mxu0 0.0
  %763 = vmatpush1.xpose.msra.mxu0 0.0
  %764 = vmatprep.subr.mxu0 0.0
  %765 = vmatpush1.xpose.msra.mxu0 0.0
  %766 = vmatprep.subr.mxu0 0.0
  %767 = vmatpush1.xpose.msra.mxu0 0.0
  %768 = vmatprep.subr.mxu0 0.0
  %769 = vmatpush1.xpose.msra.mxu0 0.0
  %770 = vmatprep.subr.mxu0 0.0
  %771 = vmatpush1.xpose.msra.mxu0 0.0
  %772 = vmatprep.subr.mxu0 0.0
  %773 = vmatpush1.xpose.msra.mxu0 0.0
  %774 = vmatprep.subr.mxu0 0.0
  %775 = vmatpush1.xpose.msra.mxu0 0.0
  %776 = vmatprep.subr.mxu0 0.0
  %777 = vmatpush1.xpose.msra.mxu0 0.0
  %778 = vmatprep.subr.mxu0 0.0
  %779 = vmatpush1.xpose.msra.mxu0 0.0
  %780 = vmatprep.subr.mxu0 0.0
  %781 = vmatpush1.xpose.msra.mxu0 0.0
  %782 = vmatprep.subr.mxu0 0.0
  %783 = vmatpush1.xpose.msra.mxu0 0.0
  %784 = vmatprep.subr.mxu0 0.0
  %785 = vmatpush1.xpose.msra.mxu0 0.0
  %786 = vmatprep.subr.mxu0 0.0
  %787 = vmatpush1.xpose.msra.mxu0 0.0
  %788 = vmatprep.subr.mxu0 0.0
  %789 = vmatpush1.xpose.msra.mxu0 0.0
  %790 = vmatprep.subr.mxu0 0.0
  %791 = vmatpush1.xpose.msra.mxu0 0.0
  %792 = vmatprep.mubr.f32.mxu0 0.0
  %793 = vmatmul.mubr.f32.gmra.mrb[0].mxu0 %v538
  %v794 = vpop.f32.mrb[0].mxu0
  %v795 = vadd.f32 0.0, %v794
  %v796 = vpop.f32.mrb[0].mxu0
  %797 = vdwg.mxu0
  %v799 = vsel %vm276, %v724, 0
  %801 = vmatprep.subr.mxu0 0.0
  %802 = vmatpush1.xpose.msra.mxu0 %v799
  %803 = vmatprep.subr.mxu0 0.0
  %804 = vmatpush1.xpose.msra.mxu0 0.0
  %805 = vmatprep.subr.mxu0 0.0
  %806 = vmatpush1.xpose.msra.mxu0 0.0
  %807 = vmatprep.subr.mxu0 0.0
  %808 = vmatpush1.xpose.msra.mxu0 0.0
  %809 = vmatprep.subr.mxu0 0.0
  %810 = vmatpush1.xpose.msra.mxu0 0.0
  %811 = vmatprep.subr.mxu0 0.0
  %812 = vmatpush1.xpose.msra.mxu0 0.0
  %813 = vmatprep.subr.mxu0 0.0
  %814 = vmatpush1.xpose.msra.mxu0 0.0
  %815 = vmatprep.subr.mxu0 0.0
  %816 = vmatpush1.xpose.msra.mxu0 0.0
  %817 = vmatprep.subr.mxu0 0.0
  %818 = vmatpush1.xpose.msra.mxu0 0.0
  %819 = vmatprep.subr.mxu0 0.0
  %820 = vmatpush1.xpose.msra.mxu0 0.0
  %821 = vmatprep.subr.mxu0 0.0
  %822 = vmatpush1.xpose.msra.mxu0 0.0
  %823 = vmatprep.subr.mxu0 0.0
  %824 = vmatpush1.xpose.msra.mxu0 0.0
  %825 = vmatprep.subr.mxu0 0.0
  %826 = vmatpush1.xpose.msra.mxu0 0.0
  %827 = vmatprep.subr.mxu0 0.0
  %828 = vmatpush1.xpose.msra.mxu0 0.0
  %829 = vmatprep.subr.mxu0 0.0
  %830 = vmatpush1.xpose.msra.mxu0 0.0
  %831 = vmatprep.subr.mxu0 0.0
  %832 = vmatpush1.xpose.msra.mxu0 0.0
  %833 = vmatprep.subr.mxu0 0.0
  %834 = vmatpush1.xpose.msra.mxu0 0.0
  %835 = vmatprep.subr.mxu0 0.0
  %836 = vmatpush1.xpose.msra.mxu0 0.0
  %837 = vmatprep.subr.mxu0 0.0
  %838 = vmatpush1.xpose.msra.mxu0 0.0
  %839 = vmatprep.subr.mxu0 0.0
  %840 = vmatpush1.xpose.msra.mxu0 0.0
  %841 = vmatprep.subr.mxu0 0.0
  %842 = vmatpush1.xpose.msra.mxu0 0.0
  %843 = vmatprep.subr.mxu0 0.0
  %844 = vmatpush1.xpose.msra.mxu0 0.0
  %845 = vmatprep.subr.mxu0 0.0
  %846 = vmatpush1.xpose.msra.mxu0 0.0
  %847 = vmatprep.subr.mxu0 0.0
  %848 = vmatpush1.xpose.msra.mxu0 0.0
  %849 = vmatprep.subr.mxu0 0.0
  %850 = vmatpush1.xpose.msra.mxu0 0.0
  %851 = vmatprep.subr.mxu0 0.0
  %852 = vmatpush1.xpose.msra.mxu0 0.0
  %853 = vmatprep.subr.mxu0 0.0
  %854 = vmatpush1.xpose.msra.mxu0 0.0
  %855 = vmatprep.subr.mxu0 0.0
  %856 = vmatpush1.xpose.msra.mxu0 0.0
  %857 = vmatprep.subr.mxu0 0.0
  %858 = vmatpush1.xpose.msra.mxu0 0.0
  %859 = vmatprep.subr.mxu0 0.0
  %860 = vmatpush1.xpose.msra.mxu0 0.0
  %861 = vmatprep.subr.mxu0 0.0
  %862 = vmatpush1.xpose.msra.mxu0 0.0
  %863 = vmatprep.subr.mxu0 0.0
  %864 = vmatpush1.xpose.msra.mxu0 0.0
  %865 = vmatprep.mubr.f32.mxu0 0.0
  %866 = vmatmul.mubr.f32.gmra.mrb[0].mxu0 %v614
  %v867 = vpop.f32.mrb[0].mxu0
  %v868 = vadd.f32 0.0, %v867
  %v869 = vpop.f32.mrb[0].mxu0
  %870 = vdwg.mxu0
  %v871 = vmul.f32 %v795, 0.35355338
  %v872 = vmul.f32 %v868, 0.35355338
  %v873 = vadd.f32 %v871, %v264
  %v874 = vadd.f32 %v872, %v264
  %v875 = vsel %vm693, %v873, -inf
  %876 = vmax.xlane.f32.xlu0 %v875
  %v877 = vpop.xlane.xlu0 %876
  %v878 = vsel %vm693, %v874, -inf
  %879 = vmax.xlane.f32.xlu0 %v878
  %v880 = vpop.xlane.xlu0 %879
  %v881 = vsub.f32 %v873, %v877
  %v882 = vsub.f32 %v874, %v880
  %v883 = vmul.f32 %v881, 1.442695
  %v884 = vpow.pop %v883
  %v885 = vmul.f32 %v882, 1.442695
  %v886 = vpow.pop %v885
  %v887 = vsel %vm693, %v884, 0.0
  %888 = vadd.xlane.f32.xlu0 %v887
  %v889 = vpop.xlane.xlu0 %888
  %v890 = vsel %vm693, %v886, 0.0
  %891 = vadd.xlane.f32.xlu0 %v890
  %v892 = vpop.xlane.xlu0 %891
  %v893 = vrcp.pop %v889
  %v894 = vrcp.pop %v892
  %v895 = vmul.f32 %v884, %v893
  %v896 = vmul.f32 %v886, %v894
  %v897 = vmul.f32 %v522, %v722
  %v898 = vmul.f32 %v527, %v722
  %v900 = vsel %vm693, %v895, 0
  %902 = vmatprep.subr.mxu0 0.0
  %903 = vmatpush1.msra.mxu0 %v897
  %904 = vmatprep.subr.mxu0 0.0
  %905 = vmatpush1.msra.mxu0 0.0
  %906 = vmatprep.subr.mxu0 0.0
  %907 = vmatpush1.msra.mxu0 0.0
  %908 = vmatprep.subr.mxu0 0.0
  %909 = vmatpush1.msra.mxu0 0.0
  %910 = vmatprep.subr.mxu0 0.0
  %911 = vmatpush1.msra.mxu0 0.0
  %912 = vmatprep.subr.mxu0 0.0
  %913 = vmatpush1.msra.mxu0 0.0
  %914 = vmatprep.subr.mxu0 0.0
  %915 = vmatpush1.msra.mxu0 0.0
  %916 = vmatprep.subr.mxu0 0.0
  %917 = vmatpush1.msra.mxu0 0.0
  %918 = vmatprep.subr.mxu0 0.0
  %919 = vmatpush1.msra.mxu0 0.0
  %920 = vmatprep.subr.mxu0 0.0
  %921 = vmatpush1.msra.mxu0 0.0
  %922 = vmatprep.subr.mxu0 0.0
  %923 = vmatpush1.msra.mxu0 0.0
  %924 = vmatprep.subr.mxu0 0.0
  %925 = vmatpush1.msra.mxu0 0.0
  %926 = vmatprep.subr.mxu0 0.0
  %927 = vmatpush1.msra.mxu0 0.0
  %928 = vmatprep.subr.mxu0 0.0
  %929 = vmatpush1.msra.mxu0 0.0
  %930 = vmatprep.subr.mxu0 0.0
  %931 = vmatpush1.msra.mxu0 0.0
  %932 = vmatprep.subr.mxu0 0.0
  %933 = vmatpush1.msra.mxu0 0.0
  %934 = vmatprep.subr.mxu0 0.0
  %935 = vmatpush1.msra.mxu0 0.0
  %936 = vmatprep.subr.mxu0 0.0
  %937 = vmatpush1.msra.mxu0 0.0
  %938 = vmatprep.subr.mxu0 0.0
  %939 = vmatpush1.msra.mxu0 0.0
  %940 = vmatprep.subr.mxu0 0.0
  %941 = vmatpush1.msra.mxu0 0.0
  %942 = vmatprep.subr.mxu0 0.0
  %943 = vmatpush1.msra.mxu0 0.0
  %944 = vmatprep.subr.mxu0 0.0
  %945 = vmatpush1.msra.mxu0 0.0
  %946 = vmatprep.subr.mxu0 0.0
  %947 = vmatpush1.msra.mxu0 0.0
  %948 = vmatprep.subr.mxu0 0.0
  %949 = vmatpush1.msra.mxu0 0.0
  %950 = vmatprep.subr.mxu0 0.0
  %951 = vmatpush1.msra.mxu0 0.0
  %952 = vmatprep.subr.mxu0 0.0
  %953 = vmatpush1.msra.mxu0 0.0
  %954 = vmatprep.subr.mxu0 0.0
  %955 = vmatpush1.msra.mxu0 0.0
  %956 = vmatprep.subr.mxu0 0.0
  %957 = vmatpush1.msra.mxu0 0.0
  %958 = vmatprep.subr.mxu0 0.0
  %959 = vmatpush1.msra.mxu0 0.0
  %960 = vmatprep.subr.mxu0 0.0
  %961 = vmatpush1.msra.mxu0 0.0
  %962 = vmatprep.subr.mxu0 0.0
  %963 = vmatpush1.msra.mxu0 0.0
  %964 = vmatprep.subr.mxu0 0.0
  %965 = vmatpush1.msra.mxu0 0.0
  %966 = vmatprep.mubr.f32.mxu0 0.0
  %967 = vmatmul.mubr.f32.gmra.mrb[0].mxu0 %v900
  %v968 = vpop.f32.mrb[0].mxu0
  %v969 = vadd.f32 0.0, %v968
  %v970 = vpop.f32.mrb[0].mxu0
  %971 = vdwg.mxu0
  %v973 = vsel %vm693, %v896, 0
  %975 = vmatprep.subr.mxu0 0.0
  %976 = vmatpush1.msra.mxu0 %v898
  %977 = vmatprep.subr.mxu0 0.0
  %978 = vmatpush1.msra.mxu0 0.0
  %979 = vmatprep.subr.mxu0 0.0
  %980 = vmatpush1.msra.mxu0 0.0
  %981 = vmatprep.subr.mxu0 0.0
  %982 = vmatpush1.msra.mxu0 0.0
  %983 = vmatprep.subr.mxu0 0.0
  %984 = vmatpush1.msra.mxu0 0.0
  %985 = vmatprep.subr.mxu0 0.0
  %986 = vmatpush1.msra.mxu0 0.0
  %987 = vmatprep.subr.mxu0 0.0
  %988 = vmatpush1.msra.mxu0 0.0
  %989 = vmatprep.subr.mxu0 0.0
  %990 = vmatpush1.msra.mxu0 0.0
  %991 = vmatprep.subr.mxu0 0.0
  %992 = vmatpush1.msra.mxu0 0.0
  %993 = vmatprep.subr.mxu0 0.0
  %994 = vmatpush1.msra.mxu0 0.0
  %995 = vmatprep.subr.mxu0 0.0
  %996 = vmatpush1.msra.mxu0 0.0
  %997 = vmatprep.subr.mxu0 0.0
  %998 = vmatpush1.msra.mxu0 0.0
  %999 = vmatprep.subr.mxu0 0.0
  %1000 = vmatpush1.msra.mxu0 0.0
  %1001 = vmatprep.subr.mxu0 0.0
  %1002 = vmatpush1.msra.mxu0 0.0
  %1003 = vmatprep.subr.mxu0 0.0
  %1004 = vmatpush1.msra.mxu0 0.0
  %1005 = vmatprep.subr.mxu0 0.0
  %1006 = vmatpush1.msra.mxu0 0.0
  %1007 = vmatprep.subr.mxu0 0.0
  %1008 = vmatpush1.msra.mxu0 0.0
  %1009 = vmatprep.subr.mxu0 0.0
  %1010 = vmatpush1.msra.mxu0 0.0
  %1011 = vmatprep.subr.mxu0 0.0
  %1012 = vmatpush1.msra.mxu0 0.0
  %1013 = vmatprep.subr.mxu0 0.0
  %1014 = vmatpush1.msra.mxu0 0.0
  %1015 = vmatprep.subr.mxu0 0.0
  %1016 = vmatpush1.msra.mxu0 0.0
  %1017 = vmatprep.subr.mxu0 0.0
  %1018 = vmatpush1.msra.mxu0 0.0
  %1019 = vmatprep.subr.mxu0 0.0
  %1020 = vmatpush1.msra.mxu0 0.0
  %1021 = vmatprep.subr.mxu0 0.0
  %1022 = vmatpush1.msra.mxu0 0.0
  %1023 = vmatprep.subr.mxu0 0.0
  %1024 = vmatpush1.msra.mxu0 0.0
  %1025 = vmatprep.subr.mxu0 0.0
  %1026 = vmatpush1.msra.mxu0 0.0
  %1027 = vmatprep.subr.mxu0 0.0
  %1028 = vmatpush1.msra.mxu0 0.0
  %1029 = vmatprep.subr.mxu0 0.0
  %1030 = vmatpush1.msra.mxu0 0.0
  %1031 = vmatprep.subr.mxu0 0.0
  %1032 = vmatpush1.msra.mxu0 0.0
  %1033 = vmatprep.subr.mxu0 0.0
  %1034 = vmatpush1.msra.mxu0 0.0
  %1035 = vmatprep.subr.mxu0 0.0
  %1036 = vmatpush1.msra.mxu0 0.0
  %1037 = vmatprep.subr.mxu0 0.0
  %1038 = vmatpush1.msra.mxu0 0.0
  %1039 = vmatprep.mubr.f32.mxu0 0.0
  %1040 = vmatmul.mubr.f32.gmra.mrb[0].mxu0 %v973
  %v1041 = vpop.f32.mrb[0].mxu0
  %v1042 = vadd.f32 0.0, %v1041
  %v1043 = vpop.f32.mrb[0].mxu0
  %1044 = vdwg.mxu0
  %v1046 = vsel %vm693, %v714, 0
  %1048 = vmatprep.subr.mxu0 0.0
  %1049 = vmatpush1.msra.mxu0 %v716
  %1050 = vmatprep.subr.mxu0 0.0
  %1051 = vmatpush1.msra.mxu0 0.0
  %1052 = vmatprep.subr.mxu0 0.0
  %1053 = vmatpush1.msra.mxu0 0.0
  %1054 = vmatprep.subr.mxu0 0.0
  %1055 = vmatpush1.msra.mxu0 0.0
  %1056 = vmatprep.subr.mxu0 0.0
  %1057 = vmatpush1.msra.mxu0 0.0
  %1058 = vmatprep.subr.mxu0 0.0
  %1059 = vmatpush1.msra.mxu0 0.0
  %1060 = vmatprep.subr.mxu0 0.0
  %1061 = vmatpush1.msra.mxu0 0.0
  %1062 = vmatprep.subr.mxu0 0.0
  %1063 = vmatpush1.msra.mxu0 0.0
  %1064 = vmatprep.subr.mxu0 0.0
  %1065 = vmatpush1.msra.mxu0 0.0
  %1066 = vmatprep.subr.mxu0 0.0
  %1067 = vmatpush1.msra.mxu0 0.0
  %1068 = vmatprep.subr.mxu0 0.0
  %1069 = vmatpush1.msra.mxu0 0.0
  %1070 = vmatprep.subr.mxu0 0.0
  %1071 = vmatpush1.msra.mxu0 0.0
  %1072 = vmatprep.subr.mxu0 0.0
  %1073 = vmatpush1.msra.mxu0 0.0
  %1074 = vmatprep.subr.mxu0 0.0
  %1075 = vmatpush1.msra.mxu0 0.0
  %1076 = vmatprep.subr.mxu0 0.0
  %1077 = vmatpush1.msra.mxu0 0.0
  %1078 = vmatprep.subr.mxu0 0.0
  %1079 = vmatpush1.msra.mxu0 0.0
  %1080 = vmatprep.subr.mxu0 0.0
  %1081 = vmatpush1.msra.mxu0 0.0
  %1082 = vmatprep.subr.mxu0 0.0
  %1083 = vmatpush1.msra.mxu0 0.0
  %1084 = vmatprep.subr.mxu0 0.0
  %1085 = vmatpush1.msra.mxu0 0.0
  %1086 = vmatprep.subr.mxu0 0.0
  %1087 = vmatpush1.msra.mxu0 0.0
  %1088 = vmatprep.subr.mxu0 0.0
  %1089 = vmatpush1.msra.mxu0 0.0
  %1090 = vmatprep.subr.mxu0 0.0
  %1091 = vmatpush1.msra.mxu0 0.0
  %1092 = vmatprep.subr.mxu0 0.0
  %1093 = vmatpush1.msra.mxu0 0.0
  %1094 = vmatprep.subr.mxu0 0.0
  %1095 = vmatpush1.msra.mxu0 0.0
  %1096 = vmatprep.subr.mxu0 0.0
  %1097 = vmatpush1.msra.mxu0 0.0
  %1098 = vmatprep.subr.mxu0 0.0
  %1099 = vmatpush1.msra.mxu0 0.0
  %1100 = vmatprep.subr.mxu0 0.0
  %1101 = vmatpush1.msra.mxu0 0.0
  %1102 = vmatprep.subr.mxu0 0.0
  %1103 = vmatpush1.msra.mxu0 0.0
  %1104 = vmatprep.subr.mxu0 0.0
  %1105 = vmatpush1.msra.mxu0 0.0
  %1106 = vmatprep.subr.mxu0 0.0
  %1107 = vmatpush1.msra.mxu0 0.0
  %1108 = vmatprep.subr.mxu0 0.0
  %1109 = vmatpush1.msra.mxu0 0.0
  %1110 = vmatprep.subr.mxu0 0.0
  %1111 = vmatpush1.msra.mxu0 0.0
  %1112 = vmatprep.mubr.f32.mxu0 0.0
  %1113 = vmatmul.mubr.f32.gmra.mrb[0].mxu0 %v1046
  %v1114 = vpop.f32.mrb[0].mxu0
  %v1115 = vadd.f32 %v969, %v1114
  %v1116 = vpop.f32.mrb[0].mxu0
  %1117 = vdwg.mxu0
  %v1119 = vsel %vm693, %v715, 0
  %1121 = vmatprep.subr.mxu0 0.0
  %1122 = vmatpush1.msra.mxu0 %v717
  %1123 = vmatprep.subr.mxu0 0.0
  %1124 = vmatpush1.msra.mxu0 0.0
  %1125 = vmatprep.subr.mxu0 0.0
  %1126 = vmatpush1.msra.mxu0 0.0
  %1127 = vmatprep.subr.mxu0 0.0
  %1128 = vmatpush1.msra.mxu0 0.0
  %1129 = vmatprep.subr.mxu0 0.0
  %1130 = vmatpush1.msra.mxu0 0.0
  %1131 = vmatprep.subr.mxu0 0.0
  %1132 = vmatpush1.msra.mxu0 0.0
  %1133 = vmatprep.subr.mxu0 0.0
  %1134 = vmatpush1.msra.mxu0 0.0
  %1135 = vmatprep.subr.mxu0 0.0
  %1136 = vmatpush1.msra.mxu0 0.0
  %1137 = vmatprep.subr.mxu0 0.0
  %1138 = vmatpush1.msra.mxu0 0.0
  %1139 = vmatprep.subr.mxu0 0.0
  %1140 = vmatpush1.msra.mxu0 0.0
  %1141 = vmatprep.subr.mxu0 0.0
  %1142 = vmatpush1.msra.mxu0 0.0
  %1143 = vmatprep.subr.mxu0 0.0
  %1144 = vmatpush1.msra.mxu0 0.0
  %1145 = vmatprep.subr.mxu0 0.0
  %1146 = vmatpush1.msra.mxu0 0.0
  %1147 = vmatprep.subr.mxu0 0.0
  %1148 = vmatpush1.msra.mxu0 0.0
  %1149 = vmatprep.subr.mxu0 0.0
  %1150 = vmatpush1.msra.mxu0 0.0
  %1151 = vmatprep.subr.mxu0 0.0
  %1152 = vmatpush1.msra.mxu0 0.0
  %1153 = vmatprep.subr.mxu0 0.0
  %1154 = vmatpush1.msra.mxu0 0.0
  %1155 = vmatprep.subr.mxu0 0.0
  %1156 = vmatpush1.msra.mxu0 0.0
  %1157 = vmatprep.subr.mxu0 0.0
  %1158 = vmatpush1.msra.mxu0 0.0
  %1159 = vmatprep.subr.mxu0 0.0
  %1160 = vmatpush1.msra.mxu0 0.0
  %1161 = vmatprep.subr.mxu0 0.0
  %1162 = vmatpush1.msra.mxu0 0.0
  %1163 = vmatprep.subr.mxu0 0.0
  %1164 = vmatpush1.msra.mxu0 0.0
  %1165 = vmatprep.subr.mxu0 0.0
  %1166 = vmatpush1.msra.mxu0 0.0
  %1167 = vmatprep.subr.mxu0 0.0
  %1168 = vmatpush1.msra.mxu0 0.0
  %1169 = vmatprep.subr.mxu0 0.0
  %1170 = vmatpush1.msra.mxu0 0.0
  %1171 = vmatprep.subr.mxu0 0.0
  %1172 = vmatpush1.msra.mxu0 0.0
  %1173 = vmatprep.subr.mxu0 0.0
  %1174 = vmatpush1.msra.mxu0 0.0
  %1175 = vmatprep.subr.mxu0 0.0
  %1176 = vmatpush1.msra.mxu0 0.0
  %1177 = vmatprep.subr.mxu0 0.0
  %1178 = vmatpush1.msra.mxu0 0.0
  %1179 = vmatprep.subr.mxu0 0.0
  %1180 = vmatpush1.msra.mxu0 0.0
  %1181 = vmatprep.subr.mxu0 0.0
  %1182 = vmatpush1.msra.mxu0 0.0
  %1183 = vmatprep.subr.mxu0 0.0
  %1184 = vmatpush1.msra.mxu0 0.0
  %1185 = vmatprep.mubr.f32.mxu0 0.0
  %1186 = vmatmul.mubr.f32.gmra.mrb[0].mxu0 %v1119
  %v1187 = vpop.f32.mrb[0].mxu0
  %v1188 = vadd.f32 %v1042, %v1187
  %v1189 = vpop.f32.mrb[0].mxu0
  %1190 = vdwg.mxu0
  %vm1191 = vcmp.ge.s32.totalorder %v153, 16
  %vm1192 = vcmp.lt.s32.totalorder %v153, 24
  %vm1193 = vmand %vm1191, %vm1192
  %v1194 = vsel %vm1193, 1, 0
  %v1195 = vcvt.s32.f32 %v1194
  %v1196 = vmul.f32 %v436, %v1195
  %v1197 = vmul.f32 %v441, %v1195
  %v1199 = vsel %vm276, %v1196, 0
  %1201 = vmatprep.subr.mxu0 0.0
  %1202 = vmatpush1.xpose.msra.mxu0 %v1199
  %1203 = vmatprep.subr.mxu0 0.0
  %1204 = vmatpush1.xpose.msra.mxu0 0.0
  %1205 = vmatprep.subr.mxu0 0.0
  %1206 = vmatpush1.xpose.msra.mxu0 0.0
  %1207 = vmatprep.subr.mxu0 0.0
  %1208 = vmatpush1.xpose.msra.mxu0 0.0
  %1209 = vmatprep.subr.mxu0 0.0
  %1210 = vmatpush1.xpose.msra.mxu0 0.0
  %1211 = vmatprep.subr.mxu0 0.0
  %1212 = vmatpush1.xpose.msra.mxu0 0.0
  %1213 = vmatprep.subr.mxu0 0.0
  %1214 = vmatpush1.xpose.msra.mxu0 0.0
  %1215 = vmatprep.subr.mxu0 0.0
  %1216 = vmatpush1.xpose.msra.mxu0 0.0
  %1217 = vmatprep.subr.mxu0 0.0
  %1218 = vmatpush1.xpose.msra.mxu0 0.0
  %1219 = vmatprep.subr.mxu0 0.0
  %1220 = vmatpush1.xpose.msra.mxu0 0.0
  %1221 = vmatprep.subr.mxu0 0.0
  %1222 = vmatpush1.xpose.msra.mxu0 0.0
  %1223 = vmatprep.subr.mxu0 0.0
  %1224 = vmatpush1.xpose.msra.mxu0 0.0
  %1225 = vmatprep.subr.mxu0 0.0
  %1226 = vmatpush1.xpose.msra.mxu0 0.0
  %1227 = vmatprep.subr.mxu0 0.0
  %1228 = vmatpush1.xpose.msra.mxu0 0.0
  %1229 = vmatprep.subr.mxu0 0.0
  %1230 = vmatpush1.xpose.msra.mxu0 0.0
  %1231 = vmatprep.subr.mxu0 0.0
  %1232 = vmatpush1.xpose.msra.mxu0 0.0
  %1233 = vmatprep.subr.mxu0 0.0
  %1234 = vmatpush1.xpose.msra.mxu0 0.0
  %1235 = vmatprep.subr.mxu0 0.0
  %1236 = vmatpush1.xpose.msra.mxu0 0.0
  %1237 = vmatprep.subr.mxu0 0.0
  %1238 = vmatpush1.xpose.msra.mxu0 0.0
  %1239 = vmatprep.subr.mxu0 0.0
  %1240 = vmatpush1.xpose.msra.mxu0 0.0
  %1241 = vmatprep.subr.mxu0 0.0
  %1242 = vmatpush1.xpose.msra.mxu0 0.0
  %1243 = vmatprep.subr.mxu0 0.0
  %1244 = vmatpush1.xpose.msra.mxu0 0.0
  %1245 = vmatprep.subr.mxu0 0.0
  %1246 = vmatpush1.xpose.msra.mxu0 0.0
  %1247 = vmatprep.subr.mxu0 0.0
  %1248 = vmatpush1.xpose.msra.mxu0 0.0
  %1249 = vmatprep.subr.mxu0 0.0
  %1250 = vmatpush1.xpose.msra.mxu0 0.0
  %1251 = vmatprep.subr.mxu0 0.0
  %1252 = vmatpush1.xpose.msra.mxu0 0.0
  %1253 = vmatprep.subr.mxu0 0.0
  %1254 = vmatpush1.xpose.msra.mxu0 0.0
  %1255 = vmatprep.subr.mxu0 0.0
  %1256 = vmatpush1.xpose.msra.mxu0 0.0
  %1257 = vmatprep.subr.mxu0 0.0
  %1258 = vmatpush1.xpose.msra.mxu0 0.0
  %1259 = vmatprep.subr.mxu0 0.0
  %1260 = vmatpush1.xpose.msra.mxu0 0.0
  %1261 = vmatprep.subr.mxu0 0.0
  %1262 = vmatpush1.xpose.msra.mxu0 0.0
  %1263 = vmatprep.subr.mxu0 0.0
  %1264 = vmatpush1.xpose.msra.mxu0 0.0
  %1265 = vmatprep.mubr.f32.mxu0 0.0
  %1266 = vmatmul.mubr.f32.gmra.mrb[0].mxu0 %v538
  %v1267 = vpop.f32.mrb[0].mxu0
  %v1268 = vadd.f32 0.0, %v1267
  %v1269 = vpop.f32.mrb[0].mxu0
  %1270 = vdwg.mxu0
  %v1272 = vsel %vm276, %v1197, 0
  %1274 = vmatprep.subr.mxu0 0.0
  %1275 = vmatpush1.xpose.msra.mxu0 %v1272
  %1276 = vmatprep.subr.mxu0 0.0
  %1277 = vmatpush1.xpose.msra.mxu0 0.0
  %1278 = vmatprep.subr.mxu0 0.0
  %1279 = vmatpush1.xpose.msra.mxu0 0.0
  %1280 = vmatprep.subr.mxu0 0.0
  %1281 = vmatpush1.xpose.msra.mxu0 0.0
  %1282 = vmatprep.subr.mxu0 0.0
  %1283 = vmatpush1.xpose.msra.mxu0 0.0
  %1284 = vmatprep.subr.mxu0 0.0
  %1285 = vmatpush1.xpose.msra.mxu0 0.0
  %1286 = vmatprep.subr.mxu0 0.0
  %1287 = vmatpush1.xpose.msra.mxu0 0.0
  %1288 = vmatprep.subr.mxu0 0.0
  %1289 = vmatpush1.xpose.msra.mxu0 0.0
  %1290 = vmatprep.subr.mxu0 0.0
  %1291 = vmatpush1.xpose.msra.mxu0 0.0
  %1292 = vmatprep.subr.mxu0 0.0
  %1293 = vmatpush1.xpose.msra.mxu0 0.0
  %1294 = vmatprep.subr.mxu0 0.0
  %1295 = vmatpush1.xpose.msra.mxu0 0.0
  %1296 = vmatprep.subr.mxu0 0.0
  %1297 = vmatpush1.xpose.msra.mxu0 0.0
  %1298 = vmatprep.subr.mxu0 0.0
  %1299 = vmatpush1.xpose.msra.mxu0 0.0
  %1300 = vmatprep.subr.mxu0 0.0
  %1301 = vmatpush1.xpose.msra.mxu0 0.0
  %1302 = vmatprep.subr.mxu0 0.0
  %1303 = vmatpush1.xpose.msra.mxu0 0.0
  %1304 = vmatprep.subr.mxu0 0.0
  %1305 = vmatpush1.xpose.msra.mxu0 0.0
  %1306 = vmatprep.subr.mxu0 0.0
  %1307 = vmatpush1.xpose.msra.mxu0 0.0
  %1308 = vmatprep.subr.mxu0 0.0
  %1309 = vmatpush1.xpose.msra.mxu0 0.0
  %1310 = vmatprep.subr.mxu0 0.0
  %1311 = vmatpush1.xpose.msra.mxu0 0.0
  %1312 = vmatprep.subr.mxu0 0.0
  %1313 = vmatpush1.xpose.msra.mxu0 0.0
  %1314 = vmatprep.subr.mxu0 0.0
  %1315 = vmatpush1.xpose.msra.mxu0 0.0
  %1316 = vmatprep.subr.mxu0 0.0
  %1317 = vmatpush1.xpose.msra.mxu0 0.0
  %1318 = vmatprep.subr.mxu0 0.0
  %1319 = vmatpush1.xpose.msra.mxu0 0.0
  %1320 = vmatprep.subr.mxu0 0.0
  %1321 = vmatpush1.xpose.msra.mxu0 0.0
  %1322 = vmatprep.subr.mxu0 0.0
  %1323 = vmatpush1.xpose.msra.mxu0 0.0
  %1324 = vmatprep.subr.mxu0 0.0
  %1325 = vmatpush1.xpose.msra.mxu0 0.0
  %1326 = vmatprep.subr.mxu0 0.0
  %1327 = vmatpush1.xpose.msra.mxu0 0.0
  %1328 = vmatprep.subr.mxu0 0.0
  %1329 = vmatpush1.xpose.msra.mxu0 0.0
  %1330 = vmatprep.subr.mxu0 0.0
  %1331 = vmatpush1.xpose.msra.mxu0 0.0
  %1332 = vmatprep.subr.mxu0 0.0
  %1333 = vmatpush1.xpose.msra.mxu0 0.0
  %1334 = vmatprep.subr.mxu0 0.0
  %1335 = vmatpush1.xpose.msra.mxu0 0.0
  %1336 = vmatprep.subr.mxu0 0.0
  %1337 = vmatpush1.xpose.msra.mxu0 0.0
  %1338 = vmatprep.mubr.f32.mxu0 0.0
  %1339 = vmatmul.mubr.f32.gmra.mrb[0].mxu0 %v614
  %v1340 = vpop.f32.mrb[0].mxu0
  %v1341 = vadd.f32 0.0, %v1340
  %v1342 = vpop.f32.mrb[0].mxu0
  %1343 = vdwg.mxu0
  %v1344 = vmul.f32 %v1268, 0.35355338
  %v1345 = vmul.f32 %v1341, 0.35355338
  %v1346 = vadd.f32 %v1344, %v264
  %v1347 = vadd.f32 %v1345, %v264
  %v1348 = vsel %vm693, %v1346, -inf
  %1349 = vmax.xlane.f32.xlu0 %v1348
  %v1350 = vpop.xlane.xlu0 %1349
  %v1351 = vsel %vm693, %v1347, -inf
  %1352 = vmax.xlane.f32.xlu0 %v1351
  %v1353 = vpop.xlane.xlu0 %1352
  %v1354 = vsub.f32 %v1346, %v1350
  %v1355 = vsub.f32 %v1347, %v1353
  %v1356 = vmul.f32 %v1354, 1.442695
  %v1357 = vpow.pop %v1356
  %v1358 = vmul.f32 %v1355, 1.442695
  %v1359 = vpow.pop %v1358
  %v1360 = vsel %vm693, %v1357, 0.0
  %1361 = vadd.xlane.f32.xlu0 %v1360
  %v1362 = vpop.xlane.xlu0 %1361
  %v1363 = vsel %vm693, %v1359, 0.0
  %1364 = vadd.xlane.f32.xlu0 %v1363
  %v1365 = vpop.xlane.xlu0 %1364
  %v1366 = vrcp.pop %v1362
  %v1367 = vrcp.pop %v1365
  %v1368 = vmul.f32 %v1357, %v1366
  %v1369 = vmul.f32 %v1359, %v1367
  %v1370 = vmul.f32 %v522, %v1195
  %v1371 = vmul.f32 %v527, %v1195
  %v1373 = vsel %vm693, %v1368, 0
  %1375 = vmatprep.subr.mxu0 0.0
  %1376 = vmatpush1.msra.mxu0 %v1370
  %1377 = vmatprep.subr.mxu0 0.0
  %1378 = vmatpush1.msra.mxu0 0.0
  %1379 = vmatprep.subr.mxu0 0.0
  %1380 = vmatpush1.msra.mxu0 0.0
  %1381 = vmatprep.subr.mxu0 0.0
  %1382 = vmatpush1.msra.mxu0 0.0
  %1383 = vmatprep.subr.mxu0 0.0
  %1384 = vmatpush1.msra.mxu0 0.0
  %1385 = vmatprep.subr.mxu0 0.0
  %1386 = vmatpush1.msra.mxu0 0.0
  %1387 = vmatprep.subr.mxu0 0.0
  %1388 = vmatpush1.msra.mxu0 0.0
  %1389 = vmatprep.subr.mxu0 0.0
  %1390 = vmatpush1.msra.mxu0 0.0
  %1391 = vmatprep.subr.mxu0 0.0
  %1392 = vmatpush1.msra.mxu0 0.0
  %1393 = vmatprep.subr.mxu0 0.0
  %1394 = vmatpush1.msra.mxu0 0.0
  %1395 = vmatprep.subr.mxu0 0.0
  %1396 = vmatpush1.msra.mxu0 0.0
  %1397 = vmatprep.subr.mxu0 0.0
  %1398 = vmatpush1.msra.mxu0 0.0
  %1399 = vmatprep.subr.mxu0 0.0
  %1400 = vmatpush1.msra.mxu0 0.0
  %1401 = vmatprep.subr.mxu0 0.0
  %1402 = vmatpush1.msra.mxu0 0.0
  %1403 = vmatprep.subr.mxu0 0.0
  %1404 = vmatpush1.msra.mxu0 0.0
  %1405 = vmatprep.subr.mxu0 0.0
  %1406 = vmatpush1.msra.mxu0 0.0
  %1407 = vmatprep.subr.mxu0 0.0
  %1408 = vmatpush1.msra.mxu0 0.0
  %1409 = vmatprep.subr.mxu0 0.0
  %1410 = vmatpush1.msra.mxu0 0.0
  %1411 = vmatprep.subr.mxu0 0.0
  %1412 = vmatpush1.msra.mxu0 0.0
  %1413 = vmatprep.subr.mxu0 0.0
  %1414 = vmatpush1.msra.mxu0 0.0
  %1415 = vmatprep.subr.mxu0 0.0
  %1416 = vmatpush1.msra.mxu0 0.0
  %1417 = vmatprep.subr.mxu0 0.0
  %1418 = vmatpush1.msra.mxu0 0.0
  %1419 = vmatprep.subr.mxu0 0.0
  %1420 = vmatpush1.msra.mxu0 0.0
  %1421 = vmatprep.subr.mxu0 0.0
  %1422 = vmatpush1.msra.mxu0 0.0
  %1423 = vmatprep.subr.mxu0 0.0
  %1424 = vmatpush1.msra.mxu0 0.0
  %1425 = vmatprep.subr.mxu0 0.0
  %1426 = vmatpush1.msra.mxu0 0.0
  %1427 = vmatprep.subr.mxu0 0.0
  %1428 = vmatpush1.msra.mxu0 0.0
  %1429 = vmatprep.subr.mxu0 0.0
  %1430 = vmatpush1.msra.mxu0 0.0
  %1431 = vmatprep.subr.mxu0 0.0
  %1432 = vmatpush1.msra.mxu0 0.0
  %1433 = vmatprep.subr.mxu0 0.0
  %1434 = vmatpush1.msra.mxu0 0.0
  %1435 = vmatprep.subr.mxu0 0.0
  %1436 = vmatpush1.msra.mxu0 0.0
  %1437 = vmatprep.subr.mxu0 0.0
  %1438 = vmatpush1.msra.mxu0 0.0
  %1439 = vmatprep.mubr.f32.mxu0 0.0
  %1440 = vmatmul.mubr.f32.gmra.mrb[0].mxu0 %v1373
  %v1441 = vpop.f32.mrb[0].mxu0
  %v1442 = vadd.f32 0.0, %v1441
  %v1443 = vpop.f32.mrb[0].mxu0
  %1444 = vdwg.mxu0
  %v1446 = vsel %vm693, %v1369, 0
  %1448 = vmatprep.subr.mxu0 0.0
  %1449 = vmatpush1.msra.mxu0 %v1371
  %1450 = vmatprep.subr.mxu0 0.0
  %1451 = vmatpush1.msra.mxu0 0.0
  %1452 = vmatprep.subr.mxu0 0.0
  %1453 = vmatpush1.msra.mxu0 0.0
  %1454 = vmatprep.subr.mxu0 0.0
  %1455 = vmatpush1.msra.mxu0 0.0
  %1456 = vmatprep.subr.mxu0 0.0
  %1457 = vmatpush1.msra.mxu0 0.0
  %1458 = vmatprep.subr.mxu0 0.0
  %1459 = vmatpush1.msra.mxu0 0.0
  %1460 = vmatprep.subr.mxu0 0.0
  %1461 = vmatpush1.msra.mxu0 0.0
  %1462 = vmatprep.subr.mxu0 0.0
  %1463 = vmatpush1.msra.mxu0 0.0
  %1464 = vmatprep.subr.mxu0 0.0
  %1465 = vmatpush1.msra.mxu0 0.0
  %1466 = vmatprep.subr.mxu0 0.0
  %1467 = vmatpush1.msra.mxu0 0.0
  %1468 = vmatprep.subr.mxu0 0.0
  %1469 = vmatpush1.msra.mxu0 0.0
  %1470 = vmatprep.subr.mxu0 0.0
  %1471 = vmatpush1.msra.mxu0 0.0
  %1472 = vmatprep.subr.mxu0 0.0
  %1473 = vmatpush1.msra.mxu0 0.0
  %1474 = vmatprep.subr.mxu0 0.0
  %1475 = vmatpush1.msra.mxu0 0.0
  %1476 = vmatprep.subr.mxu0 0.0
  %1477 = vmatpush1.msra.mxu0 0.0
  %1478 = vmatprep.subr.mxu0 0.0
  %1479 = vmatpush1.msra.mxu0 0.0
  %1480 = vmatprep.subr.mxu0 0.0
  %1481 = vmatpush1.msra.mxu0 0.0
  %1482 = vmatprep.subr.mxu0 0.0
  %1483 = vmatpush1.msra.mxu0 0.0
  %1484 = vmatprep.subr.mxu0 0.0
  %1485 = vmatpush1.msra.mxu0 0.0
  %1486 = vmatprep.subr.mxu0 0.0
  %1487 = vmatpush1.msra.mxu0 0.0
  %1488 = vmatprep.subr.mxu0 0.0
  %1489 = vmatpush1.msra.mxu0 0.0
  %1490 = vmatprep.subr.mxu0 0.0
  %1491 = vmatpush1.msra.mxu0 0.0
  %1492 = vmatprep.subr.mxu0 0.0
  %1493 = vmatpush1.msra.mxu0 0.0
  %1494 = vmatprep.subr.mxu0 0.0
  %1495 = vmatpush1.msra.mxu0 0.0
  %1496 = vmatprep.subr.mxu0 0.0
  %1497 = vmatpush1.msra.mxu0 0.0
  %1498 = vmatprep.subr.mxu0 0.0
  %1499 = vmatpush1.msra.mxu0 0.0
  %1500 = vmatprep.subr.mxu0 0.0
  %1501 = vmatpush1.msra.mxu0 0.0
  %1502 = vmatprep.subr.mxu0 0.0
  %1503 = vmatpush1.msra.mxu0 0.0
  %1504 = vmatprep.subr.mxu0 0.0
  %1505 = vmatpush1.msra.mxu0 0.0
  %1506 = vmatprep.subr.mxu0 0.0
  %1507 = vmatpush1.msra.mxu0 0.0
  %1508 = vmatprep.subr.mxu0 0.0
  %1509 = vmatpush1.msra.mxu0 0.0
  %1510 = vmatprep.subr.mxu0 0.0
  %1511 = vmatpush1.msra.mxu0 0.0
  %1512 = vmatprep.mubr.f32.mxu0 0.0
  %1513 = vmatmul.mubr.f32.gmra.mrb[0].mxu0 %v1446
  %v1514 = vpop.f32.mrb[0].mxu0
  %v1515 = vadd.f32 0.0, %v1514
  %v1516 = vpop.f32.mrb[0].mxu0
  %1517 = vdwg.mxu0
  %v1518 = vadd.f32 %v1115, %v1442
  %v1519 = vadd.f32 %v1188, %v1515
  %vm1520 = vcmp.ge.s32.totalorder %v153, 24
  %vm1521 = vcmp.lt.s32.totalorder %v153, 32
  %vm1522 = vmand %vm1520, %vm1521
  %v1523 = vsel %vm1522, 1, 0
  %v1524 = vcvt.s32.f32 %v1523
  %v1525 = vmul.f32 %v436, %v1524
  %v1526 = vmul.f32 %v441, %v1524
  %v1528 = vsel %vm276, %v1525, 0
  %1530 = vmatprep.subr.mxu0 0.0
  %1531 = vmatpush1.xpose.msra.mxu0 %v1528
  %1532 = vmatprep.subr.mxu0 0.0
  %1533 = vmatpush1.xpose.msra.mxu0 0.0
  %1534 = vmatprep.subr.mxu0 0.0
  %1535 = vmatpush1.xpose.msra.mxu0 0.0
  %1536 = vmatprep.subr.mxu0 0.0
  %1537 = vmatpush1.xpose.msra.mxu0 0.0
  %1538 = vmatprep.subr.mxu0 0.0
  %1539 = vmatpush1.xpose.msra.mxu0 0.0
  %1540 = vmatprep.subr.mxu0 0.0
  %1541 = vmatpush1.xpose.msra.mxu0 0.0
  %1542 = vmatprep.subr.mxu0 0.0
  %1543 = vmatpush1.xpose.msra.mxu0 0.0
  %1544 = vmatprep.subr.mxu0 0.0
  %1545 = vmatpush1.xpose.msra.mxu0 0.0
  %1546 = vmatprep.subr.mxu0 0.0
  %1547 = vmatpush1.xpose.msra.mxu0 0.0
  %1548 = vmatprep.subr.mxu0 0.0
  %1549 = vmatpush1.xpose.msra.mxu0 0.0
  %1550 = vmatprep.subr.mxu0 0.0
  %1551 = vmatpush1.xpose.msra.mxu0 0.0
  %1552 = vmatprep.subr.mxu0 0.0
  %1553 = vmatpush1.xpose.msra.mxu0 0.0
  %1554 = vmatprep.subr.mxu0 0.0
  %1555 = vmatpush1.xpose.msra.mxu0 0.0
  %1556 = vmatprep.subr.mxu0 0.0
  %1557 = vmatpush1.xpose.msra.mxu0 0.0
  %1558 = vmatprep.subr.mxu0 0.0
  %1559 = vmatpush1.xpose.msra.mxu0 0.0
  %1560 = vmatprep.subr.mxu0 0.0
  %1561 = vmatpush1.xpose.msra.mxu0 0.0
  %1562 = vmatprep.subr.mxu0 0.0
  %1563 = vmatpush1.xpose.msra.mxu0 0.0
  %1564 = vmatprep.subr.mxu0 0.0
  %1565 = vmatpush1.xpose.msra.mxu0 0.0
  %1566 = vmatprep.subr.mxu0 0.0
  %1567 = vmatpush1.xpose.msra.mxu0 0.0
  %1568 = vmatprep.subr.mxu0 0.0
  %1569 = vmatpush1.xpose.msra.mxu0 0.0
  %1570 = vmatprep.subr.mxu0 0.0
  %1571 = vmatpush1.xpose.msra.mxu0 0.0
  %1572 = vmatprep.subr.mxu0 0.0
  %1573 = vmatpush1.xpose.msra.mxu0 0.0
  %1574 = vmatprep.subr.mxu0 0.0
  %1575 = vmatpush1.xpose.msra.mxu0 0.0
  %1576 = vmatprep.subr.mxu0 0.0
  %1577 = vmatpush1.xpose.msra.mxu0 0.0
  %1578 = vmatprep.subr.mxu0 0.0
  %1579 = vmatpush1.xpose.msra.mxu0 0.0
  %1580 = vmatprep.subr.mxu0 0.0
  %1581 = vmatpush1.xpose.msra.mxu0 0.0
  %1582 = vmatprep.subr.mxu0 0.0
  %1583 = vmatpush1.xpose.msra.mxu0 0.0
  %1584 = vmatprep.subr.mxu0 0.0
  %1585 = vmatpush1.xpose.msra.mxu0 0.0
  %1586 = vmatprep.subr.mxu0 0.0
  %1587 = vmatpush1.xpose.msra.mxu0 0.0
  %1588 = vmatprep.subr.mxu0 0.0
  %1589 = vmatpush1.xpose.msra.mxu0 0.0
  %1590 = vmatprep.subr.mxu0 0.0
  %1591 = vmatpush1.xpose.msra.mxu0 0.0
  %1592 = vmatprep.subr.mxu0 0.0
  %1593 = vmatpush1.xpose.msra.mxu0 0.0
  %1594 = vmatprep.mubr.f32.mxu0 0.0
  %1595 = vmatmul.mubr.f32.gmra.mrb[0].mxu0 %v538
  %v1596 = vpop.f32.mrb[0].mxu0
  %v1597 = vadd.f32 0.0, %v1596
  %v1598 = vpop.f32.mrb[0].mxu0
  %1599 = vdwg.mxu0
  %v1601 = vsel %vm276, %v1526, 0
  %1603 = vmatprep.subr.mxu0 0.0
  %1604 = vmatpush1.xpose.msra.mxu0 %v1601
  %1605 = vmatprep.subr.mxu0 0.0
  %1606 = vmatpush1.xpose.msra.mxu0 0.0
  %1607 = vmatprep.subr.mxu0 0.0
  %1608 = vmatpush1.xpose.msra.mxu0 0.0
  %1609 = vmatprep.subr.mxu0 0.0
  %1610 = vmatpush1.xpose.msra.mxu0 0.0
  %1611 = vmatprep.subr.mxu0 0.0
  %1612 = vmatpush1.xpose.msra.mxu0 0.0
  %1613 = vmatprep.subr.mxu0 0.0
  %1614 = vmatpush1.xpose.msra.mxu0 0.0
  %1615 = vmatprep.subr.mxu0 0.0
  %1616 = vmatpush1.xpose.msra.mxu0 0.0
  %1617 = vmatprep.subr.mxu0 0.0
  %1618 = vmatpush1.xpose.msra.mxu0 0.0
  %1619 = vmatprep.subr.mxu0 0.0
  %1620 = vmatpush1.xpose.msra.mxu0 0.0
  %1621 = vmatprep.subr.mxu0 0.0
  %1622 = vmatpush1.xpose.msra.mxu0 0.0
  %1623 = vmatprep.subr.mxu0 0.0
  %1624 = vmatpush1.xpose.msra.mxu0 0.0
  %1625 = vmatprep.subr.mxu0 0.0
  %1626 = vmatpush1.xpose.msra.mxu0 0.0
  %1627 = vmatprep.subr.mxu0 0.0
  %1628 = vmatpush1.xpose.msra.mxu0 0.0
  %1629 = vmatprep.subr.mxu0 0.0
  %1630 = vmatpush1.xpose.msra.mxu0 0.0
  %1631 = vmatprep.subr.mxu0 0.0
  %1632 = vmatpush1.xpose.msra.mxu0 0.0
  %1633 = vmatprep.subr.mxu0 0.0
  %1634 = vmatpush1.xpose.msra.mxu0 0.0
  %1635 = vmatprep.subr.mxu0 0.0
  %1636 = vmatpush1.xpose.msra.mxu0 0.0
  %1637 = vmatprep.subr.mxu0 0.0
  %1638 = vmatpush1.xpose.msra.mxu0 0.0
  %1639 = vmatprep.subr.mxu0 0.0
  %1640 = vmatpush1.xpose.msra.mxu0 0.0
  %1641 = vmatprep.subr.mxu0 0.0
  %1642 = vmatpush1.xpose.msra.mxu0 0.0
  %1643 = vmatprep.subr.mxu0 0.0
  %1644 = vmatpush1.xpose.msra.mxu0 0.0
  %1645 = vmatprep.subr.mxu0 0.0
  %1646 = vmatpush1.xpose.msra.mxu0 0.0
  %1647 = vmatprep.subr.mxu0 0.0
  %1648 = vmatpush1.xpose.msra.mxu0 0.0
  %1649 = vmatprep.subr.mxu0 0.0
  %1650 = vmatpush1.xpose.msra.mxu0 0.0
  %1651 = vmatprep.subr.mxu0 0.0
  %1652 = vmatpush1.xpose.msra.mxu0 0.0
  %1653 = vmatprep.subr.mxu0 0.0
  %1654 = vmatpush1.xpose.msra.mxu0 0.0
  %1655 = vmatprep.subr.mxu0 0.0
  %1656 = vmatpush1.xpose.msra.mxu0 0.0
  %1657 = vmatprep.subr.mxu0 0.0
  %1658 = vmatpush1.xpose.msra.mxu0 0.0
  %1659 = vmatprep.subr.mxu0 0.0
  %1660 = vmatpush1.xpose.msra.mxu0 0.0
  %1661 = vmatprep.subr.mxu0 0.0
  %1662 = vmatpush1.xpose.msra.mxu0 0.0
  %1663 = vmatprep.subr.mxu0 0.0
  %1664 = vmatpush1.xpose.msra.mxu0 0.0
  %1665 = vmatprep.subr.mxu0 0.0
  %1666 = vmatpush1.xpose.msra.mxu0 0.0
  %1667 = vmatprep.mubr.f32.mxu0 0.0
  %1668 = vmatmul.mubr.f32.gmra.mrb[0].mxu0 %v614
  %v1669 = vpop.f32.mrb[0].mxu0
  %v1670 = vadd.f32 0.0, %v1669
  %v1671 = vpop.f32.mrb[0].mxu0
  %1672 = vdwg.mxu0
  %v1673 = vmul.f32 %v1597, 0.35355338
  %v1674 = vmul.f32 %v1670, 0.35355338
  %v1675 = vadd.f32 %v1673, %v264
  %v1676 = vadd.f32 %v1674, %v264
  %v1677 = vsel %vm693, %v1675, -inf
  %1678 = vmax.xlane.f32.xlu0 %v1677
  %v1679 = vpop.xlane.xlu0 %1678
  %v1680 = vsel %vm693, %v1676, -inf
  %1681 = vmax.xlane.f32.xlu0 %v1680
  %v1682 = vpop.xlane.xlu0 %1681
  %v1683 = vsub.f32 %v1675, %v1679
  %v1684 = vsub.f32 %v1676, %v1682
  %v1685 = vmul.f32 %v1683, 1.442695
  %v1686 = vpow.pop %v1685
  %v1687 = vmul.f32 %v1684, 1.442695
  %v1688 = vpow.pop %v1687
  %v1689 = vsel %vm693, %v1686, 0.0
  %1690 = vadd.xlane.f32.xlu0 %v1689
  %v1691 = vpop.xlane.xlu0 %1690
  %v1692 = vsel %vm693, %v1688, 0.0
  %1693 = vadd.xlane.f32.xlu0 %v1692
  %v1694 = vpop.xlane.xlu0 %1693
  %v1695 = vrcp.pop %v1691
  %v1696 = vrcp.pop %v1694
  %v1697 = vmul.f32 %v1686, %v1695
  %v1698 = vmul.f32 %v1688, %v1696
  %v1699 = vmul.f32 %v522, %v1524
  %v1700 = vmul.f32 %v527, %v1524
  %v1702 = vsel %vm693, %v1697, 0
  %1704 = vmatprep.subr.mxu0 0.0
  %1705 = vmatpush1.msra.mxu0 %v1699
  %1706 = vmatprep.subr.mxu0 0.0
  %1707 = vmatpush1.msra.mxu0 0.0
  %1708 = vmatprep.subr.mxu0 0.0
  %1709 = vmatpush1.msra.mxu0 0.0
  %1710 = vmatprep.subr.mxu0 0.0
  %1711 = vmatpush1.msra.mxu0 0.0
  %1712 = vmatprep.subr.mxu0 0.0
  %1713 = vmatpush1.msra.mxu0 0.0
  %1714 = vmatprep.subr.mxu0 0.0
  %1715 = vmatpush1.msra.mxu0 0.0
  %1716 = vmatprep.subr.mxu0 0.0
  %1717 = vmatpush1.msra.mxu0 0.0
  %1718 = vmatprep.subr.mxu0 0.0
  %1719 = vmatpush1.msra.mxu0 0.0
  %1720 = vmatprep.subr.mxu0 0.0
  %1721 = vmatpush1.msra.mxu0 0.0
  %1722 = vmatprep.subr.mxu0 0.0
  %1723 = vmatpush1.msra.mxu0 0.0
  %1724 = vmatprep.subr.mxu0 0.0
  %1725 = vmatpush1.msra.mxu0 0.0
  %1726 = vmatprep.subr.mxu0 0.0
  %1727 = vmatpush1.msra.mxu0 0.0
  %1728 = vmatprep.subr.mxu0 0.0
  %1729 = vmatpush1.msra.mxu0 0.0
  %1730 = vmatprep.subr.mxu0 0.0
  %1731 = vmatpush1.msra.mxu0 0.0
  %1732 = vmatprep.subr.mxu0 0.0
  %1733 = vmatpush1.msra.mxu0 0.0
  %1734 = vmatprep.subr.mxu0 0.0
  %1735 = vmatpush1.msra.mxu0 0.0
  %1736 = vmatprep.subr.mxu0 0.0
  %1737 = vmatpush1.msra.mxu0 0.0
  %1738 = vmatprep.subr.mxu0 0.0
  %1739 = vmatpush1.msra.mxu0 0.0
  %1740 = vmatprep.subr.mxu0 0.0
  %1741 = vmatpush1.msra.mxu0 0.0
  %1742 = vmatprep.subr.mxu0 0.0
  %1743 = vmatpush1.msra.mxu0 0.0
  %1744 = vmatprep.subr.mxu0 0.0
  %1745 = vmatpush1.msra.mxu0 0.0
  %1746 = vmatprep.subr.mxu0 0.0
  %1747 = vmatpush1.msra.mxu0 0.0
  %1748 = vmatprep.subr.mxu0 0.0
  %1749 = vmatpush1.msra.mxu0 0.0
  %1750 = vmatprep.subr.mxu0 0.0
  %1751 = vmatpush1.msra.mxu0 0.0
  %1752 = vmatprep.subr.mxu0 0.0
  %1753 = vmatpush1.msra.mxu0 0.0
  %1754 = vmatprep.subr.mxu0 0.0
  %1755 = vmatpush1.msra.mxu0 0.0
  %1756 = vmatprep.subr.mxu0 0.0
  %1757 = vmatpush1.msra.mxu0 0.0
  %1758 = vmatprep.subr.mxu0 0.0
  %1759 = vmatpush1.msra.mxu0 0.0
  %1760 = vmatprep.subr.mxu0 0.0
  %1761 = vmatpush1.msra.mxu0 0.0
  %1762 = vmatprep.subr.mxu0 0.0
  %1763 = vmatpush1.msra.mxu0 0.0
  %1764 = vmatprep.subr.mxu0 0.0
  %1765 = vmatpush1.msra.mxu0 0.0
  %1766 = vmatprep.subr.mxu0 0.0
  %1767 = vmatpush1.msra.mxu0 0.0
  %1768 = vmatprep.mubr.f32.mxu0 0.0
  %1769 = vmatmul.mubr.f32.gmra.mrb[0].mxu0 %v1702
  %v1770 = vpop.f32.mrb[0].mxu0
  %v1771 = vadd.f32 0.0, %v1770
  %v1772 = vpop.f32.mrb[0].mxu0
  %1773 = vdwg.mxu0
  %v1775 = vsel %vm693, %v1698, 0
  %1777 = vmatprep.subr.mxu0 0.0
  %1778 = vmatpush1.msra.mxu0 %v1700
  %1779 = vmatprep.subr.mxu0 0.0
  %1780 = vmatpush1.msra.mxu0 0.0
  %1781 = vmatprep.subr.mxu0 0.0
  %1782 = vmatpush1.msra.mxu0 0.0
  %1783 = vmatprep.subr.mxu0 0.0
  %1784 = vmatpush1.msra.mxu0 0.0
  %1785 = vmatprep.subr.mxu0 0.0
  %1786 = vmatpush1.msra.mxu0 0.0
  %1787 = vmatprep.subr.mxu0 0.0
  %1788 = vmatpush1.msra.mxu0 0.0
  %1789 = vmatprep.subr.mxu0 0.0
  %1790 = vmatpush1.msra.mxu0 0.0
  %1791 = vmatprep.subr.mxu0 0.0
  %1792 = vmatpush1.msra.mxu0 0.0
  %1793 = vmatprep.subr.mxu0 0.0
  %1794 = vmatpush1.msra.mxu0 0.0
  %1795 = vmatprep.subr.mxu0 0.0
  %1796 = vmatpush1.msra.mxu0 0.0
  %1797 = vmatprep.subr.mxu0 0.0
  %1798 = vmatpush1.msra.mxu0 0.0
  %1799 = vmatprep.subr.mxu0 0.0
  %1800 = vmatpush1.msra.mxu0 0.0
  %1801 = vmatprep.subr.mxu0 0.0
  %1802 = vmatpush1.msra.mxu0 0.0
  %1803 = vmatprep.subr.mxu0 0.0
  %1804 = vmatpush1.msra.mxu0 0.0
  %1805 = vmatprep.subr.mxu0 0.0
  %1806 = vmatpush1.msra.mxu0 0.0
  %1807 = vmatprep.subr.mxu0 0.0
  %1808 = vmatpush1.msra.mxu0 0.0
  %1809 = vmatprep.subr.mxu0 0.0
  %1810 = vmatpush1.msra.mxu0 0.0
  %1811 = vmatprep.subr.mxu0 0.0
  %1812 = vmatpush1.msra.mxu0 0.0
  %1813 = vmatprep.subr.mxu0 0.0
  %1814 = vmatpush1.msra.mxu0 0.0
  %1815 = vmatprep.subr.mxu0 0.0
  %1816 = vmatpush1.msra.mxu0 0.0
  %1817 = vmatprep.subr.mxu0 0.0
  %1818 = vmatpush1.msra.mxu0 0.0
  %1819 = vmatprep.subr.mxu0 0.0
  %1820 = vmatpush1.msra.mxu0 0.0
  %1821 = vmatprep.subr.mxu0 0.0
  %1822 = vmatpush1.msra.mxu0 0.0
  %1823 = vmatprep.subr.mxu0 0.0
  %1824 = vmatpush1.msra.mxu0 0.0
  %1825 = vmatprep.subr.mxu0 0.0
  %1826 = vmatpush1.msra.mxu0 0.0
  %1827 = vmatprep.subr.mxu0 0.0
  %1828 = vmatpush1.msra.mxu0 0.0
  %1829 = vmatprep.subr.mxu0 0.0
  %1830 = vmatpush1.msra.mxu0 0.0
  %1831 = vmatprep.subr.mxu0 0.0
  %1832 = vmatpush1.msra.mxu0 0.0
  %1833 = vmatprep.subr.mxu0 0.0
  %1834 = vmatpush1.msra.mxu0 0.0
  %1835 = vmatprep.subr.mxu0 0.0
  %1836 = vmatpush1.msra.mxu0 0.0
  %1837 = vmatprep.subr.mxu0 0.0
  %1838 = vmatpush1.msra.mxu0 0.0
  %1839 = vmatprep.subr.mxu0 0.0
  %1840 = vmatpush1.msra.mxu0 0.0
  %1841 = vmatprep.mubr.f32.mxu0 0.0
  %1842 = vmatmul.mubr.f32.gmra.mrb[0].mxu0 %v1775
  %v1843 = vpop.f32.mrb[0].mxu0
  %v1844 = vadd.f32 0.0, %v1843
  %v1845 = vpop.f32.mrb[0].mxu0
  %1846 = vdwg.mxu0
  %v1847 = vadd.f32 %v1518, %v1771
  %v1848 = vadd.f32 %v1519, %v1844
  %v1849 = vld [vmem:[%s17] sm:$0xff]
  %v1850 = vld [vmem:[%s17 + $0x8] sm:$0xff]
  %v1851 = vld [vmem:[%s17 + $0x10] sm:$0xff]
  %v1852 = vld [vmem:[%s17 + $0x18] sm:$0xff]
  %v1853 = vld [vmem:[%s19] sm:$0x1]
  %v1855 = vlaneseq
  %v1856 = vshrl.u32 %v1855, 7
  %v1857 = vsub.s32 0, %v1856
  %v1858 = vrot.slane %v1853, %v1857
  %v1861 = vsel %vm276, %v1847, 0
  %v1864 = vsel %vm276, %v1848, 0
  %1866 = vmatprep.subr.mxu0 0.0
  %1867 = vmatpush1.msra.mxu0 %v1849
  %1868 = vmatprep.subr.mxu0 0.0
  %1869 = vmatpush1.msra.mxu0 %v1850
  %1870 = vmatprep.subr.mxu0 0.0
  %1871 = vmatpush1.msra.mxu0 %v1851
  %1872 = vmatprep.subr.mxu0 0.0
  %1873 = vmatpush1.msra.mxu0 %v1852
  %1874 = vmatprep.subr.mxu0 0.0
  %1875 = vmatpush1.msra.mxu0 0.0
  %1876 = vmatprep.subr.mxu0 0.0
  %1877 = vmatpush1.msra.mxu0 0.0
  %1878 = vmatprep.subr.mxu0 0.0
  %1879 = vmatpush1.msra.mxu0 0.0
  %1880 = vmatprep.subr.mxu0 0.0
  %1881 = vmatpush1.msra.mxu0 0.0
  %1882 = vmatprep.subr.mxu0 0.0
  %1883 = vmatpush1.msra.mxu0 0.0
  %1884 = vmatprep.subr.mxu0 0.0
  %1885 = vmatpush1.msra.mxu0 0.0
  %1886 = vmatprep.subr.mxu0 0.0
  %1887 = vmatpush1.msra.mxu0 0.0
  %1888 = vmatprep.subr.mxu0 0.0
  %1889 = vmatpush1.msra.mxu0 0.0
  %1890 = vmatprep.subr.mxu0 0.0
  %1891 = vmatpush1.msra.mxu0 0.0
  %1892 = vmatprep.subr.mxu0 0.0
  %1893 = vmatpush1.msra.mxu0 0.0
  %1894 = vmatprep.subr.mxu0 0.0
  %1895 = vmatpush1.msra.mxu0 0.0
  %1896 = vmatprep.subr.mxu0 0.0
  %1897 = vmatpush1.msra.mxu0 0.0
  %1898 = vmatprep.subr.mxu0 0.0
  %1899 = vmatpush1.msra.mxu0 0.0
  %1900 = vmatprep.subr.mxu0 0.0
  %1901 = vmatpush1.msra.mxu0 0.0
  %1902 = vmatprep.subr.mxu0 0.0
  %1903 = vmatpush1.msra.mxu0 0.0
  %1904 = vmatprep.subr.mxu0 0.0
  %1905 = vmatpush1.msra.mxu0 0.0
  %1906 = vmatprep.subr.mxu0 0.0
  %1907 = vmatpush1.msra.mxu0 0.0
  %1908 = vmatprep.subr.mxu0 0.0
  %1909 = vmatpush1.msra.mxu0 0.0
  %1910 = vmatprep.subr.mxu0 0.0
  %1911 = vmatpush1.msra.mxu0 0.0
  %1912 = vmatprep.subr.mxu0 0.0
  %1913 = vmatpush1.msra.mxu0 0.0
  %1914 = vmatprep.subr.mxu0 0.0
  %1915 = vmatpush1.msra.mxu0 0.0
  %1916 = vmatprep.subr.mxu0 0.0
  %1917 = vmatpush1.msra.mxu0 0.0
  %1918 = vmatprep.subr.mxu0 0.0
  %1919 = vmatpush1.msra.mxu0 0.0
  %1920 = vmatprep.subr.mxu0 0.0
  %1921 = vmatpush1.msra.mxu0 0.0
  %1922 = vmatprep.subr.mxu0 0.0
  %1923 = vmatpush1.msra.mxu0 0.0
  %1924 = vmatprep.subr.mxu0 0.0
  %1925 = vmatpush1.msra.mxu0 0.0
  %1926 = vmatprep.subr.mxu0 0.0
  %1927 = vmatpush1.msra.mxu0 0.0
  %1928 = vmatprep.subr.mxu0 0.0
  %1929 = vmatpush1.msra.mxu0 0.0
  %1930 = vmatprep.mubr.f32.mxu0 0.0
  %1931 = vmatmul.mubr.f32.gmra.mrb[0].mxu0 %v1861
  %v1932 = vpop.f32.mrb[0].mxu0
  %v1933 = vadd.f32 %v1858, %v1932
  %v1934 = vpop.f32.mrb[0].mxu0
  %1935 = vmatprep.mubr.f32.mxu0 0.0
  %1936 = vmatmul.mubr.f32.gmra.mrb[0].mxu0 %v1864
  %v1937 = vpop.f32.mrb[0].mxu0
  %v1938 = vadd.f32 %v1858, %v1937
  %v1939 = vpop.f32.mrb[0].mxu0
  %1940 = vdwg.mxu0
  %v1941 = vadd.f32 %v259, %v1933
  %v1942 = vadd.f32 %v260, %v1938
  %v1943 = vld [vmem:[%s21] sm:$0x1]
  %v1944 = vld [vmem:[%s23] sm:$0x1]
  %v1945 = vsel %vm276, %v1941, 0.0
  %1946 = vadd.xlane.f32.xlu0 %v1945
  %v1947 = vpop.xlane.xlu0 %1946
  %v1948 = vsel %vm276, %v1942, 0.0
  %1949 = vadd.xlane.f32.xlu0 %v1948
  %v1950 = vpop.xlane.xlu0 %1949
  %v1951 = vrcp.pop 32.0
  %v1952 = vmul.f32 %v1947, %v1951
  %v1953 = vmul.f32 %v1950, %v1951
  %v1954 = vsub.f32 %v1941, %v1952
  %v1955 = vsub.f32 %v1942, %v1953
  %v1956 = vmul.f32 %v1954, %v1954
  %v1957 = vmul.f32 %v1955, %v1955
  %v1958 = vsel %vm276, %v1956, 0.0
  %1959 = vadd.xlane.f32.xlu0 %v1958
  %v1960 = vpop.xlane.xlu0 %1959
  %v1961 = vsel %vm276, %v1957, 0.0
  %1962 = vadd.xlane.f32.xlu0 %v1961
  %v1963 = vpop.xlane.xlu0 %1962
  %v1964 = vmul.f32 %v1960, %v1951
  %v1965 = vmul.f32 %v1963, %v1951
  %v1966 = vadd.f32 %v1964, 1e-05
  %v1967 = vadd.f32 %v1965, 1e-05
  %v1968 = vrsqrt.pop %v1966
  %v1969 = vrsqrt.pop %v1967
  %v1970 = vmul.f32 %v1954, %v1968
  %v1971 = vmul.f32 %v1955, %v1969
  %v1973 = vlaneseq
  %v1974 = vshrl.u32 %v1973, 7
  %v1975 = vsub.s32 0, %v1974
  %v1976 = vrot.slane %v1943, %v1975
  %v1978 = vmul.f32 %v1970, %v1976
  %v1979 = vmul.f32 %v1971, %v1976
  %v1981 = vlaneseq
  %v1982 = vshrl.u32 %v1981, 7
  %v1983 = vsub.s32 0, %v1982
  %v1984 = vrot.slane %v1944, %v1983
  %v1986 = vadd.f32 %v1978, %v1984
  %v1987 = vadd.f32 %v1979, %v1984
  %v1988 = vld [vmem:[%s29] sm:$0xff]
  %v1989 = vld [vmem:[%s29 + $0x8] sm:$0xff]
  %v1990 = vld [vmem:[%s29 + $0x10] sm:$0xff]
  %v1991 = vld [vmem:[%s29 + $0x18] sm:$0xff]
  %v1992 = vld [vmem:[%s29 + $0x20] sm:$0xff]
  %v1993 = vld [vmem:[%s29 + $0x28] sm:$0xff]
  %v1994 = vld [vmem:[%s29 + $0x30] sm:$0xff]
  %v1995 = vld [vmem:[%s29 + $0x38] sm:$0xff]
  %v1996 = vld [vmem:[%s29 + $0x40] sm:$0xff]
  %v1997 = vld [vmem:[%s29 + $0x48] sm:$0xff]
  %v1998 = vld [vmem:[%s29 + $0x50] sm:$0xff]
  %v1999 = vld [vmem:[%s29 + $0x58] sm:$0xff]
  %v2000 = vld [vmem:[%s29 + $0x60] sm:$0xff]
  %v2001 = vld [vmem:[%s29 + $0x68] sm:$0xff]
  %v2002 = vld [vmem:[%s29 + $0x70] sm:$0xff]
  %v2003 = vld [vmem:[%s29 + $0x78] sm:$0xff]
  %v2004 = vld [vmem:[%s29 + $0x80] sm:$0xff]
  %v2005 = vld [vmem:[%s29 + $0x88] sm:$0xff]
  %v2006 = vld [vmem:[%s29 + $0x90] sm:$0xff]
  %v2007 = vld [vmem:[%s29 + $0x98] sm:$0xff]
  %v2008 = vld [vmem:[%s29 + $0xa0] sm:$0xff]
  %v2009 = vld [vmem:[%s29 + $0xa8] sm:$0xff]
  %v2010 = vld [vmem:[%s29 + $0xb0] sm:$0xff]
  %v2011 = vld [vmem:[%s29 + $0xb8] sm:$0xff]
  %v2012 = vld [vmem:[%s29 + $0xc0] sm:$0xff]
  %v2013 = vld [vmem:[%s29 + $0xc8] sm:$0xff]
  %v2014 = vld [vmem:[%s29 + $0xd0] sm:$0xff]
  %v2015 = vld [vmem:[%s29 + $0xd8] sm:$0xff]
  %v2016 = vld [vmem:[%s29 + $0xe0] sm:$0xff]
  %v2017 = vld [vmem:[%s29 + $0xe8] sm:$0xff]
  %v2018 = vld [vmem:[%s29 + $0xf0] sm:$0xff]
  %v2019 = vld [vmem:[%s29 + $0xf8] sm:$0xff]
  %v2020 = vld [vmem:[%s29 + $0x100] sm:$0xff]
  %v2021 = vld [vmem:[%s29 + $0x108] sm:$0xff]
  %v2022 = vld [vmem:[%s29 + $0x110] sm:$0xff]
  %v2023 = vld [vmem:[%s29 + $0x118] sm:$0xff]
  %v2024 = vld [vmem:[%s29 + $0x120] sm:$0xff]
  %v2025 = vld [vmem:[%s29 + $0x128] sm:$0xff]
  %v2026 = vld [vmem:[%s29 + $0x130] sm:$0xff]
  %v2027 = vld [vmem:[%s29 + $0x138] sm:$0xff]
  %v2028 = vld [vmem:[%s29 + $0x140] sm:$0xff]
  %v2029 = vld [vmem:[%s29 + $0x148] sm:$0xff]
  %v2030 = vld [vmem:[%s29 + $0x150] sm:$0xff]
  %v2031 = vld [vmem:[%s29 + $0x158] sm:$0xff]
  %v2032 = vld [vmem:[%s29 + $0x160] sm:$0xff]
  %v2033 = vld [vmem:[%s29 + $0x168] sm:$0xff]
  %v2034 = vld [vmem:[%s29 + $0x170] sm:$0xff]
  %v2035 = vld [vmem:[%s29 + $0x178] sm:$0xff]
  %v2036 = vld [vmem:[%s29 + $0x180] sm:$0xff]
  %v2037 = vld [vmem:[%s29 + $0x188] sm:$0xff]
  %v2038 = vld [vmem:[%s29 + $0x190] sm:$0xff]
  %v2039 = vld [vmem:[%s29 + $0x198] sm:$0xff]
  %v2040 = vld [vmem:[%s29 + $0x1a0] sm:$0xff]
  %v2041 = vld [vmem:[%s29 + $0x1a8] sm:$0xff]
  %v2042 = vld [vmem:[%s29 + $0x1b0] sm:$0xff]
  %v2043 = vld [vmem:[%s29 + $0x1b8] sm:$0xff]
  %v2044 = vld [vmem:[%s29 + $0x1c0] sm:$0xff]
  %v2045 = vld [vmem:[%s29 + $0x1c8] sm:$0xff]
  %v2046 = vld [vmem:[%s29 + $0x1d0] sm:$0xff]
  %v2047 = vld [vmem:[%s29 + $0x1d8] sm:$0xff]
  %v2048 = vld [vmem:[%s29 + $0x1e0] sm:$0xff]
  %v2049 = vld [vmem:[%s29 + $0x1e8] sm:$0xff]
  %v2050 = vld [vmem:[%s29 + $0x1f0] sm:$0xff]
  %v2051 = vld [vmem:[%s29 + $0x1f8] sm:$0xff]
  %v2052 = vld [vmem:[%s31] sm:$0xff]
  %v2053 = vld [vmem:[%s31 + $0x8] sm:$0xff]
  %v2056 = vlaneseq
  %v2057 = vshrl.u32 %v2056, 7
  %v2058 = vsub.s32 0, %v2057
  %v2059 = vrot.slane %v2052, %v2058
  %v2060 = vlaneseq
  %v2061 = vshrl.u32 %v2060, 7
  %v2062 = vsub.s32 1, %v2061
  %v2063 = vrot.slane %v2052, %v2062
  %v2064 = vlaneseq
  %v2065 = vshrl.u32 %v2064, 7
  %v2066 = vsub.s32 2, %v2065
  %v2067 = vrot.slane %v2052, %v2066
  %v2068 = vlaneseq
  %v2069 = vshrl.u32 %v2068, 7
  %v2070 = vsub.s32 3, %v2069
  %v2071 = vrot.slane %v2052, %v2070
  %v2072 = vlaneseq
  %v2073 = vshrl.u32 %v2072, 7
  %v2074 = vsub.s32 4, %v2073
  %v2075 = vrot.slane %v2052, %v2074
  %v2076 = vlaneseq
  %v2077 = vshrl.u32 %v2076, 7
  %v2078 = vsub.s32 5, %v2077
  %v2079 = vrot.slane %v2052, %v2078
  %v2080 = vlaneseq
  %v2081 = vshrl.u32 %v2080, 7
  %v2082 = vsub.s32 6, %v2081
  %v2083 = vrot.slane %v2052, %v2082
  %v2084 = vlaneseq
  %v2085 = vshrl.u32 %v2084, 7
  %v2086 = vsub.s32 7, %v2085
  %v2087 = vrot.slane %v2052, %v2086
  %v2088 = vlaneseq
  %v2089 = vshrl.u32 %v2088, 7
  %v2090 = vsub.s32 0, %v2089
  %v2091 = vrot.slane %v2053, %v2090
  %v2092 = vlaneseq
  %v2093 = vshrl.u32 %v2092, 7
  %v2094 = vsub.s32 1, %v2093
  %v2095 = vrot.slane %v2053, %v2094
  %v2096 = vlaneseq
  %v2097 = vshrl.u32 %v2096, 7
  %v2098 = vsub.s32 2, %v2097
  %v2099 = vrot.slane %v2053, %v2098
  %v2100 = vlaneseq
  %v2101 = vshrl.u32 %v2100, 7
  %v2102 = vsub.s32 3, %v2101
  %v2103 = vrot.slane %v2053, %v2102
  %v2104 = vlaneseq
  %v2105 = vshrl.u32 %v2104, 7
  %v2106 = vsub.s32 4, %v2105
  %v2107 = vrot.slane %v2053, %v2106
  %v2108 = vlaneseq
  %v2109 = vshrl.u32 %v2108, 7
  %v2110 = vsub.s32 5, %v2109
  %v2111 = vrot.slane %v2053, %v2110
  %v2112 = vlaneseq
  %v2113 = vshrl.u32 %v2112, 7
  %v2114 = vsub.s32 6, %v2113
  %v2115 = vrot.slane %v2053, %v2114
  %v2116 = vlaneseq
  %v2117 = vshrl.u32 %v2116, 7
  %v2118 = vsub.s32 7, %v2117
  %v2119 = vrot.slane %v2053, %v2118
  %v2137 = vsel %vm276, %v1986, 0
  %v2140 = vsel %vm276, %v1987, 0
  %2142 = vmatprep.subr.mxu0 %v1989
  %2143 = vmatpush1.msra.mxu0 %v1988
  %2144 = vmatprep.subr.mxu0 %v2005
  %2145 = vmatpush1.msra.mxu0 %v2004
  %2146 = vmatprep.subr.mxu0 %v2021
  %2147 = vmatpush1.msra.mxu0 %v2020
  %2148 = vmatprep.subr.mxu0 %v2037
  %2149 = vmatpush1.msra.mxu0 %v2036
  %2150 = vmatprep.subr.mxu0 0.0
  %2151 = vmatpush1.msra.mxu0 0.0
  %2152 = vmatprep.subr.mxu0 0.0
  %2153 = vmatpush1.msra.mxu0 0.0
  %2154 = vmatprep.subr.mxu0 0.0
  %2155 = vmatpush1.msra.mxu0 0.0
  %2156 = vmatprep.subr.mxu0 0.0
  %2157 = vmatpush1.msra.mxu0 0.0
  %2158 = vmatprep.subr.mxu0 0.0
  %2159 = vmatpush1.msra.mxu0 0.0
  %2160 = vmatprep.subr.mxu0 0.0
  %2161 = vmatpush1.msra.mxu0 0.0
  %2162 = vmatprep.subr.mxu0 0.0
  %2163 = vmatpush1.msra.mxu0 0.0
  %2164 = vmatprep.subr.mxu0 0.0
  %2165 = vmatpush1.msra.mxu0 0.0
  %2166 = vmatprep.subr.mxu0 0.0
  %2167 = vmatpush1.msra.mxu0 0.0
  %2168 = vmatprep.subr.mxu0 0.0
  %2169 = vmatpush1.msra.mxu0 0.0
  %2170 = vmatprep.subr.mxu0 0.0
  %2171 = vmatpush1.msra.mxu0 0.0
  %2172 = vmatprep.subr.mxu0 0.0
  %2173 = vmatpush1.msra.mxu0 0.0
  %2174 = vmatprep.subr.mxu0 0.0
  %2175 = vmatpush1.msra.mxu0 0.0
  %2176 = vmatprep.subr.mxu0 0.0
  %2177 = vmatpush1.msra.mxu0 0.0
  %2178 = vmatprep.subr.mxu0 0.0
  %2179 = vmatpush1.msra.mxu0 0.0
  %2180 = vmatprep.subr.mxu0 0.0
  %2181 = vmatpush1.msra.mxu0 0.0
  %2182 = vmatprep.subr.mxu0 0.0
  %2183 = vmatpush1.msra.mxu0 0.0
  %2184 = vmatprep.subr.mxu0 0.0
  %2185 = vmatpush1.msra.mxu0 0.0
  %2186 = vmatprep.subr.mxu0 0.0
  %2187 = vmatpush1.msra.mxu0 0.0
  %2188 = vmatprep.subr.mxu0 0.0
  %2189 = vmatpush1.msra.mxu0 0.0
  %2190 = vmatprep.subr.mxu0 0.0
  %2191 = vmatpush1.msra.mxu0 0.0
  %2192 = vmatprep.subr.mxu0 0.0
  %2193 = vmatpush1.msra.mxu0 0.0
  %2194 = vmatprep.subr.mxu0 0.0
  %2195 = vmatpush1.msra.mxu0 0.0
  %2196 = vmatprep.subr.mxu0 0.0
  %2197 = vmatpush1.msra.mxu0 0.0
  %2198 = vmatprep.subr.mxu0 0.0
  %2199 = vmatpush1.msra.mxu0 0.0
  %2200 = vmatprep.subr.mxu0 0.0
  %2201 = vmatpush1.msra.mxu0 0.0
  %2202 = vmatprep.subr.mxu0 0.0
  %2203 = vmatpush1.msra.mxu0 0.0
  %2204 = vmatprep.subr.mxu0 0.0
  %2205 = vmatpush1.msra.mxu0 0.0
  %2206 = vmatprep.mubr.f32.mxu0 0.0
  %2207 = vmatmul.mubr.f32.gmra.mrb[0].mxu0 %v2137
  %v2208 = vpop.f32.mrb[0].mxu0
  %v2209 = vadd.f32 %v2059, %v2208
  %v2210 = vpop.f32.mrb[0].mxu0
  %v2211 = vadd.f32 %v2063, %v2210
  %2212 = vmatprep.mubr.f32.mxu0 0.0
  %2213 = vmatmul.mubr.f32.gmra.mrb[0].mxu0 %v2140
  %v2214 = vpop.f32.mrb[0].mxu0
  %v2215 = vadd.f32 %v2059, %v2214
  %v2216 = vpop.f32.mrb[0].mxu0
  %v2217 = vadd.f32 %v2063, %v2216
  %2218 = vdwg.mxu0
  %2219 = vmatprep.subr.mxu0 %v1991
  %2220 = vmatpush1.msra.mxu0 %v1990
  %2221 = vmatprep.subr.mxu0 %v2007
  %2222 = vmatpush1.msra.mxu0 %v2006
  %2223 = vmatprep.subr.mxu0 %v2023
  %2224 = vmatpush1.msra.mxu0 %v2022
  %2225 = vmatprep.subr.mxu0 %v2039
  %2226 = vmatpush1.msra.mxu0 %v2038
  %2227 = vmatprep.subr.mxu0 0.0
  %2228 = vmatpush1.msra.mxu0 0.0
  %2229 = vmatprep.subr.mxu0 0.0
  %2230 = vmatpush1.msra.mxu0 0.0
  %2231 = vmatprep.subr.mxu0 0.0
  %2232 = vmatpush1.msra.mxu0 0.0
  %2233 = vmatprep.subr.mxu0 0.0
  %2234 = vmatpush1.msra.mxu0 0.0
  %2235 = vmatprep.subr.mxu0 0.0
  %2236 = vmatpush1.msra.mxu0 0.0
  %2237 = vmatprep.subr.mxu0 0.0
  %2238 = vmatpush1.msra.mxu0 0.0
  %2239 = vmatprep.subr.mxu0 0.0
  %2240 = vmatpush1.msra.mxu0 0.0
  %2241 = vmatprep.subr.mxu0 0.0
  %2242 = vmatpush1.msra.mxu0 0.0
  %2243 = vmatprep.subr.mxu0 0.0
  %2244 = vmatpush1.msra.mxu0 0.0
  %2245 = vmatprep.subr.mxu0 0.0
  %2246 = vmatpush1.msra.mxu0 0.0
  %2247 = vmatprep.subr.mxu0 0.0
  %2248 = vmatpush1.msra.mxu0 0.0
  %2249 = vmatprep.subr.mxu0 0.0
  %2250 = vmatpush1.msra.mxu0 0.0
  %2251 = vmatprep.subr.mxu0 0.0
  %2252 = vmatpush1.msra.mxu0 0.0
  %2253 = vmatprep.subr.mxu0 0.0
  %2254 = vmatpush1.msra.mxu0 0.0
  %2255 = vmatprep.subr.mxu0 0.0
  %2256 = vmatpush1.msra.mxu0 0.0
  %2257 = vmatprep.subr.mxu0 0.0
  %2258 = vmatpush1.msra.mxu0 0.0
  %2259 = vmatprep.subr.mxu0 0.0
  %2260 = vmatpush1.msra.mxu0 0.0
  %2261 = vmatprep.subr.mxu0 0.0
  %2262 = vmatpush1.msra.mxu0 0.0
  %2263 = vmatprep.subr.mxu0 0.0
  %2264 = vmatpush1.msra.mxu0 0.0
  %2265 = vmatprep.subr.mxu0 0.0
  %2266 = vmatpush1.msra.mxu0 0.0
  %2267 = vmatprep.subr.mxu0 0.0
  %2268 = vmatpush1.msra.mxu0 0.0
  %2269 = vmatprep.subr.mxu0 0.0
  %2270 = vmatpush1.msra.mxu0 0.0
  %2271 = vmatprep.subr.mxu0 0.0
  %2272 = vmatpush1.msra.mxu0 0.0
  %2273 = vmatprep.subr.mxu0 0.0
  %2274 = vmatpush1.msra.mxu0 0.0
  %2275 = vmatprep.subr.mxu0 0.0
  %2276 = vmatpush1.msra.mxu0 0.0
  %2277 = vmatprep.subr.mxu0 0.0
  %2278 = vmatpush1.msra.mxu0 0.0
  %2279 = vmatprep.subr.mxu0 0.0
  %2280 = vmatpush1.msra.mxu0 0.0
  %2281 = vmatprep.subr.mxu0 0.0
  %2282 = vmatpush1.msra.mxu0 0.0
  %2283 = vmatprep.mubr.f32.mxu0 0.0
  %2284 = vmatmul.mubr.f32.gmra.mrb[0].mxu0 %v2137
  %v2285 = vpop.f32.mrb[0].mxu0
  %v2286 = vadd.f32 %v2067, %v2285
  %v2287 = vpop.f32.mrb[0].mxu0
  %v2288 = vadd.f32 %v2071, %v2287
  %2289 = vmatprep.mubr.f32.mxu0 0.0
  %2290 = vmatmul.mubr.f32.gmra.mrb[0].mxu0 %v2140
  %v2291 = vpop.f32.mrb[0].mxu0
  %v2292 = vadd.f32 %v2067, %v2291
  %v2293 = vpop.f32.mrb[0].mxu0
  %v2294 = vadd.f32 %v2071, %v2293
  %2295 = vdwg.mxu0
  %2296 = vmatprep.subr.mxu0 %v1993
  %2297 = vmatpush1.msra.mxu0 %v1992
  %2298 = vmatprep.subr.mxu0 %v2009
  %2299 = vmatpush1.msra.mxu0 %v2008
  %2300 = vmatprep.subr.mxu0 %v2025
  %2301 = vmatpush1.msra.mxu0 %v2024
  %2302 = vmatprep.subr.mxu0 %v2041
  %2303 = vmatpush1.msra.mxu0 %v2040
  %2304 = vmatprep.subr.mxu0 0.0
  %2305 = vmatpush1.msra.mxu0 0.0
  %2306 = vmatprep.subr.mxu0 0.0
  %2307 = vmatpush1.msra.mxu0 0.0
  %2308 = vmatprep.subr.mxu0 0.0
  %2309 = vmatpush1.msra.mxu0 0.0
  %2310 = vmatprep.subr.mxu0 0.0
  %2311 = vmatpush1.msra.mxu0 0.0
  %2312 = vmatprep.subr.mxu0 0.0
  %2313 = vmatpush1.msra.mxu0 0.0
  %2314 = vmatprep.subr.mxu0 0.0
  %2315 = vmatpush1.msra.mxu0 0.0
  %2316 = vmatprep.subr.mxu0 0.0
  %2317 = vmatpush1.msra.mxu0 0.0
  %2318 = vmatprep.subr.mxu0 0.0
  %2319 = vmatpush1.msra.mxu0 0.0
  %2320 = vmatprep.subr.mxu0 0.0
  %2321 = vmatpush1.msra.mxu0 0.0
  %2322 = vmatprep.subr.mxu0 0.0
  %2323 = vmatpush1.msra.mxu0 0.0
  %2324 = vmatprep.subr.mxu0 0.0
  %2325 = vmatpush1.msra.mxu0 0.0
  %2326 = vmatprep.subr.mxu0 0.0
  %2327 = vmatpush1.msra.mxu0 0.0
  %2328 = vmatprep.subr.mxu0 0.0
  %2329 = vmatpush1.msra.mxu0 0.0
  %2330 = vmatprep.subr.mxu0 0.0
  %2331 = vmatpush1.msra.mxu0 0.0
  %2332 = vmatprep.subr.mxu0 0.0
  %2333 = vmatpush1.msra.mxu0 0.0
  %2334 = vmatprep.subr.mxu0 0.0
  %2335 = vmatpush1.msra.mxu0 0.0
  %2336 = vmatprep.subr.mxu0 0.0
  %2337 = vmatpush1.msra.mxu0 0.0
  %2338 = vmatprep.subr.mxu0 0.0
  %2339 = vmatpush1.msra.mxu0 0.0
  %2340 = vmatprep.subr.mxu0 0.0
  %2341 = vmatpush1.msra.mxu0 0.0
  %2342 = vmatprep.subr.mxu0 0.0
  %2343 = vmatpush1.msra.mxu0 0.0
  %2344 = vmatprep.subr.mxu0 0.0
  %2345 = vmatpush1.msra.mxu0 0.0
  %2346 = vmatprep.subr.mxu0 0.0
  %2347 = vmatpush1.msra.mxu0 0.0
  %2348 = vmatprep.subr.mxu0 0.0
  %2349 = vmatpush1.msra.mxu0 0.0
  %2350 = vmatprep.subr.mxu0 0.0
  %2351 = vmatpush1.msra.mxu0 0.0
  %2352 = vmatprep.subr.mxu0 0.0
  %2353 = vmatpush1.msra.mxu0 0.0
  %2354 = vmatprep.subr.mxu0 0.0
  %2355 = vmatpush1.msra.mxu0 0.0
  %2356 = vmatprep.subr.mxu0 0.0
  %2357 = vmatpush1.msra.mxu0 0.0
  %2358 = vmatprep.subr.mxu0 0.0
  %2359 = vmatpush1.msra.mxu0 0.0
  %2360 = vmatprep.mubr.f32.mxu0 0.0
  %2361 = vmatmul.mubr.f32.gmra.mrb[0].mxu0 %v2137
  %v2362 = vpop.f32.mrb[0].mxu0
  %v2363 = vadd.f32 %v2075, %v2362
  %v2364 = vpop.f32.mrb[0].mxu0
  %v2365 = vadd.f32 %v2079, %v2364
  %2366 = vmatprep.mubr.f32.mxu0 0.0
  %2367 = vmatmul.mubr.f32.gmra.mrb[0].mxu0 %v2140
  %v2368 = vpop.f32.mrb[0].mxu0
  %v2369 = vadd.f32 %v2075, %v2368
  %v2370 = vpop.f32.mrb[0].mxu0
  %v2371 = vadd.f32 %v2079, %v2370
  %2372 = vdwg.mxu0
  %2373 = vmatprep.subr.mxu0 %v1995
  %2374 = vmatpush1.msra.mxu0 %v1994
  %2375 = vmatprep.subr.mxu0 %v2011
  %2376 = vmatpush1.msra.mxu0 %v2010
  %2377 = vmatprep.subr.mxu0 %v2027
  %2378 = vmatpush1.msra.mxu0 %v2026
  %2379 = vmatprep.subr.mxu0 %v2043
  %2380 = vmatpush1.msra.mxu0 %v2042
  %2381 = vmatprep.subr.mxu0 0.0
  %2382 = vmatpush1.msra.mxu0 0.0
  %2383 = vmatprep.subr.mxu0 0.0
  %2384 = vmatpush1.msra.mxu0 0.0
  %2385 = vmatprep.subr.mxu0 0.0
  %2386 = vmatpush1.msra.mxu0 0.0
  %2387 = vmatprep.subr.mxu0 0.0
  %2388 = vmatpush1.msra.mxu0 0.0
  %2389 = vmatprep.subr.mxu0 0.0
  %2390 = vmatpush1.msra.mxu0 0.0
  %2391 = vmatprep.subr.mxu0 0.0
  %2392 = vmatpush1.msra.mxu0 0.0
  %2393 = vmatprep.subr.mxu0 0.0
  %2394 = vmatpush1.msra.mxu0 0.0
  %2395 = vmatprep.subr.mxu0 0.0
  %2396 = vmatpush1.msra.mxu0 0.0
  %2397 = vmatprep.subr.mxu0 0.0
  %2398 = vmatpush1.msra.mxu0 0.0
  %2399 = vmatprep.subr.mxu0 0.0
  %2400 = vmatpush1.msra.mxu0 0.0
  %2401 = vmatprep.subr.mxu0 0.0
  %2402 = vmatpush1.msra.mxu0 0.0
  %2403 = vmatprep.subr.mxu0 0.0
  %2404 = vmatpush1.msra.mxu0 0.0
  %2405 = vmatprep.subr.mxu0 0.0
  %2406 = vmatpush1.msra.mxu0 0.0
  %2407 = vmatprep.subr.mxu0 0.0
  %2408 = vmatpush1.msra.mxu0 0.0
  %2409 = vmatprep.subr.mxu0 0.0
  %2410 = vmatpush1.msra.mxu0 0.0
  %2411 = vmatprep.subr.mxu0 0.0
  %2412 = vmatpush1.msra.mxu0 0.0
  %2413 = vmatprep.subr.mxu0 0.0
  %2414 = vmatpush1.msra.mxu0 0.0
  %2415 = vmatprep.subr.mxu0 0.0
  %2416 = vmatpush1.msra.mxu0 0.0
  %2417 = vmatprep.subr.mxu0 0.0
  %2418 = vmatpush1.msra.mxu0 0.0
  %2419 = vmatprep.subr.mxu0 0.0
  %2420 = vmatpush1.msra.mxu0 0.0
  %2421 = vmatprep.subr.mxu0 0.0
  %2422 = vmatpush1.msra.mxu0 0.0
  %2423 = vmatprep.subr.mxu0 0.0
  %2424 = vmatpush1.msra.mxu0 0.0
  %2425 = vmatprep.subr.mxu0 0.0
  %2426 = vmatpush1.msra.mxu0 0.0
  %2427 = vmatprep.subr.mxu0 0.0
  %2428 = vmatpush1.msra.mxu0 0.0
  %2429 = vmatprep.subr.mxu0 0.0
  %2430 = vmatpush1.msra.mxu0 0.0
  %2431 = vmatprep.subr.mxu0 0.0
  %2432 = vmatpush1.msra.mxu0 0.0
  %2433 = vmatprep.subr.mxu0 0.0
  %2434 = vmatpush1.msra.mxu0 0.0
  %2435 = vmatprep.subr.mxu0 0.0
  %2436 = vmatpush1.msra.mxu0 0.0
  %2437 = vmatprep.mubr.f32.mxu0 0.0
  %2438 = vmatmul.mubr.f32.gmra.mrb[0].mxu0 %v2137
  %v2439 = vpop.f32.mrb[0].mxu0
  %v2440 = vadd.f32 %v2083, %v2439
  %v2441 = vpop.f32.mrb[0].mxu0
  %v2442 = vadd.f32 %v2087, %v2441
  %2443 = vmatprep.mubr.f32.mxu0 0.0
  %2444 = vmatmul.mubr.f32.gmra.mrb[0].mxu0 %v2140
  %v2445 = vpop.f32.mrb[0].mxu0
  %v2446 = vadd.f32 %v2083, %v2445
  %v2447 = vpop.f32.mrb[0].mxu0
  %v2448 = vadd.f32 %v2087, %v2447
  %2449 = vdwg.mxu0
  %2450 = vmatprep.subr.mxu0 %v1997
  %2451 = vmatpush1.msra.mxu0 %v1996
  %2452 = vmatprep.subr.mxu0 %v2013
  %2453 = vmatpush1.msra.mxu0 %v2012
  %2454 = vmatprep.subr.mxu0 %v2029
  %2455 = vmatpush1.msra.mxu0 %v2028
  %2456 = vmatprep.subr.mxu0 %v2045
  %2457 = vmatpush1.msra.mxu0 %v2044
  %2458 = vmatprep.subr.mxu0 0.0
  %2459 = vmatpush1.msra.mxu0 0.0
  %2460 = vmatprep.subr.mxu0 0.0
  %2461 = vmatpush1.msra.mxu0 0.0
  %2462 = vmatprep.subr.mxu0 0.0
  %2463 = vmatpush1.msra.mxu0 0.0
  %2464 = vmatprep.subr.mxu0 0.0
  %2465 = vmatpush1.msra.mxu0 0.0
  %2466 = vmatprep.subr.mxu0 0.0
  %2467 = vmatpush1.msra.mxu0 0.0
  %2468 = vmatprep.subr.mxu0 0.0
  %2469 = vmatpush1.msra.mxu0 0.0
  %2470 = vmatprep.subr.mxu0 0.0
  %2471 = vmatpush1.msra.mxu0 0.0
  %2472 = vmatprep.subr.mxu0 0.0
  %2473 = vmatpush1.msra.mxu0 0.0
  %2474 = vmatprep.subr.mxu0 0.0
  %2475 = vmatpush1.msra.mxu0 0.0
  %2476 = vmatprep.subr.mxu0 0.0
  %2477 = vmatpush1.msra.mxu0 0.0
  %2478 = vmatprep.subr.mxu0 0.0
  %2479 = vmatpush1.msra.mxu0 0.0
  %2480 = vmatprep.subr.mxu0 0.0
  %2481 = vmatpush1.msra.mxu0 0.0
  %2482 = vmatprep.subr.mxu0 0.0
  %2483 = vmatpush1.msra.mxu0 0.0
  %2484 = vmatprep.subr.mxu0 0.0
  %2485 = vmatpush1.msra.mxu0 0.0
  %2486 = vmatprep.subr.mxu0 0.0
  %2487 = vmatpush1.msra.mxu0 0.0
  %2488 = vmatprep.subr.mxu0 0.0
  %2489 = vmatpush1.msra.mxu0 0.0
  %2490 = vmatprep.subr.mxu0 0.0
  %2491 = vmatpush1.msra.mxu0 0.0
  %2492 = vmatprep.subr.mxu0 0.0
  %2493 = vmatpush1.msra.mxu0 0.0
  %2494 = vmatprep.subr.mxu0 0.0
  %2495 = vmatpush1.msra.mxu0 0.0
  %2496 = vmatprep.subr.mxu0 0.0
  %2497 = vmatpush1.msra.mxu0 0.0
  %2498 = vmatprep.subr.mxu0 0.0
  %2499 = vmatpush1.msra.mxu0 0.0
  %2500 = vmatprep.subr.mxu0 0.0
  %2501 = vmatpush1.msra.mxu0 0.0
  %2502 = vmatprep.subr.mxu0 0.0
  %2503 = vmatpush1.msra.mxu0 0.0
  %2504 = vmatprep.subr.mxu0 0.0
  %2505 = vmatpush1.msra.mxu0 0.0
  %2506 = vmatprep.subr.mxu0 0.0
  %2507 = vmatpush1.msra.mxu0 0.0
  %2508 = vmatprep.subr.mxu0 0.0
  %2509 = vmatpush1.msra.mxu0 0.0
  %2510 = vmatprep.subr.mxu0 0.0
  %2511 = vmatpush1.msra.mxu0 0.0
  %2512 = vmatprep.subr.mxu0 0.0
  %2513 = vmatpush1.msra.mxu0 0.0
  %2514 = vmatprep.mubr.f32.mxu0 0.0
  %2515 = vmatmul.mubr.f32.gmra.mrb[0].mxu0 %v2137
  %v2516 = vpop.f32.mrb[0].mxu0
  %v2517 = vadd.f32 %v2091, %v2516
  %v2518 = vpop.f32.mrb[0].mxu0
  %v2519 = vadd.f32 %v2095, %v2518
  %2520 = vmatprep.mubr.f32.mxu0 0.0
  %2521 = vmatmul.mubr.f32.gmra.mrb[0].mxu0 %v2140
  %v2522 = vpop.f32.mrb[0].mxu0
  %v2523 = vadd.f32 %v2091, %v2522
  %v2524 = vpop.f32.mrb[0].mxu0
  %v2525 = vadd.f32 %v2095, %v2524
  %2526 = vdwg.mxu0
  %2527 = vmatprep.subr.mxu0 %v1999
  %2528 = vmatpush1.msra.mxu0 %v1998
  %2529 = vmatprep.subr.mxu0 %v2015
  %2530 = vmatpush1.msra.mxu0 %v2014
  %2531 = vmatprep.subr.mxu0 %v2031
  %2532 = vmatpush1.msra.mxu0 %v2030
  %2533 = vmatprep.subr.mxu0 %v2047
  %2534 = vmatpush1.msra.mxu0 %v2046
  %2535 = vmatprep.subr.mxu0 0.0
  %2536 = vmatpush1.msra.mxu0 0.0
  %2537 = vmatprep.subr.mxu0 0.0
  %2538 = vmatpush1.msra.mxu0 0.0
  %2539 = vmatprep.subr.mxu0 0.0
  %2540 = vmatpush1.msra.mxu0 0.0
  %2541 = vmatprep.subr.mxu0 0.0
  %2542 = vmatpush1.msra.mxu0 0.0
  %2543 = vmatprep.subr.mxu0 0.0
  %2544 = vmatpush1.msra.mxu0 0.0
  %2545 = vmatprep.subr.mxu0 0.0
  %2546 = vmatpush1.msra.mxu0 0.0
  %2547 = vmatprep.subr.mxu0 0.0
  %2548 = vmatpush1.msra.mxu0 0.0
  %2549 = vmatprep.subr.mxu0 0.0
  %2550 = vmatpush1.msra.mxu0 0.0
  %2551 = vmatprep.subr.mxu0 0.0
  %2552 = vmatpush1.msra.mxu0 0.0
  %2553 = vmatprep.subr.mxu0 0.0
  %2554 = vmatpush1.msra.mxu0 0.0
  %2555 = vmatprep.subr.mxu0 0.0
  %2556 = vmatpush1.msra.mxu0 0.0
  %2557 = vmatprep.subr.mxu0 0.0
  %2558 = vmatpush1.msra.mxu0 0.0
  %2559 = vmatprep.subr.mxu0 0.0
  %2560 = vmatpush1.msra.mxu0 0.0
  %2561 = vmatprep.subr.mxu0 0.0
  %2562 = vmatpush1.msra.mxu0 0.0
  %2563 = vmatprep.subr.mxu0 0.0
  %2564 = vmatpush1.msra.mxu0 0.0
  %2565 = vmatprep.subr.mxu0 0.0
  %2566 = vmatpush1.msra.mxu0 0.0
  %2567 = vmatprep.subr.mxu0 0.0
  %2568 = vmatpush1.msra.mxu0 0.0
  %2569 = vmatprep.subr.mxu0 0.0
  %2570 = vmatpush1.msra.mxu0 0.0
  %2571 = vmatprep.subr.mxu0 0.0
  %2572 = vmatpush1.msra.mxu0 0.0
  %2573 = vmatprep.subr.mxu0 0.0
  %2574 = vmatpush1.msra.mxu0 0.0
  %2575 = vmatprep.subr.mxu0 0.0
  %2576 = vmatpush1.msra.mxu0 0.0
  %2577 = vmatprep.subr.mxu0 0.0
  %2578 = vmatpush1.msra.mxu0 0.0
  %2579 = vmatprep.subr.mxu0 0.0
  %2580 = vmatpush1.msra.mxu0 0.0
  %2581 = vmatprep.subr.mxu0 0.0
  %2582 = vmatpush1.msra.mxu0 0.0
  %2583 = vmatprep.subr.mxu0 0.0
  %2584 = vmatpush1.msra.mxu0 0.0
  %2585 = vmatprep.subr.mxu0 0.0
  %2586 = vmatpush1.msra.mxu0 0.0
  %2587 = vmatprep.subr.mxu0 0.0
  %2588 = vmatpush1.msra.mxu0 0.0
  %2589 = vmatprep.subr.mxu0 0.0
  %2590 = vmatpush1.msra.mxu0 0.0
  %2591 = vmatprep.mubr.f32.mxu0 0.0
  %2592 = vmatmul.mubr.f32.gmra.mrb[0].mxu0 %v2137
  %v2593 = vpop.f32.mrb[0].mxu0
  %v2594 = vadd.f32 %v2099, %v2593
  %v2595 = vpop.f32.mrb[0].mxu0
  %v2596 = vadd.f32 %v2103, %v2595
  %2597 = vmatprep.mubr.f32.mxu0 0.0
  %2598 = vmatmul.mubr.f32.gmra.mrb[0].mxu0 %v2140
  %v2599 = vpop.f32.mrb[0].mxu0
  %v2600 = vadd.f32 %v2099, %v2599
  %v2601 = vpop.f32.mrb[0].mxu0
  %v2602 = vadd.f32 %v2103, %v2601
  %2603 = vdwg.mxu0
  %2604 = vmatprep.subr.mxu0 %v2001
  %2605 = vmatpush1.msra.mxu0 %v2000
  %2606 = vmatprep.subr.mxu0 %v2017
  %2607 = vmatpush1.msra.mxu0 %v2016
  %2608 = vmatprep.subr.mxu0 %v2033
  %2609 = vmatpush1.msra.mxu0 %v2032
  %2610 = vmatprep.subr.mxu0 %v2049
  %2611 = vmatpush1.msra.mxu0 %v2048
  %2612 = vmatprep.subr.mxu0 0.0
  %2613 = vmatpush1.msra.mxu0 0.0
  %2614 = vmatprep.subr.mxu0 0.0
  %2615 = vmatpush1.msra.mxu0 0.0
  %2616 = vmatprep.subr.mxu0 0.0
  %2617 = vmatpush1.msra.mxu0 0.0
  %2618 = vmatprep.subr.mxu0 0.0
  %2619 = vmatpush1.msra.mxu0 0.0
  %2620 = vmatprep.subr.mxu0 0.0
  %2621 = vmatpush1.msra.mxu0 0.0
  %2622 = vmatprep.subr.mxu0 0.0
  %2623 = vmatpush1.msra.mxu0 0.0
  %2624 = vmatprep.subr.mxu0 0.0
  %2625 = vmatpush1.msra.mxu0 0.0
  %2626 = vmatprep.subr.mxu0 0.0
  %2627 = vmatpush1.msra.mxu0 0.0
  %2628 = vmatprep.subr.mxu0 0.0
  %2629 = vmatpush1.msra.mxu0 0.0
  %2630 = vmatprep.subr.mxu0 0.0
  %2631 = vmatpush1.msra.mxu0 0.0
  %2632 = vmatprep.subr.mxu0 0.0
  %2633 = vmatpush1.msra.mxu0 0.0
  %2634 = vmatprep.subr.mxu0 0.0
  %2635 = vmatpush1.msra.mxu0 0.0
  %2636 = vmatprep.subr.mxu0 0.0
  %2637 = vmatpush1.msra.mxu0 0.0
  %2638 = vmatprep.subr.mxu0 0.0
  %2639 = vmatpush1.msra.mxu0 0.0
  %2640 = vmatprep.subr.mxu0 0.0
  %2641 = vmatpush1.msra.mxu0 0.0
  %2642 = vmatprep.subr.mxu0 0.0
  %2643 = vmatpush1.msra.mxu0 0.0
  %2644 = vmatprep.subr.mxu0 0.0
  %2645 = vmatpush1.msra.mxu0 0.0
  %2646 = vmatprep.subr.mxu0 0.0
  %2647 = vmatpush1.msra.mxu0 0.0
  %2648 = vmatprep.subr.mxu0 0.0
  %2649 = vmatpush1.msra.mxu0 0.0
  %2650 = vmatprep.subr.mxu0 0.0
  %2651 = vmatpush1.msra.mxu0 0.0
  %2652 = vmatprep.subr.mxu0 0.0
  %2653 = vmatpush1.msra.mxu0 0.0
  %2654 = vmatprep.subr.mxu0 0.0
  %2655 = vmatpush1.msra.mxu0 0.0
  %2656 = vmatprep.subr.mxu0 0.0
  %2657 = vmatpush1.msra.mxu0 0.0
  %2658 = vmatprep.subr.mxu0 0.0
  %2659 = vmatpush1.msra.mxu0 0.0
  %2660 = vmatprep.subr.mxu0 0.0
  %2661 = vmatpush1.msra.mxu0 0.0
  %2662 = vmatprep.subr.mxu0 0.0
  %2663 = vmatpush1.msra.mxu0 0.0
  %2664 = vmatprep.subr.mxu0 0.0
  %2665 = vmatpush1.msra.mxu0 0.0
  %2666 = vmatprep.subr.mxu0 0.0
  %2667 = vmatpush1.msra.mxu0 0.0
  %2668 = vmatprep.mubr.f32.mxu0 0.0
  %2669 = vmatmul.mubr.f32.gmra.mrb[0].mxu0 %v2137
  %v2670 = vpop.f32.mrb[0].mxu0
  %v2671 = vadd.f32 %v2107, %v2670
  %v2672 = vpop.f32.mrb[0].mxu0
  %v2673 = vadd.f32 %v2111, %v2672
  %2674 = vmatprep.mubr.f32.mxu0 0.0
  %2675 = vmatmul.mubr.f32.gmra.mrb[0].mxu0 %v2140
  %v2676 = vpop.f32.mrb[0].mxu0
  %v2677 = vadd.f32 %v2107, %v2676
  %v2678 = vpop.f32.mrb[0].mxu0
  %v2679 = vadd.f32 %v2111, %v2678
  %2680 = vdwg.mxu0
  %2681 = vmatprep.subr.mxu0 %v2003
  %2682 = vmatpush1.msra.mxu0 %v2002
  %2683 = vmatprep.subr.mxu0 %v2019
  %2684 = vmatpush1.msra.mxu0 %v2018
  %2685 = vmatprep.subr.mxu0 %v2035
  %2686 = vmatpush1.msra.mxu0 %v2034
  %2687 = vmatprep.subr.mxu0 %v2051
  %2688 = vmatpush1.msra.mxu0 %v2050
  %2689 = vmatprep.subr.mxu0 0.0
  %2690 = vmatpush1.msra.mxu0 0.0
  %2691 = vmatprep.subr.mxu0 0.0
  %2692 = vmatpush1.msra.mxu0 0.0
  %2693 = vmatprep.subr.mxu0 0.0
  %2694 = vmatpush1.msra.mxu0 0.0
  %2695 = vmatprep.subr.mxu0 0.0
  %2696 = vmatpush1.msra.mxu0 0.0
  %2697 = vmatprep.subr.mxu0 0.0
  %2698 = vmatpush1.msra.mxu0 0.0
  %2699 = vmatprep.subr.mxu0 0.0
  %2700 = vmatpush1.msra.mxu0 0.0
  %2701 = vmatprep.subr.mxu0 0.0
  %2702 = vmatpush1.msra.mxu0 0.0
  %2703 = vmatprep.subr.mxu0 0.0
  %2704 = vmatpush1.msra.mxu0 0.0
  %2705 = vmatprep.subr.mxu0 0.0
  %2706 = vmatpush1.msra.mxu0 0.0
  %2707 = vmatprep.subr.mxu0 0.0
  %2708 = vmatpush1.msra.mxu0 0.0
  %2709 = vmatprep.subr.mxu0 0.0
  %2710 = vmatpush1.msra.mxu0 0.0
  %2711 = vmatprep.subr.mxu0 0.0
  %2712 = vmatpush1.msra.mxu0 0.0
  %2713 = vmatprep.subr.mxu0 0.0
  %2714 = vmatpush1.msra.mxu0 0.0
  %2715 = vmatprep.subr.mxu0 0.0
  %2716 = vmatpush1.msra.mxu0 0.0
  %2717 = vmatprep.subr.mxu0 0.0
  %2718 = vmatpush1.msra.mxu0 0.0
  %2719 = vmatprep.subr.mxu0 0.0
  %2720 = vmatpush1.msra.mxu0 0.0
  %2721 = vmatprep.subr.mxu0 0.0
  %2722 = vmatpush1.msra.mxu0 0.0
  %2723 = vmatprep.subr.mxu0 0.0
  %2724 = vmatpush1.msra.mxu0 0.0
  %2725 = vmatprep.subr.mxu0 0.0
  %2726 = vmatpush1.msra.mxu0 0.0
  %2727 = vmatprep.subr.mxu0 0.0
  %2728 = vmatpush1.msra.mxu0 0.0
  %2729 = vmatprep.subr.mxu0 0.0
  %2730 = vmatpush1.msra.mxu0 0.0
  %2731 = vmatprep.subr.mxu0 0.0
  %2732 = vmatpush1.msra.mxu0 0.0
  %2733 = vmatprep.subr.mxu0 0.0
  %2734 = vmatpush1.msra.mxu0 0.0
  %2735 = vmatprep.subr.mxu0 0.0
  %2736 = vmatpush1.msra.mxu0 0.0
  %2737 = vmatprep.subr.mxu0 0.0
  %2738 = vmatpush1.msra.mxu0 0.0
  %2739 = vmatprep.subr.mxu0 0.0
  %2740 = vmatpush1.msra.mxu0 0.0
  %2741 = vmatprep.subr.mxu0 0.0
  %2742 = vmatpush1.msra.mxu0 0.0
  %2743 = vmatprep.subr.mxu0 0.0
  %2744 = vmatpush1.msra.mxu0 0.0
  %2745 = vmatprep.mubr.f32.mxu0 0.0
  %2746 = vmatmul.mubr.f32.gmra.mrb[0].mxu0 %v2137
  %v2747 = vpop.f32.mrb[0].mxu0
  %v2748 = vadd.f32 %v2115, %v2747
  %v2749 = vpop.f32.mrb[0].mxu0
  %v2750 = vadd.f32 %v2119, %v2749
  %2751 = vmatprep.mubr.f32.mxu0 0.0
  %2752 = vmatmul.mubr.f32.gmra.mrb[0].mxu0 %v2140
  %v2753 = vpop.f32.mrb[0].mxu0
  %v2754 = vadd.f32 %v2115, %v2753
  %v2755 = vpop.f32.mrb[0].mxu0
  %v2756 = vadd.f32 %v2119, %v2755
  %2757 = vdwg.mxu0
  %v2758 = vmax.f32 %v2209, 0.0
  %v2759 = vmax.f32 %v2211, 0.0
  %v2760 = vmax.f32 %v2286, 0.0
  %v2761 = vmax.f32 %v2288, 0.0
  %v2762 = vmax.f32 %v2363, 0.0
  %v2763 = vmax.f32 %v2365, 0.0
  %v2764 = vmax.f32 %v2440, 0.0
  %v2765 = vmax.f32 %v2442, 0.0
  %v2766 = vmax.f32 %v2517, 0.0
  %v2767 = vmax.f32 %v2519, 0.0
  %v2768 = vmax.f32 %v2594, 0.0
  %v2769 = vmax.f32 %v2596, 0.0
  %v2770 = vmax.f32 %v2671, 0.0
  %v2771 = vmax.f32 %v2673, 0.0
  %v2772 = vmax.f32 %v2748, 0.0
  %v2773 = vmax.f32 %v2750, 0.0
  %v2774 = vmax.f32 %v2215, 0.0
  %v2775 = vmax.f32 %v2217, 0.0
  %v2776 = vmax.f32 %v2292, 0.0
  %v2777 = vmax.f32 %v2294, 0.0
  %v2778 = vmax.f32 %v2369, 0.0
  %v2779 = vmax.f32 %v2371, 0.0
  %v2780 = vmax.f32 %v2446, 0.0
  %v2781 = vmax.f32 %v2448, 0.0
  %v2782 = vmax.f32 %v2523, 0.0
  %v2783 = vmax.f32 %v2525, 0.0
  %v2784 = vmax.f32 %v2600, 0.0
  %v2785 = vmax.f32 %v2602, 0.0
  %v2786 = vmax.f32 %v2677, 0.0
  %v2787 = vmax.f32 %v2679, 0.0
  %v2788 = vmax.f32 %v2754, 0.0
  %v2789 = vmax.f32 %v2756, 0.0
  %v2790 = vld [vmem:[%s33] sm:$0xff]
  %v2791 = vld [vmem:[%s33 + $0x8] sm:$0xff]
  %v2792 = vld [vmem:[%s33 + $0x10] sm:$0xff]
  %v2793 = vld [vmem:[%s33 + $0x18] sm:$0xff]
  %v2794 = vld [vmem:[%s33 + $0x20] sm:$0xff]
  %v2795 = vld [vmem:[%s33 + $0x28] sm:$0xff]
  %v2796 = vld [vmem:[%s33 + $0x30] sm:$0xff]
  %v2797 = vld [vmem:[%s33 + $0x38] sm:$0xff]
  %v2798 = vld [vmem:[%s33 + $0x40] sm:$0xff]
  %v2799 = vld [vmem:[%s33 + $0x48] sm:$0xff]
  %v2800 = vld [vmem:[%s33 + $0x50] sm:$0xff]
  %v2801 = vld [vmem:[%s33 + $0x58] sm:$0xff]
  %v2802 = vld [vmem:[%s33 + $0x60] sm:$0xff]
  %v2803 = vld [vmem:[%s33 + $0x68] sm:$0xff]
  %v2804 = vld [vmem:[%s33 + $0x70] sm:$0xff]
  %v2805 = vld [vmem:[%s33 + $0x78] sm:$0xff]
  %v2806 = vld [vmem:[%s33 + $0x80] sm:$0xff]
  %v2807 = vld [vmem:[%s33 + $0x88] sm:$0xff]
  %v2808 = vld [vmem:[%s33 + $0x90] sm:$0xff]
  %v2809 = vld [vmem:[%s33 + $0x98] sm:$0xff]
  %v2810 = vld [vmem:[%s33 + $0xa0] sm:$0xff]
  %v2811 = vld [vmem:[%s33 + $0xa8] sm:$0xff]
  %v2812 = vld [vmem:[%s33 + $0xb0] sm:$0xff]
  %v2813 = vld [vmem:[%s33 + $0xb8] sm:$0xff]
  %v2814 = vld [vmem:[%s33 + $0xc0] sm:$0xff]
  %v2815 = vld [vmem:[%s33 + $0xc8] sm:$0xff]
  %v2816 = vld [vmem:[%s33 + $0xd0] sm:$0xff]
  %v2817 = vld [vmem:[%s33 + $0xd8] sm:$0xff]
  %v2818 = vld [vmem:[%s33 + $0xe0] sm:$0xff]
  %v2819 = vld [vmem:[%s33 + $0xe8] sm:$0xff]
  %v2820 = vld [vmem:[%s33 + $0xf0] sm:$0xff]
  %v2821 = vld [vmem:[%s33 + $0xf8] sm:$0xff]
  %v2822 = vld [vmem:[%s33 + $0x100] sm:$0xff]
  %v2823 = vld [vmem:[%s33 + $0x108] sm:$0xff]
  %v2824 = vld [vmem:[%s33 + $0x110] sm:$0xff]
  %v2825 = vld [vmem:[%s33 + $0x118] sm:$0xff]
  %v2826 = vld [vmem:[%s33 + $0x120] sm:$0xff]
  %v2827 = vld [vmem:[%s33 + $0x128] sm:$0xff]
  %v2828 = vld [vmem:[%s33 + $0x130] sm:$0xff]
  %v2829 = vld [vmem:[%s33 + $0x138] sm:$0xff]
  %v2830 = vld [vmem:[%s33 + $0x140] sm:$0xff]
  %v2831 = vld [vmem:[%s33 + $0x148] sm:$0xff]
  %v2832 = vld [vmem:[%s33 + $0x150] sm:$0xff]
  %v2833 = vld [vmem:[%s33 + $0x158] sm:$0xff]
  %v2834 = vld [vmem:[%s33 + $0x160] sm:$0xff]
  %v2835 = vld [vmem:[%s33 + $0x168] sm:$0xff]
  %v2836 = vld [vmem:[%s33 + $0x170] sm:$0xff]
  %v2837 = vld [vmem:[%s33 + $0x178] sm:$0xff]
  %v2838 = vld [vmem:[%s33 + $0x180] sm:$0xff]
  %v2839 = vld [vmem:[%s33 + $0x188] sm:$0xff]
  %v2840 = vld [vmem:[%s33 + $0x190] sm:$0xff]
  %v2841 = vld [vmem:[%s33 + $0x198] sm:$0xff]
  %v2842 = vld [vmem:[%s33 + $0x1a0] sm:$0xff]
  %v2843 = vld [vmem:[%s33 + $0x1a8] sm:$0xff]
  %v2844 = vld [vmem:[%s33 + $0x1b0] sm:$0xff]
  %v2845 = vld [vmem:[%s33 + $0x1b8] sm:$0xff]
  %v2846 = vld [vmem:[%s33 + $0x1c0] sm:$0xff]
  %v2847 = vld [vmem:[%s33 + $0x1c8] sm:$0xff]
  %v2848 = vld [vmem:[%s33 + $0x1d0] sm:$0xff]
  %v2849 = vld [vmem:[%s33 + $0x1d8] sm:$0xff]
  %v2850 = vld [vmem:[%s33 + $0x1e0] sm:$0xff]
  %v2851 = vld [vmem:[%s33 + $0x1e8] sm:$0xff]
  %v2852 = vld [vmem:[%s33 + $0x1f0] sm:$0xff]
  %v2853 = vld [vmem:[%s33 + $0x1f8] sm:$0xff]
  %v2854 = vld [vmem:[%s33 + $0x200] sm:$0xff]
  %v2855 = vld [vmem:[%s33 + $0x208] sm:$0xff]
  %v2856 = vld [vmem:[%s33 + $0x210] sm:$0xff]
  %v2857 = vld [vmem:[%s33 + $0x218] sm:$0xff]
  %v2858 = vld [vmem:[%s33 + $0x220] sm:$0xff]
  %v2859 = vld [vmem:[%s33 + $0x228] sm:$0xff]
  %v2860 = vld [vmem:[%s33 + $0x230] sm:$0xff]
  %v2861 = vld [vmem:[%s33 + $0x238] sm:$0xff]
  %v2862 = vld [vmem:[%s33 + $0x240] sm:$0xff]
  %v2863 = vld [vmem:[%s33 + $0x248] sm:$0xff]
  %v2864 = vld [vmem:[%s33 + $0x250] sm:$0xff]
  %v2865 = vld [vmem:[%s33 + $0x258] sm:$0xff]
  %v2866 = vld [vmem:[%s33 + $0x260] sm:$0xff]
  %v2867 = vld [vmem:[%s33 + $0x268] sm:$0xff]
  %v2868 = vld [vmem:[%s33 + $0x270] sm:$0xff]
  %v2869 = vld [vmem:[%s33 + $0x278] sm:$0xff]
  %v2870 = vld [vmem:[%s33 + $0x280] sm:$0xff]
  %v2871 = vld [vmem:[%s33 + $0x288] sm:$0xff]
  %v2872 = vld [vmem:[%s33 + $0x290] sm:$0xff]
  %v2873 = vld [vmem:[%s33 + $0x298] sm:$0xff]
  %v2874 = vld [vmem:[%s33 + $0x2a0] sm:$0xff]
  %v2875 = vld [vmem:[%s33 + $0x2a8] sm:$0xff]
  %v2876 = vld [vmem:[%s33 + $0x2b0] sm:$0xff]
  %v2877 = vld [vmem:[%s33 + $0x2b8] sm:$0xff]
  %v2878 = vld [vmem:[%s33 + $0x2c0] sm:$0xff]
  %v2879 = vld [vmem:[%s33 + $0x2c8] sm:$0xff]
  %v2880 = vld [vmem:[%s33 + $0x2d0] sm:$0xff]
  %v2881 = vld [vmem:[%s33 + $0x2d8] sm:$0xff]
  %v2882 = vld [vmem:[%s33 + $0x2e0] sm:$0xff]
  %v2883 = vld [vmem:[%s33 + $0x2e8] sm:$0xff]
  %v2884 = vld [vmem:[%s33 + $0x2f0] sm:$0xff]
  %v2885 = vld [vmem:[%s33 + $0x2f8] sm:$0xff]
  %v2886 = vld [vmem:[%s33 + $0x300] sm:$0xff]
  %v2887 = vld [vmem:[%s33 + $0x308] sm:$0xff]
  %v2888 = vld [vmem:[%s33 + $0x310] sm:$0xff]
  %v2889 = vld [vmem:[%s33 + $0x318] sm:$0xff]
  %v2890 = vld [vmem:[%s33 + $0x320] sm:$0xff]
  %v2891 = vld [vmem:[%s33 + $0x328] sm:$0xff]
  %v2892 = vld [vmem:[%s33 + $0x330] sm:$0xff]
  %v2893 = vld [vmem:[%s33 + $0x338] sm:$0xff]
  %v2894 = vld [vmem:[%s33 + $0x340] sm:$0xff]
  %v2895 = vld [vmem:[%s33 + $0x348] sm:$0xff]
  %v2896 = vld [vmem:[%s33 + $0x350] sm:$0xff]
  %v2897 = vld [vmem:[%s33 + $0x358] sm:$0xff]
  %v2898 = vld [vmem:[%s33 + $0x360] sm:$0xff]
  %v2899 = vld [vmem:[%s33 + $0x368] sm:$0xff]
  %v2900 = vld [vmem:[%s33 + $0x370] sm:$0xff]
  %v2901 = vld [vmem:[%s33 + $0x378] sm:$0xff]
  %v2902 = vld [vmem:[%s33 + $0x380] sm:$0xff]
  %v2903 = vld [vmem:[%s33 + $0x388] sm:$0xff]
  %v2904 = vld [vmem:[%s33 + $0x390] sm:$0xff]
  %v2905 = vld [vmem:[%s33 + $0x398] sm:$0xff]
  %v2906 = vld [vmem:[%s33 + $0x3a0] sm:$0xff]
  %v2907 = vld [vmem:[%s33 + $0x3a8] sm:$0xff]
  %v2908 = vld [vmem:[%s33 + $0x3b0] sm:$0xff]
  %v2909 = vld [vmem:[%s33 + $0x3b8] sm:$0xff]
  %v2910 = vld [vmem:[%s33 + $0x3c0] sm:$0xff]
  %v2911 = vld [vmem:[%s33 + $0x3c8] sm:$0xff]
  %v2912 = vld [vmem:[%s33 + $0x3d0] sm:$0xff]
  %v2913 = vld [vmem:[%s33 + $0x3d8] sm:$0xff]
  %v2914 = vld [vmem:[%s33 + $0x3e0] sm:$0xff]
  %v2915 = vld [vmem:[%s33 + $0x3e8] sm:$0xff]
  %v2916 = vld [vmem:[%s33 + $0x3f0] sm:$0xff]
  %v2917 = vld [vmem:[%s33 + $0x3f8] sm:$0xff]
  %v2918 = vld [vmem:[%s33 + $0x400] sm:$0xff]
  %v2919 = vld [vmem:[%s33 + $0x408] sm:$0xff]
  %v2920 = vld [vmem:[%s33 + $0x410] sm:$0xff]
  %v2921 = vld [vmem:[%s33 + $0x418] sm:$0xff]
  %v2922 = vld [vmem:[%s33 + $0x420] sm:$0xff]
  %v2923 = vld [vmem:[%s33 + $0x428] sm:$0xff]
  %v2924 = vld [vmem:[%s33 + $0x430] sm:$0xff]
  %v2925 = vld [vmem:[%s33 + $0x438] sm:$0xff]
  %v2926 = vld [vmem:[%s33 + $0x440] sm:$0xff]
  %v2927 = vld [vmem:[%s33 + $0x448] sm:$0xff]
  %v2928 = vld [vmem:[%s33 + $0x450] sm:$0xff]
  %v2929 = vld [vmem:[%s33 + $0x458] sm:$0xff]
  %v2930 = vld [vmem:[%s33 + $0x460] sm:$0xff]
  %v2931 = vld [vmem:[%s33 + $0x468] sm:$0xff]
  %v2932 = vld [vmem:[%s33 + $0x470] sm:$0xff]
  %v2933 = vld [vmem:[%s33 + $0x478] sm:$0xff]
  %v2934 = vld [vmem:[%s33 + $0x480] sm:$0xff]
  %v2935 = vld [vmem:[%s33 + $0x488] sm:$0xff]
  %v2936 = vld [vmem:[%s33 + $0x490] sm:$0xff]
  %v2937 = vld [vmem:[%s33 + $0x498] sm:$0xff]
  %v2938 = vld [vmem:[%s33 + $0x4a0] sm:$0xff]
  %v2939 = vld [vmem:[%s33 + $0x4a8] sm:$0xff]
  %v2940 = vld [vmem:[%s33 + $0x4b0] sm:$0xff]
  %v2941 = vld [vmem:[%s33 + $0x4b8] sm:$0xff]
  %v2942 = vld [vmem:[%s33 + $0x4c0] sm:$0xff]
  %v2943 = vld [vmem:[%s33 + $0x4c8] sm:$0xff]
  %v2944 = vld [vmem:[%s33 + $0x4d0] sm:$0xff]
  %v2945 = vld [vmem:[%s33 + $0x4d8] sm:$0xff]
  %v2946 = vld [vmem:[%s33 + $0x4e0] sm:$0xff]
  %v2947 = vld [vmem:[%s33 + $0x4e8] sm:$0xff]
  %v2948 = vld [vmem:[%s33 + $0x4f0] sm:$0xff]
  %v2949 = vld [vmem:[%s33 + $0x4f8] sm:$0xff]
  %v2950 = vld [vmem:[%s33 + $0x500] sm:$0xff]
  %v2951 = vld [vmem:[%s33 + $0x508] sm:$0xff]
  %v2952 = vld [vmem:[%s33 + $0x510] sm:$0xff]
  %v2953 = vld [vmem:[%s33 + $0x518] sm:$0xff]
  %v2954 = vld [vmem:[%s33 + $0x520] sm:$0xff]
  %v2955 = vld [vmem:[%s33 + $0x528] sm:$0xff]
  %v2956 = vld [vmem:[%s33 + $0x530] sm:$0xff]
  %v2957 = vld [vmem:[%s33 + $0x538] sm:$0xff]
  %v2958 = vld [vmem:[%s33 + $0x540] sm:$0xff]
  %v2959 = vld [vmem:[%s33 + $0x548] sm:$0xff]
  %v2960 = vld [vmem:[%s33 + $0x550] sm:$0xff]
  %v2961 = vld [vmem:[%s33 + $0x558] sm:$0xff]
  %v2962 = vld [vmem:[%s33 + $0x560] sm:$0xff]
  %v2963 = vld [vmem:[%s33 + $0x568] sm:$0xff]
  %v2964 = vld [vmem:[%s33 + $0x570] sm:$0xff]
  %v2965 = vld [vmem:[%s33 + $0x578] sm:$0xff]
  %v2966 = vld [vmem:[%s33 + $0x580] sm:$0xff]
  %v2967 = vld [vmem:[%s33 + $0x588] sm:$0xff]
  %v2968 = vld [vmem:[%s33 + $0x590] sm:$0xff]
  %v2969 = vld [vmem:[%s33 + $0x598] sm:$0xff]
  %v2970 = vld [vmem:[%s33 + $0x5a0] sm:$0xff]
  %v2971 = vld [vmem:[%s33 + $0x5a8] sm:$0xff]
  %v2972 = vld [vmem:[%s33 + $0x5b0] sm:$0xff]
  %v2973 = vld [vmem:[%s33 + $0x5b8] sm:$0xff]
  %v2974 = vld [vmem:[%s33 + $0x5c0] sm:$0xff]
  %v2975 = vld [vmem:[%s33 + $0x5c8] sm:$0xff]
  %v2976 = vld [vmem:[%s33 + $0x5d0] sm:$0xff]
  %v2977 = vld [vmem:[%s33 + $0x5d8] sm:$0xff]
  %v2978 = vld [vmem:[%s33 + $0x5e0] sm:$0xff]
  %v2979 = vld [vmem:[%s33 + $0x5e8] sm:$0xff]
  %v2980 = vld [vmem:[%s33 + $0x5f0] sm:$0xff]
  %v2981 = vld [vmem:[%s33 + $0x5f8] sm:$0xff]
  %v2982 = vld [vmem:[%s33 + $0x600] sm:$0xff]
  %v2983 = vld [vmem:[%s33 + $0x608] sm:$0xff]
  %v2984 = vld [vmem:[%s33 + $0x610] sm:$0xff]
  %v2985 = vld [vmem:[%s33 + $0x618] sm:$0xff]
  %v2986 = vld [vmem:[%s33 + $0x620] sm:$0xff]
  %v2987 = vld [vmem:[%s33 + $0x628] sm:$0xff]
  %v2988 = vld [vmem:[%s33 + $0x630] sm:$0xff]
  %v2989 = vld [vmem:[%s33 + $0x638] sm:$0xff]
  %v2990 = vld [vmem:[%s33 + $0x640] sm:$0xff]
  %v2991 = vld [vmem:[%s33 + $0x648] sm:$0xff]
  %v2992 = vld [vmem:[%s33 + $0x650] sm:$0xff]
  %v2993 = vld [vmem:[%s33 + $0x658] sm:$0xff]
  %v2994 = vld [vmem:[%s33 + $0x660] sm:$0xff]
  %v2995 = vld [vmem:[%s33 + $0x668] sm:$0xff]
  %v2996 = vld [vmem:[%s33 + $0x670] sm:$0xff]
  %v2997 = vld [vmem:[%s33 + $0x678] sm:$0xff]
  %v2998 = vld [vmem:[%s33 + $0x680] sm:$0xff]
  %v2999 = vld [vmem:[%s33 + $0x688] sm:$0xff]
  %v3000 = vld [vmem:[%s33 + $0x690] sm:$0xff]
  %v3001 = vld [vmem:[%s33 + $0x698] sm:$0xff]
  %v3002 = vld [vmem:[%s33 + $0x6a0] sm:$0xff]
  %v3003 = vld [vmem:[%s33 + $0x6a8] sm:$0xff]
  %v3004 = vld [vmem:[%s33 + $0x6b0] sm:$0xff]
  %v3005 = vld [vmem:[%s33 + $0x6b8] sm:$0xff]
  %v3006 = vld [vmem:[%s33 + $0x6c0] sm:$0xff]
  %v3007 = vld [vmem:[%s33 + $0x6c8] sm:$0xff]
  %v3008 = vld [vmem:[%s33 + $0x6d0] sm:$0xff]
  %v3009 = vld [vmem:[%s33 + $0x6d8] sm:$0xff]
  %v3010 = vld [vmem:[%s33 + $0x6e0] sm:$0xff]
  %v3011 = vld [vmem:[%s33 + $0x6e8] sm:$0xff]
  %v3012 = vld [vmem:[%s33 + $0x6f0] sm:$0xff]
  %v3013 = vld [vmem:[%s33 + $0x6f8] sm:$0xff]
  %v3014 = vld [vmem:[%s33 + $0x700] sm:$0xff]
  %v3015 = vld [vmem:[%s33 + $0x708] sm:$0xff]
  %v3016 = vld [vmem:[%s33 + $0x710] sm:$0xff]
  %v3017 = vld [vmem:[%s33 + $0x718] sm:$0xff]
  %v3018 = vld [vmem:[%s33 + $0x720] sm:$0xff]
  %v3019 = vld [vmem:[%s33 + $0x728] sm:$0xff]
  %v3020 = vld [vmem:[%s33 + $0x730] sm:$0xff]
  %v3021 = vld [vmem:[%s33 + $0x738] sm:$0xff]
  %v3022 = vld [vmem:[%s33 + $0x740] sm:$0xff]
  %v3023 = vld [vmem:[%s33 + $0x748] sm:$0xff]
  %v3024 = vld [vmem:[%s33 + $0x750] sm:$0xff]
  %v3025 = vld [vmem:[%s33 + $0x758] sm:$0xff]
  %v3026 = vld [vmem:[%s33 + $0x760] sm:$0xff]
  %v3027 = vld [vmem:[%s33 + $0x768] sm:$0xff]
  %v3028 = vld [vmem:[%s33 + $0x770] sm:$0xff]
  %v3029 = vld [vmem:[%s33 + $0x778] sm:$0xff]
  %v3030 = vld [vmem:[%s33 + $0x780] sm:$0xff]
  %v3031 = vld [vmem:[%s33 + $0x788] sm:$0xff]
  %v3032 = vld [vmem:[%s33 + $0x790] sm:$0xff]
  %v3033 = vld [vmem:[%s33 + $0x798] sm:$0xff]
  %v3034 = vld [vmem:[%s33 + $0x7a0] sm:$0xff]
  %v3035 = vld [vmem:[%s33 + $0x7a8] sm:$0xff]
  %v3036 = vld [vmem:[%s33 + $0x7b0] sm:$0xff]
  %v3037 = vld [vmem:[%s33 + $0x7b8] sm:$0xff]
  %v3038 = vld [vmem:[%s33 + $0x7c0] sm:$0xff]
  %v3039 = vld [vmem:[%s33 + $0x7c8] sm:$0xff]
  %v3040 = vld [vmem:[%s33 + $0x7d0] sm:$0xff]
  %v3041 = vld [vmem:[%s33 + $0x7d8] sm:$0xff]
  %v3042 = vld [vmem:[%s33 + $0x7e0] sm:$0xff]
  %v3043 = vld [vmem:[%s33 + $0x7e8] sm:$0xff]
  %v3044 = vld [vmem:[%s33 + $0x7f0] sm:$0xff]
  %v3045 = vld [vmem:[%s33 + $0x7f8] sm:$0xff]
  %v3046 = vld [vmem:[%s35] sm:$0x1]
  %v3048 = vlaneseq
  %v3049 = vshrl.u32 %v3048, 7
  %v3050 = vsub.s32 0, %v3049
  %v3051 = vrot.slane %v3046, %v3050
  %3053 = vmatprep.subr.mxu0 0.0
  %3054 = vmatpush1.msra.mxu0 %v2790
  %3055 = vmatprep.subr.mxu0 0.0
  %3056 = vmatpush1.msra.mxu0 %v2791
  %3057 = vmatprep.subr.mxu0 0.0
  %3058 = vmatpush1.msra.mxu0 %v2792
  %3059 = vmatprep.subr.mxu0 0.0
  %3060 = vmatpush1.msra.mxu0 %v2793
  %3061 = vmatprep.subr.mxu0 0.0
  %3062 = vmatpush1.msra.mxu0 %v2794
  %3063 = vmatprep.subr.mxu0 0.0
  %3064 = vmatpush1.msra.mxu0 %v2795
  %3065 = vmatprep.subr.mxu0 0.0
  %3066 = vmatpush1.msra.mxu0 %v2796
  %3067 = vmatprep.subr.mxu0 0.0
  %3068 = vmatpush1.msra.mxu0 %v2797
  %3069 = vmatprep.subr.mxu0 0.0
  %3070 = vmatpush1.msra.mxu0 %v2798
  %3071 = vmatprep.subr.mxu0 0.0
  %3072 = vmatpush1.msra.mxu0 %v2799
  %3073 = vmatprep.subr.mxu0 0.0
  %3074 = vmatpush1.msra.mxu0 %v2800
  %3075 = vmatprep.subr.mxu0 0.0
  %3076 = vmatpush1.msra.mxu0 %v2801
  %3077 = vmatprep.subr.mxu0 0.0
  %3078 = vmatpush1.msra.mxu0 %v2802
  %3079 = vmatprep.subr.mxu0 0.0
  %3080 = vmatpush1.msra.mxu0 %v2803
  %3081 = vmatprep.subr.mxu0 0.0
  %3082 = vmatpush1.msra.mxu0 %v2804
  %3083 = vmatprep.subr.mxu0 0.0
  %3084 = vmatpush1.msra.mxu0 %v2805
  %3085 = vmatprep.subr.mxu0 0.0
  %3086 = vmatpush1.msra.mxu0 %v2806
  %3087 = vmatprep.subr.mxu0 0.0
  %3088 = vmatpush1.msra.mxu0 %v2807
  %3089 = vmatprep.subr.mxu0 0.0
  %3090 = vmatpush1.msra.mxu0 %v2808
  %3091 = vmatprep.subr.mxu0 0.0
  %3092 = vmatpush1.msra.mxu0 %v2809
  %3093 = vmatprep.subr.mxu0 0.0
  %3094 = vmatpush1.msra.mxu0 %v2810
  %3095 = vmatprep.subr.mxu0 0.0
  %3096 = vmatpush1.msra.mxu0 %v2811
  %3097 = vmatprep.subr.mxu0 0.0
  %3098 = vmatpush1.msra.mxu0 %v2812
  %3099 = vmatprep.subr.mxu0 0.0
  %3100 = vmatpush1.msra.mxu0 %v2813
  %3101 = vmatprep.subr.mxu0 0.0
  %3102 = vmatpush1.msra.mxu0 %v2814
  %3103 = vmatprep.subr.mxu0 0.0
  %3104 = vmatpush1.msra.mxu0 %v2815
  %3105 = vmatprep.subr.mxu0 0.0
  %3106 = vmatpush1.msra.mxu0 %v2816
  %3107 = vmatprep.subr.mxu0 0.0
  %3108 = vmatpush1.msra.mxu0 %v2817
  %3109 = vmatprep.subr.mxu0 0.0
  %3110 = vmatpush1.msra.mxu0 %v2818
  %3111 = vmatprep.subr.mxu0 0.0
  %3112 = vmatpush1.msra.mxu0 %v2819
  %3113 = vmatprep.subr.mxu0 0.0
  %3114 = vmatpush1.msra.mxu0 %v2820
  %3115 = vmatprep.subr.mxu0 0.0
  %3116 = vmatpush1.msra.mxu0 %v2821
  %3117 = vmatprep.mubr.f32.mxu0 %v2759
  %3118 = vmatmul.mubr.f32.gmra.mrb[0].mxu0 %v2758
  %v3119 = vpop.f32.mrb[0].mxu0
  %v3120 = vadd.f32 %v3051, %v3119
  %v3121 = vpop.f32.mrb[0].mxu0
  %3122 = vmatprep.mubr.f32.mxu0 %v2775
  %3123 = vmatmul.mubr.f32.gmra.mrb[0].mxu0 %v2774
  %v3124 = vpop.f32.mrb[0].mxu0
  %v3125 = vadd.f32 %v3051, %v3124
  %v3126 = vpop.f32.mrb[0].mxu0
  %3127 = vdwg.mxu0
  %3128 = vmatprep.subr.mxu0 0.0
  %3129 = vmatpush1.msra.mxu0 %v2822
  %3130 = vmatprep.subr.mxu0 0.0
  %3131 = vmatpush1.msra.mxu0 %v2823
  %3132 = vmatprep.subr.mxu0 0.0
  %3133 = vmatpush1.msra.mxu0 %v2824
  %3134 = vmatprep.subr.mxu0 0.0
  %3135 = vmatpush1.msra.mxu0 %v2825
  %3136 = vmatprep.subr.mxu0 0.0
  %3137 = vmatpush1.msra.mxu0 %v2826
  %3138 = vmatprep.subr.mxu0 0.0
  %3139 = vmatpush1.msra.mxu0 %v2827
  %3140 = vmatprep.subr.mxu0 0.0
  %3141 = vmatpush1.msra.mxu0 %v2828
  %3142 = vmatprep.subr.mxu0 0.0
  %3143 = vmatpush1.msra.mxu0 %v2829
  %3144 = vmatprep.subr.mxu0 0.0
  %3145 = vmatpush1.msra.mxu0 %v2830
  %3146 = vmatprep.subr.mxu0 0.0
  %3147 = vmatpush1.msra.mxu0 %v2831
  %3148 = vmatprep.subr.mxu0 0.0
  %3149 = vmatpush1.msra.mxu0 %v2832
  %3150 = vmatprep.subr.mxu0 0.0
  %3151 = vmatpush1.msra.mxu0 %v2833
  %3152 = vmatprep.subr.mxu0 0.0
  %3153 = vmatpush1.msra.mxu0 %v2834
  %3154 = vmatprep.subr.mxu0 0.0
  %3155 = vmatpush1.msra.mxu0 %v2835
  %3156 = vmatprep.subr.mxu0 0.0
  %3157 = vmatpush1.msra.mxu0 %v2836
  %3158 = vmatprep.subr.mxu0 0.0
  %3159 = vmatpush1.msra.mxu0 %v2837
  %3160 = vmatprep.subr.mxu0 0.0
  %3161 = vmatpush1.msra.mxu0 %v2838
  %3162 = vmatprep.subr.mxu0 0.0
  %3163 = vmatpush1.msra.mxu0 %v2839
  %3164 = vmatprep.subr.mxu0 0.0
  %3165 = vmatpush1.msra.mxu0 %v2840
  %3166 = vmatprep.subr.mxu0 0.0
  %3167 = vmatpush1.msra.mxu0 %v2841
  %3168 = vmatprep.subr.mxu0 0.0
  %3169 = vmatpush1.msra.mxu0 %v2842
  %3170 = vmatprep.subr.mxu0 0.0
  %3171 = vmatpush1.msra.mxu0 %v2843
  %3172 = vmatprep.subr.mxu0 0.0
  %3173 = vmatpush1.msra.mxu0 %v2844
  %3174 = vmatprep.subr.mxu0 0.0
  %3175 = vmatpush1.msra.mxu0 %v2845
  %3176 = vmatprep.subr.mxu0 0.0
  %3177 = vmatpush1.msra.mxu0 %v2846
  %3178 = vmatprep.subr.mxu0 0.0
  %3179 = vmatpush1.msra.mxu0 %v2847
  %3180 = vmatprep.subr.mxu0 0.0
  %3181 = vmatpush1.msra.mxu0 %v2848
  %3182 = vmatprep.subr.mxu0 0.0
  %3183 = vmatpush1.msra.mxu0 %v2849
  %3184 = vmatprep.subr.mxu0 0.0
  %3185 = vmatpush1.msra.mxu0 %v2850
  %3186 = vmatprep.subr.mxu0 0.0
  %3187 = vmatpush1.msra.mxu0 %v2851
  %3188 = vmatprep.subr.mxu0 0.0
  %3189 = vmatpush1.msra.mxu0 %v2852
  %3190 = vmatprep.subr.mxu0 0.0
  %3191 = vmatpush1.msra.mxu0 %v2853
  %3192 = vmatprep.mubr.f32.mxu0 %v2761
  %3193 = vmatmul.mubr.f32.gmra.mrb[0].mxu0 %v2760
  %v3194 = vpop.f32.mrb[0].mxu0
  %v3195 = vadd.f32 %v3120, %v3194
  %v3196 = vpop.f32.mrb[0].mxu0
  %3197 = vmatprep.mubr.f32.mxu0 %v2777
  %3198 = vmatmul.mubr.f32.gmra.mrb[0].mxu0 %v2776
  %v3199 = vpop.f32.mrb[0].mxu0
  %v3200 = vadd.f32 %v3125, %v3199
  %v3201 = vpop.f32.mrb[0].mxu0
  %3202 = vdwg.mxu0
  %3203 = vmatprep.subr.mxu0 0.0
  %3204 = vmatpush1.msra.mxu0 %v2854
  %3205 = vmatprep.subr.mxu0 0.0
  %3206 = vmatpush1.msra.mxu0 %v2855
  %3207 = vmatprep.subr.mxu0 0.0
  %3208 = vmatpush1.msra.mxu0 %v2856
  %3209 = vmatprep.subr.mxu0 0.0
  %3210 = vmatpush1.msra.mxu0 %v2857
  %3211 = vmatprep.subr.mxu0 0.0
  %3212 = vmatpush1.msra.mxu0 %v2858
  %3213 = vmatprep.subr.mxu0 0.0
  %3214 = vmatpush1.msra.mxu0 %v2859
  %3215 = vmatprep.subr.mxu0 0.0
  %3216 = vmatpush1.msra.mxu0 %v2860
  %3217 = vmatprep.subr.mxu0 0.0
  %3218 = vmatpush1.msra.mxu0 %v2861
  %3219 = vmatprep.subr.mxu0 0.0
  %3220 = vmatpush1.msra.mxu0 %v2862
  %3221 = vmatprep.subr.mxu0 0.0
  %3222 = vmatpush1.msra.mxu0 %v2863
  %3223 = vmatprep.subr.mxu0 0.0
  %3224 = vmatpush1.msra.mxu0 %v2864
  %3225 = vmatprep.subr.mxu0 0.0
  %3226 = vmatpush1.msra.mxu0 %v2865
  %3227 = vmatprep.subr.mxu0 0.0
  %3228 = vmatpush1.msra.mxu0 %v2866
  %3229 = vmatprep.subr.mxu0 0.0
  %3230 = vmatpush1.msra.mxu0 %v2867
  %3231 = vmatprep.subr.mxu0 0.0
  %3232 = vmatpush1.msra.mxu0 %v2868
  %3233 = vmatprep.subr.mxu0 0.0
  %3234 = vmatpush1.msra.mxu0 %v2869
  %3235 = vmatprep.subr.mxu0 0.0
  %3236 = vmatpush1.msra.mxu0 %v2870
  %3237 = vmatprep.subr.mxu0 0.0
  %3238 = vmatpush1.msra.mxu0 %v2871
  %3239 = vmatprep.subr.mxu0 0.0
  %3240 = vmatpush1.msra.mxu0 %v2872
  %3241 = vmatprep.subr.mxu0 0.0
  %3242 = vmatpush1.msra.mxu0 %v2873
  %3243 = vmatprep.subr.mxu0 0.0
  %3244 = vmatpush1.msra.mxu0 %v2874
  %3245 = vmatprep.subr.mxu0 0.0
  %3246 = vmatpush1.msra.mxu0 %v2875
  %3247 = vmatprep.subr.mxu0 0.0
  %3248 = vmatpush1.msra.mxu0 %v2876
  %3249 = vmatprep.subr.mxu0 0.0
  %3250 = vmatpush1.msra.mxu0 %v2877
  %3251 = vmatprep.subr.mxu0 0.0
  %3252 = vmatpush1.msra.mxu0 %v2878
  %3253 = vmatprep.subr.mxu0 0.0
  %3254 = vmatpush1.msra.mxu0 %v2879
  %3255 = vmatprep.subr.mxu0 0.0
  %3256 = vmatpush1.msra.mxu0 %v2880
  %3257 = vmatprep.subr.mxu0 0.0
  %3258 = vmatpush1.msra.mxu0 %v2881
  %3259 = vmatprep.subr.mxu0 0.0
  %3260 = vmatpush1.msra.mxu0 %v2882
  %3261 = vmatprep.subr.mxu0 0.0
  %3262 = vmatpush1.msra.mxu0 %v2883
  %3263 = vmatprep.subr.mxu0 0.0
  %3264 = vmatpush1.msra.mxu0 %v2884
  %3265 = vmatprep.subr.mxu0 0.0
  %3266 = vmatpush1.msra.mxu0 %v2885
  %3267 = vmatprep.mubr.f32.mxu0 %v2763
  %3268 = vmatmul.mubr.f32.gmra.mrb[0].mxu0 %v2762
  %v3269 = vpop.f32.mrb[0].mxu0
  %v3270 = vadd.f32 %v3195, %v3269
  %v3271 = vpop.f32.mrb[0].mxu0
  %3272 = vmatprep.mubr.f32.mxu0 %v2779
  %3273 = vmatmul.mubr.f32.gmra.mrb[0].mxu0 %v2778
  %v3274 = vpop.f32.mrb[0].mxu0
  %v3275 = vadd.f32 %v3200, %v3274
  %v3276 = vpop.f32.mrb[0].mxu0
  %3277 = vdwg.mxu0
  %3278 = vmatprep.subr.mxu0 0.0
  %3279 = vmatpush1.msra.mxu0 %v2886
  %3280 = vmatprep.subr.mxu0 0.0
  %3281 = vmatpush1.msra.mxu0 %v2887
  %3282 = vmatprep.subr.mxu0 0.0
  %3283 = vmatpush1.msra.mxu0 %v2888
  %3284 = vmatprep.subr.mxu0 0.0
  %3285 = vmatpush1.msra.mxu0 %v2889
  %3286 = vmatprep.subr.mxu0 0.0
  %3287 = vmatpush1.msra.mxu0 %v2890
  %3288 = vmatprep.subr.mxu0 0.0
  %3289 = vmatpush1.msra.mxu0 %v2891
  %3290 = vmatprep.subr.mxu0 0.0
  %3291 = vmatpush1.msra.mxu0 %v2892
  %3292 = vmatprep.subr.mxu0 0.0
  %3293 = vmatpush1.msra.mxu0 %v2893
  %3294 = vmatprep.subr.mxu0 0.0
  %3295 = vmatpush1.msra.mxu0 %v2894
  %3296 = vmatprep.subr.mxu0 0.0
  %3297 = vmatpush1.msra.mxu0 %v2895
  %3298 = vmatprep.subr.mxu0 0.0
  %3299 = vmatpush1.msra.mxu0 %v2896
  %3300 = vmatprep.subr.mxu0 0.0
  %3301 = vmatpush1.msra.mxu0 %v2897
  %3302 = vmatprep.subr.mxu0 0.0
  %3303 = vmatpush1.msra.mxu0 %v2898
  %3304 = vmatprep.subr.mxu0 0.0
  %3305 = vmatpush1.msra.mxu0 %v2899
  %3306 = vmatprep.subr.mxu0 0.0
  %3307 = vmatpush1.msra.mxu0 %v2900
  %3308 = vmatprep.subr.mxu0 0.0
  %3309 = vmatpush1.msra.mxu0 %v2901
  %3310 = vmatprep.subr.mxu0 0.0
  %3311 = vmatpush1.msra.mxu0 %v2902
  %3312 = vmatprep.subr.mxu0 0.0
  %3313 = vmatpush1.msra.mxu0 %v2903
  %3314 = vmatprep.subr.mxu0 0.0
  %3315 = vmatpush1.msra.mxu0 %v2904
  %3316 = vmatprep.subr.mxu0 0.0
  %3317 = vmatpush1.msra.mxu0 %v2905
  %3318 = vmatprep.subr.mxu0 0.0
  %3319 = vmatpush1.msra.mxu0 %v2906
  %3320 = vmatprep.subr.mxu0 0.0
  %3321 = vmatpush1.msra.mxu0 %v2907
  %3322 = vmatprep.subr.mxu0 0.0
  %3323 = vmatpush1.msra.mxu0 %v2908
  %3324 = vmatprep.subr.mxu0 0.0
  %3325 = vmatpush1.msra.mxu0 %v2909
  %3326 = vmatprep.subr.mxu0 0.0
  %3327 = vmatpush1.msra.mxu0 %v2910
  %3328 = vmatprep.subr.mxu0 0.0
  %3329 = vmatpush1.msra.mxu0 %v2911
  %3330 = vmatprep.subr.mxu0 0.0
  %3331 = vmatpush1.msra.mxu0 %v2912
  %3332 = vmatprep.subr.mxu0 0.0
  %3333 = vmatpush1.msra.mxu0 %v2913
  %3334 = vmatprep.subr.mxu0 0.0
  %3335 = vmatpush1.msra.mxu0 %v2914
  %3336 = vmatprep.subr.mxu0 0.0
  %3337 = vmatpush1.msra.mxu0 %v2915
  %3338 = vmatprep.subr.mxu0 0.0
  %3339 = vmatpush1.msra.mxu0 %v2916
  %3340 = vmatprep.subr.mxu0 0.0
  %3341 = vmatpush1.msra.mxu0 %v2917
  %3342 = vmatprep.mubr.f32.mxu0 %v2765
  %3343 = vmatmul.mubr.f32.gmra.mrb[0].mxu0 %v2764
  %v3344 = vpop.f32.mrb[0].mxu0
  %v3345 = vadd.f32 %v3270, %v3344
  %v3346 = vpop.f32.mrb[0].mxu0
  %3347 = vmatprep.mubr.f32.mxu0 %v2781
  %3348 = vmatmul.mubr.f32.gmra.mrb[0].mxu0 %v2780
  %v3349 = vpop.f32.mrb[0].mxu0
  %v3350 = vadd.f32 %v3275, %v3349
  %v3351 = vpop.f32.mrb[0].mxu0
  %3352 = vdwg.mxu0
  %3353 = vmatprep.subr.mxu0 0.0
  %3354 = vmatpush1.msra.mxu0 %v2918
  %3355 = vmatprep.subr.mxu0 0.0
  %3356 = vmatpush1.msra.mxu0 %v2919
  %3357 = vmatprep.subr.mxu0 0.0
  %3358 = vmatpush1.msra.mxu0 %v2920
  %3359 = vmatprep.subr.mxu0 0.0
  %3360 = vmatpush1.msra.mxu0 %v2921
  %3361 = vmatprep.subr.mxu0 0.0
  %3362 = vmatpush1.msra.mxu0 %v2922
  %3363 = vmatprep.subr.mxu0 0.0
  %3364 = vmatpush1.msra.mxu0 %v2923
  %3365 = vmatprep.subr.mxu0 0.0
  %3366 = vmatpush1.msra.mxu0 %v2924
  %3367 = vmatprep.subr.mxu0 0.0
  %3368 = vmatpush1.msra.mxu0 %v2925
  %3369 = vmatprep.subr.mxu0 0.0
  %3370 = vmatpush1.msra.mxu0 %v2926
  %3371 = vmatprep.subr.mxu0 0.0
  %3372 = vmatpush1.msra.mxu0 %v2927
  %3373 = vmatprep.subr.mxu0 0.0
  %3374 = vmatpush1.msra.mxu0 %v2928
  %3375 = vmatprep.subr.mxu0 0.0
  %3376 = vmatpush1.msra.mxu0 %v2929
  %3377 = vmatprep.subr.mxu0 0.0
  %3378 = vmatpush1.msra.mxu0 %v2930
  %3379 = vmatprep.subr.mxu0 0.0
  %3380 = vmatpush1.msra.mxu0 %v2931
  %3381 = vmatprep.subr.mxu0 0.0
  %3382 = vmatpush1.msra.mxu0 %v2932
  %3383 = vmatprep.subr.mxu0 0.0
  %3384 = vmatpush1.msra.mxu0 %v2933
  %3385 = vmatprep.subr.mxu0 0.0
  %3386 = vmatpush1.msra.mxu0 %v2934
  %3387 = vmatprep.subr.mxu0 0.0
  %3388 = vmatpush1.msra.mxu0 %v2935
  %3389 = vmatprep.subr.mxu0 0.0
  %3390 = vmatpush1.msra.mxu0 %v2936
  %3391 = vmatprep.subr.mxu0 0.0
  %3392 = vmatpush1.msra.mxu0 %v2937
  %3393 = vmatprep.subr.mxu0 0.0
  %3394 = vmatpush1.msra.mxu0 %v2938
  %3395 = vmatprep.subr.mxu0 0.0
  %3396 = vmatpush1.msra.mxu0 %v2939
  %3397 = vmatprep.subr.mxu0 0.0
  %3398 = vmatpush1.msra.mxu0 %v2940
  %3399 = vmatprep.subr.mxu0 0.0
  %3400 = vmatpush1.msra.mxu0 %v2941
  %3401 = vmatprep.subr.mxu0 0.0
  %3402 = vmatpush1.msra.mxu0 %v2942
  %3403 = vmatprep.subr.mxu0 0.0
  %3404 = vmatpush1.msra.mxu0 %v2943
  %3405 = vmatprep.subr.mxu0 0.0
  %3406 = vmatpush1.msra.mxu0 %v2944
  %3407 = vmatprep.subr.mxu0 0.0
  %3408 = vmatpush1.msra.mxu0 %v2945
  %3409 = vmatprep.subr.mxu0 0.0
  %3410 = vmatpush1.msra.mxu0 %v2946
  %3411 = vmatprep.subr.mxu0 0.0
  %3412 = vmatpush1.msra.mxu0 %v2947
  %3413 = vmatprep.subr.mxu0 0.0
  %3414 = vmatpush1.msra.mxu0 %v2948
  %3415 = vmatprep.subr.mxu0 0.0
  %3416 = vmatpush1.msra.mxu0 %v2949
  %3417 = vmatprep.mubr.f32.mxu0 %v2767
  %3418 = vmatmul.mubr.f32.gmra.mrb[0].mxu0 %v2766
  %v3419 = vpop.f32.mrb[0].mxu0
  %v3420 = vadd.f32 %v3345, %v3419
  %v3421 = vpop.f32.mrb[0].mxu0
  %3422 = vmatprep.mubr.f32.mxu0 %v2783
  %3423 = vmatmul.mubr.f32.gmra.mrb[0].mxu0 %v2782
  %v3424 = vpop.f32.mrb[0].mxu0
  %v3425 = vadd.f32 %v3350, %v3424
  %v3426 = vpop.f32.mrb[0].mxu0
  %3427 = vdwg.mxu0
  %3428 = vmatprep.subr.mxu0 0.0
  %3429 = vmatpush1.msra.mxu0 %v2950
  %3430 = vmatprep.subr.mxu0 0.0
  %3431 = vmatpush1.msra.mxu0 %v2951
  %3432 = vmatprep.subr.mxu0 0.0
  %3433 = vmatpush1.msra.mxu0 %v2952
  %3434 = vmatprep.subr.mxu0 0.0
  %3435 = vmatpush1.msra.mxu0 %v2953
  %3436 = vmatprep.subr.mxu0 0.0
  %3437 = vmatpush1.msra.mxu0 %v2954
  %3438 = vmatprep.subr.mxu0 0.0
  %3439 = vmatpush1.msra.mxu0 %v2955
  %3440 = vmatprep.subr.mxu0 0.0
  %3441 = vmatpush1.msra.mxu0 %v2956
  %3442 = vmatprep.subr.mxu0 0.0
  %3443 = vmatpush1.msra.mxu0 %v2957
  %3444 = vmatprep.subr.mxu0 0.0
  %3445 = vmatpush1.msra.mxu0 %v2958
  %3446 = vmatprep.subr.mxu0 0.0
  %3447 = vmatpush1.msra.mxu0 %v2959
  %3448 = vmatprep.subr.mxu0 0.0
  %3449 = vmatpush1.msra.mxu0 %v2960
  %3450 = vmatprep.subr.mxu0 0.0
  %3451 = vmatpush1.msra.mxu0 %v2961
  %3452 = vmatprep.subr.mxu0 0.0
  %3453 = vmatpush1.msra.mxu0 %v2962
  %3454 = vmatprep.subr.mxu0 0.0
  %3455 = vmatpush1.msra.mxu0 %v2963
  %3456 = vmatprep.subr.mxu0 0.0
  %3457 = vmatpush1.msra.mxu0 %v2964
  %3458 = vmatprep.subr.mxu0 0.0
  %3459 = vmatpush1.msra.mxu0 %v2965
  %3460 = vmatprep.subr.mxu0 0.0
  %3461 = vmatpush1.msra.mxu0 %v2966
  %3462 = vmatprep.subr.mxu0 0.0
  %3463 = vmatpush1.msra.mxu0 %v2967
  %3464 = vmatprep.subr.mxu0 0.0
  %3465 = vmatpush1.msra.mxu0 %v2968
  %3466 = vmatprep.subr.mxu0 0.0
  %3467 = vmatpush1.msra.mxu0 %v2969
  %3468 = vmatprep.subr.mxu0 0.0
  %3469 = vmatpush1.msra.mxu0 %v2970
  %3470 = vmatprep.subr.mxu0 0.0
  %3471 = vmatpush1.msra.mxu0 %v2971
  %3472 = vmatprep.subr.mxu0 0.0
  %3473 = vmatpush1.msra.mxu0 %v2972
  %3474 = vmatprep.subr.mxu0 0.0
  %3475 = vmatpush1.msra.mxu0 %v2973
  %3476 = vmatprep.subr.mxu0 0.0
  %3477 = vmatpush1.msra.mxu0 %v2974
  %3478 = vmatprep.subr.mxu0 0.0
  %3479 = vmatpush1.msra.mxu0 %v2975
  %3480 = vmatprep.subr.mxu0 0.0
  %3481 = vmatpush1.msra.mxu0 %v2976
  %3482 = vmatprep.subr.mxu0 0.0
  %3483 = vmatpush1.msra.mxu0 %v2977
  %3484 = vmatprep.subr.mxu0 0.0
  %3485 = vmatpush1.msra.mxu0 %v2978
  %3486 = vmatprep.subr.mxu0 0.0
  %3487 = vmatpush1.msra.mxu0 %v2979
  %3488 = vmatprep.subr.mxu0 0.0
  %3489 = vmatpush1.msra.mxu0 %v2980
  %3490 = vmatprep.subr.mxu0 0.0
  %3491 = vmatpush1.msra.mxu0 %v2981
  %3492 = vmatprep.mubr.f32.mxu0 %v2769
  %3493 = vmatmul.mubr.f32.gmra.mrb[0].mxu0 %v2768
  %v3494 = vpop.f32.mrb[0].mxu0
  %v3495 = vadd.f32 %v3420, %v3494
  %v3496 = vpop.f32.mrb[0].mxu0
  %3497 = vmatprep.mubr.f32.mxu0 %v2785
  %3498 = vmatmul.mubr.f32.gmra.mrb[0].mxu0 %v2784
  %v3499 = vpop.f32.mrb[0].mxu0
  %v3500 = vadd.f32 %v3425, %v3499
  %v3501 = vpop.f32.mrb[0].mxu0
  %3502 = vdwg.mxu0
  %3503 = vmatprep.subr.mxu0 0.0
  %3504 = vmatpush1.msra.mxu0 %v2982
  %3505 = vmatprep.subr.mxu0 0.0
  %3506 = vmatpush1.msra.mxu0 %v2983
  %3507 = vmatprep.subr.mxu0 0.0
  %3508 = vmatpush1.msra.mxu0 %v2984
  %3509 = vmatprep.subr.mxu0 0.0
  %3510 = vmatpush1.msra.mxu0 %v2985
  %3511 = vmatprep.subr.mxu0 0.0
  %3512 = vmatpush1.msra.mxu0 %v2986
  %3513 = vmatprep.subr.mxu0 0.0
  %3514 = vmatpush1.msra.mxu0 %v2987
  %3515 = vmatprep.subr.mxu0 0.0
  %3516 = vmatpush1.msra.mxu0 %v2988
  %3517 = vmatprep.subr.mxu0 0.0
  %3518 = vmatpush1.msra.mxu0 %v2989
  %3519 = vmatprep.subr.mxu0 0.0
  %3520 = vmatpush1.msra.mxu0 %v2990
  %3521 = vmatprep.subr.mxu0 0.0
  %3522 = vmatpush1.msra.mxu0 %v2991
  %3523 = vmatprep.subr.mxu0 0.0
  %3524 = vmatpush1.msra.mxu0 %v2992
  %3525 = vmatprep.subr.mxu0 0.0
  %3526 = vmatpush1.msra.mxu0 %v2993
  %3527 = vmatprep.subr.mxu0 0.0
  %3528 = vmatpush1.msra.mxu0 %v2994
  %3529 = vmatprep.subr.mxu0 0.0
  %3530 = vmatpush1.msra.mxu0 %v2995
  %3531 = vmatprep.subr.mxu0 0.0
  %3532 = vmatpush1.msra.mxu0 %v2996
  %3533 = vmatprep.subr.mxu0 0.0
  %3534 = vmatpush1.msra.mxu0 %v2997
  %3535 = vmatprep.subr.mxu0 0.0
  %3536 = vmatpush1.msra.mxu0 %v2998
  %3537 = vmatprep.subr.mxu0 0.0
  %3538 = vmatpush1.msra.mxu0 %v2999
  %3539 = vmatprep.subr.mxu0 0.0
  %3540 = vmatpush1.msra.mxu0 %v3000
  %3541 = vmatprep.subr.mxu0 0.0
  %3542 = vmatpush1.msra.mxu0 %v3001
  %3543 = vmatprep.subr.mxu0 0.0
  %3544 = vmatpush1.msra.mxu0 %v3002
  %3545 = vmatprep.subr.mxu0 0.0
  %3546 = vmatpush1.msra.mxu0 %v3003
  %3547 = vmatprep.subr.mxu0 0.0
  %3548 = vmatpush1.msra.mxu0 %v3004
  %3549 = vmatprep.subr.mxu0 0.0
  %3550 = vmatpush1.msra.mxu0 %v3005
  %3551 = vmatprep.subr.mxu0 0.0
  %3552 = vmatpush1.msra.mxu0 %v3006
  %3553 = vmatprep.subr.mxu0 0.0
  %3554 = vmatpush1.msra.mxu0 %v3007
  %3555 = vmatprep.subr.mxu0 0.0
  %3556 = vmatpush1.msra.mxu0 %v3008
  %3557 = vmatprep.subr.mxu0 0.0
  %3558 = vmatpush1.msra.mxu0 %v3009
  %3559 = vmatprep.subr.mxu0 0.0
  %3560 = vmatpush1.msra.mxu0 %v3010
  %3561 = vmatprep.subr.mxu0 0.0
  %3562 = vmatpush1.msra.mxu0 %v3011
  %3563 = vmatprep.subr.mxu0 0.0
  %3564 = vmatpush1.msra.mxu0 %v3012
  %3565 = vmatprep.subr.mxu0 0.0
  %3566 = vmatpush1.msra.mxu0 %v3013
  %3567 = vmatprep.mubr.f32.mxu0 %v2771
  %3568 = vmatmul.mubr.f32.gmra.mrb[0].mxu0 %v2770
  %v3569 = vpop.f32.mrb[0].mxu0
  %v3570 = vadd.f32 %v3495, %v3569
  %v3571 = vpop.f32.mrb[0].mxu0
  %3572 = vmatprep.mubr.f32.mxu0 %v2787
  %3573 = vmatmul.mubr.f32.gmra.mrb[0].mxu0 %v2786
  %v3574 = vpop.f32.mrb[0].mxu0
  %v3575 = vadd.f32 %v3500, %v3574
  %v3576 = vpop.f32.mrb[0].mxu0
  %3577 = vdwg.mxu0
  %3578 = vmatprep.subr.mxu0 0.0
  %3579 = vmatpush1.msra.mxu0 %v3014
  %3580 = vmatprep.subr.mxu0 0.0
  %3581 = vmatpush1.msra.mxu0 %v3015
  %3582 = vmatprep.subr.mxu0 0.0
  %3583 = vmatpush1.msra.mxu0 %v3016
  %3584 = vmatprep.subr.mxu0 0.0
  %3585 = vmatpush1.msra.mxu0 %v3017
  %3586 = vmatprep.subr.mxu0 0.0
  %3587 = vmatpush1.msra.mxu0 %v3018
  %3588 = vmatprep.subr.mxu0 0.0
  %3589 = vmatpush1.msra.mxu0 %v3019
  %3590 = vmatprep.subr.mxu0 0.0
  %3591 = vmatpush1.msra.mxu0 %v3020
  %3592 = vmatprep.subr.mxu0 0.0
  %3593 = vmatpush1.msra.mxu0 %v3021
  %3594 = vmatprep.subr.mxu0 0.0
  %3595 = vmatpush1.msra.mxu0 %v3022
  %3596 = vmatprep.subr.mxu0 0.0
  %3597 = vmatpush1.msra.mxu0 %v3023
  %3598 = vmatprep.subr.mxu0 0.0
  %3599 = vmatpush1.msra.mxu0 %v3024
  %3600 = vmatprep.subr.mxu0 0.0
  %3601 = vmatpush1.msra.mxu0 %v3025
  %3602 = vmatprep.subr.mxu0 0.0
  %3603 = vmatpush1.msra.mxu0 %v3026
  %3604 = vmatprep.subr.mxu0 0.0
  %3605 = vmatpush1.msra.mxu0 %v3027
  %3606 = vmatprep.subr.mxu0 0.0
  %3607 = vmatpush1.msra.mxu0 %v3028
  %3608 = vmatprep.subr.mxu0 0.0
  %3609 = vmatpush1.msra.mxu0 %v3029
  %3610 = vmatprep.subr.mxu0 0.0
  %3611 = vmatpush1.msra.mxu0 %v3030
  %3612 = vmatprep.subr.mxu0 0.0
  %3613 = vmatpush1.msra.mxu0 %v3031
  %3614 = vmatprep.subr.mxu0 0.0
  %3615 = vmatpush1.msra.mxu0 %v3032
  %3616 = vmatprep.subr.mxu0 0.0
  %3617 = vmatpush1.msra.mxu0 %v3033
  %3618 = vmatprep.subr.mxu0 0.0
  %3619 = vmatpush1.msra.mxu0 %v3034
  %3620 = vmatprep.subr.mxu0 0.0
  %3621 = vmatpush1.msra.mxu0 %v3035
  %3622 = vmatprep.subr.mxu0 0.0
  %3623 = vmatpush1.msra.mxu0 %v3036
  %3624 = vmatprep.subr.mxu0 0.0
  %3625 = vmatpush1.msra.mxu0 %v3037
  %3626 = vmatprep.subr.mxu0 0.0
  %3627 = vmatpush1.msra.mxu0 %v3038
  %3628 = vmatprep.subr.mxu0 0.0
  %3629 = vmatpush1.msra.mxu0 %v3039
  %3630 = vmatprep.subr.mxu0 0.0
  %3631 = vmatpush1.msra.mxu0 %v3040
  %3632 = vmatprep.subr.mxu0 0.0
  %3633 = vmatpush1.msra.mxu0 %v3041
  %3634 = vmatprep.subr.mxu0 0.0
  %3635 = vmatpush1.msra.mxu0 %v3042
  %3636 = vmatprep.subr.mxu0 0.0
  %3637 = vmatpush1.msra.mxu0 %v3043
  %3638 = vmatprep.subr.mxu0 0.0
  %3639 = vmatpush1.msra.mxu0 %v3044
  %3640 = vmatprep.subr.mxu0 0.0
  %3641 = vmatpush1.msra.mxu0 %v3045
  %3642 = vmatprep.mubr.f32.mxu0 %v2773
  %3643 = vmatmul.mubr.f32.gmra.mrb[0].mxu0 %v2772
  %v3644 = vpop.f32.mrb[0].mxu0
  %v3645 = vadd.f32 %v3570, %v3644
  %v3646 = vpop.f32.mrb[0].mxu0
  %3647 = vmatprep.mubr.f32.mxu0 %v2789
  %3648 = vmatmul.mubr.f32.gmra.mrb[0].mxu0 %v2788
  %v3649 = vpop.f32.mrb[0].mxu0
  %v3650 = vadd.f32 %v3575, %v3649
  %v3651 = vpop.f32.mrb[0].mxu0
  %3652 = vdwg.mxu0
  %v3653 = vadd.f32 %v1986, %v3645
  %v3654 = vadd.f32 %v1987, %v3650
  %v3655 = vld [vmem:[%s25] sm:$0x1]
  %v3656 = vld [vmem:[%s27] sm:$0x1]
  %v3657 = vsel %vm276, %v3653, 0.0
  %3658 = vadd.xlane.f32.xlu0 %v3657
  %v3659 = vpop.xlane.xlu0 %3658
  %v3660 = vsel %vm276, %v3654, 0.0
  %3661 = vadd.xlane.f32.xlu0 %v3660
  %v3662 = vpop.xlane.xlu0 %3661
  %v3663 = vmul.f32 %v3659, %v1951
  %v3664 = vmul.f32 %v3662, %v1951
  %v3665 = vsub.f32 %v3653, %v3663
  %v3666 = vsub.f32 %v3654, %v3664
  %v3667 = vmul.f32 %v3665, %v3665
  %v3668 = vmul.f32 %v3666, %v3666
  %v3669 = vsel %vm276, %v3667, 0.0
  %3670 = vadd.xlane.f32.xlu0 %v3669
  %v3671 = vpop.xlane.xlu0 %3670
  %v3672 = vsel %vm276, %v3668, 0.0
  %3673 = vadd.xlane.f32.xlu0 %v3672
  %v3674 = vpop.xlane.xlu0 %3673
  %v3675 = vmul.f32 %v3671, %v1951
  %v3676 = vmul.f32 %v3674, %v1951
  %v3677 = vadd.f32 %v3675, 1e-05
  %v3678 = vadd.f32 %v3676, 1e-05
  %v3679 = vrsqrt.pop %v3677
  %v3680 = vrsqrt.pop %v3678
  %v3681 = vmul.f32 %v3665, %v3679
  %v3682 = vmul.f32 %v3666, %v3680
  %v3684 = vlaneseq
  %v3685 = vshrl.u32 %v3684, 7
  %v3686 = vsub.s32 0, %v3685
  %v3687 = vrot.slane %v3655, %v3686
  %v3689 = vmul.f32 %v3681, %v3687
  %v3690 = vmul.f32 %v3682, %v3687
  %v3692 = vlaneseq
  %v3693 = vshrl.u32 %v3692, 7
  %v3694 = vsub.s32 0, %v3693
  %v3695 = vrot.slane %v3656, %v3694
  %v3697 = vadd.f32 %v3689, %v3695
  %v3698 = vadd.f32 %v3690, %v3695
  %v3699 = vld [vmem:[%s37] sm:$0xff]
  %v3700 = vld [vmem:[%s37 + $0x8] sm:$0xff]
  %v3701 = vld [vmem:[%s37 + $0x10] sm:$0xff]
  %v3702 = vld [vmem:[%s37 + $0x18] sm:$0xff]
  %v3703 = vld [vmem:[%s39] sm:$0x1]
  %v3705 = vlaneseq
  %v3706 = vshrl.u32 %v3705, 7
  %v3707 = vsub.s32 0, %v3706
  %v3708 = vrot.slane %v3703, %v3707
  %v3711 = vsel %vm276, %v3697, 0
  %v3714 = vsel %vm276, %v3698, 0
  %3716 = vmatprep.subr.mxu0 0.0
  %3717 = vmatpush1.msra.mxu0 %v3699
  %3718 = vmatprep.subr.mxu0 0.0
  %3719 = vmatpush1.msra.mxu0 %v3700
  %3720 = vmatprep.subr.mxu0 0.0
  %3721 = vmatpush1.msra.mxu0 %v3701
  %3722 = vmatprep.subr.mxu0 0.0
  %3723 = vmatpush1.msra.mxu0 %v3702
  %3724 = vmatprep.subr.mxu0 0.0
  %3725 = vmatpush1.msra.mxu0 0.0
  %3726 = vmatprep.subr.mxu0 0.0
  %3727 = vmatpush1.msra.mxu0 0.0
  %3728 = vmatprep.subr.mxu0 0.0
  %3729 = vmatpush1.msra.mxu0 0.0
  %3730 = vmatprep.subr.mxu0 0.0
  %3731 = vmatpush1.msra.mxu0 0.0
  %3732 = vmatprep.subr.mxu0 0.0
  %3733 = vmatpush1.msra.mxu0 0.0
  %3734 = vmatprep.subr.mxu0 0.0
  %3735 = vmatpush1.msra.mxu0 0.0
  %3736 = vmatprep.subr.mxu0 0.0
  %3737 = vmatpush1.msra.mxu0 0.0
  %3738 = vmatprep.subr.mxu0 0.0
  %3739 = vmatpush1.msra.mxu0 0.0
  %3740 = vmatprep.subr.mxu0 0.0
  %3741 = vmatpush1.msra.mxu0 0.0
  %3742 = vmatprep.subr.mxu0 0.0
  %3743 = vmatpush1.msra.mxu0 0.0
  %3744 = vmatprep.subr.mxu0 0.0
  %3745 = vmatpush1.msra.mxu0 0.0
  %3746 = vmatprep.subr.mxu0 0.0
  %3747 = vmatpush1.msra.mxu0 0.0
  %3748 = vmatprep.subr.mxu0 0.0
  %3749 = vmatpush1.msra.mxu0 0.0
  %3750 = vmatprep.subr.mxu0 0.0
  %3751 = vmatpush1.msra.mxu0 0.0
  %3752 = vmatprep.subr.mxu0 0.0
  %3753 = vmatpush1.msra.mxu0 0.0
  %3754 = vmatprep.subr.mxu0 0.0
  %3755 = vmatpush1.msra.mxu0 0.0
  %3756 = vmatprep.subr.mxu0 0.0
  %3757 = vmatpush1.msra.mxu0 0.0
  %3758 = vmatprep.subr.mxu0 0.0
  %3759 = vmatpush1.msra.mxu0 0.0
  %3760 = vmatprep.subr.mxu0 0.0
  %3761 = vmatpush1.msra.mxu0 0.0
  %3762 = vmatprep.subr.mxu0 0.0
  %3763 = vmatpush1.msra.mxu0 0.0
  %3764 = vmatprep.subr.mxu0 0.0
  %3765 = vmatpush1.msra.mxu0 0.0
  %3766 = vmatprep.subr.mxu0 0.0
  %3767 = vmatpush1.msra.mxu0 0.0
  %3768 = vmatprep.subr.mxu0 0.0
  %3769 = vmatpush1.msra.mxu0 0.0
  %3770 = vmatprep.subr.mxu0 0.0
  %3771 = vmatpush1.msra.mxu0 0.0
  %3772 = vmatprep.subr.mxu0 0.0
  %3773 = vmatpush1.msra.mxu0 0.0
  %3774 = vmatprep.subr.mxu0 0.0
  %3775 = vmatpush1.msra.mxu0 0.0
  %3776 = vmatprep.subr.mxu0 0.0
  %3777 = vmatpush1.msra.mxu0 0.0
  %3778 = vmatprep.subr.mxu0 0.0
  %3779 = vmatpush1.msra.mxu0 0.0
  %3780 = vmatprep.mubr.f32.mxu0 0.0
  %3781 = vmatmul.mubr.f32.gmra.mrb[0].mxu0 %v3711
  %v3782 = vpop.f32.mrb[0].mxu0
  %v3783 = vadd.f32 %v3708, %v3782
  %v3784 = vpop.f32.mrb[0].mxu0
  %3785 = vmatprep.mubr.f32.mxu0 0.0
  %3786 = vmatmul.mubr.f32.gmra.mrb[0].mxu0 %v3714
  %v3787 = vpop.f32.mrb[0].mxu0
  %v3788 = vadd.f32 %v3708, %v3787
  %v3789 = vpop.f32.mrb[0].mxu0
  %3790 = vdwg.mxu0
  %v3791 = vld [vmem:[%s41] sm:$0xff]
  %v3792 = vld [vmem:[%s41 + $0x8] sm:$0xff]
  %v3793 = vld [vmem:[%s41 + $0x10] sm:$0xff]
  %v3794 = vld [vmem:[%s41 + $0x18] sm:$0xff]
  %v3795 = vld [vmem:[%s43] sm:$0x1]
  %v3797 = vlaneseq
  %v3798 = vshrl.u32 %v3797, 7
  %v3799 = vsub.s32 0, %v3798
  %v3800 = vrot.slane %v3795, %v3799
  %3802 = vmatprep.subr.mxu0 0.0
  %3803 = vmatpush1.msra.mxu0 %v3791
  %3804 = vmatprep.subr.mxu0 0.0
  %3805 = vmatpush1.msra.mxu0 %v3792
  %3806 = vmatprep.subr.mxu0 0.0
  %3807 = vmatpush1.msra.mxu0 %v3793
  %3808 = vmatprep.subr.mxu0 0.0
  %3809 = vmatpush1.msra.mxu0 %v3794
  %3810 = vmatprep.subr.mxu0 0.0
  %3811 = vmatpush1.msra.mxu0 0.0
  %3812 = vmatprep.subr.mxu0 0.0
  %3813 = vmatpush1.msra.mxu0 0.0
  %3814 = vmatprep.subr.mxu0 0.0
  %3815 = vmatpush1.msra.mxu0 0.0
  %3816 = vmatprep.subr.mxu0 0.0
  %3817 = vmatpush1.msra.mxu0 0.0
  %3818 = vmatprep.subr.mxu0 0.0
  %3819 = vmatpush1.msra.mxu0 0.0
  %3820 = vmatprep.subr.mxu0 0.0
  %3821 = vmatpush1.msra.mxu0 0.0
  %3822 = vmatprep.subr.mxu0 0.0
  %3823 = vmatpush1.msra.mxu0 0.0
  %3824 = vmatprep.subr.mxu0 0.0
  %3825 = vmatpush1.msra.mxu0 0.0
  %3826 = vmatprep.subr.mxu0 0.0
  %3827 = vmatpush1.msra.mxu0 0.0
  %3828 = vmatprep.subr.mxu0 0.0
  %3829 = vmatpush1.msra.mxu0 0.0
  %3830 = vmatprep.subr.mxu0 0.0
  %3831 = vmatpush1.msra.mxu0 0.0
  %3832 = vmatprep.subr.mxu0 0.0
  %3833 = vmatpush1.msra.mxu0 0.0
  %3834 = vmatprep.subr.mxu0 0.0
  %3835 = vmatpush1.msra.mxu0 0.0
  %3836 = vmatprep.subr.mxu0 0.0
  %3837 = vmatpush1.msra.mxu0 0.0
  %3838 = vmatprep.subr.mxu0 0.0
  %3839 = vmatpush1.msra.mxu0 0.0
  %3840 = vmatprep.subr.mxu0 0.0
  %3841 = vmatpush1.msra.mxu0 0.0
  %3842 = vmatprep.subr.mxu0 0.0
  %3843 = vmatpush1.msra.mxu0 0.0
  %3844 = vmatprep.subr.mxu0 0.0
  %3845 = vmatpush1.msra.mxu0 0.0
  %3846 = vmatprep.subr.mxu0 0.0
  %3847 = vmatpush1.msra.mxu0 0.0
  %3848 = vmatprep.subr.mxu0 0.0
  %3849 = vmatpush1.msra.mxu0 0.0
  %3850 = vmatprep.subr.mxu0 0.0
  %3851 = vmatpush1.msra.mxu0 0.0
  %3852 = vmatprep.subr.mxu0 0.0
  %3853 = vmatpush1.msra.mxu0 0.0
  %3854 = vmatprep.subr.mxu0 0.0
  %3855 = vmatpush1.msra.mxu0 0.0
  %3856 = vmatprep.subr.mxu0 0.0
  %3857 = vmatpush1.msra.mxu0 0.0
  %3858 = vmatprep.subr.mxu0 0.0
  %3859 = vmatpush1.msra.mxu0 0.0
  %3860 = vmatprep.subr.mxu0 0.0
  %3861 = vmatpush1.msra.mxu0 0.0
  %3862 = vmatprep.subr.mxu0 0.0
  %3863 = vmatpush1.msra.mxu0 0.0
  %3864 = vmatprep.subr.mxu0 0.0
  %3865 = vmatpush1.msra.mxu0 0.0
  %3866 = vmatprep.mubr.f32.mxu0 0.0
  %3867 = vmatmul.mubr.f32.gmra.mrb[0].mxu0 %v3711
  %v3868 = vpop.f32.mrb[0].mxu0
  %v3869 = vadd.f32 %v3800, %v3868
  %v3870 = vpop.f32.mrb[0].mxu0
  %3871 = vmatprep.mubr.f32.mxu0 0.0
  %3872 = vmatmul.mubr.f32.gmra.mrb[0].mxu0 %v3714
  %v3873 = vpop.f32.mrb[0].mxu0
  %v3874 = vadd.f32 %v3800, %v3873
  %v3875 = vpop.f32.mrb[0].mxu0
  %3876 = vdwg.mxu0
  %v3877 = vld [vmem:[%s45] sm:$0xff]
  %v3878 = vld [vmem:[%s45 + $0x8] sm:$0xff]
  %v3879 = vld [vmem:[%s45 + $0x10] sm:$0xff]
  %v3880 = vld [vmem:[%s45 + $0x18] sm:$0xff]
  %v3881 = vld [vmem:[%s47] sm:$0x1]
  %v3883 = vlaneseq
  %v3884 = vshrl.u32 %v3883, 7
  %v3885 = vsub.s32 0, %v3884
  %v3886 = vrot.slane %v3881, %v3885
  %3888 = vmatprep.subr.mxu0 0.0
  %3889 = vmatpush1.msra.mxu0 %v3877
  %3890 = vmatprep.subr.mxu0 0.0
  %3891 = vmatpush1.msra.mxu0 %v3878
  %3892 = vmatprep.subr.mxu0 0.0
  %3893 = vmatpush1.msra.mxu0 %v3879
  %3894 = vmatprep.subr.mxu0 0.0
  %3895 = vmatpush1.msra.mxu0 %v3880
  %3896 = vmatprep.subr.mxu0 0.0
  %3897 = vmatpush1.msra.mxu0 0.0
  %3898 = vmatprep.subr.mxu0 0.0
  %3899 = vmatpush1.msra.mxu0 0.0
  %3900 = vmatprep.subr.mxu0 0.0
  %3901 = vmatpush1.msra.mxu0 0.0
  %3902 = vmatprep.subr.mxu0 0.0
  %3903 = vmatpush1.msra.mxu0 0.0
  %3904 = vmatprep.subr.mxu0 0.0
  %3905 = vmatpush1.msra.mxu0 0.0
  %3906 = vmatprep.subr.mxu0 0.0
  %3907 = vmatpush1.msra.mxu0 0.0
  %3908 = vmatprep.subr.mxu0 0.0
  %3909 = vmatpush1.msra.mxu0 0.0
  %3910 = vmatprep.subr.mxu0 0.0
  %3911 = vmatpush1.msra.mxu0 0.0
  %3912 = vmatprep.subr.mxu0 0.0
  %3913 = vmatpush1.msra.mxu0 0.0
  %3914 = vmatprep.subr.mxu0 0.0
  %3915 = vmatpush1.msra.mxu0 0.0
  %3916 = vmatprep.subr.mxu0 0.0
  %3917 = vmatpush1.msra.mxu0 0.0
  %3918 = vmatprep.subr.mxu0 0.0
  %3919 = vmatpush1.msra.mxu0 0.0
  %3920 = vmatprep.subr.mxu0 0.0
  %3921 = vmatpush1.msra.mxu0 0.0
  %3922 = vmatprep.subr.mxu0 0.0
  %3923 = vmatpush1.msra.mxu0 0.0
  %3924 = vmatprep.subr.mxu0 0.0
  %3925 = vmatpush1.msra.mxu0 0.0
  %3926 = vmatprep.subr.mxu0 0.0
  %3927 = vmatpush1.msra.mxu0 0.0
  %3928 = vmatprep.subr.mxu0 0.0
  %3929 = vmatpush1.msra.mxu0 0.0
  %3930 = vmatprep.subr.mxu0 0.0
  %3931 = vmatpush1.msra.mxu0 0.0
  %3932 = vmatprep.subr.mxu0 0.0
  %3933 = vmatpush1.msra.mxu0 0.0
  %3934 = vmatprep.subr.mxu0 0.0
  %3935 = vmatpush1.msra.mxu0 0.0
  %3936 = vmatprep.subr.mxu0 0.0
  %3937 = vmatpush1.msra.mxu0 0.0
  %3938 = vmatprep.subr.mxu0 0.0
  %3939 = vmatpush1.msra.mxu0 0.0
  %3940 = vmatprep.subr.mxu0 0.0
  %3941 = vmatpush1.msra.mxu0 0.0
  %3942 = vmatprep.subr.mxu0 0.0
  %3943 = vmatpush1.msra.mxu0 0.0
  %3944 = vmatprep.subr.mxu0 0.0
  %3945 = vmatpush1.msra.mxu0 0.0
  %3946 = vmatprep.subr.mxu0 0.0
  %3947 = vmatpush1.msra.mxu0 0.0
  %3948 = vmatprep.subr.mxu0 0.0
  %3949 = vmatpush1.msra.mxu0 0.0
  %3950 = vmatprep.subr.mxu0 0.0
  %3951 = vmatpush1.msra.mxu0 0.0
  %3952 = vmatprep.mubr.f32.mxu0 0.0
  %3953 = vmatmul.mubr.f32.gmra.mrb[0].mxu0 %v3711
  %v3954 = vpop.f32.mrb[0].mxu0
  %v3955 = vadd.f32 %v3886, %v3954
  %v3956 = vpop.f32.mrb[0].mxu0
  %3957 = vmatprep.mubr.f32.mxu0 0.0
  %3958 = vmatmul.mubr.f32.gmra.mrb[0].mxu0 %v3714
  %v3959 = vpop.f32.mrb[0].mxu0
  %v3960 = vadd.f32 %v3886, %v3959
  %v3961 = vpop.f32.mrb[0].mxu0
  %3962 = vdwg.mxu0
  %v3963 = vmul.f32 %v3869, %v534
  %v3964 = vmul.f32 %v3874, %v534
  %v3966 = vsel %vm276, %v3783, 0
  %v3969 = vsel %vm276, %v3963, 0
  %3971 = vmatprep.subr.mxu0 0.0
  %3972 = vmatpush1.xpose.msra.mxu0 %v3969
  %3973 = vmatprep.subr.mxu0 0.0
  %3974 = vmatpush1.xpose.msra.mxu0 0.0
  %3975 = vmatprep.subr.mxu0 0.0
  %3976 = vmatpush1.xpose.msra.mxu0 0.0
  %3977 = vmatprep.subr.mxu0 0.0
  %3978 = vmatpush1.xpose.msra.mxu0 0.0
  %3979 = vmatprep.subr.mxu0 0.0
  %3980 = vmatpush1.xpose.msra.mxu0 0.0
  %3981 = vmatprep.subr.mxu0 0.0
  %3982 = vmatpush1.xpose.msra.mxu0 0.0
  %3983 = vmatprep.subr.mxu0 0.0
  %3984 = vmatpush1.xpose.msra.mxu0 0.0
  %3985 = vmatprep.subr.mxu0 0.0
  %3986 = vmatpush1.xpose.msra.mxu0 0.0
  %3987 = vmatprep.subr.mxu0 0.0
  %3988 = vmatpush1.xpose.msra.mxu0 0.0
  %3989 = vmatprep.subr.mxu0 0.0
  %3990 = vmatpush1.xpose.msra.mxu0 0.0
  %3991 = vmatprep.subr.mxu0 0.0
  %3992 = vmatpush1.xpose.msra.mxu0 0.0
  %3993 = vmatprep.subr.mxu0 0.0
  %3994 = vmatpush1.xpose.msra.mxu0 0.0
  %3995 = vmatprep.subr.mxu0 0.0
  %3996 = vmatpush1.xpose.msra.mxu0 0.0
  %3997 = vmatprep.subr.mxu0 0.0
  %3998 = vmatpush1.xpose.msra.mxu0 0.0
  %3999 = vmatprep.subr.mxu0 0.0
  %4000 = vmatpush1.xpose.msra.mxu0 0.0
  %4001 = vmatprep.subr.mxu0 0.0
  %4002 = vmatpush1.xpose.msra.mxu0 0.0
  %4003 = vmatprep.subr.mxu0 0.0
  %4004 = vmatpush1.xpose.msra.mxu0 0.0
  %4005 = vmatprep.subr.mxu0 0.0
  %4006 = vmatpush1.xpose.msra.mxu0 0.0
  %4007 = vmatprep.subr.mxu0 0.0
  %4008 = vmatpush1.xpose.msra.mxu0 0.0
  %4009 = vmatprep.subr.mxu0 0.0
  %4010 = vmatpush1.xpose.msra.mxu0 0.0
  %4011 = vmatprep.subr.mxu0 0.0
  %4012 = vmatpush1.xpose.msra.mxu0 0.0
  %4013 = vmatprep.subr.mxu0 0.0
  %4014 = vmatpush1.xpose.msra.mxu0 0.0
  %4015 = vmatprep.subr.mxu0 0.0
  %4016 = vmatpush1.xpose.msra.mxu0 0.0
  %4017 = vmatprep.subr.mxu0 0.0
  %4018 = vmatpush1.xpose.msra.mxu0 0.0
  %4019 = vmatprep.subr.mxu0 0.0
  %4020 = vmatpush1.xpose.msra.mxu0 0.0
  %4021 = vmatprep.subr.mxu0 0.0
  %4022 = vmatpush1.xpose.msra.mxu0 0.0
  %4023 = vmatprep.subr.mxu0 0.0
  %4024 = vmatpush1.xpose.msra.mxu0 0.0
  %4025 = vmatprep.subr.mxu0 0.0
  %4026 = vmatpush1.xpose.msra.mxu0 0.0
  %4027 = vmatprep.subr.mxu0 0.0
  %4028 = vmatpush1.xpose.msra.mxu0 0.0
  %4029 = vmatprep.subr.mxu0 0.0
  %4030 = vmatpush1.xpose.msra.mxu0 0.0
  %4031 = vmatprep.subr.mxu0 0.0
  %4032 = vmatpush1.xpose.msra.mxu0 0.0
  %4033 = vmatprep.subr.mxu0 0.0
  %4034 = vmatpush1.xpose.msra.mxu0 0.0
  %4035 = vmatprep.mubr.f32.mxu0 0.0
  %4036 = vmatmul.mubr.f32.gmra.mrb[0].mxu0 %v3966
  %v4037 = vpop.f32.mrb[0].mxu0
  %v4038 = vadd.f32 0.0, %v4037
  %v4039 = vpop.f32.mrb[0].mxu0
  %4040 = vdwg.mxu0
  %v4042 = vsel %vm276, %v3788, 0
  %v4045 = vsel %vm276, %v3964, 0
  %4047 = vmatprep.subr.mxu0 0.0
  %4048 = vmatpush1.xpose.msra.mxu0 %v4045
  %4049 = vmatprep.subr.mxu0 0.0
  %4050 = vmatpush1.xpose.msra.mxu0 0.0
  %4051 = vmatprep.subr.mxu0 0.0
  %4052 = vmatpush1.xpose.msra.mxu0 0.0
  %4053 = vmatprep.subr.mxu0 0.0
  %4054 = vmatpush1.xpose.msra.mxu0 0.0
  %4055 = vmatprep.subr.mxu0 0.0
  %4056 = vmatpush1.xpose.msra.mxu0 0.0
  %4057 = vmatprep.subr.mxu0 0.0
  %4058 = vmatpush1.xpose.msra.mxu0 0.0
  %4059 = vmatprep.subr.mxu0 0.0
  %4060 = vmatpush1.xpose.msra.mxu0 0.0
  %4061 = vmatprep.subr.mxu0 0.0
  %4062 = vmatpush1.xpose.msra.mxu0 0.0
  %4063 = vmatprep.subr.mxu0 0.0
  %4064 = vmatpush1.xpose.msra.mxu0 0.0
  %4065 = vmatprep.subr.mxu0 0.0
  %4066 = vmatpush1.xpose.msra.mxu0 0.0
  %4067 = vmatprep.subr.mxu0 0.0
  %4068 = vmatpush1.xpose.msra.mxu0 0.0
  %4069 = vmatprep.subr.mxu0 0.0
  %4070 = vmatpush1.xpose.msra.mxu0 0.0
  %4071 = vmatprep.subr.mxu0 0.0
  %4072 = vmatpush1.xpose.msra.mxu0 0.0
  %4073 = vmatprep.subr.mxu0 0.0
  %4074 = vmatpush1.xpose.msra.mxu0 0.0
  %4075 = vmatprep.subr.mxu0 0.0
  %4076 = vmatpush1.xpose.msra.mxu0 0.0
  %4077 = vmatprep.subr.mxu0 0.0
  %4078 = vmatpush1.xpose.msra.mxu0 0.0
  %4079 = vmatprep.subr.mxu0 0.0
  %4080 = vmatpush1.xpose.msra.mxu0 0.0
  %4081 = vmatprep.subr.mxu0 0.0
  %4082 = vmatpush1.xpose.msra.mxu0 0.0
  %4083 = vmatprep.subr.mxu0 0.0
  %4084 = vmatpush1.xpose.msra.mxu0 0.0
  %4085 = vmatprep.subr.mxu0 0.0
  %4086 = vmatpush1.xpose.msra.mxu0 0.0
  %4087 = vmatprep.subr.mxu0 0.0
  %4088 = vmatpush1.xpose.msra.mxu0 0.0
  %4089 = vmatprep.subr.mxu0 0.0
  %4090 = vmatpush1.xpose.msra.mxu0 0.0
  %4091 = vmatprep.subr.mxu0 0.0
  %4092 = vmatpush1.xpose.msra.mxu0 0.0
  %4093 = vmatprep.subr.mxu0 0.0
  %4094 = vmatpush1.xpose.msra.mxu0 0.0
  %4095 = vmatprep.subr.mxu0 0.0
  %4096 = vmatpush1.xpose.msra.mxu0 0.0
  %4097 = vmatprep.subr.mxu0 0.0
  %4098 = vmatpush1.xpose.msra.mxu0 0.0
  %4099 = vmatprep.subr.mxu0 0.0
  %4100 = vmatpush1.xpose.msra.mxu0 0.0
  %4101 = vmatprep.subr.mxu0 0.0
  %4102 = vmatpush1.xpose.msra.mxu0 0.0
  %4103 = vmatprep.subr.mxu0 0.0
  %4104 = vmatpush1.xpose.msra.mxu0 0.0
  %4105 = vmatprep.subr.mxu0 0.0
  %4106 = vmatpush1.xpose.msra.mxu0 0.0
  %4107 = vmatprep.subr.mxu0 0.0
  %4108 = vmatpush1.xpose.msra.mxu0 0.0
  %4109 = vmatprep.subr.mxu0 0.0
  %4110 = vmatpush1.xpose.msra.mxu0 0.0
  %4111 = vmatprep.mubr.f32.mxu0 0.0
  %4112 = vmatmul.mubr.f32.gmra.mrb[0].mxu0 %v4042
  %v4113 = vpop.f32.mrb[0].mxu0
  %v4114 = vadd.f32 0.0, %v4113
  %v4115 = vpop.f32.mrb[0].mxu0
  %4116 = vdwg.mxu0
  %v4117 = vmul.f32 %v4038, 0.35355338
  %v4118 = vmul.f32 %v4114, 0.35355338
  %v4119 = vadd.f32 %v4117, %v264
  %v4120 = vadd.f32 %v4118, %v264
  %v4121 = vsel %vm693, %v4119, -inf
  %4122 = vmax.xlane.f32.xlu0 %v4121
  %v4123 = vpop.xlane.xlu0 %4122
  %v4124 = vsel %vm693, %v4120, -inf
  %4125 = vmax.xlane.f32.xlu0 %v4124
  %v4126 = vpop.xlane.xlu0 %4125
  %v4127 = vsub.f32 %v4119, %v4123
  %v4128 = vsub.f32 %v4120, %v4126
  %v4129 = vmul.f32 %v4127, 1.442695
  %v4130 = vpow.pop %v4129
  %v4131 = vmul.f32 %v4128, 1.442695
  %v4132 = vpow.pop %v4131
  %v4133 = vsel %vm693, %v4130, 0.0
  %4134 = vadd.xlane.f32.xlu0 %v4133
  %v4135 = vpop.xlane.xlu0 %4134
  %v4136 = vsel %vm693, %v4132, 0.0
  %4137 = vadd.xlane.f32.xlu0 %v4136
  %v4138 = vpop.xlane.xlu0 %4137
  %v4139 = vrcp.pop %v4135
  %v4140 = vrcp.pop %v4138
  %v4141 = vmul.f32 %v4130, %v4139
  %v4142 = vmul.f32 %v4132, %v4140
  %v4143 = vmul.f32 %v3955, %v534
  %v4144 = vmul.f32 %v3960, %v534
  %v4145 = vmul.f32 %v3869, %v722
  %v4146 = vmul.f32 %v3874, %v722
  %v4148 = vsel %vm276, %v4145, 0
  %4150 = vmatprep.subr.mxu0 0.0
  %4151 = vmatpush1.xpose.msra.mxu0 %v4148
  %4152 = vmatprep.subr.mxu0 0.0
  %4153 = vmatpush1.xpose.msra.mxu0 0.0
  %4154 = vmatprep.subr.mxu0 0.0
  %4155 = vmatpush1.xpose.msra.mxu0 0.0
  %4156 = vmatprep.subr.mxu0 0.0
  %4157 = vmatpush1.xpose.msra.mxu0 0.0
  %4158 = vmatprep.subr.mxu0 0.0
  %4159 = vmatpush1.xpose.msra.mxu0 0.0
  %4160 = vmatprep.subr.mxu0 0.0
  %4161 = vmatpush1.xpose.msra.mxu0 0.0
  %4162 = vmatprep.subr.mxu0 0.0
  %4163 = vmatpush1.xpose.msra.mxu0 0.0
  %4164 = vmatprep.subr.mxu0 0.0
  %4165 = vmatpush1.xpose.msra.mxu0 0.0
  %4166 = vmatprep.subr.mxu0 0.0
  %4167 = vmatpush1.xpose.msra.mxu0 0.0
  %4168 = vmatprep.subr.mxu0 0.0
  %4169 = vmatpush1.xpose.msra.mxu0 0.0
  %4170 = vmatprep.subr.mxu0 0.0
  %4171 = vmatpush1.xpose.msra.mxu0 0.0
  %4172 = vmatprep.subr.mxu0 0.0
  %4173 = vmatpush1.xpose.msra.mxu0 0.0
  %4174 = vmatprep.subr.mxu0 0.0
  %4175 = vmatpush1.xpose.msra.mxu0 0.0
  %4176 = vmatprep.subr.mxu0 0.0
  %4177 = vmatpush1.xpose.msra.mxu0 0.0
  %4178 = vmatprep.subr.mxu0 0.0
  %4179 = vmatpush1.xpose.msra.mxu0 0.0
  %4180 = vmatprep.subr.mxu0 0.0
  %4181 = vmatpush1.xpose.msra.mxu0 0.0
  %4182 = vmatprep.subr.mxu0 0.0
  %4183 = vmatpush1.xpose.msra.mxu0 0.0
  %4184 = vmatprep.subr.mxu0 0.0
  %4185 = vmatpush1.xpose.msra.mxu0 0.0
  %4186 = vmatprep.subr.mxu0 0.0
  %4187 = vmatpush1.xpose.msra.mxu0 0.0
  %4188 = vmatprep.subr.mxu0 0.0
  %4189 = vmatpush1.xpose.msra.mxu0 0.0
  %4190 = vmatprep.subr.mxu0 0.0
  %4191 = vmatpush1.xpose.msra.mxu0 0.0
  %4192 = vmatprep.subr.mxu0 0.0
  %4193 = vmatpush1.xpose.msra.mxu0 0.0
  %4194 = vmatprep.subr.mxu0 0.0
  %4195 = vmatpush1.xpose.msra.mxu0 0.0
  %4196 = vmatprep.subr.mxu0 0.0
  %4197 = vmatpush1.xpose.msra.mxu0 0.0
  %4198 = vmatprep.subr.mxu0 0.0
  %4199 = vmatpush1.xpose.msra.mxu0 0.0
  %4200 = vmatprep.subr.mxu0 0.0
  %4201 = vmatpush1.xpose.msra.mxu0 0.0
  %4202 = vmatprep.subr.mxu0 0.0
  %4203 = vmatpush1.xpose.msra.mxu0 0.0
  %4204 = vmatprep.subr.mxu0 0.0
  %4205 = vmatpush1.xpose.msra.mxu0 0.0
  %4206 = vmatprep.subr.mxu0 0.0
  %4207 = vmatpush1.xpose.msra.mxu0 0.0
  %4208 = vmatprep.subr.mxu0 0.0
  %4209 = vmatpush1.xpose.msra.mxu0 0.0
  %4210 = vmatprep.subr.mxu0 0.0
  %4211 = vmatpush1.xpose.msra.mxu0 0.0
  %4212 = vmatprep.subr.mxu0 0.0
  %4213 = vmatpush1.xpose.msra.mxu0 0.0
  %4214 = vmatprep.mubr.f32.mxu0 0.0
  %4215 = vmatmul.mubr.f32.gmra.mrb[0].mxu0 %v3966
  %v4216 = vpop.f32.mrb[0].mxu0
  %v4217 = vadd.f32 0.0, %v4216
  %v4218 = vpop.f32.mrb[0].mxu0
  %4219 = vdwg.mxu0
  %v4221 = vsel %vm276, %v4146, 0
  %4223 = vmatprep.subr.mxu0 0.0
  %4224 = vmatpush1.xpose.msra.mxu0 %v4221
  %4225 = vmatprep.subr.mxu0 0.0
  %4226 = vmatpush1.xpose.msra.mxu0 0.0
  %4227 = vmatprep.subr.mxu0 0.0
  %4228 = vmatpush1.xpose.msra.mxu0 0.0
  %4229 = vmatprep.subr.mxu0 0.0
  %4230 = vmatpush1.xpose.msra.mxu0 0.0
  %4231 = vmatprep.subr.mxu0 0.0
  %4232 = vmatpush1.xpose.msra.mxu0 0.0
  %4233 = vmatprep.subr.mxu0 0.0
  %4234 = vmatpush1.xpose.msra.mxu0 0.0
  %4235 = vmatprep.subr.mxu0 0.0
  %4236 = vmatpush1.xpose.msra.mxu0 0.0
  %4237 = vmatprep.subr.mxu0 0.0
  %4238 = vmatpush1.xpose.msra.mxu0 0.0
  %4239 = vmatprep.subr.mxu0 0.0
  %4240 = vmatpush1.xpose.msra.mxu0 0.0
  %4241 = vmatprep.subr.mxu0 0.0
  %4242 = vmatpush1.xpose.msra.mxu0 0.0
  %4243 = vmatprep.subr.mxu0 0.0
  %4244 = vmatpush1.xpose.msra.mxu0 0.0
  %4245 = vmatprep.subr.mxu0 0.0
  %4246 = vmatpush1.xpose.msra.mxu0 0.0
  %4247 = vmatprep.subr.mxu0 0.0
  %4248 = vmatpush1.xpose.msra.mxu0 0.0
  %4249 = vmatprep.subr.mxu0 0.0
  %4250 = vmatpush1.xpose.msra.mxu0 0.0
  %4251 = vmatprep.subr.mxu0 0.0
  %4252 = vmatpush1.xpose.msra.mxu0 0.0
  %4253 = vmatprep.subr.mxu0 0.0
  %4254 = vmatpush1.xpose.msra.mxu0 0.0
  %4255 = vmatprep.subr.mxu0 0.0
  %4256 = vmatpush1.xpose.msra.mxu0 0.0
  %4257 = vmatprep.subr.mxu0 0.0
  %4258 = vmatpush1.xpose.msra.mxu0 0.0
  %4259 = vmatprep.subr.mxu0 0.0
  %4260 = vmatpush1.xpose.msra.mxu0 0.0
  %4261 = vmatprep.subr.mxu0 0.0
  %4262 = vmatpush1.xpose.msra.mxu0 0.0
  %4263 = vmatprep.subr.mxu0 0.0
  %4264 = vmatpush1.xpose.msra.mxu0 0.0
  %4265 = vmatprep.subr.mxu0 0.0
  %4266 = vmatpush1.xpose.msra.mxu0 0.0
  %4267 = vmatprep.subr.mxu0 0.0
  %4268 = vmatpush1.xpose.msra.mxu0 0.0
  %4269 = vmatprep.subr.mxu0 0.0
  %4270 = vmatpush1.xpose.msra.mxu0 0.0
  %4271 = vmatprep.subr.mxu0 0.0
  %4272 = vmatpush1.xpose.msra.mxu0 0.0
  %4273 = vmatprep.subr.mxu0 0.0
  %4274 = vmatpush1.xpose.msra.mxu0 0.0
  %4275 = vmatprep.subr.mxu0 0.0
  %4276 = vmatpush1.xpose.msra.mxu0 0.0
  %4277 = vmatprep.subr.mxu0 0.0
  %4278 = vmatpush1.xpose.msra.mxu0 0.0
  %4279 = vmatprep.subr.mxu0 0.0
  %4280 = vmatpush1.xpose.msra.mxu0 0.0
  %4281 = vmatprep.subr.mxu0 0.0
  %4282 = vmatpush1.xpose.msra.mxu0 0.0
  %4283 = vmatprep.subr.mxu0 0.0
  %4284 = vmatpush1.xpose.msra.mxu0 0.0
  %4285 = vmatprep.subr.mxu0 0.0
  %4286 = vmatpush1.xpose.msra.mxu0 0.0
  %4287 = vmatprep.mubr.f32.mxu0 0.0
  %4288 = vmatmul.mubr.f32.gmra.mrb[0].mxu0 %v4042
  %v4289 = vpop.f32.mrb[0].mxu0
  %v4290 = vadd.f32 0.0, %v4289
  %v4291 = vpop.f32.mrb[0].mxu0
  %4292 = vdwg.mxu0
  %v4293 = vmul.f32 %v4217, 0.35355338
  %v4294 = vmul.f32 %v4290, 0.35355338
  %v4295 = vadd.f32 %v4293, %v264
  %v4296 = vadd.f32 %v4294, %v264
  %v4297 = vsel %vm693, %v4295, -inf
  %4298 = vmax.xlane.f32.xlu0 %v4297
  %v4299 = vpop.xlane.xlu0 %4298
  %v4300 = vsel %vm693, %v4296, -inf
  %4301 = vmax.xlane.f32.xlu0 %v4300
  %v4302 = vpop.xlane.xlu0 %4301
  %v4303 = vsub.f32 %v4295, %v4299
  %v4304 = vsub.f32 %v4296, %v4302
  %v4305 = vmul.f32 %v4303, 1.442695
  %v4306 = vpow.pop %v4305
  %v4307 = vmul.f32 %v4304, 1.442695
  %v4308 = vpow.pop %v4307
  %v4309 = vsel %vm693, %v4306, 0.0
  %4310 = vadd.xlane.f32.xlu0 %v4309
  %v4311 = vpop.xlane.xlu0 %4310
  %v4312 = vsel %vm693, %v4308, 0.0
  %4313 = vadd.xlane.f32.xlu0 %v4312
  %v4314 = vpop.xlane.xlu0 %4313
  %v4315 = vrcp.pop %v4311
  %v4316 = vrcp.pop %v4314
  %v4317 = vmul.f32 %v4306, %v4315
  %v4318 = vmul.f32 %v4308, %v4316
  %v4319 = vmul.f32 %v3955, %v722
  %v4320 = vmul.f32 %v3960, %v722
  %v4322 = vsel %vm693, %v4317, 0
  %4324 = vmatprep.subr.mxu0 0.0
  %4325 = vmatpush1.msra.mxu0 %v4319
  %4326 = vmatprep.subr.mxu0 0.0
  %4327 = vmatpush1.msra.mxu0 0.0
  %4328 = vmatprep.subr.mxu0 0.0
  %4329 = vmatpush1.msra.mxu0 0.0
  %4330 = vmatprep.subr.mxu0 0.0
  %4331 = vmatpush1.msra.mxu0 0.0
  %4332 = vmatprep.subr.mxu0 0.0
  %4333 = vmatpush1.msra.mxu0 0.0
  %4334 = vmatprep.subr.mxu0 0.0
  %4335 = vmatpush1.msra.mxu0 0.0
  %4336 = vmatprep.subr.mxu0 0.0
  %4337 = vmatpush1.msra.mxu0 0.0
  %4338 = vmatprep.subr.mxu0 0.0
  %4339 = vmatpush1.msra.mxu0 0.0
  %4340 = vmatprep.subr.mxu0 0.0
  %4341 = vmatpush1.msra.mxu0 0.0
  %4342 = vmatprep.subr.mxu0 0.0
  %4343 = vmatpush1.msra.mxu0 0.0
  %4344 = vmatprep.subr.mxu0 0.0
  %4345 = vmatpush1.msra.mxu0 0.0
  %4346 = vmatprep.subr.mxu0 0.0
  %4347 = vmatpush1.msra.mxu0 0.0
  %4348 = vmatprep.subr.mxu0 0.0
  %4349 = vmatpush1.msra.mxu0 0.0
  %4350 = vmatprep.subr.mxu0 0.0
  %4351 = vmatpush1.msra.mxu0 0.0
  %4352 = vmatprep.subr.mxu0 0.0
  %4353 = vmatpush1.msra.mxu0 0.0
  %4354 = vmatprep.subr.mxu0 0.0
  %4355 = vmatpush1.msra.mxu0 0.0
  %4356 = vmatprep.subr.mxu0 0.0
  %4357 = vmatpush1.msra.mxu0 0.0
  %4358 = vmatprep.subr.mxu0 0.0
  %4359 = vmatpush1.msra.mxu0 0.0
  %4360 = vmatprep.subr.mxu0 0.0
  %4361 = vmatpush1.msra.mxu0 0.0
  %4362 = vmatprep.subr.mxu0 0.0
  %4363 = vmatpush1.msra.mxu0 0.0
  %4364 = vmatprep.subr.mxu0 0.0
  %4365 = vmatpush1.msra.mxu0 0.0
  %4366 = vmatprep.subr.mxu0 0.0
  %4367 = vmatpush1.msra.mxu0 0.0
  %4368 = vmatprep.subr.mxu0 0.0
  %4369 = vmatpush1.msra.mxu0 0.0
  %4370 = vmatprep.subr.mxu0 0.0
  %4371 = vmatpush1.msra.mxu0 0.0
  %4372 = vmatprep.subr.mxu0 0.0
  %4373 = vmatpush1.msra.mxu0 0.0
  %4374 = vmatprep.subr.mxu0 0.0
  %4375 = vmatpush1.msra.mxu0 0.0
  %4376 = vmatprep.subr.mxu0 0.0
  %4377 = vmatpush1.msra.mxu0 0.0
  %4378 = vmatprep.subr.mxu0 0.0
  %4379 = vmatpush1.msra.mxu0 0.0
  %4380 = vmatprep.subr.mxu0 0.0
  %4381 = vmatpush1.msra.mxu0 0.0
  %4382 = vmatprep.subr.mxu0 0.0
  %4383 = vmatpush1.msra.mxu0 0.0
  %4384 = vmatprep.subr.mxu0 0.0
  %4385 = vmatpush1.msra.mxu0 0.0
  %4386 = vmatprep.subr.mxu0 0.0
  %4387 = vmatpush1.msra.mxu0 0.0
  %4388 = vmatprep.mubr.f32.mxu0 0.0
  %4389 = vmatmul.mubr.f32.gmra.mrb[0].mxu0 %v4322
  %v4390 = vpop.f32.mrb[0].mxu0
  %v4391 = vadd.f32 0.0, %v4390
  %v4392 = vpop.f32.mrb[0].mxu0
  %4393 = vdwg.mxu0
  %v4395 = vsel %vm693, %v4318, 0
  %4397 = vmatprep.subr.mxu0 0.0
  %4398 = vmatpush1.msra.mxu0 %v4320
  %4399 = vmatprep.subr.mxu0 0.0
  %4400 = vmatpush1.msra.mxu0 0.0
  %4401 = vmatprep.subr.mxu0 0.0
  %4402 = vmatpush1.msra.mxu0 0.0
  %4403 = vmatprep.subr.mxu0 0.0
  %4404 = vmatpush1.msra.mxu0 0.0
  %4405 = vmatprep.subr.mxu0 0.0
  %4406 = vmatpush1.msra.mxu0 0.0
  %4407 = vmatprep.subr.mxu0 0.0
  %4408 = vmatpush1.msra.mxu0 0.0
  %4409 = vmatprep.subr.mxu0 0.0
  %4410 = vmatpush1.msra.mxu0 0.0
  %4411 = vmatprep.subr.mxu0 0.0
  %4412 = vmatpush1.msra.mxu0 0.0
  %4413 = vmatprep.subr.mxu0 0.0
  %4414 = vmatpush1.msra.mxu0 0.0
  %4415 = vmatprep.subr.mxu0 0.0
  %4416 = vmatpush1.msra.mxu0 0.0
  %4417 = vmatprep.subr.mxu0 0.0
  %4418 = vmatpush1.msra.mxu0 0.0
  %4419 = vmatprep.subr.mxu0 0.0
  %4420 = vmatpush1.msra.mxu0 0.0
  %4421 = vmatprep.subr.mxu0 0.0
  %4422 = vmatpush1.msra.mxu0 0.0
  %4423 = vmatprep.subr.mxu0 0.0
  %4424 = vmatpush1.msra.mxu0 0.0
  %4425 = vmatprep.subr.mxu0 0.0
  %4426 = vmatpush1.msra.mxu0 0.0
  %4427 = vmatprep.subr.mxu0 0.0
  %4428 = vmatpush1.msra.mxu0 0.0
  %4429 = vmatprep.subr.mxu0 0.0
  %4430 = vmatpush1.msra.mxu0 0.0
  %4431 = vmatprep.subr.mxu0 0.0
  %4432 = vmatpush1.msra.mxu0 0.0
  %4433 = vmatprep.subr.mxu0 0.0
  %4434 = vmatpush1.msra.mxu0 0.0
  %4435 = vmatprep.subr.mxu0 0.0
  %4436 = vmatpush1.msra.mxu0 0.0
  %4437 = vmatprep.subr.mxu0 0.0
  %4438 = vmatpush1.msra.mxu0 0.0
  %4439 = vmatprep.subr.mxu0 0.0
  %4440 = vmatpush1.msra.mxu0 0.0
  %4441 = vmatprep.subr.mxu0 0.0
  %4442 = vmatpush1.msra.mxu0 0.0
  %4443 = vmatprep.subr.mxu0 0.0
  %4444 = vmatpush1.msra.mxu0 0.0
  %4445 = vmatprep.subr.mxu0 0.0
  %4446 = vmatpush1.msra.mxu0 0.0
  %4447 = vmatprep.subr.mxu0 0.0
  %4448 = vmatpush1.msra.mxu0 0.0
  %4449 = vmatprep.subr.mxu0 0.0
  %4450 = vmatpush1.msra.mxu0 0.0
  %4451 = vmatprep.subr.mxu0 0.0
  %4452 = vmatpush1.msra.mxu0 0.0
  %4453 = vmatprep.subr.mxu0 0.0
  %4454 = vmatpush1.msra.mxu0 0.0
  %4455 = vmatprep.subr.mxu0 0.0
  %4456 = vmatpush1.msra.mxu0 0.0
  %4457 = vmatprep.subr.mxu0 0.0
  %4458 = vmatpush1.msra.mxu0 0.0
  %4459 = vmatprep.subr.mxu0 0.0
  %4460 = vmatpush1.msra.mxu0 0.0
  %4461 = vmatprep.mubr.f32.mxu0 0.0
  %4462 = vmatmul.mubr.f32.gmra.mrb[0].mxu0 %v4395
  %v4463 = vpop.f32.mrb[0].mxu0
  %v4464 = vadd.f32 0.0, %v4463
  %v4465 = vpop.f32.mrb[0].mxu0
  %4466 = vdwg.mxu0
  %v4468 = vsel %vm693, %v4141, 0
  %4470 = vmatprep.subr.mxu0 0.0
  %4471 = vmatpush1.msra.mxu0 %v4143
  %4472 = vmatprep.subr.mxu0 0.0
  %4473 = vmatpush1.msra.mxu0 0.0
  %4474 = vmatprep.subr.mxu0 0.0
  %4475 = vmatpush1.msra.mxu0 0.0
  %4476 = vmatprep.subr.mxu0 0.0
  %4477 = vmatpush1.msra.mxu0 0.0
  %4478 = vmatprep.subr.mxu0 0.0
  %4479 = vmatpush1.msra.mxu0 0.0
  %4480 = vmatprep.subr.mxu0 0.0
  %4481 = vmatpush1.msra.mxu0 0.0
  %4482 = vmatprep.subr.mxu0 0.0
  %4483 = vmatpush1.msra.mxu0 0.0
  %4484 = vmatprep.subr.mxu0 0.0
  %4485 = vmatpush1.msra.mxu0 0.0
  %4486 = vmatprep.subr.mxu0 0.0
  %4487 = vmatpush1.msra.mxu0 0.0
  %4488 = vmatprep.subr.mxu0 0.0
  %4489 = vmatpush1.msra.mxu0 0.0
  %4490 = vmatprep.subr.mxu0 0.0
  %4491 = vmatpush1.msra.mxu0 0.0
  %4492 = vmatprep.subr.mxu0 0.0
  %4493 = vmatpush1.msra.mxu0 0.0
  %4494 = vmatprep.subr.mxu0 0.0
  %4495 = vmatpush1.msra.mxu0 0.0
  %4496 = vmatprep.subr.mxu0 0.0
  %4497 = vmatpush1.msra.mxu0 0.0
  %4498 = vmatprep.subr.mxu0 0.0
  %4499 = vmatpush1.msra.mxu0 0.0
  %4500 = vmatprep.subr.mxu0 0.0
  %4501 = vmatpush1.msra.mxu0 0.0
  %4502 = vmatprep.subr.mxu0 0.0
  %4503 = vmatpush1.msra.mxu0 0.0
  %4504 = vmatprep.subr.mxu0 0.0
  %4505 = vmatpush1.msra.mxu0 0.0
  %4506 = vmatprep.subr.mxu0 0.0
  %4507 = vmatpush1.msra.mxu0 0.0
  %4508 = vmatprep.subr.mxu0 0.0
  %4509 = vmatpush1.msra.mxu0 0.0
  %4510 = vmatprep.subr.mxu0 0.0
  %4511 = vmatpush1.msra.mxu0 0.0
  %4512 = vmatprep.subr.mxu0 0.0
  %4513 = vmatpush1.msra.mxu0 0.0
  %4514 = vmatprep.subr.mxu0 0.0
  %4515 = vmatpush1.msra.mxu0 0.0
  %4516 = vmatprep.subr.mxu0 0.0
  %4517 = vmatpush1.msra.mxu0 0.0
  %4518 = vmatprep.subr.mxu0 0.0
  %4519 = vmatpush1.msra.mxu0 0.0
  %4520 = vmatprep.subr.mxu0 0.0
  %4521 = vmatpush1.msra.mxu0 0.0
  %4522 = vmatprep.subr.mxu0 0.0
  %4523 = vmatpush1.msra.mxu0 0.0
  %4524 = vmatprep.subr.mxu0 0.0
  %4525 = vmatpush1.msra.mxu0 0.0
  %4526 = vmatprep.subr.mxu0 0.0
  %4527 = vmatpush1.msra.mxu0 0.0
  %4528 = vmatprep.subr.mxu0 0.0
  %4529 = vmatpush1.msra.mxu0 0.0
  %4530 = vmatprep.subr.mxu0 0.0
  %4531 = vmatpush1.msra.mxu0 0.0
  %4532 = vmatprep.subr.mxu0 0.0
  %4533 = vmatpush1.msra.mxu0 0.0
  %4534 = vmatprep.mubr.f32.mxu0 0.0
  %4535 = vmatmul.mubr.f32.gmra.mrb[0].mxu0 %v4468
  %v4536 = vpop.f32.mrb[0].mxu0
  %v4537 = vadd.f32 %v4391, %v4536
  %v4538 = vpop.f32.mrb[0].mxu0
  %4539 = vdwg.mxu0
  %v4541 = vsel %vm693, %v4142, 0
  %4543 = vmatprep.subr.mxu0 0.0
  %4544 = vmatpush1.msra.mxu0 %v4144
  %4545 = vmatprep.subr.mxu0 0.0
  %4546 = vmatpush1.msra.mxu0 0.0
  %4547 = vmatprep.subr.mxu0 0.0
  %4548 = vmatpush1.msra.mxu0 0.0
  %4549 = vmatprep.subr.mxu0 0.0
  %4550 = vmatpush1.msra.mxu0 0.0
  %4551 = vmatprep.subr.mxu0 0.0
  %4552 = vmatpush1.msra.mxu0 0.0
  %4553 = vmatprep.subr.mxu0 0.0
  %4554 = vmatpush1.msra.mxu0 0.0
  %4555 = vmatprep.subr.mxu0 0.0
  %4556 = vmatpush1.msra.mxu0 0.0
  %4557 = vmatprep.subr.mxu0 0.0
  %4558 = vmatpush1.msra.mxu0 0.0
  %4559 = vmatprep.subr.mxu0 0.0
  %4560 = vmatpush1.msra.mxu0 0.0
  %4561 = vmatprep.subr.mxu0 0.0
  %4562 = vmatpush1.msra.mxu0 0.0
  %4563 = vmatprep.subr.mxu0 0.0
  %4564 = vmatpush1.msra.mxu0 0.0
  %4565 = vmatprep.subr.mxu0 0.0
  %4566 = vmatpush1.msra.mxu0 0.0
  %4567 = vmatprep.subr.mxu0 0.0
  %4568 = vmatpush1.msra.mxu0 0.0
  %4569 = vmatprep.subr.mxu0 0.0
  %4570 = vmatpush1.msra.mxu0 0.0
  %4571 = vmatprep.subr.mxu0 0.0
  %4572 = vmatpush1.msra.mxu0 0.0
  %4573 = vmatprep.subr.mxu0 0.0
  %4574 = vmatpush1.msra.mxu0 0.0
  %4575 = vmatprep.subr.mxu0 0.0
  %4576 = vmatpush1.msra.mxu0 0.0
  %4577 = vmatprep.subr.mxu0 0.0
  %4578 = vmatpush1.msra.mxu0 0.0
  %4579 = vmatprep.subr.mxu0 0.0
  %4580 = vmatpush1.msra.mxu0 0.0
  %4581 = vmatprep.subr.mxu0 0.0
  %4582 = vmatpush1.msra.mxu0 0.0
  %4583 = vmatprep.subr.mxu0 0.0
  %4584 = vmatpush1.msra.mxu0 0.0
  %4585 = vmatprep.subr.mxu0 0.0
  %4586 = vmatpush1.msra.mxu0 0.0
  %4587 = vmatprep.subr.mxu0 0.0
  %4588 = vmatpush1.msra.mxu0 0.0
  %4589 = vmatprep.subr.mxu0 0.0
  %4590 = vmatpush1.msra.mxu0 0.0
  %4591 = vmatprep.subr.mxu0 0.0
  %4592 = vmatpush1.msra.mxu0 0.0
  %4593 = vmatprep.subr.mxu0 0.0
  %4594 = vmatpush1.msra.mxu0 0.0
  %4595 = vmatprep.subr.mxu0 0.0
  %4596 = vmatpush1.msra.mxu0 0.0
  %4597 = vmatprep.subr.mxu0 0.0
  %4598 = vmatpush1.msra.mxu0 0.0
  %4599 = vmatprep.subr.mxu0 0.0
  %4600 = vmatpush1.msra.mxu0 0.0
  %4601 = vmatprep.subr.mxu0 0.0
  %4602 = vmatpush1.msra.mxu0 0.0
  %4603 = vmatprep.subr.mxu0 0.0
  %4604 = vmatpush1.msra.mxu0 0.0
  %4605 = vmatprep.subr.mxu0 0.0
  %4606 = vmatpush1.msra.mxu0 0.0
  %4607 = vmatprep.mubr.f32.mxu0 0.0
  %4608 = vmatmul.mubr.f32.gmra.mrb[0].mxu0 %v4541
  %v4609 = vpop.f32.mrb[0].mxu0
  %v4610 = vadd.f32 %v4464, %v4609
  %v4611 = vpop.f32.mrb[0].mxu0
  %4612 = vdwg.mxu0
  %v4613 = vmul.f32 %v3869, %v1195
  %v4614 = vmul.f32 %v3874, %v1195
  %v4616 = vsel %vm276, %v4613, 0
  %4618 = vmatprep.subr.mxu0 0.0
  %4619 = vmatpush1.xpose.msra.mxu0 %v4616
  %4620 = vmatprep.subr.mxu0 0.0
  %4621 = vmatpush1.xpose.msra.mxu0 0.0
  %4622 = vmatprep.subr.mxu0 0.0
  %4623 = vmatpush1.xpose.msra.mxu0 0.0
  %4624 = vmatprep.subr.mxu0 0.0
  %4625 = vmatpush1.xpose.msra.mxu0 0.0
  %4626 = vmatprep.subr.mxu0 0.0
  %4627 = vmatpush1.xpose.msra.mxu0 0.0
  %4628 = vmatprep.subr.mxu0 0.0
  %4629 = vmatpush1.xpose.msra.mxu0 0.0
  %4630 = vmatprep.subr.mxu0 0.0
  %4631 = vmatpush1.xpose.msra.mxu0 0.0
  %4632 = vmatprep.subr.mxu0 0.0
  %4633 = vmatpush1.xpose.msra.mxu0 0.0
  %4634 = vmatprep.subr.mxu0 0.0
  %4635 = vmatpush1.xpose.msra.mxu0 0.0
  %4636 = vmatprep.subr.mxu0 0.0
  %4637 = vmatpush1.xpose.msra.mxu0 0.0
  %4638 = vmatprep.subr.mxu0 0.0
  %4639 = vmatpush1.xpose.msra.mxu0 0.0
  %4640 = vmatprep.subr.mxu0 0.0
  %4641 = vmatpush1.xpose.msra.mxu0 0.0
  %4642 = vmatprep.subr.mxu0 0.0
  %4643 = vmatpush1.xpose.msra.mxu0 0.0
  %4644 = vmatprep.subr.mxu0 0.0
  %4645 = vmatpush1.xpose.msra.mxu0 0.0
  %4646 = vmatprep.subr.mxu0 0.0
  %4647 = vmatpush1.xpose.msra.mxu0 0.0
  %4648 = vmatprep.subr.mxu0 0.0
  %4649 = vmatpush1.xpose.msra.mxu0 0.0
  %4650 = vmatprep.subr.mxu0 0.0
  %4651 = vmatpush1.xpose.msra.mxu0 0.0
  %4652 = vmatprep.subr.mxu0 0.0
  %4653 = vmatpush1.xpose.msra.mxu0 0.0
  %4654 = vmatprep.subr.mxu0 0.0
  %4655 = vmatpush1.xpose.msra.mxu0 0.0
  %4656 = vmatprep.subr.mxu0 0.0
  %4657 = vmatpush1.xpose.msra.mxu0 0.0
  %4658 = vmatprep.subr.mxu0 0.0
  %4659 = vmatpush1.xpose.msra.mxu0 0.0
  %4660 = vmatprep.subr.mxu0 0.0
  %4661 = vmatpush1.xpose.msra.mxu0 0.0
  %4662 = vmatprep.subr.mxu0 0.0
  %4663 = vmatpush1.xpose.msra.mxu0 0.0
  %4664 = vmatprep.subr.mxu0 0.0
  %4665 = vmatpush1.xpose.msra.mxu0 0.0
  %4666 = vmatprep.subr.mxu0 0.0
  %4667 = vmatpush1.xpose.msra.mxu0 0.0
  %4668 = vmatprep.subr.mxu0 0.0
  %4669 = vmatpush1.xpose.msra.mxu0 0.0
  %4670 = vmatprep.subr.mxu0 0.0
  %4671 = vmatpush1.xpose.msra.mxu0 0.0
  %4672 = vmatprep.subr.mxu0 0.0
  %4673 = vmatpush1.xpose.msra.mxu0 0.0
  %4674 = vmatprep.subr.mxu0 0.0
  %4675 = vmatpush1.xpose.msra.mxu0 0.0
  %4676 = vmatprep.subr.mxu0 0.0
  %4677 = vmatpush1.xpose.msra.mxu0 0.0
  %4678 = vmatprep.subr.mxu0 0.0
  %4679 = vmatpush1.xpose.msra.mxu0 0.0
  %4680 = vmatprep.subr.mxu0 0.0
  %4681 = vmatpush1.xpose.msra.mxu0 0.0
  %4682 = vmatprep.mubr.f32.mxu0 0.0
  %4683 = vmatmul.mubr.f32.gmra.mrb[0].mxu0 %v3966
  %v4684 = vpop.f32.mrb[0].mxu0
  %v4685 = vadd.f32 0.0, %v4684
  %v4686 = vpop.f32.mrb[0].mxu0
  %4687 = vdwg.mxu0
  %v4689 = vsel %vm276, %v4614, 0
  %4691 = vmatprep.subr.mxu0 0.0
  %4692 = vmatpush1.xpose.msra.mxu0 %v4689
  %4693 = vmatprep.subr.mxu0 0.0
  %4694 = vmatpush1.xpose.msra.mxu0 0.0
  %4695 = vmatprep.subr.mxu0 0.0
  %4696 = vmatpush1.xpose.msra.mxu0 0.0
  %4697 = vmatprep.subr.mxu0 0.0
  %4698 = vmatpush1.xpose.msra.mxu0 0.0
  %4699 = vmatprep.subr.mxu0 0.0
  %4700 = vmatpush1.xpose.msra.mxu0 0.0
  %4701 = vmatprep.subr.mxu0 0.0
  %4702 = vmatpush1.xpose.msra.mxu0 0.0
  %4703 = vmatprep.subr.mxu0 0.0
  %4704 = vmatpush1.xpose.msra.mxu0 0.0
  %4705 = vmatprep.subr.mxu0 0.0
  %4706 = vmatpush1.xpose.msra.mxu0 0.0
  %4707 = vmatprep.subr.mxu0 0.0
  %4708 = vmatpush1.xpose.msra.mxu0 0.0
  %4709 = vmatprep.subr.mxu0 0.0
  %4710 = vmatpush1.xpose.msra.mxu0 0.0
  %4711 = vmatprep.subr.mxu0 0.0
  %4712 = vmatpush1.xpose.msra.mxu0 0.0
  %4713 = vmatprep.subr.mxu0 0.0
  %4714 = vmatpush1.xpose.msra.mxu0 0.0
  %4715 = vmatprep.subr.mxu0 0.0
  %4716 = vmatpush1.xpose.msra.mxu0 0.0
  %4717 = vmatprep.subr.mxu0 0.0
  %4718 = vmatpush1.xpose.msra.mxu0 0.0
  %4719 = vmatprep.subr.mxu0 0.0
  %4720 = vmatpush1.xpose.msra.mxu0 0.0
  %4721 = vmatprep.subr.mxu0 0.0
  %4722 = vmatpush1.xpose.msra.mxu0 0.0
  %4723 = vmatprep.subr.mxu0 0.0
  %4724 = vmatpush1.xpose.msra.mxu0 0.0
  %4725 = vmatprep.subr.mxu0 0.0
  %4726 = vmatpush1.xpose.msra.mxu0 0.0
  %4727 = vmatprep.subr.mxu0 0.0
  %4728 = vmatpush1.xpose.msra.mxu0 0.0
  %4729 = vmatprep.subr.mxu0 0.0
  %4730 = vmatpush1.xpose.msra.mxu0 0.0
  %4731 = vmatprep.subr.mxu0 0.0
  %4732 = vmatpush1.xpose.msra.mxu0 0.0
  %4733 = vmatprep.subr.mxu0 0.0
  %4734 = vmatpush1.xpose.msra.mxu0 0.0
  %4735 = vmatprep.subr.mxu0 0.0
  %4736 = vmatpush1.xpose.msra.mxu0 0.0
  %4737 = vmatprep.subr.mxu0 0.0
  %4738 = vmatpush1.xpose.msra.mxu0 0.0
  %4739 = vmatprep.subr.mxu0 0.0
  %4740 = vmatpush1.xpose.msra.mxu0 0.0
  %4741 = vmatprep.subr.mxu0 0.0
  %4742 = vmatpush1.xpose.msra.mxu0 0.0
  %4743 = vmatprep.subr.mxu0 0.0
  %4744 = vmatpush1.xpose.msra.mxu0 0.0
  %4745 = vmatprep.subr.mxu0 0.0
  %4746 = vmatpush1.xpose.msra.mxu0 0.0
  %4747 = vmatprep.subr.mxu0 0.0
  %4748 = vmatpush1.xpose.msra.mxu0 0.0
  %4749 = vmatprep.subr.mxu0 0.0
  %4750 = vmatpush1.xpose.msra.mxu0 0.0
  %4751 = vmatprep.subr.mxu0 0.0
  %4752 = vmatpush1.xpose.msra.mxu0 0.0
  %4753 = vmatprep.subr.mxu0 0.0
  %4754 = vmatpush1.xpose.msra.mxu0 0.0
  %4755 = vmatprep.mubr.f32.mxu0 0.0
  %4756 = vmatmul.mubr.f32.gmra.mrb[0].mxu0 %v4042
  %v4757 = vpop.f32.mrb[0].mxu0
  %v4758 = vadd.f32 0.0, %v4757
  %v4759 = vpop.f32.mrb[0].mxu0
  %4760 = vdwg.mxu0
  %v4761 = vmul.f32 %v4685, 0.35355338
  %v4762 = vmul.f32 %v4758, 0.35355338
  %v4763 = vadd.f32 %v4761, %v264
  %v4764 = vadd.f32 %v4762, %v264
  %v4765 = vsel %vm693, %v4763, -inf
  %4766 = vmax.xlane.f32.xlu0 %v4765
  %v4767 = vpop.xlane.xlu0 %4766
  %v4768 = vsel %vm693, %v4764, -inf
  %4769 = vmax.xlane.f32.xlu0 %v4768
  %v4770 = vpop.xlane.xlu0 %4769
  %v4771 = vsub.f32 %v4763, %v4767
  %v4772 = vsub.f32 %v4764, %v4770
  %v4773 = vmul.f32 %v4771, 1.442695
  %v4774 = vpow.pop %v4773
  %v4775 = vmul.f32 %v4772, 1.442695
  %v4776 = vpow.pop %v4775
  %v4777 = vsel %vm693, %v4774, 0.0
  %4778 = vadd.xlane.f32.xlu0 %v4777
  %v4779 = vpop.xlane.xlu0 %4778
  %v4780 = vsel %vm693, %v4776, 0.0
  %4781 = vadd.xlane.f32.xlu0 %v4780
  %v4782 = vpop.xlane.xlu0 %4781
  %v4783 = vrcp.pop %v4779
  %v4784 = vrcp.pop %v4782
  %v4785 = vmul.f32 %v4774, %v4783
  %v4786 = vmul.f32 %v4776, %v4784
  %v4787 = vmul.f32 %v3955, %v1195
  %v4788 = vmul.f32 %v3960, %v1195
  %v4790 = vsel %vm693, %v4785, 0
  %4792 = vmatprep.subr.mxu0 0.0
  %4793 = vmatpush1.msra.mxu0 %v4787
  %4794 = vmatprep.subr.mxu0 0.0
  %4795 = vmatpush1.msra.mxu0 0.0
  %4796 = vmatprep.subr.mxu0 0.0
  %4797 = vmatpush1.msra.mxu0 0.0
  %4798 = vmatprep.subr.mxu0 0.0
  %4799 = vmatpush1.msra.mxu0 0.0
  %4800 = vmatprep.subr.mxu0 0.0
  %4801 = vmatpush1.msra.mxu0 0.0
  %4802 = vmatprep.subr.mxu0 0.0
  %4803 = vmatpush1.msra.mxu0 0.0
  %4804 = vmatprep.subr.mxu0 0.0
  %4805 = vmatpush1.msra.mxu0 0.0
  %4806 = vmatprep.subr.mxu0 0.0
  %4807 = vmatpush1.msra.mxu0 0.0
  %4808 = vmatprep.subr.mxu0 0.0
  %4809 = vmatpush1.msra.mxu0 0.0
  %4810 = vmatprep.subr.mxu0 0.0
  %4811 = vmatpush1.msra.mxu0 0.0
  %4812 = vmatprep.subr.mxu0 0.0
  %4813 = vmatpush1.msra.mxu0 0.0
  %4814 = vmatprep.subr.mxu0 0.0
  %4815 = vmatpush1.msra.mxu0 0.0
  %4816 = vmatprep.subr.mxu0 0.0
  %4817 = vmatpush1.msra.mxu0 0.0
  %4818 = vmatprep.subr.mxu0 0.0
  %4819 = vmatpush1.msra.mxu0 0.0
  %4820 = vmatprep.subr.mxu0 0.0
  %4821 = vmatpush1.msra.mxu0 0.0
  %4822 = vmatprep.subr.mxu0 0.0
  %4823 = vmatpush1.msra.mxu0 0.0
  %4824 = vmatprep.subr.mxu0 0.0
  %4825 = vmatpush1.msra.mxu0 0.0
  %4826 = vmatprep.subr.mxu0 0.0
  %4827 = vmatpush1.msra.mxu0 0.0
  %4828 = vmatprep.subr.mxu0 0.0
  %4829 = vmatpush1.msra.mxu0 0.0
  %4830 = vmatprep.subr.mxu0 0.0
  %4831 = vmatpush1.msra.mxu0 0.0
  %4832 = vmatprep.subr.mxu0 0.0
  %4833 = vmatpush1.msra.mxu0 0.0
  %4834 = vmatprep.subr.mxu0 0.0
  %4835 = vmatpush1.msra.mxu0 0.0
  %4836 = vmatprep.subr.mxu0 0.0
  %4837 = vmatpush1.msra.mxu0 0.0
  %4838 = vmatprep.subr.mxu0 0.0
  %4839 = vmatpush1.msra.mxu0 0.0
  %4840 = vmatprep.subr.mxu0 0.0
  %4841 = vmatpush1.msra.mxu0 0.0
  %4842 = vmatprep.subr.mxu0 0.0
  %4843 = vmatpush1.msra.mxu0 0.0
  %4844 = vmatprep.subr.mxu0 0.0
  %4845 = vmatpush1.msra.mxu0 0.0
  %4846 = vmatprep.subr.mxu0 0.0
  %4847 = vmatpush1.msra.mxu0 0.0
  %4848 = vmatprep.subr.mxu0 0.0
  %4849 = vmatpush1.msra.mxu0 0.0
  %4850 = vmatprep.subr.mxu0 0.0
  %4851 = vmatpush1.msra.mxu0 0.0
  %4852 = vmatprep.subr.mxu0 0.0
  %4853 = vmatpush1.msra.mxu0 0.0
  %4854 = vmatprep.subr.mxu0 0.0
  %4855 = vmatpush1.msra.mxu0 0.0
  %4856 = vmatprep.mubr.f32.mxu0 0.0
  %4857 = vmatmul.mubr.f32.gmra.mrb[0].mxu0 %v4790
  %v4858 = vpop.f32.mrb[0].mxu0
  %v4859 = vadd.f32 0.0, %v4858
  %v4860 = vpop.f32.mrb[0].mxu0
  %4861 = vdwg.mxu0
  %v4863 = vsel %vm693, %v4786, 0
  %4865 = vmatprep.subr.mxu0 0.0
  %4866 = vmatpush1.msra.mxu0 %v4788
  %4867 = vmatprep.subr.mxu0 0.0
  %4868 = vmatpush1.msra.mxu0 0.0
  %4869 = vmatprep.subr.mxu0 0.0
  %4870 = vmatpush1.msra.mxu0 0.0
  %4871 = vmatprep.subr.mxu0 0.0
  %4872 = vmatpush1.msra.mxu0 0.0
  %4873 = vmatprep.subr.mxu0 0.0
  %4874 = vmatpush1.msra.mxu0 0.0
  %4875 = vmatprep.subr.mxu0 0.0
  %4876 = vmatpush1.msra.mxu0 0.0
  %4877 = vmatprep.subr.mxu0 0.0
  %4878 = vmatpush1.msra.mxu0 0.0
  %4879 = vmatprep.subr.mxu0 0.0
  %4880 = vmatpush1.msra.mxu0 0.0
  %4881 = vmatprep.subr.mxu0 0.0
  %4882 = vmatpush1.msra.mxu0 0.0
  %4883 = vmatprep.subr.mxu0 0.0
  %4884 = vmatpush1.msra.mxu0 0.0
  %4885 = vmatprep.subr.mxu0 0.0
  %4886 = vmatpush1.msra.mxu0 0.0
  %4887 = vmatprep.subr.mxu0 0.0
  %4888 = vmatpush1.msra.mxu0 0.0
  %4889 = vmatprep.subr.mxu0 0.0
  %4890 = vmatpush1.msra.mxu0 0.0
  %4891 = vmatprep.subr.mxu0 0.0
  %4892 = vmatpush1.msra.mxu0 0.0
  %4893 = vmatprep.subr.mxu0 0.0
  %4894 = vmatpush1.msra.mxu0 0.0
  %4895 = vmatprep.subr.mxu0 0.0
  %4896 = vmatpush1.msra.mxu0 0.0
  %4897 = vmatprep.subr.mxu0 0.0
  %4898 = vmatpush1.msra.mxu0 0.0
  %4899 = vmatprep.subr.mxu0 0.0
  %4900 = vmatpush1.msra.mxu0 0.0
  %4901 = vmatprep.subr.mxu0 0.0
  %4902 = vmatpush1.msra.mxu0 0.0
  %4903 = vmatprep.subr.mxu0 0.0
  %4904 = vmatpush1.msra.mxu0 0.0
  %4905 = vmatprep.subr.mxu0 0.0
  %4906 = vmatpush1.msra.mxu0 0.0
  %4907 = vmatprep.subr.mxu0 0.0
  %4908 = vmatpush1.msra.mxu0 0.0
  %4909 = vmatprep.subr.mxu0 0.0
  %4910 = vmatpush1.msra.mxu0 0.0
  %4911 = vmatprep.subr.mxu0 0.0
  %4912 = vmatpush1.msra.mxu0 0.0
  %4913 = vmatprep.subr.mxu0 0.0
  %4914 = vmatpush1.msra.mxu0 0.0
  %4915 = vmatprep.subr.mxu0 0.0
  %4916 = vmatpush1.msra.mxu0 0.0
  %4917 = vmatprep.subr.mxu0 0.0
  %4918 = vmatpush1.msra.mxu0 0.0
  %4919 = vmatprep.subr.mxu0 0.0
  %4920 = vmatpush1.msra.mxu0 0.0
  %4921 = vmatprep.subr.mxu0 0.0
  %4922 = vmatpush1.msra.mxu0 0.0
  %4923 = vmatprep.subr.mxu0 0.0
  %4924 = vmatpush1.msra.mxu0 0.0
  %4925 = vmatprep.subr.mxu0 0.0
  %4926 = vmatpush1.msra.mxu0 0.0
  %4927 = vmatprep.subr.mxu0 0.0
  %4928 = vmatpush1.msra.mxu0 0.0
  %4929 = vmatprep.mubr.f32.mxu0 0.0
  %4930 = vmatmul.mubr.f32.gmra.mrb[0].mxu0 %v4863
  %v4931 = vpop.f32.mrb[0].mxu0
  %v4932 = vadd.f32 0.0, %v4931
  %v4933 = vpop.f32.mrb[0].mxu0
  %4934 = vdwg.mxu0
  %v4935 = vadd.f32 %v4537, %v4859
  %v4936 = vadd.f32 %v4610, %v4932
  %v4937 = vmul.f32 %v3869, %v1524
  %v4938 = vmul.f32 %v3874, %v1524
  %v4940 = vsel %vm276, %v4937, 0
  %4942 = vmatprep.subr.mxu0 0.0
  %4943 = vmatpush1.xpose.msra.mxu0 %v4940
  %4944 = vmatprep.subr.mxu0 0.0
  %4945 = vmatpush1.xpose.msra.mxu0 0.0
  %4946 = vmatprep.subr.mxu0 0.0
  %4947 = vmatpush1.xpose.msra.mxu0 0.0
  %4948 = vmatprep.subr.mxu0 0.0
  %4949 = vmatpush1.xpose.msra.mxu0 0.0
  %4950 = vmatprep.subr.mxu0 0.0
  %4951 = vmatpush1.xpose.msra.mxu0 0.0
  %4952 = vmatprep.subr.mxu0 0.0
  %4953 = vmatpush1.xpose.msra.mxu0 0.0
  %4954 = vmatprep.subr.mxu0 0.0
  %4955 = vmatpush1.xpose.msra.mxu0 0.0
  %4956 = vmatprep.subr.mxu0 0.0
  %4957 = vmatpush1.xpose.msra.mxu0 0.0
  %4958 = vmatprep.subr.mxu0 0.0
  %4959 = vmatpush1.xpose.msra.mxu0 0.0
  %4960 = vmatprep.subr.mxu0 0.0
  %4961 = vmatpush1.xpose.msra.mxu0 0.0
  %4962 = vmatprep.subr.mxu0 0.0
  %4963 = vmatpush1.xpose.msra.mxu0 0.0
  %4964 = vmatprep.subr.mxu0 0.0
  %4965 = vmatpush1.xpose.msra.mxu0 0.0
  %4966 = vmatprep.subr.mxu0 0.0
  %4967 = vmatpush1.xpose.msra.mxu0 0.0
  %4968 = vmatprep.subr.mxu0 0.0
  %4969 = vmatpush1.xpose.msra.mxu0 0.0
  %4970 = vmatprep.subr.mxu0 0.0
  %4971 = vmatpush1.xpose.msra.mxu0 0.0
  %4972 = vmatprep.subr.mxu0 0.0
  %4973 = vmatpush1.xpose.msra.mxu0 0.0
  %4974 = vmatprep.subr.mxu0 0.0
  %4975 = vmatpush1.xpose.msra.mxu0 0.0
  %4976 = vmatprep.subr.mxu0 0.0
  %4977 = vmatpush1.xpose.msra.mxu0 0.0
  %4978 = vmatprep.subr.mxu0 0.0
  %4979 = vmatpush1.xpose.msra.mxu0 0.0
  %4980 = vmatprep.subr.mxu0 0.0
  %4981 = vmatpush1.xpose.msra.mxu0 0.0
  %4982 = vmatprep.subr.mxu0 0.0
  %4983 = vmatpush1.xpose.msra.mxu0 0.0
  %4984 = vmatprep.subr.mxu0 0.0
  %4985 = vmatpush1.xpose.msra.mxu0 0.0
  %4986 = vmatprep.subr.mxu0 0.0
  %4987 = vmatpush1.xpose.msra.mxu0 0.0
  %4988 = vmatprep.subr.mxu0 0.0
  %4989 = vmatpush1.xpose.msra.mxu0 0.0
  %4990 = vmatprep.subr.mxu0 0.0
  %4991 = vmatpush1.xpose.msra.mxu0 0.0
  %4992 = vmatprep.subr.mxu0 0.0
  %4993 = vmatpush1.xpose.msra.mxu0 0.0
  %4994 = vmatprep.subr.mxu0 0.0
  %4995 = vmatpush1.xpose.msra.mxu0 0.0
  %4996 = vmatprep.subr.mxu0 0.0
  %4997 = vmatpush1.xpose.msra.mxu0 0.0
  %4998 = vmatprep.subr.mxu0 0.0
  %4999 = vmatpush1.xpose.msra.mxu0 0.0
  %5000 = vmatprep.subr.mxu0 0.0
  %5001 = vmatpush1.xpose.msra.mxu0 0.0
  %5002 = vmatprep.subr.mxu0 0.0
  %5003 = vmatpush1.xpose.msra.mxu0 0.0
  %5004 = vmatprep.subr.mxu0 0.0
  %5005 = vmatpush1.xpose.msra.mxu0 0.0
  %5006 = vmatprep.mubr.f32.mxu0 0.0
  %5007 = vmatmul.mubr.f32.gmra.mrb[0].mxu0 %v3966
  %v5008 = vpop.f32.mrb[0].mxu0
  %v5009 = vadd.f32 0.0, %v5008
  %v5010 = vpop.f32.mrb[0].mxu0
  %5011 = vdwg.mxu0
  %v5013 = vsel %vm276, %v4938, 0
  %5015 = vmatprep.subr.mxu0 0.0
  %5016 = vmatpush1.xpose.msra.mxu0 %v5013
  %5017 = vmatprep.subr.mxu0 0.0
  %5018 = vmatpush1.xpose.msra.mxu0 0.0
  %5019 = vmatprep.subr.mxu0 0.0
  %5020 = vmatpush1.xpose.msra.mxu0 0.0
  %5021 = vmatprep.subr.mxu0 0.0
  %5022 = vmatpush1.xpose.msra.mxu0 0.0
  %5023 = vmatprep.subr.mxu0 0.0
  %5024 = vmatpush1.xpose.msra.mxu0 0.0
  %5025 = vmatprep.subr.mxu0 0.0
  %5026 = vmatpush1.xpose.msra.mxu0 0.0
  %5027 = vmatprep.subr.mxu0 0.0
  %5028 = vmatpush1.xpose.msra.mxu0 0.0
  %5029 = vmatprep.subr.mxu0 0.0
  %5030 = vmatpush1.xpose.msra.mxu0 0.0
  %5031 = vmatprep.subr.mxu0 0.0
  %5032 = vmatpush1.xpose.msra.mxu0 0.0
  %5033 = vmatprep.subr.mxu0 0.0
  %5034 = vmatpush1.xpose.msra.mxu0 0.0
  %5035 = vmatprep.subr.mxu0 0.0
  %5036 = vmatpush1.xpose.msra.mxu0 0.0
  %5037 = vmatprep.subr.mxu0 0.0
  %5038 = vmatpush1.xpose.msra.mxu0 0.0
  %5039 = vmatprep.subr.mxu0 0.0
  %5040 = vmatpush1.xpose.msra.mxu0 0.0
  %5041 = vmatprep.subr.mxu0 0.0
  %5042 = vmatpush1.xpose.msra.mxu0 0.0
  %5043 = vmatprep.subr.mxu0 0.0
  %5044 = vmatpush1.xpose.msra.mxu0 0.0
  %5045 = vmatprep.subr.mxu0 0.0
  %5046 = vmatpush1.xpose.msra.mxu0 0.0
  %5047 = vmatprep.subr.mxu0 0.0
  %5048 = vmatpush1.xpose.msra.mxu0 0.0
  %5049 = vmatprep.subr.mxu0 0.0
  %5050 = vmatpush1.xpose.msra.mxu0 0.0
  %5051 = vmatprep.subr.mxu0 0.0
  %5052 = vmatpush1.xpose.msra.mxu0 0.0
  %5053 = vmatprep.subr.mxu0 0.0
  %5054 = vmatpush1.xpose.msra.mxu0 0.0
  %5055 = vmatprep.subr.mxu0 0.0
  %5056 = vmatpush1.xpose.msra.mxu0 0.0
  %5057 = vmatprep.subr.mxu0 0.0
  %5058 = vmatpush1.xpose.msra.mxu0 0.0
  %5059 = vmatprep.subr.mxu0 0.0
  %5060 = vmatpush1.xpose.msra.mxu0 0.0
  %5061 = vmatprep.subr.mxu0 0.0
  %5062 = vmatpush1.xpose.msra.mxu0 0.0
  %5063 = vmatprep.subr.mxu0 0.0
  %5064 = vmatpush1.xpose.msra.mxu0 0.0
  %5065 = vmatprep.subr.mxu0 0.0
  %5066 = vmatpush1.xpose.msra.mxu0 0.0
  %5067 = vmatprep.subr.mxu0 0.0
  %5068 = vmatpush1.xpose.msra.mxu0 0.0
  %5069 = vmatprep.subr.mxu0 0.0
  %5070 = vmatpush1.xpose.msra.mxu0 0.0
  %5071 = vmatprep.subr.mxu0 0.0
  %5072 = vmatpush1.xpose.msra.mxu0 0.0
  %5073 = vmatprep.subr.mxu0 0.0
  %5074 = vmatpush1.xpose.msra.mxu0 0.0
  %5075 = vmatprep.subr.mxu0 0.0
  %5076 = vmatpush1.xpose.msra.mxu0 0.0
  %5077 = vmatprep.subr.mxu0 0.0
  %5078 = vmatpush1.xpose.msra.mxu0 0.0
  %5079 = vmatprep.mubr.f32.mxu0 0.0
  %5080 = vmatmul.mubr.f32.gmra.mrb[0].mxu0 %v4042
  %v5081 = vpop.f32.mrb[0].mxu0
  %v5082 = vadd.f32 0.0, %v5081
  %v5083 = vpop.f32.mrb[0].mxu0
  %5084 = vdwg.mxu0
  %v5085 = vmul.f32 %v5009, 0.35355338
  %v5086 = vmul.f32 %v5082, 0.35355338
  %v5087 = vadd.f32 %v5085, %v264
  %v5088 = vadd.f32 %v5086, %v264
  %v5089 = vsel %vm693, %v5087, -inf
  %5090 = vmax.xlane.f32.xlu0 %v5089
  %v5091 = vpop.xlane.xlu0 %5090
  %v5092 = vsel %vm693, %v5088, -inf
  %5093 = vmax.xlane.f32.xlu0 %v5092
  %v5094 = vpop.xlane.xlu0 %5093
  %v5095 = vsub.f32 %v5087, %v5091
  %v5096 = vsub.f32 %v5088, %v5094
  %v5097 = vmul.f32 %v5095, 1.442695
  %v5098 = vpow.pop %v5097
  %v5099 = vmul.f32 %v5096, 1.442695
  %v5100 = vpow.pop %v5099
  %v5101 = vsel %vm693, %v5098, 0.0
  %5102 = vadd.xlane.f32.xlu0 %v5101
  %v5103 = vpop.xlane.xlu0 %5102
  %v5104 = vsel %vm693, %v5100, 0.0
  %5105 = vadd.xlane.f32.xlu0 %v5104
  %v5106 = vpop.xlane.xlu0 %5105
  %v5107 = vrcp.pop %v5103
  %v5108 = vrcp.pop %v5106
  %v5109 = vmul.f32 %v5098, %v5107
  %v5110 = vmul.f32 %v5100, %v5108
  %v5111 = vmul.f32 %v3955, %v1524
  %v5112 = vmul.f32 %v3960, %v1524
  %v5114 = vsel %vm693, %v5109, 0
  %5116 = vmatprep.subr.mxu0 0.0
  %5117 = vmatpush1.msra.mxu0 %v5111
  %5118 = vmatprep.subr.mxu0 0.0
  %5119 = vmatpush1.msra.mxu0 0.0
  %5120 = vmatprep.subr.mxu0 0.0
  %5121 = vmatpush1.msra.mxu0 0.0
  %5122 = vmatprep.subr.mxu0 0.0
  %5123 = vmatpush1.msra.mxu0 0.0
  %5124 = vmatprep.subr.mxu0 0.0
  %5125 = vmatpush1.msra.mxu0 0.0
  %5126 = vmatprep.subr.mxu0 0.0
  %5127 = vmatpush1.msra.mxu0 0.0
  %5128 = vmatprep.subr.mxu0 0.0
  %5129 = vmatpush1.msra.mxu0 0.0
  %5130 = vmatprep.subr.mxu0 0.0
  %5131 = vmatpush1.msra.mxu0 0.0
  %5132 = vmatprep.subr.mxu0 0.0
  %5133 = vmatpush1.msra.mxu0 0.0
  %5134 = vmatprep.subr.mxu0 0.0
  %5135 = vmatpush1.msra.mxu0 0.0
  %5136 = vmatprep.subr.mxu0 0.0
  %5137 = vmatpush1.msra.mxu0 0.0
  %5138 = vmatprep.subr.mxu0 0.0
  %5139 = vmatpush1.msra.mxu0 0.0
  %5140 = vmatprep.subr.mxu0 0.0
  %5141 = vmatpush1.msra.mxu0 0.0
  %5142 = vmatprep.subr.mxu0 0.0
  %5143 = vmatpush1.msra.mxu0 0.0
  %5144 = vmatprep.subr.mxu0 0.0
  %5145 = vmatpush1.msra.mxu0 0.0
  %5146 = vmatprep.subr.mxu0 0.0
  %5147 = vmatpush1.msra.mxu0 0.0
  %5148 = vmatprep.subr.mxu0 0.0
  %5149 = vmatpush1.msra.mxu0 0.0
  %5150 = vmatprep.subr.mxu0 0.0
  %5151 = vmatpush1.msra.mxu0 0.0
  %5152 = vmatprep.subr.mxu0 0.0
  %5153 = vmatpush1.msra.mxu0 0.0
  %5154 = vmatprep.subr.mxu0 0.0
  %5155 = vmatpush1.msra.mxu0 0.0
  %5156 = vmatprep.subr.mxu0 0.0
  %5157 = vmatpush1.msra.mxu0 0.0
  %5158 = vmatprep.subr.mxu0 0.0
  %5159 = vmatpush1.msra.mxu0 0.0
  %5160 = vmatprep.subr.mxu0 0.0
  %5161 = vmatpush1.msra.mxu0 0.0
  %5162 = vmatprep.subr.mxu0 0.0
  %5163 = vmatpush1.msra.mxu0 0.0
  %5164 = vmatprep.subr.mxu0 0.0
  %5165 = vmatpush1.msra.mxu0 0.0
  %5166 = vmatprep.subr.mxu0 0.0
  %5167 = vmatpush1.msra.mxu0 0.0
  %5168 = vmatprep.subr.mxu0 0.0
  %5169 = vmatpush1.msra.mxu0 0.0
  %5170 = vmatprep.subr.mxu0 0.0
  %5171 = vmatpush1.msra.mxu0 0.0
  %5172 = vmatprep.subr.mxu0 0.0
  %5173 = vmatpush1.msra.mxu0 0.0
  %5174 = vmatprep.subr.mxu0 0.0
  %5175 = vmatpush1.msra.mxu0 0.0
  %5176 = vmatprep.subr.mxu0 0.0
  %5177 = vmatpush1.msra.mxu0 0.0
  %5178 = vmatprep.subr.mxu0 0.0
  %5179 = vmatpush1.msra.mxu0 0.0
  %5180 = vmatprep.mubr.f32.mxu0 0.0
  %5181 = vmatmul.mubr.f32.gmra.mrb[0].mxu0 %v5114
  %v5182 = vpop.f32.mrb[0].mxu0
  %v5183 = vadd.f32 0.0, %v5182
  %v5184 = vpop.f32.mrb[0].mxu0
  %5185 = vdwg.mxu0
  %v5187 = vsel %vm693, %v5110, 0
  %5189 = vmatprep.subr.mxu0 0.0
  %5190 = vmatpush1.msra.mxu0 %v5112
  %5191 = vmatprep.subr.mxu0 0.0
  %5192 = vmatpush1.msra.mxu0 0.0
  %5193 = vmatprep.subr.mxu0 0.0
  %5194 = vmatpush1.msra.mxu0 0.0
  %5195 = vmatprep.subr.mxu0 0.0
  %5196 = vmatpush1.msra.mxu0 0.0
  %5197 = vmatprep.subr.mxu0 0.0
  %5198 = vmatpush1.msra.mxu0 0.0
  %5199 = vmatprep.subr.mxu0 0.0
  %5200 = vmatpush1.msra.mxu0 0.0
  %5201 = vmatprep.subr.mxu0 0.0
  %5202 = vmatpush1.msra.mxu0 0.0
  %5203 = vmatprep.subr.mxu0 0.0
  %5204 = vmatpush1.msra.mxu0 0.0
  %5205 = vmatprep.subr.mxu0 0.0
  %5206 = vmatpush1.msra.mxu0 0.0
  %5207 = vmatprep.subr.mxu0 0.0
  %5208 = vmatpush1.msra.mxu0 0.0
  %5209 = vmatprep.subr.mxu0 0.0
  %5210 = vmatpush1.msra.mxu0 0.0
  %5211 = vmatprep.subr.mxu0 0.0
  %5212 = vmatpush1.msra.mxu0 0.0
  %5213 = vmatprep.subr.mxu0 0.0
  %5214 = vmatpush1.msra.mxu0 0.0
  %5215 = vmatprep.subr.mxu0 0.0
  %5216 = vmatpush1.msra.mxu0 0.0
  %5217 = vmatprep.subr.mxu0 0.0
  %5218 = vmatpush1.msra.mxu0 0.0
  %5219 = vmatprep.subr.mxu0 0.0
  %5220 = vmatpush1.msra.mxu0 0.0
  %5221 = vmatprep.subr.mxu0 0.0
  %5222 = vmatpush1.msra.mxu0 0.0
  %5223 = vmatprep.subr.mxu0 0.0
  %5224 = vmatpush1.msra.mxu0 0.0
  %5225 = vmatprep.subr.mxu0 0.0
  %5226 = vmatpush1.msra.mxu0 0.0
  %5227 = vmatprep.subr.mxu0 0.0
  %5228 = vmatpush1.msra.mxu0 0.0
  %5229 = vmatprep.subr.mxu0 0.0
  %5230 = vmatpush1.msra.mxu0 0.0
  %5231 = vmatprep.subr.mxu0 0.0
  %5232 = vmatpush1.msra.mxu0 0.0
  %5233 = vmatprep.subr.mxu0 0.0
  %5234 = vmatpush1.msra.mxu0 0.0
  %5235 = vmatprep.subr.mxu0 0.0
  %5236 = vmatpush1.msra.mxu0 0.0
  %5237 = vmatprep.subr.mxu0 0.0
  %5238 = vmatpush1.msra.mxu0 0.0
  %5239 = vmatprep.subr.mxu0 0.0
  %5240 = vmatpush1.msra.mxu0 0.0
  %5241 = vmatprep.subr.mxu0 0.0
  %5242 = vmatpush1.msra.mxu0 0.0
  %5243 = vmatprep.subr.mxu0 0.0
  %5244 = vmatpush1.msra.mxu0 0.0
  %5245 = vmatprep.subr.mxu0 0.0
  %5246 = vmatpush1.msra.mxu0 0.0
  %5247 = vmatprep.subr.mxu0 0.0
  %5248 = vmatpush1.msra.mxu0 0.0
  %5249 = vmatprep.subr.mxu0 0.0
  %5250 = vmatpush1.msra.mxu0 0.0
  %5251 = vmatprep.subr.mxu0 0.0
  %5252 = vmatpush1.msra.mxu0 0.0
  %5253 = vmatprep.mubr.f32.mxu0 0.0
  %5254 = vmatmul.mubr.f32.gmra.mrb[0].mxu0 %v5187
  %v5255 = vpop.f32.mrb[0].mxu0
  %v5256 = vadd.f32 0.0, %v5255
  %v5257 = vpop.f32.mrb[0].mxu0
  %5258 = vdwg.mxu0
  %v5259 = vadd.f32 %v4935, %v5183
  %v5260 = vadd.f32 %v4936, %v5256
  %v5261 = vld [vmem:[%s49] sm:$0xff]
  %v5262 = vld [vmem:[%s49 + $0x8] sm:$0xff]
  %v5263 = vld [vmem:[%s49 + $0x10] sm:$0xff]
  %v5264 = vld [vmem:[%s49 + $0x18] sm:$0xff]
  %v5265 = vld [vmem:[%s51] sm:$0x1]
  %v5267 = vlaneseq
  %v5268 = vshrl.u32 %v5267, 7
  %v5269 = vsub.s32 0, %v5268
  %v5270 = vrot.slane %v5265, %v5269
  %v5273 = vsel %vm276, %v5259, 0
  %v5276 = vsel %vm276, %v5260, 0
  %5278 = vmatprep.subr.mxu0 0.0
  %5279 = vmatpush1.msra.mxu0 %v5261
  %5280 = vmatprep.subr.mxu0 0.0
  %5281 = vmatpush1.msra.mxu0 %v5262
  %5282 = vmatprep.subr.mxu0 0.0
  %5283 = vmatpush1.msra.mxu0 %v5263
  %5284 = vmatprep.subr.mxu0 0.0
  %5285 = vmatpush1.msra.mxu0 %v5264
  %5286 = vmatprep.subr.mxu0 0.0
  %5287 = vmatpush1.msra.mxu0 0.0
  %5288 = vmatprep.subr.mxu0 0.0
  %5289 = vmatpush1.msra.mxu0 0.0
  %5290 = vmatprep.subr.mxu0 0.0
  %5291 = vmatpush1.msra.mxu0 0.0
  %5292 = vmatprep.subr.mxu0 0.0
  %5293 = vmatpush1.msra.mxu0 0.0
  %5294 = vmatprep.subr.mxu0 0.0
  %5295 = vmatpush1.msra.mxu0 0.0
  %5296 = vmatprep.subr.mxu0 0.0
  %5297 = vmatpush1.msra.mxu0 0.0
  %5298 = vmatprep.subr.mxu0 0.0
  %5299 = vmatpush1.msra.mxu0 0.0
  %5300 = vmatprep.subr.mxu0 0.0
  %5301 = vmatpush1.msra.mxu0 0.0
  %5302 = vmatprep.subr.mxu0 0.0
  %5303 = vmatpush1.msra.mxu0 0.0
  %5304 = vmatprep.subr.mxu0 0.0
  %5305 = vmatpush1.msra.mxu0 0.0
  %5306 = vmatprep.subr.mxu0 0.0
  %5307 = vmatpush1.msra.mxu0 0.0
  %5308 = vmatprep.subr.mxu0 0.0
  %5309 = vmatpush1.msra.mxu0 0.0
  %5310 = vmatprep.subr.mxu0 0.0
  %5311 = vmatpush1.msra.mxu0 0.0
  %5312 = vmatprep.subr.mxu0 0.0
  %5313 = vmatpush1.msra.mxu0 0.0
  %5314 = vmatprep.subr.mxu0 0.0
  %5315 = vmatpush1.msra.mxu0 0.0
  %5316 = vmatprep.subr.mxu0 0.0
  %5317 = vmatpush1.msra.mxu0 0.0
  %5318 = vmatprep.subr.mxu0 0.0
  %5319 = vmatpush1.msra.mxu0 0.0
  %5320 = vmatprep.subr.mxu0 0.0
  %5321 = vmatpush1.msra.mxu0 0.0
  %5322 = vmatprep.subr.mxu0 0.0
  %5323 = vmatpush1.msra.mxu0 0.0
  %5324 = vmatprep.subr.mxu0 0.0
  %5325 = vmatpush1.msra.mxu0 0.0
  %5326 = vmatprep.subr.mxu0 0.0
  %5327 = vmatpush1.msra.mxu0 0.0
  %5328 = vmatprep.subr.mxu0 0.0
  %5329 = vmatpush1.msra.mxu0 0.0
  %5330 = vmatprep.subr.mxu0 0.0
  %5331 = vmatpush1.msra.mxu0 0.0
  %5332 = vmatprep.subr.mxu0 0.0
  %5333 = vmatpush1.msra.mxu0 0.0
  %5334 = vmatprep.subr.mxu0 0.0
  %5335 = vmatpush1.msra.mxu0 0.0
  %5336 = vmatprep.subr.mxu0 0.0
  %5337 = vmatpush1.msra.mxu0 0.0
  %5338 = vmatprep.subr.mxu0 0.0
  %5339 = vmatpush1.msra.mxu0 0.0
  %5340 = vmatprep.subr.mxu0 0.0
  %5341 = vmatpush1.msra.mxu0 0.0
  %5342 = vmatprep.mubr.f32.mxu0 0.0
  %5343 = vmatmul.mubr.f32.gmra.mrb[0].mxu0 %v5273
  %v5344 = vpop.f32.mrb[0].mxu0
  %v5345 = vadd.f32 %v5270, %v5344
  %v5346 = vpop.f32.mrb[0].mxu0
  %5347 = vmatprep.mubr.f32.mxu0 0.0
  %5348 = vmatmul.mubr.f32.gmra.mrb[0].mxu0 %v5276
  %v5349 = vpop.f32.mrb[0].mxu0
  %v5350 = vadd.f32 %v5270, %v5349
  %v5351 = vpop.f32.mrb[0].mxu0
  %5352 = vdwg.mxu0
  %v5353 = vadd.f32 %v3697, %v5345
  %v5354 = vadd.f32 %v3698, %v5350
  %v5355 = vld [vmem:[%s53] sm:$0x1]
  %v5356 = vld [vmem:[%s55] sm:$0x1]
  %v5357 = vsel %vm276, %v5353, 0.0
  %5358 = vadd.xlane.f32.xlu0 %v5357
  %v5359 = vpop.xlane.xlu0 %5358
  %v5360 = vsel %vm276, %v5354, 0.0
  %5361 = vadd.xlane.f32.xlu0 %v5360
  %v5362 = vpop.xlane.xlu0 %5361
  %v5363 = vmul.f32 %v5359, %v1951
  %v5364 = vmul.f32 %v5362, %v1951
  %v5365 = vsub.f32 %v5353, %v5363
  %v5366 = vsub.f32 %v5354, %v5364
  %v5367 = vmul.f32 %v5365, %v5365
  %v5368 = vmul.f32 %v5366, %v5366
  %v5369 = vsel %vm276, %v5367, 0.0
  %5370 = vadd.xlane.f32.xlu0 %v5369
  %v5371 = vpop.xlane.xlu0 %5370
  %v5372 = vsel %vm276, %v5368, 0.0
  %5373 = vadd.xlane.f32.xlu0 %v5372
  %v5374 = vpop.xlane.xlu0 %5373
  %v5375 = vmul.f32 %v5371, %v1951
  %v5376 = vmul.f32 %v5374, %v1951
  %v5377 = vadd.f32 %v5375, 1e-05
  %v5378 = vadd.f32 %v5376, 1e-05
  %v5379 = vrsqrt.pop %v5377
  %v5380 = vrsqrt.pop %v5378
  %v5381 = vmul.f32 %v5365, %v5379
  %v5382 = vmul.f32 %v5366, %v5380
  %v5384 = vlaneseq
  %v5385 = vshrl.u32 %v5384, 7
  %v5386 = vsub.s32 0, %v5385
  %v5387 = vrot.slane %v5355, %v5386
  %v5389 = vmul.f32 %v5381, %v5387
  %v5390 = vmul.f32 %v5382, %v5387
  %v5392 = vlaneseq
  %v5393 = vshrl.u32 %v5392, 7
  %v5394 = vsub.s32 0, %v5393
  %v5395 = vrot.slane %v5356, %v5394
  %v5397 = vadd.f32 %v5389, %v5395
  %v5398 = vadd.f32 %v5390, %v5395
  %v5399 = vld [vmem:[%s61] sm:$0xff]
  %v5400 = vld [vmem:[%s61 + $0x8] sm:$0xff]
  %v5401 = vld [vmem:[%s61 + $0x10] sm:$0xff]
  %v5402 = vld [vmem:[%s61 + $0x18] sm:$0xff]
  %v5403 = vld [vmem:[%s61 + $0x20] sm:$0xff]
  %v5404 = vld [vmem:[%s61 + $0x28] sm:$0xff]
  %v5405 = vld [vmem:[%s61 + $0x30] sm:$0xff]
  %v5406 = vld [vmem:[%s61 + $0x38] sm:$0xff]
  %v5407 = vld [vmem:[%s61 + $0x40] sm:$0xff]
  %v5408 = vld [vmem:[%s61 + $0x48] sm:$0xff]
  %v5409 = vld [vmem:[%s61 + $0x50] sm:$0xff]
  %v5410 = vld [vmem:[%s61 + $0x58] sm:$0xff]
  %v5411 = vld [vmem:[%s61 + $0x60] sm:$0xff]
  %v5412 = vld [vmem:[%s61 + $0x68] sm:$0xff]
  %v5413 = vld [vmem:[%s61 + $0x70] sm:$0xff]
  %v5414 = vld [vmem:[%s61 + $0x78] sm:$0xff]
  %v5415 = vld [vmem:[%s61 + $0x80] sm:$0xff]
  %v5416 = vld [vmem:[%s61 + $0x88] sm:$0xff]
  %v5417 = vld [vmem:[%s61 + $0x90] sm:$0xff]
  %v5418 = vld [vmem:[%s61 + $0x98] sm:$0xff]
  %v5419 = vld [vmem:[%s61 + $0xa0] sm:$0xff]
  %v5420 = vld [vmem:[%s61 + $0xa8] sm:$0xff]
  %v5421 = vld [vmem:[%s61 + $0xb0] sm:$0xff]
  %v5422 = vld [vmem:[%s61 + $0xb8] sm:$0xff]
  %v5423 = vld [vmem:[%s61 + $0xc0] sm:$0xff]
  %v5424 = vld [vmem:[%s61 + $0xc8] sm:$0xff]
  %v5425 = vld [vmem:[%s61 + $0xd0] sm:$0xff]
  %v5426 = vld [vmem:[%s61 + $0xd8] sm:$0xff]
  %v5427 = vld [vmem:[%s61 + $0xe0] sm:$0xff]
  %v5428 = vld [vmem:[%s61 + $0xe8] sm:$0xff]
  %v5429 = vld [vmem:[%s61 + $0xf0] sm:$0xff]
  %v5430 = vld [vmem:[%s61 + $0xf8] sm:$0xff]
  %v5431 = vld [vmem:[%s61 + $0x100] sm:$0xff]
  %v5432 = vld [vmem:[%s61 + $0x108] sm:$0xff]
  %v5433 = vld [vmem:[%s61 + $0x110] sm:$0xff]
  %v5434 = vld [vmem:[%s61 + $0x118] sm:$0xff]
  %v5435 = vld [vmem:[%s61 + $0x120] sm:$0xff]
  %v5436 = vld [vmem:[%s61 + $0x128] sm:$0xff]
  %v5437 = vld [vmem:[%s61 + $0x130] sm:$0xff]
  %v5438 = vld [vmem:[%s61 + $0x138] sm:$0xff]
  %v5439 = vld [vmem:[%s61 + $0x140] sm:$0xff]
  %v5440 = vld [vmem:[%s61 + $0x148] sm:$0xff]
  %v5441 = vld [vmem:[%s61 + $0x150] sm:$0xff]
  %v5442 = vld [vmem:[%s61 + $0x158] sm:$0xff]
  %v5443 = vld [vmem:[%s61 + $0x160] sm:$0xff]
  %v5444 = vld [vmem:[%s61 + $0x168] sm:$0xff]
  %v5445 = vld [vmem:[%s61 + $0x170] sm:$0xff]
  %v5446 = vld [vmem:[%s61 + $0x178] sm:$0xff]
  %v5447 = vld [vmem:[%s61 + $0x180] sm:$0xff]
  %v5448 = vld [vmem:[%s61 + $0x188] sm:$0xff]
  %v5449 = vld [vmem:[%s61 + $0x190] sm:$0xff]
  %v5450 = vld [vmem:[%s61 + $0x198] sm:$0xff]
  %v5451 = vld [vmem:[%s61 + $0x1a0] sm:$0xff]
  %v5452 = vld [vmem:[%s61 + $0x1a8] sm:$0xff]
  %v5453 = vld [vmem:[%s61 + $0x1b0] sm:$0xff]
  %v5454 = vld [vmem:[%s61 + $0x1b8] sm:$0xff]
  %v5455 = vld [vmem:[%s61 + $0x1c0] sm:$0xff]
  %v5456 = vld [vmem:[%s61 + $0x1c8] sm:$0xff]
  %v5457 = vld [vmem:[%s61 + $0x1d0] sm:$0xff]
  %v5458 = vld [vmem:[%s61 + $0x1d8] sm:$0xff]
  %v5459 = vld [vmem:[%s61 + $0x1e0] sm:$0xff]
  %v5460 = vld [vmem:[%s61 + $0x1e8] sm:$0xff]
  %v5461 = vld [vmem:[%s61 + $0x1f0] sm:$0xff]
  %v5462 = vld [vmem:[%s61 + $0x1f8] sm:$0xff]
  %v5463 = vld [vmem:[%s63] sm:$0xff]
  %v5464 = vld [vmem:[%s63 + $0x8] sm:$0xff]
  %v5467 = vlaneseq
  %v5468 = vshrl.u32 %v5467, 7
  %v5469 = vsub.s32 0, %v5468
  %v5470 = vrot.slane %v5463, %v5469
  %v5471 = vlaneseq
  %v5472 = vshrl.u32 %v5471, 7
  %v5473 = vsub.s32 1, %v5472
  %v5474 = vrot.slane %v5463, %v5473
  %v5475 = vlaneseq
  %v5476 = vshrl.u32 %v5475, 7
  %v5477 = vsub.s32 2, %v5476
  %v5478 = vrot.slane %v5463, %v5477
  %v5479 = vlaneseq
  %v5480 = vshrl.u32 %v5479, 7
  %v5481 = vsub.s32 3, %v5480
  %v5482 = vrot.slane %v5463, %v5481
  %v5483 = vlaneseq
  %v5484 = vshrl.u32 %v5483, 7
  %v5485 = vsub.s32 4, %v5484
  %v5486 = vrot.slane %v5463, %v5485
  %v5487 = vlaneseq
  %v5488 = vshrl.u32 %v5487, 7
  %v5489 = vsub.s32 5, %v5488
  %v5490 = vrot.slane %v5463, %v5489
  %v5491 = vlaneseq
  %v5492 = vshrl.u32 %v5491, 7
  %v5493 = vsub.s32 6, %v5492
  %v5494 = vrot.slane %v5463, %v5493
  %v5495 = vlaneseq
  %v5496 = vshrl.u32 %v5495, 7
  %v5497 = vsub.s32 7, %v5496
  %v5498 = vrot.slane %v5463, %v5497
  %v5499 = vlaneseq
  %v5500 = vshrl.u32 %v5499, 7
  %v5501 = vsub.s32 0, %v5500
  %v5502 = vrot.slane %v5464, %v5501
  %v5503 = vlaneseq
  %v5504 = vshrl.u32 %v5503, 7
  %v5505 = vsub.s32 1, %v5504
  %v5506 = vrot.slane %v5464, %v5505
  %v5507 = vlaneseq
  %v5508 = vshrl.u32 %v5507, 7
  %v5509 = vsub.s32 2, %v5508
  %v5510 = vrot.slane %v5464, %v5509
  %v5511 = vlaneseq
  %v5512 = vshrl.u32 %v5511, 7
  %v5513 = vsub.s32 3, %v5512
  %v5514 = vrot.slane %v5464, %v5513
  %v5515 = vlaneseq
  %v5516 = vshrl.u32 %v5515, 7
  %v5517 = vsub.s32 4, %v5516
  %v5518 = vrot.slane %v5464, %v5517
  %v5519 = vlaneseq
  %v5520 = vshrl.u32 %v5519, 7
  %v5521 = vsub.s32 5, %v5520
  %v5522 = vrot.slane %v5464, %v5521
  %v5523 = vlaneseq
  %v5524 = vshrl.u32 %v5523, 7
  %v5525 = vsub.s32 6, %v5524
  %v5526 = vrot.slane %v5464, %v5525
  %v5527 = vlaneseq
  %v5528 = vshrl.u32 %v5527, 7
  %v5529 = vsub.s32 7, %v5528
  %v5530 = vrot.slane %v5464, %v5529
  %v5548 = vsel %vm276, %v5397, 0
  %v5551 = vsel %vm276, %v5398, 0
  %5553 = vmatprep.subr.mxu0 %v5400
  %5554 = vmatpush1.msra.mxu0 %v5399
  %5555 = vmatprep.subr.mxu0 %v5416
  %5556 = vmatpush1.msra.mxu0 %v5415
  %5557 = vmatprep.subr.mxu0 %v5432
  %5558 = vmatpush1.msra.mxu0 %v5431
  %5559 = vmatprep.subr.mxu0 %v5448
  %5560 = vmatpush1.msra.mxu0 %v5447
  %5561 = vmatprep.subr.mxu0 0.0
  %5562 = vmatpush1.msra.mxu0 0.0
  %5563 = vmatprep.subr.mxu0 0.0
  %5564 = vmatpush1.msra.mxu0 0.0
  %5565 = vmatprep.subr.mxu0 0.0
  %5566 = vmatpush1.msra.mxu0 0.0
  %5567 = vmatprep.subr.mxu0 0.0
  %5568 = vmatpush1.msra.mxu0 0.0
  %5569 = vmatprep.subr.mxu0 0.0
  %5570 = vmatpush1.msra.mxu0 0.0
  %5571 = vmatprep.subr.mxu0 0.0
  %5572 = vmatpush1.msra.mxu0 0.0
  %5573 = vmatprep.subr.mxu0 0.0
  %5574 = vmatpush1.msra.mxu0 0.0
  %5575 = vmatprep.subr.mxu0 0.0
  %5576 = vmatpush1.msra.mxu0 0.0
  %5577 = vmatprep.subr.mxu0 0.0
  %5578 = vmatpush1.msra.mxu0 0.0
  %5579 = vmatprep.subr.mxu0 0.0
  %5580 = vmatpush1.msra.mxu0 0.0
  %5581 = vmatprep.subr.mxu0 0.0
  %5582 = vmatpush1.msra.mxu0 0.0
  %5583 = vmatprep.subr.mxu0 0.0
  %5584 = vmatpush1.msra.mxu0 0.0
  %5585 = vmatprep.subr.mxu0 0.0
  %5586 = vmatpush1.msra.mxu0 0.0
  %5587 = vmatprep.subr.mxu0 0.0
  %5588 = vmatpush1.msra.mxu0 0.0
  %5589 = vmatprep.subr.mxu0 0.0
  %5590 = vmatpush1.msra.mxu0 0.0
  %5591 = vmatprep.subr.mxu0 0.0
  %5592 = vmatpush1.msra.mxu0 0.0
  %5593 = vmatprep.subr.mxu0 0.0
  %5594 = vmatpush1.msra.mxu0 0.0
  %5595 = vmatprep.subr.mxu0 0.0
  %5596 = vmatpush1.msra.mxu0 0.0
  %5597 = vmatprep.subr.mxu0 0.0
  %5598 = vmatpush1.msra.mxu0 0.0
  %5599 = vmatprep.subr.mxu0 0.0
  %5600 = vmatpush1.msra.mxu0 0.0
  %5601 = vmatprep.subr.mxu0 0.0
  %5602 = vmatpush1.msra.mxu0 0.0
  %5603 = vmatprep.subr.mxu0 0.0
  %5604 = vmatpush1.msra.mxu0 0.0
  %5605 = vmatprep.subr.mxu0 0.0
  %5606 = vmatpush1.msra.mxu0 0.0
  %5607 = vmatprep.subr.mxu0 0.0
  %5608 = vmatpush1.msra.mxu0 0.0
  %5609 = vmatprep.subr.mxu0 0.0
  %5610 = vmatpush1.msra.mxu0 0.0
  %5611 = vmatprep.subr.mxu0 0.0
  %5612 = vmatpush1.msra.mxu0 0.0
  %5613 = vmatprep.subr.mxu0 0.0
  %5614 = vmatpush1.msra.mxu0 0.0
  %5615 = vmatprep.subr.mxu0 0.0
  %5616 = vmatpush1.msra.mxu0 0.0
  %5617 = vmatprep.mubr.f32.mxu0 0.0
  %5618 = vmatmul.mubr.f32.gmra.mrb[0].mxu0 %v5548
  %v5619 = vpop.f32.mrb[0].mxu0
  %v5620 = vadd.f32 %v5470, %v5619
  %v5621 = vpop.f32.mrb[0].mxu0
  %v5622 = vadd.f32 %v5474, %v5621
  %5623 = vmatprep.mubr.f32.mxu0 0.0
  %5624 = vmatmul.mubr.f32.gmra.mrb[0].mxu0 %v5551
  %v5625 = vpop.f32.mrb[0].mxu0
  %v5626 = vadd.f32 %v5470, %v5625
  %v5627 = vpop.f32.mrb[0].mxu0
  %v5628 = vadd.f32 %v5474, %v5627
  %5629 = vdwg.mxu0
  %5630 = vmatprep.subr.mxu0 %v5402
  %5631 = vmatpush1.msra.mxu0 %v5401
  %5632 = vmatprep.subr.mxu0 %v5418
  %5633 = vmatpush1.msra.mxu0 %v5417
  %5634 = vmatprep.subr.mxu0 %v5434
  %5635 = vmatpush1.msra.mxu0 %v5433
  %5636 = vmatprep.subr.mxu0 %v5450
  %5637 = vmatpush1.msra.mxu0 %v5449
  %5638 = vmatprep.subr.mxu0 0.0
  %5639 = vmatpush1.msra.mxu0 0.0
  %5640 = vmatprep.subr.mxu0 0.0
  %5641 = vmatpush1.msra.mxu0 0.0
  %5642 = vmatprep.subr.mxu0 0.0
  %5643 = vmatpush1.msra.mxu0 0.0
  %5644 = vmatprep.subr.mxu0 0.0
  %5645 = vmatpush1.msra.mxu0 0.0
  %5646 = vmatprep.subr.mxu0 0.0
  %5647 = vmatpush1.msra.mxu0 0.0
  %5648 = vmatprep.subr.mxu0 0.0
  %5649 = vmatpush1.msra.mxu0 0.0
  %5650 = vmatprep.subr.mxu0 0.0
  %5651 = vmatpush1.msra.mxu0 0.0
  %5652 = vmatprep.subr.mxu0 0.0
  %5653 = vmatpush1.msra.mxu0 0.0
  %5654 = vmatprep.subr.mxu0 0.0
  %5655 = vmatpush1.msra.mxu0 0.0
  %5656 = vmatprep.subr.mxu0 0.0
  %5657 = vmatpush1.msra.mxu0 0.0
  %5658 = vmatprep.subr.mxu0 0.0
  %5659 = vmatpush1.msra.mxu0 0.0
  %5660 = vmatprep.subr.mxu0 0.0
  %5661 = vmatpush1.msra.mxu0 0.0
  %5662 = vmatprep.subr.mxu0 0.0
  %5663 = vmatpush1.msra.mxu0 0.0
  %5664 = vmatprep.subr.mxu0 0.0
  %5665 = vmatpush1.msra.mxu0 0.0
  %5666 = vmatprep.subr.mxu0 0.0
  %5667 = vmatpush1.msra.mxu0 0.0
  %5668 = vmatprep.subr.mxu0 0.0
  %5669 = vmatpush1.msra.mxu0 0.0
  %5670 = vmatprep.subr.mxu0 0.0
  %5671 = vmatpush1.msra.mxu0 0.0
  %5672 = vmatprep.subr.mxu0 0.0
  %5673 = vmatpush1.msra.mxu0 0.0
  %5674 = vmatprep.subr.mxu0 0.0
  %5675 = vmatpush1.msra.mxu0 0.0
  %5676 = vmatprep.subr.mxu0 0.0
  %5677 = vmatpush1.msra.mxu0 0.0
  %5678 = vmatprep.subr.mxu0 0.0
  %5679 = vmatpush1.msra.mxu0 0.0
  %5680 = vmatprep.subr.mxu0 0.0
  %5681 = vmatpush1.msra.mxu0 0.0
  %5682 = vmatprep.subr.mxu0 0.0
  %5683 = vmatpush1.msra.mxu0 0.0
  %5684 = vmatprep.subr.mxu0 0.0
  %5685 = vmatpush1.msra.mxu0 0.0
  %5686 = vmatprep.subr.mxu0 0.0
  %5687 = vmatpush1.msra.mxu0 0.0
  %5688 = vmatprep.subr.mxu0 0.0
  %5689 = vmatpush1.msra.mxu0 0.0
  %5690 = vmatprep.subr.mxu0 0.0
  %5691 = vmatpush1.msra.mxu0 0.0
  %5692 = vmatprep.subr.mxu0 0.0
  %5693 = vmatpush1.msra.mxu0 0.0
  %5694 = vmatprep.mubr.f32.mxu0 0.0
  %5695 = vmatmul.mubr.f32.gmra.mrb[0].mxu0 %v5548
  %v5696 = vpop.f32.mrb[0].mxu0
  %v5697 = vadd.f32 %v5478, %v5696
  %v5698 = vpop.f32.mrb[0].mxu0
  %v5699 = vadd.f32 %v5482, %v5698
  %5700 = vmatprep.mubr.f32.mxu0 0.0
  %5701 = vmatmul.mubr.f32.gmra.mrb[0].mxu0 %v5551
  %v5702 = vpop.f32.mrb[0].mxu0
  %v5703 = vadd.f32 %v5478, %v5702
  %v5704 = vpop.f32.mrb[0].mxu0
  %v5705 = vadd.f32 %v5482, %v5704
  %5706 = vdwg.mxu0
  %5707 = vmatprep.subr.mxu0 %v5404
  %5708 = vmatpush1.msra.mxu0 %v5403
  %5709 = vmatprep.subr.mxu0 %v5420
  %5710 = vmatpush1.msra.mxu0 %v5419
  %5711 = vmatprep.subr.mxu0 %v5436
  %5712 = vmatpush1.msra.mxu0 %v5435
  %5713 = vmatprep.subr.mxu0 %v5452
  %5714 = vmatpush1.msra.mxu0 %v5451
  %5715 = vmatprep.subr.mxu0 0.0
  %5716 = vmatpush1.msra.mxu0 0.0
  %5717 = vmatprep.subr.mxu0 0.0
  %5718 = vmatpush1.msra.mxu0 0.0
  %5719 = vmatprep.subr.mxu0 0.0
  %5720 = vmatpush1.msra.mxu0 0.0
  %5721 = vmatprep.subr.mxu0 0.0
  %5722 = vmatpush1.msra.mxu0 0.0
  %5723 = vmatprep.subr.mxu0 0.0
  %5724 = vmatpush1.msra.mxu0 0.0
  %5725 = vmatprep.subr.mxu0 0.0
  %5726 = vmatpush1.msra.mxu0 0.0
  %5727 = vmatprep.subr.mxu0 0.0
  %5728 = vmatpush1.msra.mxu0 0.0
  %5729 = vmatprep.subr.mxu0 0.0
  %5730 = vmatpush1.msra.mxu0 0.0
  %5731 = vmatprep.subr.mxu0 0.0
  %5732 = vmatpush1.msra.mxu0 0.0
  %5733 = vmatprep.subr.mxu0 0.0
  %5734 = vmatpush1.msra.mxu0 0.0
  %5735 = vmatprep.subr.mxu0 0.0
  %5736 = vmatpush1.msra.mxu0 0.0
  %5737 = vmatprep.subr.mxu0 0.0
  %5738 = vmatpush1.msra.mxu0 0.0
  %5739 = vmatprep.subr.mxu0 0.0
  %5740 = vmatpush1.msra.mxu0 0.0
  %5741 = vmatprep.subr.mxu0 0.0
  %5742 = vmatpush1.msra.mxu0 0.0
  %5743 = vmatprep.subr.mxu0 0.0
  %5744 = vmatpush1.msra.mxu0 0.0
  %5745 = vmatprep.subr.mxu0 0.0
  %5746 = vmatpush1.msra.mxu0 0.0
  %5747 = vmatprep.subr.mxu0 0.0
  %5748 = vmatpush1.msra.mxu0 0.0
  %5749 = vmatprep.subr.mxu0 0.0
  %5750 = vmatpush1.msra.mxu0 0.0
  %5751 = vmatprep.subr.mxu0 0.0
  %5752 = vmatpush1.msra.mxu0 0.0
  %5753 = vmatprep.subr.mxu0 0.0
  %5754 = vmatpush1.msra.mxu0 0.0
  %5755 = vmatprep.subr.mxu0 0.0
  %5756 = vmatpush1.msra.mxu0 0.0
  %5757 = vmatprep.subr.mxu0 0.0
  %5758 = vmatpush1.msra.mxu0 0.0
  %5759 = vmatprep.subr.mxu0 0.0
  %5760 = vmatpush1.msra.mxu0 0.0
  %5761 = vmatprep.subr.mxu0 0.0
  %5762 = vmatpush1.msra.mxu0 0.0
  %5763 = vmatprep.subr.mxu0 0.0
  %5764 = vmatpush1.msra.mxu0 0.0
  %5765 = vmatprep.subr.mxu0 0.0
  %5766 = vmatpush1.msra.mxu0 0.0
  %5767 = vmatprep.subr.mxu0 0.0
  %5768 = vmatpush1.msra.mxu0 0.0
  %5769 = vmatprep.subr.mxu0 0.0
  %5770 = vmatpush1.msra.mxu0 0.0
  %5771 = vmatprep.mubr.f32.mxu0 0.0
  %5772 = vmatmul.mubr.f32.gmra.mrb[0].mxu0 %v5548
  %v5773 = vpop.f32.mrb[0].mxu0
  %v5774 = vadd.f32 %v5486, %v5773
  %v5775 = vpop.f32.mrb[0].mxu0
  %v5776 = vadd.f32 %v5490, %v5775
  %5777 = vmatprep.mubr.f32.mxu0 0.0
  %5778 = vmatmul.mubr.f32.gmra.mrb[0].mxu0 %v5551
  %v5779 = vpop.f32.mrb[0].mxu0
  %v5780 = vadd.f32 %v5486, %v5779
  %v5781 = vpop.f32.mrb[0].mxu0
  %v5782 = vadd.f32 %v5490, %v5781
  %5783 = vdwg.mxu0
  %5784 = vmatprep.subr.mxu0 %v5406
  %5785 = vmatpush1.msra.mxu0 %v5405
  %5786 = vmatprep.subr.mxu0 %v5422
  %5787 = vmatpush1.msra.mxu0 %v5421
  %5788 = vmatprep.subr.mxu0 %v5438
  %5789 = vmatpush1.msra.mxu0 %v5437
  %5790 = vmatprep.subr.mxu0 %v5454
  %5791 = vmatpush1.msra.mxu0 %v5453
  %5792 = vmatprep.subr.mxu0 0.0
  %5793 = vmatpush1.msra.mxu0 0.0
  %5794 = vmatprep.subr.mxu0 0.0
  %5795 = vmatpush1.msra.mxu0 0.0
  %5796 = vmatprep.subr.mxu0 0.0
  %5797 = vmatpush1.msra.mxu0 0.0
  %5798 = vmatprep.subr.mxu0 0.0
  %5799 = vmatpush1.msra.mxu0 0.0
  %5800 = vmatprep.subr.mxu0 0.0
  %5801 = vmatpush1.msra.mxu0 0.0
  %5802 = vmatprep.subr.mxu0 0.0
  %5803 = vmatpush1.msra.mxu0 0.0
  %5804 = vmatprep.subr.mxu0 0.0
  %5805 = vmatpush1.msra.mxu0 0.0
  %5806 = vmatprep.subr.mxu0 0.0
  %5807 = vmatpush1.msra.mxu0 0.0
  %5808 = vmatprep.subr.mxu0 0.0
  %5809 = vmatpush1.msra.mxu0 0.0
  %5810 = vmatprep.subr.mxu0 0.0
  %5811 = vmatpush1.msra.mxu0 0.0
  %5812 = vmatprep.subr.mxu0 0.0
  %5813 = vmatpush1.msra.mxu0 0.0
  %5814 = vmatprep.subr.mxu0 0.0
  %5815 = vmatpush1.msra.mxu0 0.0
  %5816 = vmatprep.subr.mxu0 0.0
  %5817 = vmatpush1.msra.mxu0 0.0
  %5818 = vmatprep.subr.mxu0 0.0
  %5819 = vmatpush1.msra.mxu0 0.0
  %5820 = vmatprep.subr.mxu0 0.0
  %5821 = vmatpush1.msra.mxu0 0.0
  %5822 = vmatprep.subr.mxu0 0.0
  %5823 = vmatpush1.msra.mxu0 0.0
  %5824 = vmatprep.subr.mxu0 0.0
  %5825 = vmatpush1.msra.mxu0 0.0
  %5826 = vmatprep.subr.mxu0 0.0
  %5827 = vmatpush1.msra.mxu0 0.0
  %5828 = vmatprep.subr.mxu0 0.0
  %5829 = vmatpush1.msra.mxu0 0.0
  %5830 = vmatprep.subr.mxu0 0.0
  %5831 = vmatpush1.msra.mxu0 0.0
  %5832 = vmatprep.subr.mxu0 0.0
  %5833 = vmatpush1.msra.mxu0 0.0
  %5834 = vmatprep.subr.mxu0 0.0
  %5835 = vmatpush1.msra.mxu0 0.0
  %5836 = vmatprep.subr.mxu0 0.0
  %5837 = vmatpush1.msra.mxu0 0.0
  %5838 = vmatprep.subr.mxu0 0.0
  %5839 = vmatpush1.msra.mxu0 0.0
  %5840 = vmatprep.subr.mxu0 0.0
  %5841 = vmatpush1.msra.mxu0 0.0
  %5842 = vmatprep.subr.mxu0 0.0
  %5843 = vmatpush1.msra.mxu0 0.0
  %5844 = vmatprep.subr.mxu0 0.0
  %5845 = vmatpush1.msra.mxu0 0.0
  %5846 = vmatprep.subr.mxu0 0.0
  %5847 = vmatpush1.msra.mxu0 0.0
  %5848 = vmatprep.mubr.f32.mxu0 0.0
  %5849 = vmatmul.mubr.f32.gmra.mrb[0].mxu0 %v5548
  %v5850 = vpop.f32.mrb[0].mxu0
  %v5851 = vadd.f32 %v5494, %v5850
  %v5852 = vpop.f32.mrb[0].mxu0
  %v5853 = vadd.f32 %v5498, %v5852
  %5854 = vmatprep.mubr.f32.mxu0 0.0
  %5855 = vmatmul.mubr.f32.gmra.mrb[0].mxu0 %v5551
  %v5856 = vpop.f32.mrb[0].mxu0
  %v5857 = vadd.f32 %v5494, %v5856
  %v5858 = vpop.f32.mrb[0].mxu0
  %v5859 = vadd.f32 %v5498, %v5858
  %5860 = vdwg.mxu0
  %5861 = vmatprep.subr.mxu0 %v5408
  %5862 = vmatpush1.msra.mxu0 %v5407
  %5863 = vmatprep.subr.mxu0 %v5424
  %5864 = vmatpush1.msra.mxu0 %v5423
  %5865 = vmatprep.subr.mxu0 %v5440
  %5866 = vmatpush1.msra.mxu0 %v5439
  %5867 = vmatprep.subr.mxu0 %v5456
  %5868 = vmatpush1.msra.mxu0 %v5455
  %5869 = vmatprep.subr.mxu0 0.0
  %5870 = vmatpush1.msra.mxu0 0.0
  %5871 = vmatprep.subr.mxu0 0.0
  %5872 = vmatpush1.msra.mxu0 0.0
  %5873 = vmatprep.subr.mxu0 0.0
  %5874 = vmatpush1.msra.mxu0 0.0
  %5875 = vmatprep.subr.mxu0 0.0
  %5876 = vmatpush1.msra.mxu0 0.0
  %5877 = vmatprep.subr.mxu0 0.0
  %5878 = vmatpush1.msra.mxu0 0.0
  %5879 = vmatprep.subr.mxu0 0.0
  %5880 = vmatpush1.msra.mxu0 0.0
  %5881 = vmatprep.subr.mxu0 0.0
  %5882 = vmatpush1.msra.mxu0 0.0
  %5883 = vmatprep.subr.mxu0 0.0
  %5884 = vmatpush1.msra.mxu0 0.0
  %5885 = vmatprep.subr.mxu0 0.0
  %5886 = vmatpush1.msra.mxu0 0.0
  %5887 = vmatprep.subr.mxu0 0.0
  %5888 = vmatpush1.msra.mxu0 0.0
  %5889 = vmatprep.subr.mxu0 0.0
  %5890 = vmatpush1.msra.mxu0 0.0
  %5891 = vmatprep.subr.mxu0 0.0
  %5892 = vmatpush1.msra.mxu0 0.0
  %5893 = vmatprep.subr.mxu0 0.0
  %5894 = vmatpush1.msra.mxu0 0.0
  %5895 = vmatprep.subr.mxu0 0.0
  %5896 = vmatpush1.msra.mxu0 0.0
  %5897 = vmatprep.subr.mxu0 0.0
  %5898 = vmatpush1.msra.mxu0 0.0
  %5899 = vmatprep.subr.mxu0 0.0
  %5900 = vmatpush1.msra.mxu0 0.0
  %5901 = vmatprep.subr.mxu0 0.0
  %5902 = vmatpush1.msra.mxu0 0.0
  %5903 = vmatprep.subr.mxu0 0.0
  %5904 = vmatpush1.msra.mxu0 0.0
  %5905 = vmatprep.subr.mxu0 0.0
  %5906 = vmatpush1.msra.mxu0 0.0
  %5907 = vmatprep.subr.mxu0 0.0
  %5908 = vmatpush1.msra.mxu0 0.0
  %5909 = vmatprep.subr.mxu0 0.0
  %5910 = vmatpush1.msra.mxu0 0.0
  %5911 = vmatprep.subr.mxu0 0.0
  %5912 = vmatpush1.msra.mxu0 0.0
  %5913 = vmatprep.subr.mxu0 0.0
  %5914 = vmatpush1.msra.mxu0 0.0
  %5915 = vmatprep.subr.mxu0 0.0
  %5916 = vmatpush1.msra.mxu0 0.0
  %5917 = vmatprep.subr.mxu0 0.0
  %5918 = vmatpush1.msra.mxu0 0.0
  %5919 = vmatprep.subr.mxu0 0.0
  %5920 = vmatpush1.msra.mxu0 0.0
  %5921 = vmatprep.subr.mxu0 0.0
  %5922 = vmatpush1.msra.mxu0 0.0
  %5923 = vmatprep.subr.mxu0 0.0
  %5924 = vmatpush1.msra.mxu0 0.0
  %5925 = vmatprep.mubr.f32.mxu0 0.0
  %5926 = vmatmul.mubr.f32.gmra.mrb[0].mxu0 %v5548
  %v5927 = vpop.f32.mrb[0].mxu0
  %v5928 = vadd.f32 %v5502, %v5927
  %v5929 = vpop.f32.mrb[0].mxu0
  %v5930 = vadd.f32 %v5506, %v5929
  %5931 = vmatprep.mubr.f32.mxu0 0.0
  %5932 = vmatmul.mubr.f32.gmra.mrb[0].mxu0 %v5551
  %v5933 = vpop.f32.mrb[0].mxu0
  %v5934 = vadd.f32 %v5502, %v5933
  %v5935 = vpop.f32.mrb[0].mxu0
  %v5936 = vadd.f32 %v5506, %v5935
  %5937 = vdwg.mxu0
  %5938 = vmatprep.subr.mxu0 %v5410
  %5939 = vmatpush1.msra.mxu0 %v5409
  %5940 = vmatprep.subr.mxu0 %v5426
  %5941 = vmatpush1.msra.mxu0 %v5425
  %5942 = vmatprep.subr.mxu0 %v5442
  %5943 = vmatpush1.msra.mxu0 %v5441
  %5944 = vmatprep.subr.mxu0 %v5458
  %5945 = vmatpush1.msra.mxu0 %v5457
  %5946 = vmatprep.subr.mxu0 0.0
  %5947 = vmatpush1.msra.mxu0 0.0
  %5948 = vmatprep.subr.mxu0 0.0
  %5949 = vmatpush1.msra.mxu0 0.0
  %5950 = vmatprep.subr.mxu0 0.0
  %5951 = vmatpush1.msra.mxu0 0.0
  %5952 = vmatprep.subr.mxu0 0.0
  %5953 = vmatpush1.msra.mxu0 0.0
  %5954 = vmatprep.subr.mxu0 0.0
  %5955 = vmatpush1.msra.mxu0 0.0
  %5956 = vmatprep.subr.mxu0 0.0
  %5957 = vmatpush1.msra.mxu0 0.0
  %5958 = vmatprep.subr.mxu0 0.0
  %5959 = vmatpush1.msra.mxu0 0.0
  %5960 = vmatprep.subr.mxu0 0.0
  %5961 = vmatpush1.msra.mxu0 0.0
  %5962 = vmatprep.subr.mxu0 0.0
  %5963 = vmatpush1.msra.mxu0 0.0
  %5964 = vmatprep.subr.mxu0 0.0
  %5965 = vmatpush1.msra.mxu0 0.0
  %5966 = vmatprep.subr.mxu0 0.0
  %5967 = vmatpush1.msra.mxu0 0.0
  %5968 = vmatprep.subr.mxu0 0.0
  %5969 = vmatpush1.msra.mxu0 0.0
  %5970 = vmatprep.subr.mxu0 0.0
  %5971 = vmatpush1.msra.mxu0 0.0
  %5972 = vmatprep.subr.mxu0 0.0
  %5973 = vmatpush1.msra.mxu0 0.0
  %5974 = vmatprep.subr.mxu0 0.0
  %5975 = vmatpush1.msra.mxu0 0.0
  %5976 = vmatprep.subr.mxu0 0.0
  %5977 = vmatpush1.msra.mxu0 0.0
  %5978 = vmatprep.subr.mxu0 0.0
  %5979 = vmatpush1.msra.mxu0 0.0
  %5980 = vmatprep.subr.mxu0 0.0
  %5981 = vmatpush1.msra.mxu0 0.0
  %5982 = vmatprep.subr.mxu0 0.0
  %5983 = vmatpush1.msra.mxu0 0.0
  %5984 = vmatprep.subr.mxu0 0.0
  %5985 = vmatpush1.msra.mxu0 0.0
  %5986 = vmatprep.subr.mxu0 0.0
  %5987 = vmatpush1.msra.mxu0 0.0
  %5988 = vmatprep.subr.mxu0 0.0
  %5989 = vmatpush1.msra.mxu0 0.0
  %5990 = vmatprep.subr.mxu0 0.0
  %5991 = vmatpush1.msra.mxu0 0.0
  %5992 = vmatprep.subr.mxu0 0.0
  %5993 = vmatpush1.msra.mxu0 0.0
  %5994 = vmatprep.subr.mxu0 0.0
  %5995 = vmatpush1.msra.mxu0 0.0
  %5996 = vmatprep.subr.mxu0 0.0
  %5997 = vmatpush1.msra.mxu0 0.0
  %5998 = vmatprep.subr.mxu0 0.0
  %5999 = vmatpush1.msra.mxu0 0.0
  %6000 = vmatprep.subr.mxu0 0.0
  %6001 = vmatpush1.msra.mxu0 0.0
  %6002 = vmatprep.mubr.f32.mxu0 0.0
  %6003 = vmatmul.mubr.f32.gmra.mrb[0].mxu0 %v5548
  %v6004 = vpop.f32.mrb[0].mxu0
  %v6005 = vadd.f32 %v5510, %v6004
  %v6006 = vpop.f32.mrb[0].mxu0
  %v6007 = vadd.f32 %v5514, %v6006
  %6008 = vmatprep.mubr.f32.mxu0 0.0
  %6009 = vmatmul.mubr.f32.gmra.mrb[0].mxu0 %v5551
  %v6010 = vpop.f32.mrb[0].mxu0
  %v6011 = vadd.f32 %v5510, %v6010
  %v6012 = vpop.f32.mrb[0].mxu0
  %v6013 = vadd.f32 %v5514, %v6012
  %6014 = vdwg.mxu0
  %6015 = vmatprep.subr.mxu0 %v5412
  %6016 = vmatpush1.msra.mxu0 %v5411
  %6017 = vmatprep.subr.mxu0 %v5428
  %6018 = vmatpush1.msra.mxu0 %v5427
  %6019 = vmatprep.subr.mxu0 %v5444
  %6020 = vmatpush1.msra.mxu0 %v5443
  %6021 = vmatprep.subr.mxu0 %v5460
  %6022 = vmatpush1.msra.mxu0 %v5459
  %6023 = vmatprep.subr.mxu0 0.0
  %6024 = vmatpush1.msra.mxu0 0.0
  %6025 = vmatprep.subr.mxu0 0.0
  %6026 = vmatpush1.msra.mxu0 0.0
  %6027 = vmatprep.subr.mxu0 0.0
  %6028 = vmatpush1.msra.mxu0 0.0
  %6029 = vmatprep.subr.mxu0 0.0
  %6030 = vmatpush1.msra.mxu0 0.0
  %6031 = vmatprep.subr.mxu0 0.0
  %6032 = vmatpush1.msra.mxu0 0.0
  %6033 = vmatprep.subr.mxu0 0.0
  %6034 = vmatpush1.msra.mxu0 0.0
  %6035 = vmatprep.subr.mxu0 0.0
  %6036 = vmatpush1.msra.mxu0 0.0
  %6037 = vmatprep.subr.mxu0 0.0
  %6038 = vmatpush1.msra.mxu0 0.0
  %6039 = vmatprep.subr.mxu0 0.0
  %6040 = vmatpush1.msra.mxu0 0.0
  %6041 = vmatprep.subr.mxu0 0.0
  %6042 = vmatpush1.msra.mxu0 0.0
  %6043 = vmatprep.subr.mxu0 0.0
  %6044 = vmatpush1.msra.mxu0 0.0
  %6045 = vmatprep.subr.mxu0 0.0
  %6046 = vmatpush1.msra.mxu0 0.0
  %6047 = vmatprep.subr.mxu0 0.0
  %6048 = vmatpush1.msra.mxu0 0.0
  %6049 = vmatprep.subr.mxu0 0.0
  %6050 = vmatpush1.msra.mxu0 0.0
  %6051 = vmatprep.subr.mxu0 0.0
  %6052 = vmatpush1.msra.mxu0 0.0
  %6053 = vmatprep.subr.mxu0 0.0
  %6054 = vmatpush1.msra.mxu0 0.0
  %6055 = vmatprep.subr.mxu0 0.0
  %6056 = vmatpush1.msra.mxu0 0.0
  %6057 = vmatprep.subr.mxu0 0.0
  %6058 = vmatpush1.msra.mxu0 0.0
  %6059 = vmatprep.subr.mxu0 0.0
  %6060 = vmatpush1.msra.mxu0 0.0
  %6061 = vmatprep.subr.mxu0 0.0
  %6062 = vmatpush1.msra.mxu0 0.0
  %6063 = vmatprep.subr.mxu0 0.0
  %6064 = vmatpush1.msra.mxu0 0.0
  %6065 = vmatprep.subr.mxu0 0.0
  %6066 = vmatpush1.msra.mxu0 0.0
  %6067 = vmatprep.subr.mxu0 0.0
  %6068 = vmatpush1.msra.mxu0 0.0
  %6069 = vmatprep.subr.mxu0 0.0
  %6070 = vmatpush1.msra.mxu0 0.0
  %6071 = vmatprep.subr.mxu0 0.0
  %6072 = vmatpush1.msra.mxu0 0.0
  %6073 = vmatprep.subr.mxu0 0.0
  %6074 = vmatpush1.msra.mxu0 0.0
  %6075 = vmatprep.subr.mxu0 0.0
  %6076 = vmatpush1.msra.mxu0 0.0
  %6077 = vmatprep.subr.mxu0 0.0
  %6078 = vmatpush1.msra.mxu0 0.0
  %6079 = vmatprep.mubr.f32.mxu0 0.0
  %6080 = vmatmul.mubr.f32.gmra.mrb[0].mxu0 %v5548
  %v6081 = vpop.f32.mrb[0].mxu0
  %v6082 = vadd.f32 %v5518, %v6081
  %v6083 = vpop.f32.mrb[0].mxu0
  %v6084 = vadd.f32 %v5522, %v6083
  %6085 = vmatprep.mubr.f32.mxu0 0.0
  %6086 = vmatmul.mubr.f32.gmra.mrb[0].mxu0 %v5551
  %v6087 = vpop.f32.mrb[0].mxu0
  %v6088 = vadd.f32 %v5518, %v6087
  %v6089 = vpop.f32.mrb[0].mxu0
  %v6090 = vadd.f32 %v5522, %v6089
  %6091 = vdwg.mxu0
  %6092 = vmatprep.subr.mxu0 %v5414
  %6093 = vmatpush1.msra.mxu0 %v5413
  %6094 = vmatprep.subr.mxu0 %v5430
  %6095 = vmatpush1.msra.mxu0 %v5429
  %6096 = vmatprep.subr.mxu0 %v5446
  %6097 = vmatpush1.msra.mxu0 %v5445
  %6098 = vmatprep.subr.mxu0 %v5462
  %6099 = vmatpush1.msra.mxu0 %v5461
  %6100 = vmatprep.subr.mxu0 0.0
  %6101 = vmatpush1.msra.mxu0 0.0
  %6102 = vmatprep.subr.mxu0 0.0
  %6103 = vmatpush1.msra.mxu0 0.0
  %6104 = vmatprep.subr.mxu0 0.0
  %6105 = vmatpush1.msra.mxu0 0.0
  %6106 = vmatprep.subr.mxu0 0.0
  %6107 = vmatpush1.msra.mxu0 0.0
  %6108 = vmatprep.subr.mxu0 0.0
  %6109 = vmatpush1.msra.mxu0 0.0
  %6110 = vmatprep.subr.mxu0 0.0
  %6111 = vmatpush1.msra.mxu0 0.0
  %6112 = vmatprep.subr.mxu0 0.0
  %6113 = vmatpush1.msra.mxu0 0.0
  %6114 = vmatprep.subr.mxu0 0.0
  %6115 = vmatpush1.msra.mxu0 0.0
  %6116 = vmatprep.subr.mxu0 0.0
  %6117 = vmatpush1.msra.mxu0 0.0
  %6118 = vmatprep.subr.mxu0 0.0
  %6119 = vmatpush1.msra.mxu0 0.0
  %6120 = vmatprep.subr.mxu0 0.0
  %6121 = vmatpush1.msra.mxu0 0.0
  %6122 = vmatprep.subr.mxu0 0.0
  %6123 = vmatpush1.msra.mxu0 0.0
  %6124 = vmatprep.subr.mxu0 0.0
  %6125 = vmatpush1.msra.mxu0 0.0
  %6126 = vmatprep.subr.mxu0 0.0
  %6127 = vmatpush1.msra.mxu0 0.0
  %6128 = vmatprep.subr.mxu0 0.0
  %6129 = vmatpush1.msra.mxu0 0.0
  %6130 = vmatprep.subr.mxu0 0.0
  %6131 = vmatpush1.msra.mxu0 0.0
  %6132 = vmatprep.subr.mxu0 0.0
  %6133 = vmatpush1.msra.mxu0 0.0
  %6134 = vmatprep.subr.mxu0 0.0
  %6135 = vmatpush1.msra.mxu0 0.0
  %6136 = vmatprep.subr.mxu0 0.0
  %6137 = vmatpush1.msra.mxu0 0.0
  %6138 = vmatprep.subr.mxu0 0.0
  %6139 = vmatpush1.msra.mxu0 0.0
  %6140 = vmatprep.subr.mxu0 0.0
  %6141 = vmatpush1.msra.mxu0 0.0
  %6142 = vmatprep.subr.mxu0 0.0
  %6143 = vmatpush1.msra.mxu0 0.0
  %6144 = vmatprep.subr.mxu0 0.0
  %6145 = vmatpush1.msra.mxu0 0.0
  %6146 = vmatprep.subr.mxu0 0.0
  %6147 = vmatpush1.msra.mxu0 0.0
  %6148 = vmatprep.subr.mxu0 0.0
  %6149 = vmatpush1.msra.mxu0 0.0
  %6150 = vmatprep.subr.mxu0 0.0
  %6151 = vmatpush1.msra.mxu0 0.0
  %6152 = vmatprep.subr.mxu0 0.0
  %6153 = vmatpush1.msra.mxu0 0.0
  %6154 = vmatprep.subr.mxu0 0.0
  %6155 = vmatpush1.msra.mxu0 0.0
  %6156 = vmatprep.mubr.f32.mxu0 0.0
  %6157 = vmatmul.mubr.f32.gmra.mrb[0].mxu0 %v5548
  %v6158 = vpop.f32.mrb[0].mxu0
  %v6159 = vadd.f32 %v5526, %v6158
  %v6160 = vpop.f32.mrb[0].mxu0
  %v6161 = vadd.f32 %v5530, %v6160
  %6162 = vmatprep.mubr.f32.mxu0 0.0
  %6163 = vmatmul.mubr.f32.gmra.mrb[0].mxu0 %v5551
  %v6164 = vpop.f32.mrb[0].mxu0
  %v6165 = vadd.f32 %v5526, %v6164
  %v6166 = vpop.f32.mrb[0].mxu0
  %v6167 = vadd.f32 %v5530, %v6166
  %6168 = vdwg.mxu0
  %v6169 = vmax.f32 %v5620, 0.0
  %v6170 = vmax.f32 %v5622, 0.0
  %v6171 = vmax.f32 %v5697, 0.0
  %v6172 = vmax.f32 %v5699, 0.0
  %v6173 = vmax.f32 %v5774, 0.0
  %v6174 = vmax.f32 %v5776, 0.0
  %v6175 = vmax.f32 %v5851, 0.0
  %v6176 = vmax.f32 %v5853, 0.0
  %v6177 = vmax.f32 %v5928, 0.0
  %v6178 = vmax.f32 %v5930, 0.0
  %v6179 = vmax.f32 %v6005, 0.0
  %v6180 = vmax.f32 %v6007, 0.0
  %v6181 = vmax.f32 %v6082, 0.0
  %v6182 = vmax.f32 %v6084, 0.0
  %v6183 = vmax.f32 %v6159, 0.0
  %v6184 = vmax.f32 %v6161, 0.0
  %v6185 = vmax.f32 %v5626, 0.0
  %v6186 = vmax.f32 %v5628, 0.0
  %v6187 = vmax.f32 %v5703, 0.0
  %v6188 = vmax.f32 %v5705, 0.0
  %v6189 = vmax.f32 %v5780, 0.0
  %v6190 = vmax.f32 %v5782, 0.0
  %v6191 = vmax.f32 %v5857, 0.0
  %v6192 = vmax.f32 %v5859, 0.0
  %v6193 = vmax.f32 %v5934, 0.0
  %v6194 = vmax.f32 %v5936, 0.0
  %v6195 = vmax.f32 %v6011, 0.0
  %v6196 = vmax.f32 %v6013, 0.0
  %v6197 = vmax.f32 %v6088, 0.0
  %v6198 = vmax.f32 %v6090, 0.0
  %v6199 = vmax.f32 %v6165, 0.0
  %v6200 = vmax.f32 %v6167, 0.0
  %v6201 = vld [vmem:[%s65] sm:$0xff]
  %v6202 = vld [vmem:[%s65 + $0x8] sm:$0xff]
  %v6203 = vld [vmem:[%s65 + $0x10] sm:$0xff]
  %v6204 = vld [vmem:[%s65 + $0x18] sm:$0xff]
  %v6205 = vld [vmem:[%s65 + $0x20] sm:$0xff]
  %v6206 = vld [vmem:[%s65 + $0x28] sm:$0xff]
  %v6207 = vld [vmem:[%s65 + $0x30] sm:$0xff]
  %v6208 = vld [vmem:[%s65 + $0x38] sm:$0xff]
  %v6209 = vld [vmem:[%s65 + $0x40] sm:$0xff]
  %v6210 = vld [vmem:[%s65 + $0x48] sm:$0xff]
  %v6211 = vld [vmem:[%s65 + $0x50] sm:$0xff]
  %v6212 = vld [vmem:[%s65 + $0x58] sm:$0xff]
  %v6213 = vld [vmem:[%s65 + $0x60] sm:$0xff]
  %v6214 = vld [vmem:[%s65 + $0x68] sm:$0xff]
  %v6215 = vld [vmem:[%s65 + $0x70] sm:$0xff]
  %v6216 = vld [vmem:[%s65 + $0x78] sm:$0xff]
  %v6217 = vld [vmem:[%s65 + $0x80] sm:$0xff]
  %v6218 = vld [vmem:[%s65 + $0x88] sm:$0xff]
  %v6219 = vld [vmem:[%s65 + $0x90] sm:$0xff]
  %v6220 = vld [vmem:[%s65 + $0x98] sm:$0xff]
  %v6221 = vld [vmem:[%s65 + $0xa0] sm:$0xff]
  %v6222 = vld [vmem:[%s65 + $0xa8] sm:$0xff]
  %v6223 = vld [vmem:[%s65 + $0xb0] sm:$0xff]
  %v6224 = vld [vmem:[%s65 + $0xb8] sm:$0xff]
  %v6225 = vld [vmem:[%s65 + $0xc0] sm:$0xff]
  %v6226 = vld [vmem:[%s65 + $0xc8] sm:$0xff]
  %v6227 = vld [vmem:[%s65 + $0xd0] sm:$0xff]
  %v6228 = vld [vmem:[%s65 + $0xd8] sm:$0xff]
  %v6229 = vld [vmem:[%s65 + $0xe0] sm:$0xff]
  %v6230 = vld [vmem:[%s65 + $0xe8] sm:$0xff]
  %v6231 = vld [vmem:[%s65 + $0xf0] sm:$0xff]
  %v6232 = vld [vmem:[%s65 + $0xf8] sm:$0xff]
  %v6233 = vld [vmem:[%s65 + $0x100] sm:$0xff]
  %v6234 = vld [vmem:[%s65 + $0x108] sm:$0xff]
  %v6235 = vld [vmem:[%s65 + $0x110] sm:$0xff]
  %v6236 = vld [vmem:[%s65 + $0x118] sm:$0xff]
  %v6237 = vld [vmem:[%s65 + $0x120] sm:$0xff]
  %v6238 = vld [vmem:[%s65 + $0x128] sm:$0xff]
  %v6239 = vld [vmem:[%s65 + $0x130] sm:$0xff]
  %v6240 = vld [vmem:[%s65 + $0x138] sm:$0xff]
  %v6241 = vld [vmem:[%s65 + $0x140] sm:$0xff]
  %v6242 = vld [vmem:[%s65 + $0x148] sm:$0xff]
  %v6243 = vld [vmem:[%s65 + $0x150] sm:$0xff]
  %v6244 = vld [vmem:[%s65 + $0x158] sm:$0xff]
  %v6245 = vld [vmem:[%s65 + $0x160] sm:$0xff]
  %v6246 = vld [vmem:[%s65 + $0x168] sm:$0xff]
  %v6247 = vld [vmem:[%s65 + $0x170] sm:$0xff]
  %v6248 = vld [vmem:[%s65 + $0x178] sm:$0xff]
  %v6249 = vld [vmem:[%s65 + $0x180] sm:$0xff]
  %v6250 = vld [vmem:[%s65 + $0x188] sm:$0xff]
  %v6251 = vld [vmem:[%s65 + $0x190] sm:$0xff]
  %v6252 = vld [vmem:[%s65 + $0x198] sm:$0xff]
  %v6253 = vld [vmem:[%s65 + $0x1a0] sm:$0xff]
  %v6254 = vld [vmem:[%s65 + $0x1a8] sm:$0xff]
  %v6255 = vld [vmem:[%s65 + $0x1b0] sm:$0xff]
  %v6256 = vld [vmem:[%s65 + $0x1b8] sm:$0xff]
  %v6257 = vld [vmem:[%s65 + $0x1c0] sm:$0xff]
  %v6258 = vld [vmem:[%s65 + $0x1c8] sm:$0xff]
  %v6259 = vld [vmem:[%s65 + $0x1d0] sm:$0xff]
  %v6260 = vld [vmem:[%s65 + $0x1d8] sm:$0xff]
  %v6261 = vld [vmem:[%s65 + $0x1e0] sm:$0xff]
  %v6262 = vld [vmem:[%s65 + $0x1e8] sm:$0xff]
  %v6263 = vld [vmem:[%s65 + $0x1f0] sm:$0xff]
  %v6264 = vld [vmem:[%s65 + $0x1f8] sm:$0xff]
  %v6265 = vld [vmem:[%s65 + $0x200] sm:$0xff]
  %v6266 = vld [vmem:[%s65 + $0x208] sm:$0xff]
  %v6267 = vld [vmem:[%s65 + $0x210] sm:$0xff]
  %v6268 = vld [vmem:[%s65 + $0x218] sm:$0xff]
  %v6269 = vld [vmem:[%s65 + $0x220] sm:$0xff]
  %v6270 = vld [vmem:[%s65 + $0x228] sm:$0xff]
  %v6271 = vld [vmem:[%s65 + $0x230] sm:$0xff]
  %v6272 = vld [vmem:[%s65 + $0x238] sm:$0xff]
  %v6273 = vld [vmem:[%s65 + $0x240] sm:$0xff]
  %v6274 = vld [vmem:[%s65 + $0x248] sm:$0xff]
  %v6275 = vld [vmem:[%s65 + $0x250] sm:$0xff]
  %v6276 = vld [vmem:[%s65 + $0x258] sm:$0xff]
  %v6277 = vld [vmem:[%s65 + $0x260] sm:$0xff]
  %v6278 = vld [vmem:[%s65 + $0x268] sm:$0xff]
  %v6279 = vld [vmem:[%s65 + $0x270] sm:$0xff]
  %v6280 = vld [vmem:[%s65 + $0x278] sm:$0xff]
  %v6281 = vld [vmem:[%s65 + $0x280] sm:$0xff]
  %v6282 = vld [vmem:[%s65 + $0x288] sm:$0xff]
  %v6283 = vld [vmem:[%s65 + $0x290] sm:$0xff]
  %v6284 = vld [vmem:[%s65 + $0x298] sm:$0xff]
  %v6285 = vld [vmem:[%s65 + $0x2a0] sm:$0xff]
  %v6286 = vld [vmem:[%s65 + $0x2a8] sm:$0xff]
  %v6287 = vld [vmem:[%s65 + $0x2b0] sm:$0xff]
  %v6288 = vld [vmem:[%s65 + $0x2b8] sm:$0xff]
  %v6289 = vld [vmem:[%s65 + $0x2c0] sm:$0xff]
  %v6290 = vld [vmem:[%s65 + $0x2c8] sm:$0xff]
  %v6291 = vld [vmem:[%s65 + $0x2d0] sm:$0xff]
  %v6292 = vld [vmem:[%s65 + $0x2d8] sm:$0xff]
  %v6293 = vld [vmem:[%s65 + $0x2e0] sm:$0xff]
  %v6294 = vld [vmem:[%s65 + $0x2e8] sm:$0xff]
  %v6295 = vld [vmem:[%s65 + $0x2f0] sm:$0xff]
  %v6296 = vld [vmem:[%s65 + $0x2f8] sm:$0xff]
  %v6297 = vld [vmem:[%s65 + $0x300] sm:$0xff]
  %v6298 = vld [vmem:[%s65 + $0x308] sm:$0xff]
  %v6299 = vld [vmem:[%s65 + $0x310] sm:$0xff]
  %v6300 = vld [vmem:[%s65 + $0x318] sm:$0xff]
  %v6301 = vld [vmem:[%s65 + $0x320] sm:$0xff]
  %v6302 = vld [vmem:[%s65 + $0x328] sm:$0xff]
  %v6303 = vld [vmem:[%s65 + $0x330] sm:$0xff]
  %v6304 = vld [vmem:[%s65 + $0x338] sm:$0xff]
  %v6305 = vld [vmem:[%s65 + $0x340] sm:$0xff]
  %v6306 = vld [vmem:[%s65 + $0x348] sm:$0xff]
  %v6307 = vld [vmem:[%s65 + $0x350] sm:$0xff]
  %v6308 = vld [vmem:[%s65 + $0x358] sm:$0xff]
  %v6309 = vld [vmem:[%s65 + $0x360] sm:$0xff]
  %v6310 = vld [vmem:[%s65 + $0x368] sm:$0xff]
  %v6311 = vld [vmem:[%s65 + $0x370] sm:$0xff]
  %v6312 = vld [vmem:[%s65 + $0x378] sm:$0xff]
  %v6313 = vld [vmem:[%s65 + $0x380] sm:$0xff]
  %v6314 = vld [vmem:[%s65 + $0x388] sm:$0xff]
  %v6315 = vld [vmem:[%s65 + $0x390] sm:$0xff]
  %v6316 = vld [vmem:[%s65 + $0x398] sm:$0xff]
  %v6317 = vld [vmem:[%s65 + $0x3a0] sm:$0xff]
  %v6318 = vld [vmem:[%s65 + $0x3a8] sm:$0xff]
  %v6319 = vld [vmem:[%s65 + $0x3b0] sm:$0xff]
  %v6320 = vld [vmem:[%s65 + $0x3b8] sm:$0xff]
  %v6321 = vld [vmem:[%s65 + $0x3c0] sm:$0xff]
  %v6322 = vld [vmem:[%s65 + $0x3c8] sm:$0xff]
  %v6323 = vld [vmem:[%s65 + $0x3d0] sm:$0xff]
  %v6324 = vld [vmem:[%s65 + $0x3d8] sm:$0xff]
  %v6325 = vld [vmem:[%s65 + $0x3e0] sm:$0xff]
  %v6326 = vld [vmem:[%s65 + $0x3e8] sm:$0xff]
  %v6327 = vld [vmem:[%s65 + $0x3f0] sm:$0xff]
  %v6328 = vld [vmem:[%s65 + $0x3f8] sm:$0xff]
  %v6329 = vld [vmem:[%s65 + $0x400] sm:$0xff]
  %v6330 = vld [vmem:[%s65 + $0x408] sm:$0xff]
  %v6331 = vld [vmem:[%s65 + $0x410] sm:$0xff]
  %v6332 = vld [vmem:[%s65 + $0x418] sm:$0xff]
  %v6333 = vld [vmem:[%s65 + $0x420] sm:$0xff]
  %v6334 = vld [vmem:[%s65 + $0x428] sm:$0xff]
  %v6335 = vld [vmem:[%s65 + $0x430] sm:$0xff]
  %v6336 = vld [vmem:[%s65 + $0x438] sm:$0xff]
  %v6337 = vld [vmem:[%s65 + $0x440] sm:$0xff]
  %v6338 = vld [vmem:[%s65 + $0x448] sm:$0xff]
  %v6339 = vld [vmem:[%s65 + $0x450] sm:$0xff]
  %v6340 = vld [vmem:[%s65 + $0x458] sm:$0xff]
  %v6341 = vld [vmem:[%s65 + $0x460] sm:$0xff]
  %v6342 = vld [vmem:[%s65 + $0x468] sm:$0xff]
  %v6343 = vld [vmem:[%s65 + $0x470] sm:$0xff]
  %v6344 = vld [vmem:[%s65 + $0x478] sm:$0xff]
  %v6345 = vld [vmem:[%s65 + $0x480] sm:$0xff]
  %v6346 = vld [vmem:[%s65 + $0x488] sm:$0xff]
  %v6347 = vld [vmem:[%s65 + $0x490] sm:$0xff]
  %v6348 = vld [vmem:[%s65 + $0x498] sm:$0xff]
  %v6349 = vld [vmem:[%s65 + $0x4a0] sm:$0xff]
  %v6350 = vld [vmem:[%s65 + $0x4a8] sm:$0xff]
  %v6351 = vld [vmem:[%s65 + $0x4b0] sm:$0xff]
  %v6352 = vld [vmem:[%s65 + $0x4b8] sm:$0xff]
  %v6353 = vld [vmem:[%s65 + $0x4c0] sm:$0xff]
  %v6354 = vld [vmem:[%s65 + $0x4c8] sm:$0xff]
  %v6355 = vld [vmem:[%s65 + $0x4d0] sm:$0xff]
  %v6356 = vld [vmem:[%s65 + $0x4d8] sm:$0xff]
  %v6357 = vld [vmem:[%s65 + $0x4e0] sm:$0xff]
  %v6358 = vld [vmem:[%s65 + $0x4e8] sm:$0xff]
  %v6359 = vld [vmem:[%s65 + $0x4f0] sm:$0xff]
  %v6360 = vld [vmem:[%s65 + $0x4f8] sm:$0xff]
  %v6361 = vld [vmem:[%s65 + $0x500] sm:$0xff]
  %v6362 = vld [vmem:[%s65 + $0x508] sm:$0xff]
  %v6363 = vld [vmem:[%s65 + $0x510] sm:$0xff]
  %v6364 = vld [vmem:[%s65 + $0x518] sm:$0xff]
  %v6365 = vld [vmem:[%s65 + $0x520] sm:$0xff]
  %v6366 = vld [vmem:[%s65 + $0x528] sm:$0xff]
  %v6367 = vld [vmem:[%s65 + $0x530] sm:$0xff]
  %v6368 = vld [vmem:[%s65 + $0x538] sm:$0xff]
  %v6369 = vld [vmem:[%s65 + $0x540] sm:$0xff]
  %v6370 = vld [vmem:[%s65 + $0x548] sm:$0xff]
  %v6371 = vld [vmem:[%s65 + $0x550] sm:$0xff]
  %v6372 = vld [vmem:[%s65 + $0x558] sm:$0xff]
  %v6373 = vld [vmem:[%s65 + $0x560] sm:$0xff]
  %v6374 = vld [vmem:[%s65 + $0x568] sm:$0xff]
  %v6375 = vld [vmem:[%s65 + $0x570] sm:$0xff]
  %v6376 = vld [vmem:[%s65 + $0x578] sm:$0xff]
  %v6377 = vld [vmem:[%s65 + $0x580] sm:$0xff]
  %v6378 = vld [vmem:[%s65 + $0x588] sm:$0xff]
  %v6379 = vld [vmem:[%s65 + $0x590] sm:$0xff]
  %v6380 = vld [vmem:[%s65 + $0x598] sm:$0xff]
  %v6381 = vld [vmem:[%s65 + $0x5a0] sm:$0xff]
  %v6382 = vld [vmem:[%s65 + $0x5a8] sm:$0xff]
  %v6383 = vld [vmem:[%s65 + $0x5b0] sm:$0xff]
  %v6384 = vld [vmem:[%s65 + $0x5b8] sm:$0xff]
  %v6385 = vld [vmem:[%s65 + $0x5c0] sm:$0xff]
  %v6386 = vld [vmem:[%s65 + $0x5c8] sm:$0xff]
  %v6387 = vld [vmem:[%s65 + $0x5d0] sm:$0xff]
  %v6388 = vld [vmem:[%s65 + $0x5d8] sm:$0xff]
  %v6389 = vld [vmem:[%s65 + $0x5e0] sm:$0xff]
  %v6390 = vld [vmem:[%s65 + $0x5e8] sm:$0xff]
  %v6391 = vld [vmem:[%s65 + $0x5f0] sm:$0xff]
  %v6392 = vld [vmem:[%s65 + $0x5f8] sm:$0xff]
  %v6393 = vld [vmem:[%s65 + $0x600] sm:$0xff]
  %v6394 = vld [vmem:[%s65 + $0x608] sm:$0xff]
  %v6395 = vld [vmem:[%s65 + $0x610] sm:$0xff]
  %v6396 = vld [vmem:[%s65 + $0x618] sm:$0xff]
  %v6397 = vld [vmem:[%s65 + $0x620] sm:$0xff]
  %v6398 = vld [vmem:[%s65 + $0x628] sm:$0xff]
  %v6399 = vld [vmem:[%s65 + $0x630] sm:$0xff]
  %v6400 = vld [vmem:[%s65 + $0x638] sm:$0xff]
  %v6401 = vld [vmem:[%s65 + $0x640] sm:$0xff]
  %v6402 = vld [vmem:[%s65 + $0x648] sm:$0xff]
  %v6403 = vld [vmem:[%s65 + $0x650] sm:$0xff]
  %v6404 = vld [vmem:[%s65 + $0x658] sm:$0xff]
  %v6405 = vld [vmem:[%s65 + $0x660] sm:$0xff]
  %v6406 = vld [vmem:[%s65 + $0x668] sm:$0xff]
  %v6407 = vld [vmem:[%s65 + $0x670] sm:$0xff]
  %v6408 = vld [vmem:[%s65 + $0x678] sm:$0xff]
  %v6409 = vld [vmem:[%s65 + $0x680] sm:$0xff]
  %v6410 = vld [vmem:[%s65 + $0x688] sm:$0xff]
  %v6411 = vld [vmem:[%s65 + $0x690] sm:$0xff]
  %v6412 = vld [vmem:[%s65 + $0x698] sm:$0xff]
  %v6413 = vld [vmem:[%s65 + $0x6a0] sm:$0xff]
  %v6414 = vld [vmem:[%s65 + $0x6a8] sm:$0xff]
  %v6415 = vld [vmem:[%s65 + $0x6b0] sm:$0xff]
  %v6416 = vld [vmem:[%s65 + $0x6b8] sm:$0xff]
  %v6417 = vld [vmem:[%s65 + $0x6c0] sm:$0xff]
  %v6418 = vld [vmem:[%s65 + $0x6c8] sm:$0xff]
  %v6419 = vld [vmem:[%s65 + $0x6d0] sm:$0xff]
  %v6420 = vld [vmem:[%s65 + $0x6d8] sm:$0xff]
  %v6421 = vld [vmem:[%s65 + $0x6e0] sm:$0xff]
  %v6422 = vld [vmem:[%s65 + $0x6e8] sm:$0xff]
  %v6423 = vld [vmem:[%s65 + $0x6f0] sm:$0xff]
  %v6424 = vld [vmem:[%s65 + $0x6f8] sm:$0xff]
  %v6425 = vld [vmem:[%s65 + $0x700] sm:$0xff]
  %v6426 = vld [vmem:[%s65 + $0x708] sm:$0xff]
  %v6427 = vld [vmem:[%s65 + $0x710] sm:$0xff]
  %v6428 = vld [vmem:[%s65 + $0x718] sm:$0xff]
  %v6429 = vld [vmem:[%s65 + $0x720] sm:$0xff]
  %v6430 = vld [vmem:[%s65 + $0x728] sm:$0xff]
  %v6431 = vld [vmem:[%s65 + $0x730] sm:$0xff]
  %v6432 = vld [vmem:[%s65 + $0x738] sm:$0xff]
  %v6433 = vld [vmem:[%s65 + $0x740] sm:$0xff]
  %v6434 = vld [vmem:[%s65 + $0x748] sm:$0xff]
  %v6435 = vld [vmem:[%s65 + $0x750] sm:$0xff]
  %v6436 = vld [vmem:[%s65 + $0x758] sm:$0xff]
  %v6437 = vld [vmem:[%s65 + $0x760] sm:$0xff]
  %v6438 = vld [vmem:[%s65 + $0x768] sm:$0xff]
  %v6439 = vld [vmem:[%s65 + $0x770] sm:$0xff]
  %v6440 = vld [vmem:[%s65 + $0x778] sm:$0xff]
  %v6441 = vld [vmem:[%s65 + $0x780] sm:$0xff]
  %v6442 = vld [vmem:[%s65 + $0x788] sm:$0xff]
  %v6443 = vld [vmem:[%s65 + $0x790] sm:$0xff]
  %v6444 = vld [vmem:[%s65 + $0x798] sm:$0xff]
  %v6445 = vld [vmem:[%s65 + $0x7a0] sm:$0xff]
  %v6446 = vld [vmem:[%s65 + $0x7a8] sm:$0xff]
  %v6447 = vld [vmem:[%s65 + $0x7b0] sm:$0xff]
  %v6448 = vld [vmem:[%s65 + $0x7b8] sm:$0xff]
  %v6449 = vld [vmem:[%s65 + $0x7c0] sm:$0xff]
  %v6450 = vld [vmem:[%s65 + $0x7c8] sm:$0xff]
  %v6451 = vld [vmem:[%s65 + $0x7d0] sm:$0xff]
  %v6452 = vld [vmem:[%s65 + $0x7d8] sm:$0xff]
  %v6453 = vld [vmem:[%s65 + $0x7e0] sm:$0xff]
  %v6454 = vld [vmem:[%s65 + $0x7e8] sm:$0xff]
  %v6455 = vld [vmem:[%s65 + $0x7f0] sm:$0xff]
  %v6456 = vld [vmem:[%s65 + $0x7f8] sm:$0xff]
  %v6457 = vld [vmem:[%s67] sm:$0x1]
  %v6459 = vlaneseq
  %v6460 = vshrl.u32 %v6459, 7
  %v6461 = vsub.s32 0, %v6460
  %v6462 = vrot.slane %v6457, %v6461
  %6464 = vmatprep.subr.mxu0 0.0
  %6465 = vmatpush1.msra.mxu0 %v6201
  %6466 = vmatprep.subr.mxu0 0.0
  %6467 = vmatpush1.msra.mxu0 %v6202
  %6468 = vmatprep.subr.mxu0 0.0
  %6469 = vmatpush1.msra.mxu0 %v6203
  %6470 = vmatprep.subr.mxu0 0.0
  %6471 = vmatpush1.msra.mxu0 %v6204
  %6472 = vmatprep.subr.mxu0 0.0
  %6473 = vmatpush1.msra.mxu0 %v6205
  %6474 = vmatprep.subr.mxu0 0.0
  %6475 = vmatpush1.msra.mxu0 %v6206
  %6476 = vmatprep.subr.mxu0 0.0
  %6477 = vmatpush1.msra.mxu0 %v6207
  %6478 = vmatprep.subr.mxu0 0.0
  %6479 = vmatpush1.msra.mxu0 %v6208
  %6480 = vmatprep.subr.mxu0 0.0
  %6481 = vmatpush1.msra.mxu0 %v6209
  %6482 = vmatprep.subr.mxu0 0.0
  %6483 = vmatpush1.msra.mxu0 %v6210
  %6484 = vmatprep.subr.mxu0 0.0
  %6485 = vmatpush1.msra.mxu0 %v6211
  %6486 = vmatprep.subr.mxu0 0.0
  %6487 = vmatpush1.msra.mxu0 %v6212
  %6488 = vmatprep.subr.mxu0 0.0
  %6489 = vmatpush1.msra.mxu0 %v6213
  %6490 = vmatprep.subr.mxu0 0.0
  %6491 = vmatpush1.msra.mxu0 %v6214
  %6492 = vmatprep.subr.mxu0 0.0
  %6493 = vmatpush1.msra.mxu0 %v6215
  %6494 = vmatprep.subr.mxu0 0.0
  %6495 = vmatpush1.msra.mxu0 %v6216
  %6496 = vmatprep.subr.mxu0 0.0
  %6497 = vmatpush1.msra.mxu0 %v6217
  %6498 = vmatprep.subr.mxu0 0.0
  %6499 = vmatpush1.msra.mxu0 %v6218
  %6500 = vmatprep.subr.mxu0 0.0
  %6501 = vmatpush1.msra.mxu0 %v6219
  %6502 = vmatprep.subr.mxu0 0.0
  %6503 = vmatpush1.msra.mxu0 %v6220
  %6504 = vmatprep.subr.mxu0 0.0
  %6505 = vmatpush1.msra.mxu0 %v6221
  %6506 = vmatprep.subr.mxu0 0.0
  %6507 = vmatpush1.msra.mxu0 %v6222
  %6508 = vmatprep.subr.mxu0 0.0
  %6509 = vmatpush1.msra.mxu0 %v6223
  %6510 = vmatprep.subr.mxu0 0.0
  %6511 = vmatpush1.msra.mxu0 %v6224
  %6512 = vmatprep.subr.mxu0 0.0
  %6513 = vmatpush1.msra.mxu0 %v6225
  %6514 = vmatprep.subr.mxu0 0.0
  %6515 = vmatpush1.msra.mxu0 %v6226
  %6516 = vmatprep.subr.mxu0 0.0
  %6517 = vmatpush1.msra.mxu0 %v6227
  %6518 = vmatprep.subr.mxu0 0.0
  %6519 = vmatpush1.msra.mxu0 %v6228
  %6520 = vmatprep.subr.mxu0 0.0
  %6521 = vmatpush1.msra.mxu0 %v6229
  %6522 = vmatprep.subr.mxu0 0.0
  %6523 = vmatpush1.msra.mxu0 %v6230
  %6524 = vmatprep.subr.mxu0 0.0
  %6525 = vmatpush1.msra.mxu0 %v6231
  %6526 = vmatprep.subr.mxu0 0.0
  %6527 = vmatpush1.msra.mxu0 %v6232
  %6528 = vmatprep.mubr.f32.mxu0 %v6170
  %6529 = vmatmul.mubr.f32.gmra.mrb[0].mxu0 %v6169
  %v6530 = vpop.f32.mrb[0].mxu0
  %v6531 = vadd.f32 %v6462, %v6530
  %v6532 = vpop.f32.mrb[0].mxu0
  %6533 = vmatprep.mubr.f32.mxu0 %v6186
  %6534 = vmatmul.mubr.f32.gmra.mrb[0].mxu0 %v6185
  %v6535 = vpop.f32.mrb[0].mxu0
  %v6536 = vadd.f32 %v6462, %v6535
  %v6537 = vpop.f32.mrb[0].mxu0
  %6538 = vdwg.mxu0
  %6539 = vmatprep.subr.mxu0 0.0
  %6540 = vmatpush1.msra.mxu0 %v6233
  %6541 = vmatprep.subr.mxu0 0.0
  %6542 = vmatpush1.msra.mxu0 %v6234
  %6543 = vmatprep.subr.mxu0 0.0
  %6544 = vmatpush1.msra.mxu0 %v6235
  %6545 = vmatprep.subr.mxu0 0.0
  %6546 = vmatpush1.msra.mxu0 %v6236
  %6547 = vmatprep.subr.mxu0 0.0
  %6548 = vmatpush1.msra.mxu0 %v6237
  %6549 = vmatprep.subr.mxu0 0.0
  %6550 = vmatpush1.msra.mxu0 %v6238
  %6551 = vmatprep.subr.mxu0 0.0
  %6552 = vmatpush1.msra.mxu0 %v6239
  %6553 = vmatprep.subr.mxu0 0.0
  %6554 = vmatpush1.msra.mxu0 %v6240
  %6555 = vmatprep.subr.mxu0 0.0
  %6556 = vmatpush1.msra.mxu0 %v6241
  %6557 = vmatprep.subr.mxu0 0.0
  %6558 = vmatpush1.msra.mxu0 %v6242
  %6559 = vmatprep.subr.mxu0 0.0
  %6560 = vmatpush1.msra.mxu0 %v6243
  %6561 = vmatprep.subr.mxu0 0.0
  %6562 = vmatpush1.msra.mxu0 %v6244
  %6563 = vmatprep.subr.mxu0 0.0
  %6564 = vmatpush1.msra.mxu0 %v6245
  %6565 = vmatprep.subr.mxu0 0.0
  %6566 = vmatpush1.msra.mxu0 %v6246
  %6567 = vmatprep.subr.mxu0 0.0
  %6568 = vmatpush1.msra.mxu0 %v6247
  %6569 = vmatprep.subr.mxu0 0.0
  %6570 = vmatpush1.msra.mxu0 %v6248
  %6571 = vmatprep.subr.mxu0 0.0
  %6572 = vmatpush1.msra.mxu0 %v6249
  %6573 = vmatprep.subr.mxu0 0.0
  %6574 = vmatpush1.msra.mxu0 %v6250
  %6575 = vmatprep.subr.mxu0 0.0
  %6576 = vmatpush1.msra.mxu0 %v6251
  %6577 = vmatprep.subr.mxu0 0.0
  %6578 = vmatpush1.msra.mxu0 %v6252
  %6579 = vmatprep.subr.mxu0 0.0
  %6580 = vmatpush1.msra.mxu0 %v6253
  %6581 = vmatprep.subr.mxu0 0.0
  %6582 = vmatpush1.msra.mxu0 %v6254
  %6583 = vmatprep.subr.mxu0 0.0
  %6584 = vmatpush1.msra.mxu0 %v6255
  %6585 = vmatprep.subr.mxu0 0.0
  %6586 = vmatpush1.msra.mxu0 %v6256
  %6587 = vmatprep.subr.mxu0 0.0
  %6588 = vmatpush1.msra.mxu0 %v6257
  %6589 = vmatprep.subr.mxu0 0.0
  %6590 = vmatpush1.msra.mxu0 %v6258
  %6591 = vmatprep.subr.mxu0 0.0
  %6592 = vmatpush1.msra.mxu0 %v6259
  %6593 = vmatprep.subr.mxu0 0.0
  %6594 = vmatpush1.msra.mxu0 %v6260
  %6595 = vmatprep.subr.mxu0 0.0
  %6596 = vmatpush1.msra.mxu0 %v6261
  %6597 = vmatprep.subr.mxu0 0.0
  %6598 = vmatpush1.msra.mxu0 %v6262
  %6599 = vmatprep.subr.mxu0 0.0
  %6600 = vmatpush1.msra.mxu0 %v6263
  %6601 = vmatprep.subr.mxu0 0.0
  %6602 = vmatpush1.msra.mxu0 %v6264
  %6603 = vmatprep.mubr.f32.mxu0 %v6172
  %6604 = vmatmul.mubr.f32.gmra.mrb[0].mxu0 %v6171
  %v6605 = vpop.f32.mrb[0].mxu0
  %v6606 = vadd.f32 %v6531, %v6605
  %v6607 = vpop.f32.mrb[0].mxu0
  %6608 = vmatprep.mubr.f32.mxu0 %v6188
  %6609 = vmatmul.mubr.f32.gmra.mrb[0].mxu0 %v6187
  %v6610 = vpop.f32.mrb[0].mxu0
  %v6611 = vadd.f32 %v6536, %v6610
  %v6612 = vpop.f32.mrb[0].mxu0
  %6613 = vdwg.mxu0
  %6614 = vmatprep.subr.mxu0 0.0
  %6615 = vmatpush1.msra.mxu0 %v6265
  %6616 = vmatprep.subr.mxu0 0.0
  %6617 = vmatpush1.msra.mxu0 %v6266
  %6618 = vmatprep.subr.mxu0 0.0
  %6619 = vmatpush1.msra.mxu0 %v6267
  %6620 = vmatprep.subr.mxu0 0.0
  %6621 = vmatpush1.msra.mxu0 %v6268
  %6622 = vmatprep.subr.mxu0 0.0
  %6623 = vmatpush1.msra.mxu0 %v6269
  %6624 = vmatprep.subr.mxu0 0.0
  %6625 = vmatpush1.msra.mxu0 %v6270
  %6626 = vmatprep.subr.mxu0 0.0
  %6627 = vmatpush1.msra.mxu0 %v6271
  %6628 = vmatprep.subr.mxu0 0.0
  %6629 = vmatpush1.msra.mxu0 %v6272
  %6630 = vmatprep.subr.mxu0 0.0
  %6631 = vmatpush1.msra.mxu0 %v6273
  %6632 = vmatprep.subr.mxu0 0.0
  %6633 = vmatpush1.msra.mxu0 %v6274
  %6634 = vmatprep.subr.mxu0 0.0
  %6635 = vmatpush1.msra.mxu0 %v6275
  %6636 = vmatprep.subr.mxu0 0.0
  %6637 = vmatpush1.msra.mxu0 %v6276
  %6638 = vmatprep.subr.mxu0 0.0
  %6639 = vmatpush1.msra.mxu0 %v6277
  %6640 = vmatprep.subr.mxu0 0.0
  %6641 = vmatpush1.msra.mxu0 %v6278
  %6642 = vmatprep.subr.mxu0 0.0
  %6643 = vmatpush1.msra.mxu0 %v6279
  %6644 = vmatprep.subr.mxu0 0.0
  %6645 = vmatpush1.msra.mxu0 %v6280
  %6646 = vmatprep.subr.mxu0 0.0
  %6647 = vmatpush1.msra.mxu0 %v6281
  %6648 = vmatprep.subr.mxu0 0.0
  %6649 = vmatpush1.msra.mxu0 %v6282
  %6650 = vmatprep.subr.mxu0 0.0
  %6651 = vmatpush1.msra.mxu0 %v6283
  %6652 = vmatprep.subr.mxu0 0.0
  %6653 = vmatpush1.msra.mxu0 %v6284
  %6654 = vmatprep.subr.mxu0 0.0
  %6655 = vmatpush1.msra.mxu0 %v6285
  %6656 = vmatprep.subr.mxu0 0.0
  %6657 = vmatpush1.msra.mxu0 %v6286
  %6658 = vmatprep.subr.mxu0 0.0
  %6659 = vmatpush1.msra.mxu0 %v6287
  %6660 = vmatprep.subr.mxu0 0.0
  %6661 = vmatpush1.msra.mxu0 %v6288
  %6662 = vmatprep.subr.mxu0 0.0
  %6663 = vmatpush1.msra.mxu0 %v6289
  %6664 = vmatprep.subr.mxu0 0.0
  %6665 = vmatpush1.msra.mxu0 %v6290
  %6666 = vmatprep.subr.mxu0 0.0
  %6667 = vmatpush1.msra.mxu0 %v6291
  %6668 = vmatprep.subr.mxu0 0.0
  %6669 = vmatpush1.msra.mxu0 %v6292
  %6670 = vmatprep.subr.mxu0 0.0
  %6671 = vmatpush1.msra.mxu0 %v6293
  %6672 = vmatprep.subr.mxu0 0.0
  %6673 = vmatpush1.msra.mxu0 %v6294
  %6674 = vmatprep.subr.mxu0 0.0
  %6675 = vmatpush1.msra.mxu0 %v6295
  %6676 = vmatprep.subr.mxu0 0.0
  %6677 = vmatpush1.msra.mxu0 %v6296
  %6678 = vmatprep.mubr.f32.mxu0 %v6174
  %6679 = vmatmul.mubr.f32.gmra.mrb[0].mxu0 %v6173
  %v6680 = vpop.f32.mrb[0].mxu0
  %v6681 = vadd.f32 %v6606, %v6680
  %v6682 = vpop.f32.mrb[0].mxu0
  %6683 = vmatprep.mubr.f32.mxu0 %v6190
  %6684 = vmatmul.mubr.f32.gmra.mrb[0].mxu0 %v6189
  %v6685 = vpop.f32.mrb[0].mxu0
  %v6686 = vadd.f32 %v6611, %v6685
  %v6687 = vpop.f32.mrb[0].mxu0
  %6688 = vdwg.mxu0
  %6689 = vmatprep.subr.mxu0 0.0
  %6690 = vmatpush1.msra.mxu0 %v6297
  %6691 = vmatprep.subr.mxu0 0.0
  %6692 = vmatpush1.msra.mxu0 %v6298
  %6693 = vmatprep.subr.mxu0 0.0
  %6694 = vmatpush1.msra.mxu0 %v6299
  %6695 = vmatprep.subr.mxu0 0.0
  %6696 = vmatpush1.msra.mxu0 %v6300
  %6697 = vmatprep.subr.mxu0 0.0
  %6698 = vmatpush1.msra.mxu0 %v6301
  %6699 = vmatprep.subr.mxu0 0.0
  %6700 = vmatpush1.msra.mxu0 %v6302
  %6701 = vmatprep.subr.mxu0 0.0
  %6702 = vmatpush1.msra.mxu0 %v6303
  %6703 = vmatprep.subr.mxu0 0.0
  %6704 = vmatpush1.msra.mxu0 %v6304
  %6705 = vmatprep.subr.mxu0 0.0
  %6706 = vmatpush1.msra.mxu0 %v6305
  %6707 = vmatprep.subr.mxu0 0.0
  %6708 = vmatpush1.msra.mxu0 %v6306
  %6709 = vmatprep.subr.mxu0 0.0
  %6710 = vmatpush1.msra.mxu0 %v6307
  %6711 = vmatprep.subr.mxu0 0.0
  %6712 = vmatpush1.msra.mxu0 %v6308
  %6713 = vmatprep.subr.mxu0 0.0
  %6714 = vmatpush1.msra.mxu0 %v6309
  %6715 = vmatprep.subr.mxu0 0.0
  %6716 = vmatpush1.msra.mxu0 %v6310
  %6717 = vmatprep.subr.mxu0 0.0
  %6718 = vmatpush1.msra.mxu0 %v6311
  %6719 = vmatprep.subr.mxu0 0.0
  %6720 = vmatpush1.msra.mxu0 %v6312
  %6721 = vmatprep.subr.mxu0 0.0
  %6722 = vmatpush1.msra.mxu0 %v6313
  %6723 = vmatprep.subr.mxu0 0.0
  %6724 = vmatpush1.msra.mxu0 %v6314
  %6725 = vmatprep.subr.mxu0 0.0
  %6726 = vmatpush1.msra.mxu0 %v6315
  %6727 = vmatprep.subr.mxu0 0.0
  %6728 = vmatpush1.msra.mxu0 %v6316
  %6729 = vmatprep.subr.mxu0 0.0
  %6730 = vmatpush1.msra.mxu0 %v6317
  %6731 = vmatprep.subr.mxu0 0.0
  %6732 = vmatpush1.msra.mxu0 %v6318
  %6733 = vmatprep.subr.mxu0 0.0
  %6734 = vmatpush1.msra.mxu0 %v6319
  %6735 = vmatprep.subr.mxu0 0.0
  %6736 = vmatpush1.msra.mxu0 %v6320
  %6737 = vmatprep.subr.mxu0 0.0
  %6738 = vmatpush1.msra.mxu0 %v6321
  %6739 = vmatprep.subr.mxu0 0.0
  %6740 = vmatpush1.msra.mxu0 %v6322
  %6741 = vmatprep.subr.mxu0 0.0
  %6742 = vmatpush1.msra.mxu0 %v6323
  %6743 = vmatprep.subr.mxu0 0.0
  %6744 = vmatpush1.msra.mxu0 %v6324
  %6745 = vmatprep.subr.mxu0 0.0
  %6746 = vmatpush1.msra.mxu0 %v6325
  %6747 = vmatprep.subr.mxu0 0.0
  %6748 = vmatpush1.msra.mxu0 %v6326
  %6749 = vmatprep.subr.mxu0 0.0
  %6750 = vmatpush1.msra.mxu0 %v6327
  %6751 = vmatprep.subr.mxu0 0.0
  %6752 = vmatpush1.msra.mxu0 %v6328
  %6753 = vmatprep.mubr.f32.mxu0 %v6176
  %6754 = vmatmul.mubr.f32.gmra.mrb[0].mxu0 %v6175
  %v6755 = vpop.f32.mrb[0].mxu0
  %v6756 = vadd.f32 %v6681, %v6755
  %v6757 = vpop.f32.mrb[0].mxu0
  %6758 = vmatprep.mubr.f32.mxu0 %v6192
  %6759 = vmatmul.mubr.f32.gmra.mrb[0].mxu0 %v6191
  %v6760 = vpop.f32.mrb[0].mxu0
  %v6761 = vadd.f32 %v6686, %v6760
  %v6762 = vpop.f32.mrb[0].mxu0
  %6763 = vdwg.mxu0
  %6764 = vmatprep.subr.mxu0 0.0
  %6765 = vmatpush1.msra.mxu0 %v6329
  %6766 = vmatprep.subr.mxu0 0.0
  %6767 = vmatpush1.msra.mxu0 %v6330
  %6768 = vmatprep.subr.mxu0 0.0
  %6769 = vmatpush1.msra.mxu0 %v6331
  %6770 = vmatprep.subr.mxu0 0.0
  %6771 = vmatpush1.msra.mxu0 %v6332
  %6772 = vmatprep.subr.mxu0 0.0
  %6773 = vmatpush1.msra.mxu0 %v6333
  %6774 = vmatprep.subr.mxu0 0.0
  %6775 = vmatpush1.msra.mxu0 %v6334
  %6776 = vmatprep.subr.mxu0 0.0
  %6777 = vmatpush1.msra.mxu0 %v6335
  %6778 = vmatprep.subr.mxu0 0.0
  %6779 = vmatpush1.msra.mxu0 %v6336
  %6780 = vmatprep.subr.mxu0 0.0
  %6781 = vmatpush1.msra.mxu0 %v6337
  %6782 = vmatprep.subr.mxu0 0.0
  %6783 = vmatpush1.msra.mxu0 %v6338
  %6784 = vmatprep.subr.mxu0 0.0
  %6785 = vmatpush1.msra.mxu0 %v6339
  %6786 = vmatprep.subr.mxu0 0.0
  %6787 = vmatpush1.msra.mxu0 %v6340
  %6788 = vmatprep.subr.mxu0 0.0
  %6789 = vmatpush1.msra.mxu0 %v6341
  %6790 = vmatprep.subr.mxu0 0.0
  %6791 = vmatpush1.msra.mxu0 %v6342
  %6792 = vmatprep.subr.mxu0 0.0
  %6793 = vmatpush1.msra.mxu0 %v6343
  %6794 = vmatprep.subr.mxu0 0.0
  %6795 = vmatpush1.msra.mxu0 %v6344
  %6796 = vmatprep.subr.mxu0 0.0
  %6797 = vmatpush1.msra.mxu0 %v6345
  %6798 = vmatprep.subr.mxu0 0.0
  %6799 = vmatpush1.msra.mxu0 %v6346
  %6800 = vmatprep.subr.mxu0 0.0
  %6801 = vmatpush1.msra.mxu0 %v6347
  %6802 = vmatprep.subr.mxu0 0.0
  %6803 = vmatpush1.msra.mxu0 %v6348
  %6804 = vmatprep.subr.mxu0 0.0
  %6805 = vmatpush1.msra.mxu0 %v6349
  %6806 = vmatprep.subr.mxu0 0.0
  %6807 = vmatpush1.msra.mxu0 %v6350
  %6808 = vmatprep.subr.mxu0 0.0
  %6809 = vmatpush1.msra.mxu0 %v6351
  %6810 = vmatprep.subr.mxu0 0.0
  %6811 = vmatpush1.msra.mxu0 %v6352
  %6812 = vmatprep.subr.mxu0 0.0
  %6813 = vmatpush1.msra.mxu0 %v6353
  %6814 = vmatprep.subr.mxu0 0.0
  %6815 = vmatpush1.msra.mxu0 %v6354
  %6816 = vmatprep.subr.mxu0 0.0
  %6817 = vmatpush1.msra.mxu0 %v6355
  %6818 = vmatprep.subr.mxu0 0.0
  %6819 = vmatpush1.msra.mxu0 %v6356
  %6820 = vmatprep.subr.mxu0 0.0
  %6821 = vmatpush1.msra.mxu0 %v6357
  %6822 = vmatprep.subr.mxu0 0.0
  %6823 = vmatpush1.msra.mxu0 %v6358
  %6824 = vmatprep.subr.mxu0 0.0
  %6825 = vmatpush1.msra.mxu0 %v6359
  %6826 = vmatprep.subr.mxu0 0.0
  %6827 = vmatpush1.msra.mxu0 %v6360
  %6828 = vmatprep.mubr.f32.mxu0 %v6178
  %6829 = vmatmul.mubr.f32.gmra.mrb[0].mxu0 %v6177
  %v6830 = vpop.f32.mrb[0].mxu0
  %v6831 = vadd.f32 %v6756, %v6830
  %v6832 = vpop.f32.mrb[0].mxu0
  %6833 = vmatprep.mubr.f32.mxu0 %v6194
  %6834 = vmatmul.mubr.f32.gmra.mrb[0].mxu0 %v6193
  %v6835 = vpop.f32.mrb[0].mxu0
  %v6836 = vadd.f32 %v6761, %v6835
  %v6837 = vpop.f32.mrb[0].mxu0
  %6838 = vdwg.mxu0
  %6839 = vmatprep.subr.mxu0 0.0
  %6840 = vmatpush1.msra.mxu0 %v6361
  %6841 = vmatprep.subr.mxu0 0.0
  %6842 = vmatpush1.msra.mxu0 %v6362
  %6843 = vmatprep.subr.mxu0 0.0
  %6844 = vmatpush1.msra.mxu0 %v6363
  %6845 = vmatprep.subr.mxu0 0.0
  %6846 = vmatpush1.msra.mxu0 %v6364
  %6847 = vmatprep.subr.mxu0 0.0
  %6848 = vmatpush1.msra.mxu0 %v6365
  %6849 = vmatprep.subr.mxu0 0.0
  %6850 = vmatpush1.msra.mxu0 %v6366
  %6851 = vmatprep.subr.mxu0 0.0
  %6852 = vmatpush1.msra.mxu0 %v6367
  %6853 = vmatprep.subr.mxu0 0.0
  %6854 = vmatpush1.msra.mxu0 %v6368
  %6855 = vmatprep.subr.mxu0 0.0
  %6856 = vmatpush1.msra.mxu0 %v6369
  %6857 = vmatprep.subr.mxu0 0.0
  %6858 = vmatpush1.msra.mxu0 %v6370
  %6859 = vmatprep.subr.mxu0 0.0
  %6860 = vmatpush1.msra.mxu0 %v6371
  %6861 = vmatprep.subr.mxu0 0.0
  %6862 = vmatpush1.msra.mxu0 %v6372
  %6863 = vmatprep.subr.mxu0 0.0
  %6864 = vmatpush1.msra.mxu0 %v6373
  %6865 = vmatprep.subr.mxu0 0.0
  %6866 = vmatpush1.msra.mxu0 %v6374
  %6867 = vmatprep.subr.mxu0 0.0
  %6868 = vmatpush1.msra.mxu0 %v6375
  %6869 = vmatprep.subr.mxu0 0.0
  %6870 = vmatpush1.msra.mxu0 %v6376
  %6871 = vmatprep.subr.mxu0 0.0
  %6872 = vmatpush1.msra.mxu0 %v6377
  %6873 = vmatprep.subr.mxu0 0.0
  %6874 = vmatpush1.msra.mxu0 %v6378
  %6875 = vmatprep.subr.mxu0 0.0
  %6876 = vmatpush1.msra.mxu0 %v6379
  %6877 = vmatprep.subr.mxu0 0.0
  %6878 = vmatpush1.msra.mxu0 %v6380
  %6879 = vmatprep.subr.mxu0 0.0
  %6880 = vmatpush1.msra.mxu0 %v6381
  %6881 = vmatprep.subr.mxu0 0.0
  %6882 = vmatpush1.msra.mxu0 %v6382
  %6883 = vmatprep.subr.mxu0 0.0
  %6884 = vmatpush1.msra.mxu0 %v6383
  %6885 = vmatprep.subr.mxu0 0.0
  %6886 = vmatpush1.msra.mxu0 %v6384
  %6887 = vmatprep.subr.mxu0 0.0
  %6888 = vmatpush1.msra.mxu0 %v6385
  %6889 = vmatprep.subr.mxu0 0.0
  %6890 = vmatpush1.msra.mxu0 %v6386
  %6891 = vmatprep.subr.mxu0 0.0
  %6892 = vmatpush1.msra.mxu0 %v6387
  %6893 = vmatprep.subr.mxu0 0.0
  %6894 = vmatpush1.msra.mxu0 %v6388
  %6895 = vmatprep.subr.mxu0 0.0
  %6896 = vmatpush1.msra.mxu0 %v6389
  %6897 = vmatprep.subr.mxu0 0.0
  %6898 = vmatpush1.msra.mxu0 %v6390
  %6899 = vmatprep.subr.mxu0 0.0
  %6900 = vmatpush1.msra.mxu0 %v6391
  %6901 = vmatprep.subr.mxu0 0.0
  %6902 = vmatpush1.msra.mxu0 %v6392
  %6903 = vmatprep.mubr.f32.mxu0 %v6180
  %6904 = vmatmul.mubr.f32.gmra.mrb[0].mxu0 %v6179
  %v6905 = vpop.f32.mrb[0].mxu0
  %v6906 = vadd.f32 %v6831, %v6905
  %v6907 = vpop.f32.mrb[0].mxu0
  %6908 = vmatprep.mubr.f32.mxu0 %v6196
  %6909 = vmatmul.mubr.f32.gmra.mrb[0].mxu0 %v6195
  %v6910 = vpop.f32.mrb[0].mxu0
  %v6911 = vadd.f32 %v6836, %v6910
  %v6912 = vpop.f32.mrb[0].mxu0
  %6913 = vdwg.mxu0
  %6914 = vmatprep.subr.mxu0 0.0
  %6915 = vmatpush1.msra.mxu0 %v6393
  %6916 = vmatprep.subr.mxu0 0.0
  %6917 = vmatpush1.msra.mxu0 %v6394
  %6918 = vmatprep.subr.mxu0 0.0
  %6919 = vmatpush1.msra.mxu0 %v6395
  %6920 = vmatprep.subr.mxu0 0.0
  %6921 = vmatpush1.msra.mxu0 %v6396
  %6922 = vmatprep.subr.mxu0 0.0
  %6923 = vmatpush1.msra.mxu0 %v6397
  %6924 = vmatprep.subr.mxu0 0.0
  %6925 = vmatpush1.msra.mxu0 %v6398
  %6926 = vmatprep.subr.mxu0 0.0
  %6927 = vmatpush1.msra.mxu0 %v6399
  %6928 = vmatprep.subr.mxu0 0.0
  %6929 = vmatpush1.msra.mxu0 %v6400
  %6930 = vmatprep.subr.mxu0 0.0
  %6931 = vmatpush1.msra.mxu0 %v6401
  %6932 = vmatprep.subr.mxu0 0.0
  %6933 = vmatpush1.msra.mxu0 %v6402
  %6934 = vmatprep.subr.mxu0 0.0
  %6935 = vmatpush1.msra.mxu0 %v6403
  %6936 = vmatprep.subr.mxu0 0.0
  %6937 = vmatpush1.msra.mxu0 %v6404
  %6938 = vmatprep.subr.mxu0 0.0
  %6939 = vmatpush1.msra.mxu0 %v6405
  %6940 = vmatprep.subr.mxu0 0.0
  %6941 = vmatpush1.msra.mxu0 %v6406
  %6942 = vmatprep.subr.mxu0 0.0
  %6943 = vmatpush1.msra.mxu0 %v6407
  %6944 = vmatprep.subr.mxu0 0.0
  %6945 = vmatpush1.msra.mxu0 %v6408
  %6946 = vmatprep.subr.mxu0 0.0
  %6947 = vmatpush1.msra.mxu0 %v6409
  %6948 = vmatprep.subr.mxu0 0.0
  %6949 = vmatpush1.msra.mxu0 %v6410
  %6950 = vmatprep.subr.mxu0 0.0
  %6951 = vmatpush1.msra.mxu0 %v6411
  %6952 = vmatprep.subr.mxu0 0.0
  %6953 = vmatpush1.msra.mxu0 %v6412
  %6954 = vmatprep.subr.mxu0 0.0
  %6955 = vmatpush1.msra.mxu0 %v6413
  %6956 = vmatprep.subr.mxu0 0.0
  %6957 = vmatpush1.msra.mxu0 %v6414
  %6958 = vmatprep.subr.mxu0 0.0
  %6959 = vmatpush1.msra.mxu0 %v6415
  %6960 = vmatprep.subr.mxu0 0.0
  %6961 = vmatpush1.msra.mxu0 %v6416
  %6962 = vmatprep.subr.mxu0 0.0
  %6963 = vmatpush1.msra.mxu0 %v6417
  %6964 = vmatprep.subr.mxu0 0.0
  %6965 = vmatpush1.msra.mxu0 %v6418
  %6966 = vmatprep.subr.mxu0 0.0
  %6967 = vmatpush1.msra.mxu0 %v6419
  %6968 = vmatprep.subr.mxu0 0.0
  %6969 = vmatpush1.msra.mxu0 %v6420
  %6970 = vmatprep.subr.mxu0 0.0
  %6971 = vmatpush1.msra.mxu0 %v6421
  %6972 = vmatprep.subr.mxu0 0.0
  %6973 = vmatpush1.msra.mxu0 %v6422
  %6974 = vmatprep.subr.mxu0 0.0
  %6975 = vmatpush1.msra.mxu0 %v6423
  %6976 = vmatprep.subr.mxu0 0.0
  %6977 = vmatpush1.msra.mxu0 %v6424
  %6978 = vmatprep.mubr.f32.mxu0 %v6182
  %6979 = vmatmul.mubr.f32.gmra.mrb[0].mxu0 %v6181
  %v6980 = vpop.f32.mrb[0].mxu0
  %v6981 = vadd.f32 %v6906, %v6980
  %v6982 = vpop.f32.mrb[0].mxu0
  %6983 = vmatprep.mubr.f32.mxu0 %v6198
  %6984 = vmatmul.mubr.f32.gmra.mrb[0].mxu0 %v6197
  %v6985 = vpop.f32.mrb[0].mxu0
  %v6986 = vadd.f32 %v6911, %v6985
  %v6987 = vpop.f32.mrb[0].mxu0
  %6988 = vdwg.mxu0
  %6989 = vmatprep.subr.mxu0 0.0
  %6990 = vmatpush1.msra.mxu0 %v6425
  %6991 = vmatprep.subr.mxu0 0.0
  %6992 = vmatpush1.msra.mxu0 %v6426
  %6993 = vmatprep.subr.mxu0 0.0
  %6994 = vmatpush1.msra.mxu0 %v6427
  %6995 = vmatprep.subr.mxu0 0.0
  %6996 = vmatpush1.msra.mxu0 %v6428
  %6997 = vmatprep.subr.mxu0 0.0
  %6998 = vmatpush1.msra.mxu0 %v6429
  %6999 = vmatprep.subr.mxu0 0.0
  %7000 = vmatpush1.msra.mxu0 %v6430
  %7001 = vmatprep.subr.mxu0 0.0
  %7002 = vmatpush1.msra.mxu0 %v6431
  %7003 = vmatprep.subr.mxu0 0.0
  %7004 = vmatpush1.msra.mxu0 %v6432
  %7005 = vmatprep.subr.mxu0 0.0
  %7006 = vmatpush1.msra.mxu0 %v6433
  %7007 = vmatprep.subr.mxu0 0.0
  %7008 = vmatpush1.msra.mxu0 %v6434
  %7009 = vmatprep.subr.mxu0 0.0
  %7010 = vmatpush1.msra.mxu0 %v6435
  %7011 = vmatprep.subr.mxu0 0.0
  %7012 = vmatpush1.msra.mxu0 %v6436
  %7013 = vmatprep.subr.mxu0 0.0
  %7014 = vmatpush1.msra.mxu0 %v6437
  %7015 = vmatprep.subr.mxu0 0.0
  %7016 = vmatpush1.msra.mxu0 %v6438
  %7017 = vmatprep.subr.mxu0 0.0
  %7018 = vmatpush1.msra.mxu0 %v6439
  %7019 = vmatprep.subr.mxu0 0.0
  %7020 = vmatpush1.msra.mxu0 %v6440
  %7021 = vmatprep.subr.mxu0 0.0
  %7022 = vmatpush1.msra.mxu0 %v6441
  %7023 = vmatprep.subr.mxu0 0.0
  %7024 = vmatpush1.msra.mxu0 %v6442
  %7025 = vmatprep.subr.mxu0 0.0
  %7026 = vmatpush1.msra.mxu0 %v6443
  %7027 = vmatprep.subr.mxu0 0.0
  %7028 = vmatpush1.msra.mxu0 %v6444
  %7029 = vmatprep.subr.mxu0 0.0
  %7030 = vmatpush1.msra.mxu0 %v6445
  %7031 = vmatprep.subr.mxu0 0.0
  %7032 = vmatpush1.msra.mxu0 %v6446
  %7033 = vmatprep.subr.mxu0 0.0
  %7034 = vmatpush1.msra.mxu0 %v6447
  %7035 = vmatprep.subr.mxu0 0.0
  %7036 = vmatpush1.msra.mxu0 %v6448
  %7037 = vmatprep.subr.mxu0 0.0
  %7038 = vmatpush1.msra.mxu0 %v6449
  %7039 = vmatprep.subr.mxu0 0.0
  %7040 = vmatpush1.msra.mxu0 %v6450
  %7041 = vmatprep.subr.mxu0 0.0
  %7042 = vmatpush1.msra.mxu0 %v6451
  %7043 = vmatprep.subr.mxu0 0.0
  %7044 = vmatpush1.msra.mxu0 %v6452
  %7045 = vmatprep.subr.mxu0 0.0
  %7046 = vmatpush1.msra.mxu0 %v6453
  %7047 = vmatprep.subr.mxu0 0.0
  %7048 = vmatpush1.msra.mxu0 %v6454
  %7049 = vmatprep.subr.mxu0 0.0
  %7050 = vmatpush1.msra.mxu0 %v6455
  %7051 = vmatprep.subr.mxu0 0.0
  %7052 = vmatpush1.msra.mxu0 %v6456
  %7053 = vmatprep.mubr.f32.mxu0 %v6184
  %7054 = vmatmul.mubr.f32.gmra.mrb[0].mxu0 %v6183
  %v7055 = vpop.f32.mrb[0].mxu0
  %v7056 = vadd.f32 %v6981, %v7055
  %v7057 = vpop.f32.mrb[0].mxu0
  %7058 = vmatprep.mubr.f32.mxu0 %v6200
  %7059 = vmatmul.mubr.f32.gmra.mrb[0].mxu0 %v6199
  %v7060 = vpop.f32.mrb[0].mxu0
  %v7061 = vadd.f32 %v6986, %v7060
  %v7062 = vpop.f32.mrb[0].mxu0
  %7063 = vdwg.mxu0
  %v7064 = vadd.f32 %v5397, %v7056
  %v7065 = vadd.f32 %v5398, %v7061
  %v7066 = vld [vmem:[%s57] sm:$0x1]
  %v7067 = vld [vmem:[%s59] sm:$0x1]
  %v7068 = vsel %vm276, %v7064, 0.0
  %7069 = vadd.xlane.f32.xlu0 %v7068
  %v7070 = vpop.xlane.xlu0 %7069
  %v7071 = vsel %vm276, %v7065, 0.0
  %7072 = vadd.xlane.f32.xlu0 %v7071
  %v7073 = vpop.xlane.xlu0 %7072
  %v7074 = vmul.f32 %v7070, %v1951
  %v7075 = vmul.f32 %v7073, %v1951
  %v7076 = vsub.f32 %v7064, %v7074
  %v7077 = vsub.f32 %v7065, %v7075
  %v7078 = vmul.f32 %v7076, %v7076
  %v7079 = vmul.f32 %v7077, %v7077
  %v7080 = vsel %vm276, %v7078, 0.0
  %7081 = vadd.xlane.f32.xlu0 %v7080
  %v7082 = vpop.xlane.xlu0 %7081
  %v7083 = vsel %vm276, %v7079, 0.0
  %7084 = vadd.xlane.f32.xlu0 %v7083
  %v7085 = vpop.xlane.xlu0 %7084
  %v7086 = vmul.f32 %v7082, %v1951
  %v7087 = vmul.f32 %v7085, %v1951
  %v7088 = vadd.f32 %v7086, 1e-05
  %v7089 = vadd.f32 %v7087, 1e-05
  %v7090 = vrsqrt.pop %v7088
  %v7091 = vrsqrt.pop %v7089
  %v7092 = vmul.f32 %v7076, %v7090
  %v7093 = vmul.f32 %v7077, %v7091
  %v7095 = vlaneseq
  %v7096 = vshrl.u32 %v7095, 7
  %v7097 = vsub.s32 0, %v7096
  %v7098 = vrot.slane %v7066, %v7097
  %v7100 = vmul.f32 %v7092, %v7098
  %v7101 = vmul.f32 %v7093, %v7098
  %v7103 = vlaneseq
  %v7104 = vshrl.u32 %v7103, 7
  %v7105 = vsub.s32 0, %v7104
  %v7106 = vrot.slane %v7067, %v7105
  %v7108 = vadd.f32 %v7100, %v7106
  %v7109 = vadd.f32 %v7101, %v7106
  %v7110 = vld [vmem:[%s69] sm:$0xff]
  %v7111 = vld [vmem:[%s69 + $0x8] sm:$0xff]
  %v7112 = vld [vmem:[%s69 + $0x10] sm:$0xff]
  %v7113 = vld [vmem:[%s69 + $0x18] sm:$0xff]
  %v7114 = vld [vmem:[%s71] sm:$0x1]
  %v7116 = vlaneseq
  %v7117 = vshrl.u32 %v7116, 7
  %v7118 = vsub.s32 0, %v7117
  %v7119 = vrot.slane %v7114, %v7118
  %v7122 = vsel %vm276, %v7108, 0
  %v7125 = vsel %vm276, %v7109, 0
  %7127 = vmatprep.subr.mxu0 0.0
  %7128 = vmatpush1.msra.mxu0 %v7110
  %7129 = vmatprep.subr.mxu0 0.0
  %7130 = vmatpush1.msra.mxu0 %v7111
  %7131 = vmatprep.subr.mxu0 0.0
  %7132 = vmatpush1.msra.mxu0 %v7112
  %7133 = vmatprep.subr.mxu0 0.0
  %7134 = vmatpush1.msra.mxu0 %v7113
  %7135 = vmatprep.subr.mxu0 0.0
  %7136 = vmatpush1.msra.mxu0 0.0
  %7137 = vmatprep.subr.mxu0 0.0
  %7138 = vmatpush1.msra.mxu0 0.0
  %7139 = vmatprep.subr.mxu0 0.0
  %7140 = vmatpush1.msra.mxu0 0.0
  %7141 = vmatprep.subr.mxu0 0.0
  %7142 = vmatpush1.msra.mxu0 0.0
  %7143 = vmatprep.subr.mxu0 0.0
  %7144 = vmatpush1.msra.mxu0 0.0
  %7145 = vmatprep.subr.mxu0 0.0
  %7146 = vmatpush1.msra.mxu0 0.0
  %7147 = vmatprep.subr.mxu0 0.0
  %7148 = vmatpush1.msra.mxu0 0.0
  %7149 = vmatprep.subr.mxu0 0.0
  %7150 = vmatpush1.msra.mxu0 0.0
  %7151 = vmatprep.subr.mxu0 0.0
  %7152 = vmatpush1.msra.mxu0 0.0
  %7153 = vmatprep.subr.mxu0 0.0
  %7154 = vmatpush1.msra.mxu0 0.0
  %7155 = vmatprep.subr.mxu0 0.0
  %7156 = vmatpush1.msra.mxu0 0.0
  %7157 = vmatprep.subr.mxu0 0.0
  %7158 = vmatpush1.msra.mxu0 0.0
  %7159 = vmatprep.subr.mxu0 0.0
  %7160 = vmatpush1.msra.mxu0 0.0
  %7161 = vmatprep.subr.mxu0 0.0
  %7162 = vmatpush1.msra.mxu0 0.0
  %7163 = vmatprep.subr.mxu0 0.0
  %7164 = vmatpush1.msra.mxu0 0.0
  %7165 = vmatprep.subr.mxu0 0.0
  %7166 = vmatpush1.msra.mxu0 0.0
  %7167 = vmatprep.subr.mxu0 0.0
  %7168 = vmatpush1.msra.mxu0 0.0
  %7169 = vmatprep.subr.mxu0 0.0
  %7170 = vmatpush1.msra.mxu0 0.0
  %7171 = vmatprep.subr.mxu0 0.0
  %7172 = vmatpush1.msra.mxu0 0.0
  %7173 = vmatprep.subr.mxu0 0.0
  %7174 = vmatpush1.msra.mxu0 0.0
  %7175 = vmatprep.subr.mxu0 0.0
  %7176 = vmatpush1.msra.mxu0 0.0
  %7177 = vmatprep.subr.mxu0 0.0
  %7178 = vmatpush1.msra.mxu0 0.0
  %7179 = vmatprep.subr.mxu0 0.0
  %7180 = vmatpush1.msra.mxu0 0.0
  %7181 = vmatprep.subr.mxu0 0.0
  %7182 = vmatpush1.msra.mxu0 0.0
  %7183 = vmatprep.subr.mxu0 0.0
  %7184 = vmatpush1.msra.mxu0 0.0
  %7185 = vmatprep.subr.mxu0 0.0
  %7186 = vmatpush1.msra.mxu0 0.0
  %7187 = vmatprep.subr.mxu0 0.0
  %7188 = vmatpush1.msra.mxu0 0.0
  %7189 = vmatprep.subr.mxu0 0.0
  %7190 = vmatpush1.msra.mxu0 0.0
  %7191 = vmatprep.mubr.f32.mxu0 0.0
  %7192 = vmatmul.mubr.f32.gmra.mrb[0].mxu0 %v7122
  %v7193 = vpop.f32.mrb[0].mxu0
  %v7194 = vadd.f32 %v7119, %v7193
  %v7195 = vpop.f32.mrb[0].mxu0
  %7196 = vmatprep.mubr.f32.mxu0 0.0
  %7197 = vmatmul.mubr.f32.gmra.mrb[0].mxu0 %v7125
  %v7198 = vpop.f32.mrb[0].mxu0
  %v7199 = vadd.f32 %v7119, %v7198
  %v7200 = vpop.f32.mrb[0].mxu0
  %7201 = vdwg.mxu0
  %7202 = vst [vmem:[%s73] sm:$0xff] %v7194
  %7203 = vst [vmem:[%s73 + $0x8] sm:$0xff] %v7199
  // Predicated region
  $region146: #{transformer_only_forward.1} parent=0 // pred_check
    _
  $region147: #{transformer_only_forward.1} parent=0 // pred_check_branch
    %7205 = sbr.rel (0) target = $region149
  $region148: #{transformer_only_forward.1} parent=0 // pred_region
    _
  $region149: #{transformer_only_forward.1} parent=0 // pred_fallthru
    _
  // Predicated region
  $region150: #{transformer_only_forward.1} parent=0 // pred_check
    _
  $region151: #{transformer_only_forward.1} parent=0 // pred_check_branch
    %7207 = sbr.rel (0) target = $region153
  $region152: #{transformer_only_forward.1} parent=0 // pred_region
    _
  $region153: #{transformer_only_forward.1} parent=0 // pred_fallthru
    _

</llo_original>
